<compile_context>
chip_gen: v7x
topology: tpu7x:2x2x1
jax: 0.10.0
libtpu: 0.0.40
codegen_flags: <defaults>
</compile_context>

<pallas_src>
import jax
import jax.numpy as jnp
from jax.experimental import pallas as pl
from jax.experimental.pallas import tpu as pltpu


# --------------------------------------------------------------------------
# Static shape bookkeeping
# --------------------------------------------------------------------------
def _dims(image_dim):
    H, W = image_dim
    assert H % 4 == 0 and W % 4 == 0, "block decomposition needs H, W % 4 == 0"
    HB, WB = H // 4, W // 4                 # number of 4x4 input blocks
    OH1, OW1 = HB - 1, WB - 1               # conv1: k=8, s=4, VALID
    assert OH1 >= 4 and OW1 >= 4, "image too small for conv2 (k=4)"
    OH2 = (OH1 - 4) // 2 + 1                # conv2: k=4, s=2, VALID
    OW2 = (OW1 - 4) // 2 + 1
    return HB, WB, OH1, OW1, OH2, OW2


# --------------------------------------------------------------------------
# Fused forward kernel (built for static problem sizes)
# --------------------------------------------------------------------------
def _make_fused_kernel(N, C, HB, WB, OH1, OW1, OH2, OW2, n_classes):
    A = n_classes

    def kernel(x_ref, w1_ref, b1_ref, w2_ref, b2_ref, fcw_ref, fcb_ref,
               wh_ref, bh_ref, v_ref, pi_ref, y1_ref, p2_ref):
        # ---------------- Conv1 (k=8, s=4) + ReLU ---------------------------
        # x_ref : (N*HB, WB, C*16)  rows=(n, hb), lanes=(c, hi, wi)
        # w1_ref: (4, C*16, 16)     one (C*16, 16) matrix per (dh, dw) tap
        # y1_ref: (N*OH1, OW1, 16)  ReLU'd conv1 output, rows=(n, oh1)
        b1 = b1_ref[...]                                   # (1, 16)
        for n in range(N):
            for oh in range(OH1):
                acc = jnp.zeros((OW1, 16), jnp.float32)
                for dh in range(2):
                    for dw in range(2):
                        xs = x_ref[n * HB + oh + dh, dw:dw + OW1, :]  # (OW1, C*16)
                        acc = acc + jnp.dot(
                            xs, w1_ref[dh * 2 + dw],
                            preferred_element_type=jnp.float32)
                y1_ref[n * OH1 + oh] = jnp.maximum(acc + b1, 0.0)

        # ---------------- Conv2 (k=4, s=2): in-VMEM im2col + matmul + ReLU --
        # p2_ref: (OH2*OW2*N, 256)  rows=(p, n), cols=(kh, kw, c1)
        for p in range(OH2 * OW2):
            oh2, ow2 = p // OW2, p % OW2
            for n in range(N):
                row = p * N + n
                for kh in range(4):
                    src = n * OH1 + 2 * oh2 + kh
                    for kw in range(4):
                        c0 = (kh * 4 + kw) * 16
                        p2_ref[row:row + 1, c0:c0 + 16] = (
                            y1_ref[src, 2 * ow2 + kw:2 * ow2 + kw + 1, :])
        y2 = jnp.maximum(
            jnp.dot(p2_ref[...], w2_ref[...],
                    preferred_element_type=jnp.float32) + b2_ref[...],
            0.0)                                           # (OH2*OW2*N, 32)

        # ---------------- Linear(cnn_output, 512) + ReLU --------------------
        # fcw rows were permuted at init to the kernel's (p, c2) ordering, so
        # the PyTorch (C, H, W) flatten is matched with no transpose here.
        h = jnp.zeros((N, 512), jnp.float32)
        for p in range(OH2 * OW2):
            h = h + jnp.dot(y2[p * N:(p + 1) * N, :],
                            fcw_ref[p * 32:(p + 1) * 32, :],
                            preferred_element_type=jnp.float32)
        h = jnp.maximum(h + fcb_ref[...], 0.0)             # (N, 512)

        # ---------------- Fused value + policy heads ------------------------
        logits = jnp.dot(h, wh_ref[...],
                         preferred_element_type=jnp.float32) + bh_ref[...]
        v_ref[...] = logits[:, 0:1]                        # value head
        p_logits = logits[:, 1:1 + A]                      # policy head
        m = jnp.max(p_logits, axis=1, keepdims=True)
        e = jnp.exp(p_logits - m)
        pi_ref[...] = e * pl.reciprocal(
            jnp.sum(e, axis=1, keepdims=True), approx=True)

    return kernel


# --------------------------------------------------------------------------
# Parameters: PyTorch layout at init, re-laid-out ONCE for the kernel
# --------------------------------------------------------------------------
def init_params(key, image_dim, color_dim, n_classes):
    _, _, _, _, OH2, OW2 = _dims(image_dim)
    cnn_output = 32 * OH2 * OW2
    ks = jax.random.split(key, 10)
    s = 0.05
    params = {
        "conv1_w": s * jax.random.normal(ks[0], (16, color_dim, 8, 8), jnp.float32),
        "conv1_b": s * jax.random.normal(ks[1], (16,), jnp.float32),
        "conv2_w": s * jax.random.normal(ks[2], (32, 16, 4, 4), jnp.float32),
        "conv2_b": s * jax.random.normal(ks[3], (32,), jnp.float32),
        "fc_w":    s * jax.random.normal(ks[4], (512, cnn_output), jnp.float32),
        "fc_b":    s * jax.random.normal(ks[5], (512,), jnp.float32),
        "v_w":     s * jax.random.normal(ks[6], (1, 512), jnp.float32),
        "v_b":     s * jax.random.normal(ks[7], (1,), jnp.float32),
        "p_w":     s * jax.random.normal(ks[8], (n_classes, 512), jnp.float32),
        "p_b":     s * jax.random.normal(ks[9], (n_classes,), jnp.float32),
    }
    return params, cnn_output


def prepare_kernel_params(params, image_dim, color_dim, n_classes):
    """One-time weight re-layout so the jitted forward does zero transposes."""
    _, _, _, _, OH2, OW2 = _dims(image_dim)
    C = color_dim
    # conv1: (16, C, 8, 8) -> (4 taps, C*16, 16), tap = dh*2+dw, rows=(c,hi,wi)
    w1 = params["conv1_w"].reshape(16, C, 2, 4, 2, 4)
    w1_blk = jnp.transpose(w1, (2, 4, 1, 3, 5, 0)).reshape(4, C * 16, 16)
    # conv2: (32, 16, 4, 4) -> (256, 32), rows ordered (kh, kw, c1)
    w2_mat = jnp.transpose(params["conv2_w"], (2, 3, 1, 0)).reshape(256, 32)
    # fc: permute rows from PyTorch flatten order (c2, oh2, ow2) to (p, c2)
    fcw = params["fc_w"].T.reshape(32, OH2, OW2, 512)
    fcw_k = jnp.transpose(fcw, (1, 2, 0, 3)).reshape(OH2 * OW2 * 32, 512)
    # heads fused: column 0 = value head, columns 1: = policy head
    wh = jnp.concatenate([params["v_w"].T, params["p_w"].T], axis=1)  # (512, 1+A)
    bh = jnp.concatenate([params["v_b"], params["p_b"]])[None, :]     # (1, 1+A)
    return {
        "w1": w1_blk, "b1": params["conv1_b"][None, :],
        "w2": w2_mat, "b2": params["conv2_b"][None, :],
        "fcw": fcw_k, "fcb": params["fc_b"][None, :],
        "wh": wh, "bh": bh,
    }


# --------------------------------------------------------------------------
# Forward builder: one pallas_call, full-array blocks (everything fits VMEM)
# --------------------------------------------------------------------------
def make_forward(image_dim, color_dim, n_classes, batch):
    HB, WB, OH1, OW1, OH2, OW2 = _dims(image_dim)
    N, C, A = batch, color_dim, n_classes
    kernel = _make_fused_kernel(N, C, HB, WB, OH1, OW1, OH2, OW2, A)

    def full(shape):
        nd = len(shape)

        def imap():
            return (0,) * nd

        return pl.BlockSpec(shape, imap)

    in_shapes = [
        (N * HB, WB, C * 16),      # blocked input
        (4, C * 16, 16), (1, 16),  # conv1 w, b
        (256, 32), (1, 32),        # conv2 w, b
        (OH2 * OW2 * 32, 512), (1, 512),  # fc w, b
        (512, 1 + A), (1, 1 + A),  # fused heads w, b
    ]

    fused = pl.pallas_call(
        kernel,
        out_shape=(jax.ShapeDtypeStruct((N, 1), jnp.float32),
                   jax.ShapeDtypeStruct((N, A), jnp.float32)),
        in_specs=[full(s) for s in in_shapes],
        out_specs=(full((N, 1)), full((N, A))),
        scratch_shapes=[
            pltpu.VMEM((N * OH1, OW1, 16), jnp.float32),    # conv1 activations
            pltpu.VMEM((OH2 * OW2 * N, 256), jnp.float32),  # conv2 im2col patches
        ],
    )

    @jax.jit
    def forward(kp, x):
        # Host side is layout plumbing only: 4x4-block the (N,C,H,W) input so
        # conv1's taps are contiguous 2D slices inside the kernel (~32 KB copy).
        x = x.astype(jnp.float32)
        x_blk = jnp.transpose(x.reshape(N, C, HB, 4, WB, 4),
                              (0, 2, 4, 1, 3, 5)).reshape(N * HB, WB, C * 16)
        v, pi = fused(x_blk, kp["w1"], kp["b1"], kp["w2"], kp["b2"],
                      kp["fcw"], kp["fcb"], kp["wh"], kp["bh"])
        return pi, jnp.squeeze(v, axis=-1)

    return forward


# --------------------------------------------------------------------------
# Pure-JAX reference (PyTorch-layout params) for validation
# --------------------------------------------------------------------------
def reference_forward(params, x):
    x = x.astype(jnp.float32)
    dn = ("NCHW", "OIHW", "NCHW")
    h = jax.lax.conv_general_dilated(x, params["conv1_w"], (4, 4), "VALID",
                                     dimension_numbers=dn)
    h = jnp.maximum(h + params["conv1_b"][None, :, None, None], 0.0)
    h = jax.lax.conv_general_dilated(h, params["conv2_w"], (2, 2), "VALID",
                                     dimension_numbers=dn)
    h = jnp.maximum(h + params["conv2_b"][None, :, None, None], 0.0)
    h = h.reshape(x.shape[0], -1)
    h = jnp.maximum(h @ params["fc_w"].T + params["fc_b"], 0.0)
    v = h @ params["v_w"].T + params["v_b"]
    pi = jax.nn.softmax(h @ params["p_w"].T + params["p_b"], axis=1)
    return pi, jnp.squeeze(v, axis=-1)


if __name__ == "__main__":
    image_dim = (32, 32)
    color_dim = 4
    n_classes = 6
    batch = 2

    pkey, xkey = jax.random.split(jax.random.PRNGKey(0))
    params, cnn_output = init_params(pkey, image_dim, color_dim, n_classes)
    assert cnn_output == 128  # (32 -> 7 -> 2) spatial, 32 channels

    kparams = prepare_kernel_params(params, image_dim, color_dim, n_classes)
    forward = make_forward(image_dim, color_dim, n_classes, batch)

    x = jax.random.normal(xkey, (batch, color_dim, *image_dim), dtype=jnp.float32)

    pi, v = forward(kparams, x)
    jax.block_until_ready((pi, v))

    assert pi.shape == (batch, n_classes) and v.shape == (batch,)
    assert bool(jnp.all(jnp.isfinite(pi))) and bool(jnp.all(jnp.isfinite(v)))
    # softmax rows sum to ~1 (approx reciprocal => tiny deviation allowed)
    assert bool(jnp.allclose(jnp.sum(pi, axis=1), 1.0, atol=5e-3))

    # Validate against the pure-JAX reference (f32, highest precision).
    with jax.default_matmul_precision("highest"):
        pi_exp, v_exp = reference_forward(params, x)
    assert bool(jnp.allclose(pi, pi_exp, atol=5e-3)), (
        f"pi mismatch, max abs err={float(jnp.max(jnp.abs(pi - pi_exp)))}")
    assert bool(jnp.allclose(v, v_exp, atol=2e-2)), (
        f"v mismatch, max abs err={float(jnp.max(jnp.abs(v - v_exp)))}")

    print("KERNEL_OK")
</pallas_src>

<mosaic_0001>
module attributes {stable_mosaic.version = 11 : i64} {
  func.func @kernel(%arg0: memref<16x8x64xf32, #tpu.memory_space<vmem>>, %arg1: memref<4x64x16xf32, #tpu.memory_space<vmem>>, %arg2: memref<1x16xf32, #tpu.memory_space<vmem>>, %arg3: memref<256x32xf32, #tpu.memory_space<vmem>>, %arg4: memref<1x32xf32, #tpu.memory_space<vmem>>, %arg5: memref<128x512xf32, #tpu.memory_space<vmem>>, %arg6: memref<1x512xf32, #tpu.memory_space<vmem>>, %arg7: memref<512x7xf32, #tpu.memory_space<vmem>>, %arg8: memref<1x7xf32, #tpu.memory_space<vmem>>, %arg9: memref<2x1xf32, #tpu.memory_space<vmem>>, %arg10: memref<2x6xf32, #tpu.memory_space<vmem>>, %arg11: memref<14x7x16xf32, #tpu.memory_space<vmem>>, %arg12: memref<8x256xf32, #tpu.memory_space<vmem>>) attributes {dimension_semantics = [], scalar_prefetch = 0 : i64, scratch_operands = 2 : i64, tpu.core_type = #tpu.core_type<tc>} {
    %c0 = arith.constant 0 : index
    %c0_0 = arith.constant 0 : index
    %0 = vector.load %arg2[%c0, %c0_0] : memref<1x16xf32, #tpu.memory_space<vmem>>, vector<1x16xf32>
    %cst = arith.constant 0.000000e+00 : f32
    %1 = vector.broadcast %cst : f32 to vector<7x16xf32>
    %c0_1 = arith.constant 0 : index
    %c0_2 = arith.constant 0 : index
    %c0_3 = arith.constant 0 : index
    %2 = vector.load %arg0[%c0_1, %c0_2, %c0_3] : memref<16x8x64xf32, #tpu.memory_space<vmem>>, vector<1x7x64xf32>
    %3 = vector.shape_cast %2 : vector<1x7x64xf32> to vector<7x64xf32>
    %c0_4 = arith.constant 0 : index
    %c0_5 = arith.constant 0 : index
    %c0_6 = arith.constant 0 : index
    %4 = vector.load %arg1[%c0_4, %c0_5, %c0_6] : memref<4x64x16xf32, #tpu.memory_space<vmem>>, vector<1x64x16xf32>
    %5 = vector.shape_cast %4 : vector<1x64x16xf32> to vector<64x16xf32>
    %cst_7 = arith.constant dense<0.000000e+00> : vector<7x16xf32>
    %6 = tpu.matmul %3, %5, %cst_7 {dimension_numbers = #tpu.dot_dimension_numbers<[1], [0], [0], [1], [0, 0, 1, 1], [], []>} : vector<7x64xf32>, vector<64x16xf32>, vector<7x16xf32> -> vector<7x16xf32>
    %7 = arith.addf %1, %6 : vector<7x16xf32>
    %c0_8 = arith.constant 0 : index
    %c1 = arith.constant 1 : index
    %c0_9 = arith.constant 0 : index
    %8 = vector.load %arg0[%c0_8, %c1, %c0_9] : memref<16x8x64xf32, #tpu.memory_space<vmem>>, vector<1x7x64xf32>
    %9 = vector.shape_cast %8 : vector<1x7x64xf32> to vector<7x64xf32>
    %c1_10 = arith.constant 1 : index
    %c0_11 = arith.constant 0 : index
    %c0_12 = arith.constant 0 : index
    %10 = vector.load %arg1[%c1_10, %c0_11, %c0_12] : memref<4x64x16xf32, #tpu.memory_space<vmem>>, vector<1x64x16xf32>
    %11 = vector.shape_cast %10 : vector<1x64x16xf32> to vector<64x16xf32>
    %cst_13 = arith.constant dense<0.000000e+00> : vector<7x16xf32>
    %12 = tpu.matmul %9, %11, %cst_13 {dimension_numbers = #tpu.dot_dimension_numbers<[1], [0], [0], [1], [0, 0, 1, 1], [], []>} : vector<7x64xf32>, vector<64x16xf32>, vector<7x16xf32> -> vector<7x16xf32>
    %13 = arith.addf %7, %12 : vector<7x16xf32>
    %c1_14 = arith.constant 1 : index
    %c0_15 = arith.constant 0 : index
    %c0_16 = arith.constant 0 : index
    %14 = vector.load %arg0[%c1_14, %c0_15, %c0_16] : memref<16x8x64xf32, #tpu.memory_space<vmem>>, vector<1x7x64xf32>
    %15 = vector.shape_cast %14 : vector<1x7x64xf32> to vector<7x64xf32>
    %c2 = arith.constant 2 : index
    %c0_17 = arith.constant 0 : index
    %c0_18 = arith.constant 0 : index
    %16 = vector.load %arg1[%c2, %c0_17, %c0_18] : memref<4x64x16xf32, #tpu.memory_space<vmem>>, vector<1x64x16xf32>
    %17 = vector.shape_cast %16 : vector<1x64x16xf32> to vector<64x16xf32>
    %cst_19 = arith.constant dense<0.000000e+00> : vector<7x16xf32>
    %18 = tpu.matmul %15, %17, %cst_19 {dimension_numbers = #tpu.dot_dimension_numbers<[1], [0], [0], [1], [0, 0, 1, 1], [], []>} : vector<7x64xf32>, vector<64x16xf32>, vector<7x16xf32> -> vector<7x16xf32>
    %19 = arith.addf %13, %18 : vector<7x16xf32>
    %c1_20 = arith.constant 1 : index
    %c1_21 = arith.constant 1 : index
    %c0_22 = arith.constant 0 : index
    %20 = vector.load %arg0[%c1_20, %c1_21, %c0_22] : memref<16x8x64xf32, #tpu.memory_space<vmem>>, vector<1x7x64xf32>
    %21 = vector.shape_cast %20 : vector<1x7x64xf32> to vector<7x64xf32>
    %c3 = arith.constant 3 : index
    %c0_23 = arith.constant 0 : index
    %c0_24 = arith.constant 0 : index
    %22 = vector.load %arg1[%c3, %c0_23, %c0_24] : memref<4x64x16xf32, #tpu.memory_space<vmem>>, vector<1x64x16xf32>
    %23 = vector.shape_cast %22 : vector<1x64x16xf32> to vector<64x16xf32>
    %cst_25 = arith.constant dense<0.000000e+00> : vector<7x16xf32>
    %24 = tpu.matmul %21, %23, %cst_25 {dimension_numbers = #tpu.dot_dimension_numbers<[1], [0], [0], [1], [0, 0, 1, 1], [], []>} : vector<7x64xf32>, vector<64x16xf32>, vector<7x16xf32> -> vector<7x16xf32>
    %25 = arith.addf %19, %24 : vector<7x16xf32>
    %26 = vector.broadcast %0 : vector<1x16xf32> to vector<7x16xf32>
    %27 = arith.addf %25, %26 : vector<7x16xf32>
    %cst_26 = arith.constant 0.000000e+00 : f32
    %28 = vector.broadcast %cst_26 : f32 to vector<7x16xf32>
    %29 = arith.maximumf %27, %28 : vector<7x16xf32>
    %c0_27 = arith.constant 0 : index
    %c0_28 = arith.constant 0 : index
    %c0_29 = arith.constant 0 : index
    %30 = vector.load %arg11[%c0_27, %c0_28, %c0_29] : memref<14x7x16xf32, #tpu.memory_space<vmem>>, vector<1x7x16xf32>
    %31 = vector.shape_cast %30 : vector<1x7x16xf32> to vector<7x16xf32>
    %32 = vector.shape_cast %29 : vector<7x16xf32> to vector<1x7x16xf32>
    tpu.vector_store %arg11[%c0_27, %c0_28, %c0_29], %32 {strides = array<i32>} : memref<14x7x16xf32, #tpu.memory_space<vmem>>, vector<1x7x16xf32>,
    %cst_30 = arith.constant 0.000000e+00 : f32
    %33 = vector.broadcast %cst_30 : f32 to vector<7x16xf32>
    %c1_31 = arith.constant 1 : index
    %c0_32 = arith.constant 0 : index
    %c0_33 = arith.constant 0 : index
    %34 = vector.load %arg0[%c1_31, %c0_32, %c0_33] : memref<16x8x64xf32, #tpu.memory_space<vmem>>, vector<1x7x64xf32>
    %35 = vector.shape_cast %34 : vector<1x7x64xf32> to vector<7x64xf32>
    %c0_34 = arith.constant 0 : index
    %c0_35 = arith.constant 0 : index
    %c0_36 = arith.constant 0 : index
    %36 = vector.load %arg1[%c0_34, %c0_35, %c0_36] : memref<4x64x16xf32, #tpu.memory_space<vmem>>, vector<1x64x16xf32>
    %37 = vector.shape_cast %36 : vector<1x64x16xf32> to vector<64x16xf32>
    %cst_37 = arith.constant dense<0.000000e+00> : vector<7x16xf32>
    %38 = tpu.matmul %35, %37, %cst_37 {dimension_numbers = #tpu.dot_dimension_numbers<[1], [0], [0], [1], [0, 0, 1, 1], [], []>} : vector<7x64xf32>, vector<64x16xf32>, vector<7x16xf32> -> vector<7x16xf32>
    %39 = arith.addf %33, %38 : vector<7x16xf32>
    %c1_38 = arith.constant 1 : index
    %c1_39 = arith.constant 1 : index
    %c0_40 = arith.constant 0 : index
    %40 = vector.load %arg0[%c1_38, %c1_39, %c0_40] : memref<16x8x64xf32, #tpu.memory_space<vmem>>, vector<1x7x64xf32>
    %41 = vector.shape_cast %40 : vector<1x7x64xf32> to vector<7x64xf32>
    %c1_41 = arith.constant 1 : index
    %c0_42 = arith.constant 0 : index
    %c0_43 = arith.constant 0 : index
    %42 = vector.load %arg1[%c1_41, %c0_42, %c0_43] : memref<4x64x16xf32, #tpu.memory_space<vmem>>, vector<1x64x16xf32>
    %43 = vector.shape_cast %42 : vector<1x64x16xf32> to vector<64x16xf32>
    %cst_44 = arith.constant dense<0.000000e+00> : vector<7x16xf32>
    %44 = tpu.matmul %41, %43, %cst_44 {dimension_numbers = #tpu.dot_dimension_numbers<[1], [0], [0], [1], [0, 0, 1, 1], [], []>} : vector<7x64xf32>, vector<64x16xf32>, vector<7x16xf32> -> vector<7x16xf32>
    %45 = arith.addf %39, %44 : vector<7x16xf32>
    %c2_45 = arith.constant 2 : index
    %c0_46 = arith.constant 0 : index
    %c0_47 = arith.constant 0 : index
    %46 = vector.load %arg0[%c2_45, %c0_46, %c0_47] : memref<16x8x64xf32, #tpu.memory_space<vmem>>, vector<1x7x64xf32>
    %47 = vector.shape_cast %46 : vector<1x7x64xf32> to vector<7x64xf32>
    %c2_48 = arith.constant 2 : index
    %c0_49 = arith.constant 0 : index
    %c0_50 = arith.constant 0 : index
    %48 = vector.load %arg1[%c2_48, %c0_49, %c0_50] : memref<4x64x16xf32, #tpu.memory_space<vmem>>, vector<1x64x16xf32>
    %49 = vector.shape_cast %48 : vector<1x64x16xf32> to vector<64x16xf32>
    %cst_51 = arith.constant dense<0.000000e+00> : vector<7x16xf32>
    %50 = tpu.matmul %47, %49, %cst_51 {dimension_numbers = #tpu.dot_dimension_numbers<[1], [0], [0], [1], [0, 0, 1, 1], [], []>} : vector<7x64xf32>, vector<64x16xf32>, vector<7x16xf32> -> vector<7x16xf32>
    %51 = arith.addf %45, %50 : vector<7x16xf32>
    %c2_52 = arith.constant 2 : index
    %c1_53 = arith.constant 1 : index
    %c0_54 = arith.constant 0 : index
    %52 = vector.load %arg0[%c2_52, %c1_53, %c0_54] : memref<16x8x64xf32, #tpu.memory_space<vmem>>, vector<1x7x64xf32>
    %53 = vector.shape_cast %52 : vector<1x7x64xf32> to vector<7x64xf32>
    %c3_55 = arith.constant 3 : index
    %c0_56 = arith.constant 0 : index
    %c0_57 = arith.constant 0 : index
    %54 = vector.load %arg1[%c3_55, %c0_56, %c0_57] : memref<4x64x16xf32, #tpu.memory_space<vmem>>, vector<1x64x16xf32>
    %55 = vector.shape_cast %54 : vector<1x64x16xf32> to vector<64x16xf32>
    %cst_58 = arith.constant dense<0.000000e+00> : vector<7x16xf32>
    %56 = tpu.matmul %53, %55, %cst_58 {dimension_numbers = #tpu.dot_dimension_numbers<[1], [0], [0], [1], [0, 0, 1, 1], [], []>} : vector<7x64xf32>, vector<64x16xf32>, vector<7x16xf32> -> vector<7x16xf32>
    %57 = arith.addf %51, %56 : vector<7x16xf32>
    %58 = vector.broadcast %0 : vector<1x16xf32> to vector<7x16xf32>
    %59 = arith.addf %57, %58 : vector<7x16xf32>
    %cst_59 = arith.constant 0.000000e+00 : f32
    %60 = vector.broadcast %cst_59 : f32 to vector<7x16xf32>
    %61 = arith.maximumf %59, %60 : vector<7x16xf32>
    %c1_60 = arith.constant 1 : index
    %c0_61 = arith.constant 0 : index
    %c0_62 = arith.constant 0 : index
    %62 = vector.load %arg11[%c1_60, %c0_61, %c0_62] : memref<14x7x16xf32, #tpu.memory_space<vmem>>, vector<1x7x16xf32>
    %63 = vector.shape_cast %62 : vector<1x7x16xf32> to vector<7x16xf32>
    %64 = vector.shape_cast %61 : vector<7x16xf32> to vector<1x7x16xf32>
    tpu.vector_store %arg11[%c1_60, %c0_61, %c0_62], %64 {strides = array<i32>} : memref<14x7x16xf32, #tpu.memory_space<vmem>>, vector<1x7x16xf32>,
    %cst_63 = arith.constant 0.000000e+00 : f32
    %65 = vector.broadcast %cst_63 : f32 to vector<7x16xf32>
    %c2_64 = arith.constant 2 : index
    %c0_65 = arith.constant 0 : index
    %c0_66 = arith.constant 0 : index
    %66 = vector.load %arg0[%c2_64, %c0_65, %c0_66] : memref<16x8x64xf32, #tpu.memory_space<vmem>>, vector<1x7x64xf32>
    %67 = vector.shape_cast %66 : vector<1x7x64xf32> to vector<7x64xf32>
    %c0_67 = arith.constant 0 : index
    %c0_68 = arith.constant 0 : index
    %c0_69 = arith.constant 0 : index
    %68 = vector.load %arg1[%c0_67, %c0_68, %c0_69] : memref<4x64x16xf32, #tpu.memory_space<vmem>>, vector<1x64x16xf32>
    %69 = vector.shape_cast %68 : vector<1x64x16xf32> to vector<64x16xf32>
    %cst_70 = arith.constant dense<0.000000e+00> : vector<7x16xf32>
    %70 = tpu.matmul %67, %69, %cst_70 {dimension_numbers = #tpu.dot_dimension_numbers<[1], [0], [0], [1], [0, 0, 1, 1], [], []>} : vector<7x64xf32>, vector<64x16xf32>, vector<7x16xf32> -> vector<7x16xf32>
    %71 = arith.addf %65, %70 : vector<7x16xf32>
    %c2_71 = arith.constant 2 : index
    %c1_72 = arith.constant 1 : index
    %c0_73 = arith.constant 0 : index
    %72 = vector.load %arg0[%c2_71, %c1_72, %c0_73] : memref<16x8x64xf32, #tpu.memory_space<vmem>>, vector<1x7x64xf32>
    %73 = vector.shape_cast %72 : vector<1x7x64xf32> to vector<7x64xf32>
    %c1_74 = arith.constant 1 : index
    %c0_75 = arith.constant 0 : index
    %c0_76 = arith.constant 0 : index
    %74 = vector.load %arg1[%c1_74, %c0_75, %c0_76] : memref<4x64x16xf32, #tpu.memory_space<vmem>>, vector<1x64x16xf32>
    %75 = vector.shape_cast %74 : vector<1x64x16xf32> to vector<64x16xf32>
    %cst_77 = arith.constant dense<0.000000e+00> : vector<7x16xf32>
    %76 = tpu.matmul %73, %75, %cst_77 {dimension_numbers = #tpu.dot_dimension_numbers<[1], [0], [0], [1], [0, 0, 1, 1], [], []>} : vector<7x64xf32>, vector<64x16xf32>, vector<7x16xf32> -> vector<7x16xf32>
    %77 = arith.addf %71, %76 : vector<7x16xf32>
    %c3_78 = arith.constant 3 : index
    %c0_79 = arith.constant 0 : index
    %c0_80 = arith.constant 0 : index
    %78 = vector.load %arg0[%c3_78, %c0_79, %c0_80] : memref<16x8x64xf32, #tpu.memory_space<vmem>>, vector<1x7x64xf32>
    %79 = vector.shape_cast %78 : vector<1x7x64xf32> to vector<7x64xf32>
    %c2_81 = arith.constant 2 : index
    %c0_82 = arith.constant 0 : index
    %c0_83 = arith.constant 0 : index
    %80 = vector.load %arg1[%c2_81, %c0_82, %c0_83] : memref<4x64x16xf32, #tpu.memory_space<vmem>>, vector<1x64x16xf32>
    %81 = vector.shape_cast %80 : vector<1x64x16xf32> to vector<64x16xf32>
    %cst_84 = arith.constant dense<0.000000e+00> : vector<7x16xf32>
    %82 = tpu.matmul %79, %81, %cst_84 {dimension_numbers = #tpu.dot_dimension_numbers<[1], [0], [0], [1], [0, 0, 1, 1], [], []>} : vector<7x64xf32>, vector<64x16xf32>, vector<7x16xf32> -> vector<7x16xf32>
    %83 = arith.addf %77, %82 : vector<7x16xf32>
    %c3_85 = arith.constant 3 : index
    %c1_86 = arith.constant 1 : index
    %c0_87 = arith.constant 0 : index
    %84 = vector.load %arg0[%c3_85, %c1_86, %c0_87] : memref<16x8x64xf32, #tpu.memory_space<vmem>>, vector<1x7x64xf32>
    %85 = vector.shape_cast %84 : vector<1x7x64xf32> to vector<7x64xf32>
    %c3_88 = arith.constant 3 : index
    %c0_89 = arith.constant 0 : index
    %c0_90 = arith.constant 0 : index
    %86 = vector.load %arg1[%c3_88, %c0_89, %c0_90] : memref<4x64x16xf32, #tpu.memory_space<vmem>>, vector<1x64x16xf32>
    %87 = vector.shape_cast %86 : vector<1x64x16xf32> to vector<64x16xf32>
    %cst_91 = arith.constant dense<0.000000e+00> : vector<7x16xf32>
    %88 = tpu.matmul %85, %87, %cst_91 {dimension_numbers = #tpu.dot_dimension_numbers<[1], [0], [0], [1], [0, 0, 1, 1], [], []>} : vector<7x64xf32>, vector<64x16xf32>, vector<7x16xf32> -> vector<7x16xf32>
    %89 = arith.addf %83, %88 : vector<7x16xf32>
    %90 = vector.broadcast %0 : vector<1x16xf32> to vector<7x16xf32>
    %91 = arith.addf %89, %90 : vector<7x16xf32>
    %cst_92 = arith.constant 0.000000e+00 : f32
    %92 = vector.broadcast %cst_92 : f32 to vector<7x16xf32>
    %93 = arith.maximumf %91, %92 : vector<7x16xf32>
    %c2_93 = arith.constant 2 : index
    %c0_94 = arith.constant 0 : index
    %c0_95 = arith.constant 0 : index
    %94 = vector.load %arg11[%c2_93, %c0_94, %c0_95] : memref<14x7x16xf32, #tpu.memory_space<vmem>>, vector<1x7x16xf32>
    %95 = vector.shape_cast %94 : vector<1x7x16xf32> to vector<7x16xf32>
    %96 = vector.shape_cast %93 : vector<7x16xf32> to vector<1x7x16xf32>
    tpu.vector_store %arg11[%c2_93, %c0_94, %c0_95], %96 {strides = array<i32>} : memref<14x7x16xf32, #tpu.memory_space<vmem>>, vector<1x7x16xf32>,
    %cst_96 = arith.constant 0.000000e+00 : f32
    %97 = vector.broadcast %cst_96 : f32 to vector<7x16xf32>
    %c3_97 = arith.constant 3 : index
    %c0_98 = arith.constant 0 : index
    %c0_99 = arith.constant 0 : index
    %98 = vector.load %arg0[%c3_97, %c0_98, %c0_99] : memref<16x8x64xf32, #tpu.memory_space<vmem>>, vector<1x7x64xf32>
    %99 = vector.shape_cast %98 : vector<1x7x64xf32> to vector<7x64xf32>
    %c0_100 = arith.constant 0 : index
    %c0_101 = arith.constant 0 : index
    %c0_102 = arith.constant 0 : index
    %100 = vector.load %arg1[%c0_100, %c0_101, %c0_102] : memref<4x64x16xf32, #tpu.memory_space<vmem>>, vector<1x64x16xf32>
    %101 = vector.shape_cast %100 : vector<1x64x16xf32> to vector<64x16xf32>
    %cst_103 = arith.constant dense<0.000000e+00> : vector<7x16xf32>
    %102 = tpu.matmul %99, %101, %cst_103 {dimension_numbers = #tpu.dot_dimension_numbers<[1], [0], [0], [1], [0, 0, 1, 1], [], []>} : vector<7x64xf32>, vector<64x16xf32>, vector<7x16xf32> -> vector<7x16xf32>
    %103 = arith.addf %97, %102 : vector<7x16xf32>
    %c3_104 = arith.constant 3 : index
    %c1_105 = arith.constant 1 : index
    %c0_106 = arith.constant 0 : index
    %104 = vector.load %arg0[%c3_104, %c1_105, %c0_106] : memref<16x8x64xf32, #tpu.memory_space<vmem>>, vector<1x7x64xf32>
    %105 = vector.shape_cast %104 : vector<1x7x64xf32> to vector<7x64xf32>
    %c1_107 = arith.constant 1 : index
    %c0_108 = arith.constant 0 : index
    %c0_109 = arith.constant 0 : index
    %106 = vector.load %arg1[%c1_107, %c0_108, %c0_109] : memref<4x64x16xf32, #tpu.memory_space<vmem>>, vector<1x64x16xf32>
    %107 = vector.shape_cast %106 : vector<1x64x16xf32> to vector<64x16xf32>
    %cst_110 = arith.constant dense<0.000000e+00> : vector<7x16xf32>
    %108 = tpu.matmul %105, %107, %cst_110 {dimension_numbers = #tpu.dot_dimension_numbers<[1], [0], [0], [1], [0, 0, 1, 1], [], []>} : vector<7x64xf32>, vector<64x16xf32>, vector<7x16xf32> -> vector<7x16xf32>
    %109 = arith.addf %103, %108 : vector<7x16xf32>
    %c4 = arith.constant 4 : index
    %c0_111 = arith.constant 0 : index
    %c0_112 = arith.constant 0 : index
    %110 = vector.load %arg0[%c4, %c0_111, %c0_112] : memref<16x8x64xf32, #tpu.memory_space<vmem>>, vector<1x7x64xf32>
    %111 = vector.shape_cast %110 : vector<1x7x64xf32> to vector<7x64xf32>
    %c2_113 = arith.constant 2 : index
    %c0_114 = arith.constant 0 : index
    %c0_115 = arith.constant 0 : index
    %112 = vector.load %arg1[%c2_113, %c0_114, %c0_115] : memref<4x64x16xf32, #tpu.memory_space<vmem>>, vector<1x64x16xf32>
    %113 = vector.shape_cast %112 : vector<1x64x16xf32> to vector<64x16xf32>
    %cst_116 = arith.constant dense<0.000000e+00> : vector<7x16xf32>
    %114 = tpu.matmul %111, %113, %cst_116 {dimension_numbers = #tpu.dot_dimension_numbers<[1], [0], [0], [1], [0, 0, 1, 1], [], []>} : vector<7x64xf32>, vector<64x16xf32>, vector<7x16xf32> -> vector<7x16xf32>
    %115 = arith.addf %109, %114 : vector<7x16xf32>
    %c4_117 = arith.constant 4 : index
    %c1_118 = arith.constant 1 : index
    %c0_119 = arith.constant 0 : index
    %116 = vector.load %arg0[%c4_117, %c1_118, %c0_119] : memref<16x8x64xf32, #tpu.memory_space<vmem>>, vector<1x7x64xf32>
    %117 = vector.shape_cast %116 : vector<1x7x64xf32> to vector<7x64xf32>
    %c3_120 = arith.constant 3 : index
    %c0_121 = arith.constant 0 : index
    %c0_122 = arith.constant 0 : index
    %118 = vector.load %arg1[%c3_120, %c0_121, %c0_122] : memref<4x64x16xf32, #tpu.memory_space<vmem>>, vector<1x64x16xf32>
    %119 = vector.shape_cast %118 : vector<1x64x16xf32> to vector<64x16xf32>
    %cst_123 = arith.constant dense<0.000000e+00> : vector<7x16xf32>
    %120 = tpu.matmul %117, %119, %cst_123 {dimension_numbers = #tpu.dot_dimension_numbers<[1], [0], [0], [1], [0, 0, 1, 1], [], []>} : vector<7x64xf32>, vector<64x16xf32>, vector<7x16xf32> -> vector<7x16xf32>
    %121 = arith.addf %115, %120 : vector<7x16xf32>
    %122 = vector.broadcast %0 : vector<1x16xf32> to vector<7x16xf32>
    %123 = arith.addf %121, %122 : vector<7x16xf32>
    %cst_124 = arith.constant 0.000000e+00 : f32
    %124 = vector.broadcast %cst_124 : f32 to vector<7x16xf32>
    %125 = arith.maximumf %123, %124 : vector<7x16xf32>
    %c3_125 = arith.constant 3 : index
    %c0_126 = arith.constant 0 : index
    %c0_127 = arith.constant 0 : index
    %126 = vector.load %arg11[%c3_125, %c0_126, %c0_127] : memref<14x7x16xf32, #tpu.memory_space<vmem>>, vector<1x7x16xf32>
    %127 = vector.shape_cast %126 : vector<1x7x16xf32> to vector<7x16xf32>
    %128 = vector.shape_cast %125 : vector<7x16xf32> to vector<1x7x16xf32>
    tpu.vector_store %arg11[%c3_125, %c0_126, %c0_127], %128 {strides = array<i32>} : memref<14x7x16xf32, #tpu.memory_space<vmem>>, vector<1x7x16xf32>,
    %cst_128 = arith.constant 0.000000e+00 : f32
    %129 = vector.broadcast %cst_128 : f32 to vector<7x16xf32>
    %c4_129 = arith.constant 4 : index
    %c0_130 = arith.constant 0 : index
    %c0_131 = arith.constant 0 : index
    %130 = vector.load %arg0[%c4_129, %c0_130, %c0_131] : memref<16x8x64xf32, #tpu.memory_space<vmem>>, vector<1x7x64xf32>
    %131 = vector.shape_cast %130 : vector<1x7x64xf32> to vector<7x64xf32>
    %c0_132 = arith.constant 0 : index
    %c0_133 = arith.constant 0 : index
    %c0_134 = arith.constant 0 : index
    %132 = vector.load %arg1[%c0_132, %c0_133, %c0_134] : memref<4x64x16xf32, #tpu.memory_space<vmem>>, vector<1x64x16xf32>
    %133 = vector.shape_cast %132 : vector<1x64x16xf32> to vector<64x16xf32>
    %cst_135 = arith.constant dense<0.000000e+00> : vector<7x16xf32>
    %134 = tpu.matmul %131, %133, %cst_135 {dimension_numbers = #tpu.dot_dimension_numbers<[1], [0], [0], [1], [0, 0, 1, 1], [], []>} : vector<7x64xf32>, vector<64x16xf32>, vector<7x16xf32> -> vector<7x16xf32>
    %135 = arith.addf %129, %134 : vector<7x16xf32>
    %c4_136 = arith.constant 4 : index
    %c1_137 = arith.constant 1 : index
    %c0_138 = arith.constant 0 : index
    %136 = vector.load %arg0[%c4_136, %c1_137, %c0_138] : memref<16x8x64xf32, #tpu.memory_space<vmem>>, vector<1x7x64xf32>
    %137 = vector.shape_cast %136 : vector<1x7x64xf32> to vector<7x64xf32>
    %c1_139 = arith.constant 1 : index
    %c0_140 = arith.constant 0 : index
    %c0_141 = arith.constant 0 : index
    %138 = vector.load %arg1[%c1_139, %c0_140, %c0_141] : memref<4x64x16xf32, #tpu.memory_space<vmem>>, vector<1x64x16xf32>
    %139 = vector.shape_cast %138 : vector<1x64x16xf32> to vector<64x16xf32>
    %cst_142 = arith.constant dense<0.000000e+00> : vector<7x16xf32>
    %140 = tpu.matmul %137, %139, %cst_142 {dimension_numbers = #tpu.dot_dimension_numbers<[1], [0], [0], [1], [0, 0, 1, 1], [], []>} : vector<7x64xf32>, vector<64x16xf32>, vector<7x16xf32> -> vector<7x16xf32>
    %141 = arith.addf %135, %140 : vector<7x16xf32>
    %c5 = arith.constant 5 : index
    %c0_143 = arith.constant 0 : index
    %c0_144 = arith.constant 0 : index
    %142 = vector.load %arg0[%c5, %c0_143, %c0_144] : memref<16x8x64xf32, #tpu.memory_space<vmem>>, vector<1x7x64xf32>
    %143 = vector.shape_cast %142 : vector<1x7x64xf32> to vector<7x64xf32>
    %c2_145 = arith.constant 2 : index
    %c0_146 = arith.constant 0 : index
    %c0_147 = arith.constant 0 : index
    %144 = vector.load %arg1[%c2_145, %c0_146, %c0_147] : memref<4x64x16xf32, #tpu.memory_space<vmem>>, vector<1x64x16xf32>
    %145 = vector.shape_cast %144 : vector<1x64x16xf32> to vector<64x16xf32>
    %cst_148 = arith.constant dense<0.000000e+00> : vector<7x16xf32>
    %146 = tpu.matmul %143, %145, %cst_148 {dimension_numbers = #tpu.dot_dimension_numbers<[1], [0], [0], [1], [0, 0, 1, 1], [], []>} : vector<7x64xf32>, vector<64x16xf32>, vector<7x16xf32> -> vector<7x16xf32>
    %147 = arith.addf %141, %146 : vector<7x16xf32>
    %c5_149 = arith.constant 5 : index
    %c1_150 = arith.constant 1 : index
    %c0_151 = arith.constant 0 : index
    %148 = vector.load %arg0[%c5_149, %c1_150, %c0_151] : memref<16x8x64xf32, #tpu.memory_space<vmem>>, vector<1x7x64xf32>
    %149 = vector.shape_cast %148 : vector<1x7x64xf32> to vector<7x64xf32>
    %c3_152 = arith.constant 3 : index
    %c0_153 = arith.constant 0 : index
    %c0_154 = arith.constant 0 : index
    %150 = vector.load %arg1[%c3_152, %c0_153, %c0_154] : memref<4x64x16xf32, #tpu.memory_space<vmem>>, vector<1x64x16xf32>
    %151 = vector.shape_cast %150 : vector<1x64x16xf32> to vector<64x16xf32>
    %cst_155 = arith.constant dense<0.000000e+00> : vector<7x16xf32>
    %152 = tpu.matmul %149, %151, %cst_155 {dimension_numbers = #tpu.dot_dimension_numbers<[1], [0], [0], [1], [0, 0, 1, 1], [], []>} : vector<7x64xf32>, vector<64x16xf32>, vector<7x16xf32> -> vector<7x16xf32>
    %153 = arith.addf %147, %152 : vector<7x16xf32>
    %154 = vector.broadcast %0 : vector<1x16xf32> to vector<7x16xf32>
    %155 = arith.addf %153, %154 : vector<7x16xf32>
    %cst_156 = arith.constant 0.000000e+00 : f32
    %156 = vector.broadcast %cst_156 : f32 to vector<7x16xf32>
    %157 = arith.maximumf %155, %156 : vector<7x16xf32>
    %c4_157 = arith.constant 4 : index
    %c0_158 = arith.constant 0 : index
    %c0_159 = arith.constant 0 : index
    %158 = vector.load %arg11[%c4_157, %c0_158, %c0_159] : memref<14x7x16xf32, #tpu.memory_space<vmem>>, vector<1x7x16xf32>
    %159 = vector.shape_cast %158 : vector<1x7x16xf32> to vector<7x16xf32>
    %160 = vector.shape_cast %157 : vector<7x16xf32> to vector<1x7x16xf32>
    tpu.vector_store %arg11[%c4_157, %c0_158, %c0_159], %160 {strides = array<i32>} : memref<14x7x16xf32, #tpu.memory_space<vmem>>, vector<1x7x16xf32>,
    %cst_160 = arith.constant 0.000000e+00 : f32
    %161 = vector.broadcast %cst_160 : f32 to vector<7x16xf32>
    %c5_161 = arith.constant 5 : index
    %c0_162 = arith.constant 0 : index
    %c0_163 = arith.constant 0 : index
    %162 = vector.load %arg0[%c5_161, %c0_162, %c0_163] : memref<16x8x64xf32, #tpu.memory_space<vmem>>, vector<1x7x64xf32>
    %163 = vector.shape_cast %162 : vector<1x7x64xf32> to vector<7x64xf32>
    %c0_164 = arith.constant 0 : index
    %c0_165 = arith.constant 0 : index
    %c0_166 = arith.constant 0 : index
    %164 = vector.load %arg1[%c0_164, %c0_165, %c0_166] : memref<4x64x16xf32, #tpu.memory_space<vmem>>, vector<1x64x16xf32>
    %165 = vector.shape_cast %164 : vector<1x64x16xf32> to vector<64x16xf32>
    %cst_167 = arith.constant dense<0.000000e+00> : vector<7x16xf32>
    %166 = tpu.matmul %163, %165, %cst_167 {dimension_numbers = #tpu.dot_dimension_numbers<[1], [0], [0], [1], [0, 0, 1, 1], [], []>} : vector<7x64xf32>, vector<64x16xf32>, vector<7x16xf32> -> vector<7x16xf32>
    %167 = arith.addf %161, %166 : vector<7x16xf32>
    %c5_168 = arith.constant 5 : index
    %c1_169 = arith.constant 1 : index
    %c0_170 = arith.constant 0 : index
    %168 = vector.load %arg0[%c5_168, %c1_169, %c0_170] : memref<16x8x64xf32, #tpu.memory_space<vmem>>, vector<1x7x64xf32>
    %169 = vector.shape_cast %168 : vector<1x7x64xf32> to vector<7x64xf32>
    %c1_171 = arith.constant 1 : index
    %c0_172 = arith.constant 0 : index
    %c0_173 = arith.constant 0 : index
    %170 = vector.load %arg1[%c1_171, %c0_172, %c0_173] : memref<4x64x16xf32, #tpu.memory_space<vmem>>, vector<1x64x16xf32>
    %171 = vector.shape_cast %170 : vector<1x64x16xf32> to vector<64x16xf32>
    %cst_174 = arith.constant dense<0.000000e+00> : vector<7x16xf32>
    %172 = tpu.matmul %169, %171, %cst_174 {dimension_numbers = #tpu.dot_dimension_numbers<[1], [0], [0], [1], [0, 0, 1, 1], [], []>} : vector<7x64xf32>, vector<64x16xf32>, vector<7x16xf32> -> vector<7x16xf32>
    %173 = arith.addf %167, %172 : vector<7x16xf32>
    %c6 = arith.constant 6 : index
    %c0_175 = arith.constant 0 : index
    %c0_176 = arith.constant 0 : index
    %174 = vector.load %arg0[%c6, %c0_175, %c0_176] : memref<16x8x64xf32, #tpu.memory_space<vmem>>, vector<1x7x64xf32>
    %175 = vector.shape_cast %174 : vector<1x7x64xf32> to vector<7x64xf32>
    %c2_177 = arith.constant 2 : index
    %c0_178 = arith.constant 0 : index
    %c0_179 = arith.constant 0 : index
    %176 = vector.load %arg1[%c2_177, %c0_178, %c0_179] : memref<4x64x16xf32, #tpu.memory_space<vmem>>, vector<1x64x16xf32>
    %177 = vector.shape_cast %176 : vector<1x64x16xf32> to vector<64x16xf32>
    %cst_180 = arith.constant dense<0.000000e+00> : vector<7x16xf32>
    %178 = tpu.matmul %175, %177, %cst_180 {dimension_numbers = #tpu.dot_dimension_numbers<[1], [0], [0], [1], [0, 0, 1, 1], [], []>} : vector<7x64xf32>, vector<64x16xf32>, vector<7x16xf32> -> vector<7x16xf32>
    %179 = arith.addf %173, %178 : vector<7x16xf32>
    %c6_181 = arith.constant 6 : index
    %c1_182 = arith.constant 1 : index
    %c0_183 = arith.constant 0 : index
    %180 = vector.load %arg0[%c6_181, %c1_182, %c0_183] : memref<16x8x64xf32, #tpu.memory_space<vmem>>, vector<1x7x64xf32>
    %181 = vector.shape_cast %180 : vector<1x7x64xf32> to vector<7x64xf32>
    %c3_184 = arith.constant 3 : index
    %c0_185 = arith.constant 0 : index
    %c0_186 = arith.constant 0 : index
    %182 = vector.load %arg1[%c3_184, %c0_185, %c0_186] : memref<4x64x16xf32, #tpu.memory_space<vmem>>, vector<1x64x16xf32>
    %183 = vector.shape_cast %182 : vector<1x64x16xf32> to vector<64x16xf32>
    %cst_187 = arith.constant dense<0.000000e+00> : vector<7x16xf32>
    %184 = tpu.matmul %181, %183, %cst_187 {dimension_numbers = #tpu.dot_dimension_numbers<[1], [0], [0], [1], [0, 0, 1, 1], [], []>} : vector<7x64xf32>, vector<64x16xf32>, vector<7x16xf32> -> vector<7x16xf32>
    %185 = arith.addf %179, %184 : vector<7x16xf32>
    %186 = vector.broadcast %0 : vector<1x16xf32> to vector<7x16xf32>
    %187 = arith.addf %185, %186 : vector<7x16xf32>
    %cst_188 = arith.constant 0.000000e+00 : f32
    %188 = vector.broadcast %cst_188 : f32 to vector<7x16xf32>
    %189 = arith.maximumf %187, %188 : vector<7x16xf32>
    %c5_189 = arith.constant 5 : index
    %c0_190 = arith.constant 0 : index
    %c0_191 = arith.constant 0 : index
    %190 = vector.load %arg11[%c5_189, %c0_190, %c0_191] : memref<14x7x16xf32, #tpu.memory_space<vmem>>, vector<1x7x16xf32>
    %191 = vector.shape_cast %190 : vector<1x7x16xf32> to vector<7x16xf32>
    %192 = vector.shape_cast %189 : vector<7x16xf32> to vector<1x7x16xf32>
    tpu.vector_store %arg11[%c5_189, %c0_190, %c0_191], %192 {strides = array<i32>} : memref<14x7x16xf32, #tpu.memory_space<vmem>>, vector<1x7x16xf32>,
    %cst_192 = arith.constant 0.000000e+00 : f32
    %193 = vector.broadcast %cst_192 : f32 to vector<7x16xf32>
    %c6_193 = arith.constant 6 : index
    %c0_194 = arith.constant 0 : index
    %c0_195 = arith.constant 0 : index
    %194 = vector.load %arg0[%c6_193, %c0_194, %c0_195] : memref<16x8x64xf32, #tpu.memory_space<vmem>>, vector<1x7x64xf32>
    %195 = vector.shape_cast %194 : vector<1x7x64xf32> to vector<7x64xf32>
    %c0_196 = arith.constant 0 : index
    %c0_197 = arith.constant 0 : index
    %c0_198 = arith.constant 0 : index
    %196 = vector.load %arg1[%c0_196, %c0_197, %c0_198] : memref<4x64x16xf32, #tpu.memory_space<vmem>>, vector<1x64x16xf32>
    %197 = vector.shape_cast %196 : vector<1x64x16xf32> to vector<64x16xf32>
    %cst_199 = arith.constant dense<0.000000e+00> : vector<7x16xf32>
    %198 = tpu.matmul %195, %197, %cst_199 {dimension_numbers = #tpu.dot_dimension_numbers<[1], [0], [0], [1], [0, 0, 1, 1], [], []>} : vector<7x64xf32>, vector<64x16xf32>, vector<7x16xf32> -> vector<7x16xf32>
    %199 = arith.addf %193, %198 : vector<7x16xf32>
    %c6_200 = arith.constant 6 : index
    %c1_201 = arith.constant 1 : index
    %c0_202 = arith.constant 0 : index
    %200 = vector.load %arg0[%c6_200, %c1_201, %c0_202] : memref<16x8x64xf32, #tpu.memory_space<vmem>>, vector<1x7x64xf32>
    %201 = vector.shape_cast %200 : vector<1x7x64xf32> to vector<7x64xf32>
    %c1_203 = arith.constant 1 : index
    %c0_204 = arith.constant 0 : index
    %c0_205 = arith.constant 0 : index
    %202 = vector.load %arg1[%c1_203, %c0_204, %c0_205] : memref<4x64x16xf32, #tpu.memory_space<vmem>>, vector<1x64x16xf32>
    %203 = vector.shape_cast %202 : vector<1x64x16xf32> to vector<64x16xf32>
    %cst_206 = arith.constant dense<0.000000e+00> : vector<7x16xf32>
    %204 = tpu.matmul %201, %203, %cst_206 {dimension_numbers = #tpu.dot_dimension_numbers<[1], [0], [0], [1], [0, 0, 1, 1], [], []>} : vector<7x64xf32>, vector<64x16xf32>, vector<7x16xf32> -> vector<7x16xf32>
    %205 = arith.addf %199, %204 : vector<7x16xf32>
    %c7 = arith.constant 7 : index
    %c0_207 = arith.constant 0 : index
    %c0_208 = arith.constant 0 : index
    %206 = vector.load %arg0[%c7, %c0_207, %c0_208] : memref<16x8x64xf32, #tpu.memory_space<vmem>>, vector<1x7x64xf32>
    %207 = vector.shape_cast %206 : vector<1x7x64xf32> to vector<7x64xf32>
    %c2_209 = arith.constant 2 : index
    %c0_210 = arith.constant 0 : index
    %c0_211 = arith.constant 0 : index
    %208 = vector.load %arg1[%c2_209, %c0_210, %c0_211] : memref<4x64x16xf32, #tpu.memory_space<vmem>>, vector<1x64x16xf32>
    %209 = vector.shape_cast %208 : vector<1x64x16xf32> to vector<64x16xf32>
    %cst_212 = arith.constant dense<0.000000e+00> : vector<7x16xf32>
    %210 = tpu.matmul %207, %209, %cst_212 {dimension_numbers = #tpu.dot_dimension_numbers<[1], [0], [0], [1], [0, 0, 1, 1], [], []>} : vector<7x64xf32>, vector<64x16xf32>, vector<7x16xf32> -> vector<7x16xf32>
    %211 = arith.addf %205, %210 : vector<7x16xf32>
    %c7_213 = arith.constant 7 : index
    %c1_214 = arith.constant 1 : index
    %c0_215 = arith.constant 0 : index
    %212 = vector.load %arg0[%c7_213, %c1_214, %c0_215] : memref<16x8x64xf32, #tpu.memory_space<vmem>>, vector<1x7x64xf32>
    %213 = vector.shape_cast %212 : vector<1x7x64xf32> to vector<7x64xf32>
    %c3_216 = arith.constant 3 : index
    %c0_217 = arith.constant 0 : index
    %c0_218 = arith.constant 0 : index
    %214 = vector.load %arg1[%c3_216, %c0_217, %c0_218] : memref<4x64x16xf32, #tpu.memory_space<vmem>>, vector<1x64x16xf32>
    %215 = vector.shape_cast %214 : vector<1x64x16xf32> to vector<64x16xf32>
    %cst_219 = arith.constant dense<0.000000e+00> : vector<7x16xf32>
    %216 = tpu.matmul %213, %215, %cst_219 {dimension_numbers = #tpu.dot_dimension_numbers<[1], [0], [0], [1], [0, 0, 1, 1], [], []>} : vector<7x64xf32>, vector<64x16xf32>, vector<7x16xf32> -> vector<7x16xf32>
    %217 = arith.addf %211, %216 : vector<7x16xf32>
    %218 = vector.broadcast %0 : vector<1x16xf32> to vector<7x16xf32>
    %219 = arith.addf %217, %218 : vector<7x16xf32>
    %cst_220 = arith.constant 0.000000e+00 : f32
    %220 = vector.broadcast %cst_220 : f32 to vector<7x16xf32>
    %221 = arith.maximumf %219, %220 : vector<7x16xf32>
    %c6_221 = arith.constant 6 : index
    %c0_222 = arith.constant 0 : index
    %c0_223 = arith.constant 0 : index
    %222 = vector.load %arg11[%c6_221, %c0_222, %c0_223] : memref<14x7x16xf32, #tpu.memory_space<vmem>>, vector<1x7x16xf32>
    %223 = vector.shape_cast %222 : vector<1x7x16xf32> to vector<7x16xf32>
    %224 = vector.shape_cast %221 : vector<7x16xf32> to vector<1x7x16xf32>
    tpu.vector_store %arg11[%c6_221, %c0_222, %c0_223], %224 {strides = array<i32>} : memref<14x7x16xf32, #tpu.memory_space<vmem>>, vector<1x7x16xf32>,
    %cst_224 = arith.constant 0.000000e+00 : f32
    %225 = vector.broadcast %cst_224 : f32 to vector<7x16xf32>
    %c8 = arith.constant 8 : index
    %c0_225 = arith.constant 0 : index
    %c0_226 = arith.constant 0 : index
    %226 = vector.load %arg0[%c8, %c0_225, %c0_226] : memref<16x8x64xf32, #tpu.memory_space<vmem>>, vector<1x7x64xf32>
    %227 = vector.shape_cast %226 : vector<1x7x64xf32> to vector<7x64xf32>
    %c0_227 = arith.constant 0 : index
    %c0_228 = arith.constant 0 : index
    %c0_229 = arith.constant 0 : index
    %228 = vector.load %arg1[%c0_227, %c0_228, %c0_229] : memref<4x64x16xf32, #tpu.memory_space<vmem>>, vector<1x64x16xf32>
    %229 = vector.shape_cast %228 : vector<1x64x16xf32> to vector<64x16xf32>
    %cst_230 = arith.constant dense<0.000000e+00> : vector<7x16xf32>
    %230 = tpu.matmul %227, %229, %cst_230 {dimension_numbers = #tpu.dot_dimension_numbers<[1], [0], [0], [1], [0, 0, 1, 1], [], []>} : vector<7x64xf32>, vector<64x16xf32>, vector<7x16xf32> -> vector<7x16xf32>
    %231 = arith.addf %225, %230 : vector<7x16xf32>
    %c8_231 = arith.constant 8 : index
    %c1_232 = arith.constant 1 : index
    %c0_233 = arith.constant 0 : index
    %232 = vector.load %arg0[%c8_231, %c1_232, %c0_233] : memref<16x8x64xf32, #tpu.memory_space<vmem>>, vector<1x7x64xf32>
    %233 = vector.shape_cast %232 : vector<1x7x64xf32> to vector<7x64xf32>
    %c1_234 = arith.constant 1 : index
    %c0_235 = arith.constant 0 : index
    %c0_236 = arith.constant 0 : index
    %234 = vector.load %arg1[%c1_234, %c0_235, %c0_236] : memref<4x64x16xf32, #tpu.memory_space<vmem>>, vector<1x64x16xf32>
    %235 = vector.shape_cast %234 : vector<1x64x16xf32> to vector<64x16xf32>
    %cst_237 = arith.constant dense<0.000000e+00> : vector<7x16xf32>
    %236 = tpu.matmul %233, %235, %cst_237 {dimension_numbers = #tpu.dot_dimension_numbers<[1], [0], [0], [1], [0, 0, 1, 1], [], []>} : vector<7x64xf32>, vector<64x16xf32>, vector<7x16xf32> -> vector<7x16xf32>
    %237 = arith.addf %231, %236 : vector<7x16xf32>
    %c9 = arith.constant 9 : index
    %c0_238 = arith.constant 0 : index
    %c0_239 = arith.constant 0 : index
    %238 = vector.load %arg0[%c9, %c0_238, %c0_239] : memref<16x8x64xf32, #tpu.memory_space<vmem>>, vector<1x7x64xf32>
    %239 = vector.shape_cast %238 : vector<1x7x64xf32> to vector<7x64xf32>
    %c2_240 = arith.constant 2 : index
    %c0_241 = arith.constant 0 : index
    %c0_242 = arith.constant 0 : index
    %240 = vector.load %arg1[%c2_240, %c0_241, %c0_242] : memref<4x64x16xf32, #tpu.memory_space<vmem>>, vector<1x64x16xf32>
    %241 = vector.shape_cast %240 : vector<1x64x16xf32> to vector<64x16xf32>
    %cst_243 = arith.constant dense<0.000000e+00> : vector<7x16xf32>
    %242 = tpu.matmul %239, %241, %cst_243 {dimension_numbers = #tpu.dot_dimension_numbers<[1], [0], [0], [1], [0, 0, 1, 1], [], []>} : vector<7x64xf32>, vector<64x16xf32>, vector<7x16xf32> -> vector<7x16xf32>
    %243 = arith.addf %237, %242 : vector<7x16xf32>
    %c9_244 = arith.constant 9 : index
    %c1_245 = arith.constant 1 : index
    %c0_246 = arith.constant 0 : index
    %244 = vector.load %arg0[%c9_244, %c1_245, %c0_246] : memref<16x8x64xf32, #tpu.memory_space<vmem>>, vector<1x7x64xf32>
    %245 = vector.shape_cast %244 : vector<1x7x64xf32> to vector<7x64xf32>
    %c3_247 = arith.constant 3 : index
    %c0_248 = arith.constant 0 : index
    %c0_249 = arith.constant 0 : index
    %246 = vector.load %arg1[%c3_247, %c0_248, %c0_249] : memref<4x64x16xf32, #tpu.memory_space<vmem>>, vector<1x64x16xf32>
    %247 = vector.shape_cast %246 : vector<1x64x16xf32> to vector<64x16xf32>
    %cst_250 = arith.constant dense<0.000000e+00> : vector<7x16xf32>
    %248 = tpu.matmul %245, %247, %cst_250 {dimension_numbers = #tpu.dot_dimension_numbers<[1], [0], [0], [1], [0, 0, 1, 1], [], []>} : vector<7x64xf32>, vector<64x16xf32>, vector<7x16xf32> -> vector<7x16xf32>
    %249 = arith.addf %243, %248 : vector<7x16xf32>
    %250 = vector.broadcast %0 : vector<1x16xf32> to vector<7x16xf32>
    %251 = arith.addf %249, %250 : vector<7x16xf32>
    %cst_251 = arith.constant 0.000000e+00 : f32
    %252 = vector.broadcast %cst_251 : f32 to vector<7x16xf32>
    %253 = arith.maximumf %251, %252 : vector<7x16xf32>
    %c7_252 = arith.constant 7 : index
    %c0_253 = arith.constant 0 : index
    %c0_254 = arith.constant 0 : index
    %254 = vector.load %arg11[%c7_252, %c0_253, %c0_254] : memref<14x7x16xf32, #tpu.memory_space<vmem>>, vector<1x7x16xf32>
    %255 = vector.shape_cast %254 : vector<1x7x16xf32> to vector<7x16xf32>
    %256 = vector.shape_cast %253 : vector<7x16xf32> to vector<1x7x16xf32>
    tpu.vector_store %arg11[%c7_252, %c0_253, %c0_254], %256 {strides = array<i32>} : memref<14x7x16xf32, #tpu.memory_space<vmem>>, vector<1x7x16xf32>,
    %cst_255 = arith.constant 0.000000e+00 : f32
    %257 = vector.broadcast %cst_255 : f32 to vector<7x16xf32>
    %c9_256 = arith.constant 9 : index
    %c0_257 = arith.constant 0 : index
    %c0_258 = arith.constant 0 : index
    %258 = vector.load %arg0[%c9_256, %c0_257, %c0_258] : memref<16x8x64xf32, #tpu.memory_space<vmem>>, vector<1x7x64xf32>
    %259 = vector.shape_cast %258 : vector<1x7x64xf32> to vector<7x64xf32>
    %c0_259 = arith.constant 0 : index
    %c0_260 = arith.constant 0 : index
    %c0_261 = arith.constant 0 : index
    %260 = vector.load %arg1[%c0_259, %c0_260, %c0_261] : memref<4x64x16xf32, #tpu.memory_space<vmem>>, vector<1x64x16xf32>
    %261 = vector.shape_cast %260 : vector<1x64x16xf32> to vector<64x16xf32>
    %cst_262 = arith.constant dense<0.000000e+00> : vector<7x16xf32>
    %262 = tpu.matmul %259, %261, %cst_262 {dimension_numbers = #tpu.dot_dimension_numbers<[1], [0], [0], [1], [0, 0, 1, 1], [], []>} : vector<7x64xf32>, vector<64x16xf32>, vector<7x16xf32> -> vector<7x16xf32>
    %263 = arith.addf %257, %262 : vector<7x16xf32>
    %c9_263 = arith.constant 9 : index
    %c1_264 = arith.constant 1 : index
    %c0_265 = arith.constant 0 : index
    %264 = vector.load %arg0[%c9_263, %c1_264, %c0_265] : memref<16x8x64xf32, #tpu.memory_space<vmem>>, vector<1x7x64xf32>
    %265 = vector.shape_cast %264 : vector<1x7x64xf32> to vector<7x64xf32>
    %c1_266 = arith.constant 1 : index
    %c0_267 = arith.constant 0 : index
    %c0_268 = arith.constant 0 : index
    %266 = vector.load %arg1[%c1_266, %c0_267, %c0_268] : memref<4x64x16xf32, #tpu.memory_space<vmem>>, vector<1x64x16xf32>
    %267 = vector.shape_cast %266 : vector<1x64x16xf32> to vector<64x16xf32>
    %cst_269 = arith.constant dense<0.000000e+00> : vector<7x16xf32>
    %268 = tpu.matmul %265, %267, %cst_269 {dimension_numbers = #tpu.dot_dimension_numbers<[1], [0], [0], [1], [0, 0, 1, 1], [], []>} : vector<7x64xf32>, vector<64x16xf32>, vector<7x16xf32> -> vector<7x16xf32>
    %269 = arith.addf %263, %268 : vector<7x16xf32>
    %c10 = arith.constant 10 : index
    %c0_270 = arith.constant 0 : index
    %c0_271 = arith.constant 0 : index
    %270 = vector.load %arg0[%c10, %c0_270, %c0_271] : memref<16x8x64xf32, #tpu.memory_space<vmem>>, vector<1x7x64xf32>
    %271 = vector.shape_cast %270 : vector<1x7x64xf32> to vector<7x64xf32>
    %c2_272 = arith.constant 2 : index
    %c0_273 = arith.constant 0 : index
    %c0_274 = arith.constant 0 : index
    %272 = vector.load %arg1[%c2_272, %c0_273, %c0_274] : memref<4x64x16xf32, #tpu.memory_space<vmem>>, vector<1x64x16xf32>
    %273 = vector.shape_cast %272 : vector<1x64x16xf32> to vector<64x16xf32>
    %cst_275 = arith.constant dense<0.000000e+00> : vector<7x16xf32>
    %274 = tpu.matmul %271, %273, %cst_275 {dimension_numbers = #tpu.dot_dimension_numbers<[1], [0], [0], [1], [0, 0, 1, 1], [], []>} : vector<7x64xf32>, vector<64x16xf32>, vector<7x16xf32> -> vector<7x16xf32>
    %275 = arith.addf %269, %274 : vector<7x16xf32>
    %c10_276 = arith.constant 10 : index
    %c1_277 = arith.constant 1 : index
    %c0_278 = arith.constant 0 : index
    %276 = vector.load %arg0[%c10_276, %c1_277, %c0_278] : memref<16x8x64xf32, #tpu.memory_space<vmem>>, vector<1x7x64xf32>
    %277 = vector.shape_cast %276 : vector<1x7x64xf32> to vector<7x64xf32>
    %c3_279 = arith.constant 3 : index
    %c0_280 = arith.constant 0 : index
    %c0_281 = arith.constant 0 : index
    %278 = vector.load %arg1[%c3_279, %c0_280, %c0_281] : memref<4x64x16xf32, #tpu.memory_space<vmem>>, vector<1x64x16xf32>
    %279 = vector.shape_cast %278 : vector<1x64x16xf32> to vector<64x16xf32>
    %cst_282 = arith.constant dense<0.000000e+00> : vector<7x16xf32>
    %280 = tpu.matmul %277, %279, %cst_282 {dimension_numbers = #tpu.dot_dimension_numbers<[1], [0], [0], [1], [0, 0, 1, 1], [], []>} : vector<7x64xf32>, vector<64x16xf32>, vector<7x16xf32> -> vector<7x16xf32>
    %281 = arith.addf %275, %280 : vector<7x16xf32>
    %282 = vector.broadcast %0 : vector<1x16xf32> to vector<7x16xf32>
    %283 = arith.addf %281, %282 : vector<7x16xf32>
    %cst_283 = arith.constant 0.000000e+00 : f32
    %284 = vector.broadcast %cst_283 : f32 to vector<7x16xf32>
    %285 = arith.maximumf %283, %284 : vector<7x16xf32>
    %c8_284 = arith.constant 8 : index
    %c0_285 = arith.constant 0 : index
    %c0_286 = arith.constant 0 : index
    %286 = vector.load %arg11[%c8_284, %c0_285, %c0_286] : memref<14x7x16xf32, #tpu.memory_space<vmem>>, vector<1x7x16xf32>
    %287 = vector.shape_cast %286 : vector<1x7x16xf32> to vector<7x16xf32>
    %288 = vector.shape_cast %285 : vector<7x16xf32> to vector<1x7x16xf32>
    tpu.vector_store %arg11[%c8_284, %c0_285, %c0_286], %288 {strides = array<i32>} : memref<14x7x16xf32, #tpu.memory_space<vmem>>, vector<1x7x16xf32>,
    %cst_287 = arith.constant 0.000000e+00 : f32
    %289 = vector.broadcast %cst_287 : f32 to vector<7x16xf32>
    %c10_288 = arith.constant 10 : index
    %c0_289 = arith.constant 0 : index
    %c0_290 = arith.constant 0 : index
    %290 = vector.load %arg0[%c10_288, %c0_289, %c0_290] : memref<16x8x64xf32, #tpu.memory_space<vmem>>, vector<1x7x64xf32>
    %291 = vector.shape_cast %290 : vector<1x7x64xf32> to vector<7x64xf32>
    %c0_291 = arith.constant 0 : index
    %c0_292 = arith.constant 0 : index
    %c0_293 = arith.constant 0 : index
    %292 = vector.load %arg1[%c0_291, %c0_292, %c0_293] : memref<4x64x16xf32, #tpu.memory_space<vmem>>, vector<1x64x16xf32>
    %293 = vector.shape_cast %292 : vector<1x64x16xf32> to vector<64x16xf32>
    %cst_294 = arith.constant dense<0.000000e+00> : vector<7x16xf32>
    %294 = tpu.matmul %291, %293, %cst_294 {dimension_numbers = #tpu.dot_dimension_numbers<[1], [0], [0], [1], [0, 0, 1, 1], [], []>} : vector<7x64xf32>, vector<64x16xf32>, vector<7x16xf32> -> vector<7x16xf32>
    %295 = arith.addf %289, %294 : vector<7x16xf32>
    %c10_295 = arith.constant 10 : index
    %c1_296 = arith.constant 1 : index
    %c0_297 = arith.constant 0 : index
    %296 = vector.load %arg0[%c10_295, %c1_296, %c0_297] : memref<16x8x64xf32, #tpu.memory_space<vmem>>, vector<1x7x64xf32>
    %297 = vector.shape_cast %296 : vector<1x7x64xf32> to vector<7x64xf32>
    %c1_298 = arith.constant 1 : index
    %c0_299 = arith.constant 0 : index
    %c0_300 = arith.constant 0 : index
    %298 = vector.load %arg1[%c1_298, %c0_299, %c0_300] : memref<4x64x16xf32, #tpu.memory_space<vmem>>, vector<1x64x16xf32>
    %299 = vector.shape_cast %298 : vector<1x64x16xf32> to vector<64x16xf32>
    %cst_301 = arith.constant dense<0.000000e+00> : vector<7x16xf32>
    %300 = tpu.matmul %297, %299, %cst_301 {dimension_numbers = #tpu.dot_dimension_numbers<[1], [0], [0], [1], [0, 0, 1, 1], [], []>} : vector<7x64xf32>, vector<64x16xf32>, vector<7x16xf32> -> vector<7x16xf32>
    %301 = arith.addf %295, %300 : vector<7x16xf32>
    %c11 = arith.constant 11 : index
    %c0_302 = arith.constant 0 : index
    %c0_303 = arith.constant 0 : index
    %302 = vector.load %arg0[%c11, %c0_302, %c0_303] : memref<16x8x64xf32, #tpu.memory_space<vmem>>, vector<1x7x64xf32>
    %303 = vector.shape_cast %302 : vector<1x7x64xf32> to vector<7x64xf32>
    %c2_304 = arith.constant 2 : index
    %c0_305 = arith.constant 0 : index
    %c0_306 = arith.constant 0 : index
    %304 = vector.load %arg1[%c2_304, %c0_305, %c0_306] : memref<4x64x16xf32, #tpu.memory_space<vmem>>, vector<1x64x16xf32>
    %305 = vector.shape_cast %304 : vector<1x64x16xf32> to vector<64x16xf32>
    %cst_307 = arith.constant dense<0.000000e+00> : vector<7x16xf32>
    %306 = tpu.matmul %303, %305, %cst_307 {dimension_numbers = #tpu.dot_dimension_numbers<[1], [0], [0], [1], [0, 0, 1, 1], [], []>} : vector<7x64xf32>, vector<64x16xf32>, vector<7x16xf32> -> vector<7x16xf32>
    %307 = arith.addf %301, %306 : vector<7x16xf32>
    %c11_308 = arith.constant 11 : index
    %c1_309 = arith.constant 1 : index
    %c0_310 = arith.constant 0 : index
    %308 = vector.load %arg0[%c11_308, %c1_309, %c0_310] : memref<16x8x64xf32, #tpu.memory_space<vmem>>, vector<1x7x64xf32>
    %309 = vector.shape_cast %308 : vector<1x7x64xf32> to vector<7x64xf32>
    %c3_311 = arith.constant 3 : index
    %c0_312 = arith.constant 0 : index
    %c0_313 = arith.constant 0 : index
    %310 = vector.load %arg1[%c3_311, %c0_312, %c0_313] : memref<4x64x16xf32, #tpu.memory_space<vmem>>, vector<1x64x16xf32>
    %311 = vector.shape_cast %310 : vector<1x64x16xf32> to vector<64x16xf32>
    %cst_314 = arith.constant dense<0.000000e+00> : vector<7x16xf32>
    %312 = tpu.matmul %309, %311, %cst_314 {dimension_numbers = #tpu.dot_dimension_numbers<[1], [0], [0], [1], [0, 0, 1, 1], [], []>} : vector<7x64xf32>, vector<64x16xf32>, vector<7x16xf32> -> vector<7x16xf32>
    %313 = arith.addf %307, %312 : vector<7x16xf32>
    %314 = vector.broadcast %0 : vector<1x16xf32> to vector<7x16xf32>
    %315 = arith.addf %313, %314 : vector<7x16xf32>
    %cst_315 = arith.constant 0.000000e+00 : f32
    %316 = vector.broadcast %cst_315 : f32 to vector<7x16xf32>
    %317 = arith.maximumf %315, %316 : vector<7x16xf32>
    %c9_316 = arith.constant 9 : index
    %c0_317 = arith.constant 0 : index
    %c0_318 = arith.constant 0 : index
    %318 = vector.load %arg11[%c9_316, %c0_317, %c0_318] : memref<14x7x16xf32, #tpu.memory_space<vmem>>, vector<1x7x16xf32>
    %319 = vector.shape_cast %318 : vector<1x7x16xf32> to vector<7x16xf32>
    %320 = vector.shape_cast %317 : vector<7x16xf32> to vector<1x7x16xf32>
    tpu.vector_store %arg11[%c9_316, %c0_317, %c0_318], %320 {strides = array<i32>} : memref<14x7x16xf32, #tpu.memory_space<vmem>>, vector<1x7x16xf32>,
    %cst_319 = arith.constant 0.000000e+00 : f32
    %321 = vector.broadcast %cst_319 : f32 to vector<7x16xf32>
    %c11_320 = arith.constant 11 : index
    %c0_321 = arith.constant 0 : index
    %c0_322 = arith.constant 0 : index
    %322 = vector.load %arg0[%c11_320, %c0_321, %c0_322] : memref<16x8x64xf32, #tpu.memory_space<vmem>>, vector<1x7x64xf32>
    %323 = vector.shape_cast %322 : vector<1x7x64xf32> to vector<7x64xf32>
    %c0_323 = arith.constant 0 : index
    %c0_324 = arith.constant 0 : index
    %c0_325 = arith.constant 0 : index
    %324 = vector.load %arg1[%c0_323, %c0_324, %c0_325] : memref<4x64x16xf32, #tpu.memory_space<vmem>>, vector<1x64x16xf32>
    %325 = vector.shape_cast %324 : vector<1x64x16xf32> to vector<64x16xf32>
    %cst_326 = arith.constant dense<0.000000e+00> : vector<7x16xf32>
    %326 = tpu.matmul %323, %325, %cst_326 {dimension_numbers = #tpu.dot_dimension_numbers<[1], [0], [0], [1], [0, 0, 1, 1], [], []>} : vector<7x64xf32>, vector<64x16xf32>, vector<7x16xf32> -> vector<7x16xf32>
    %327 = arith.addf %321, %326 : vector<7x16xf32>
    %c11_327 = arith.constant 11 : index
    %c1_328 = arith.constant 1 : index
    %c0_329 = arith.constant 0 : index
    %328 = vector.load %arg0[%c11_327, %c1_328, %c0_329] : memref<16x8x64xf32, #tpu.memory_space<vmem>>, vector<1x7x64xf32>
    %329 = vector.shape_cast %328 : vector<1x7x64xf32> to vector<7x64xf32>
    %c1_330 = arith.constant 1 : index
    %c0_331 = arith.constant 0 : index
    %c0_332 = arith.constant 0 : index
    %330 = vector.load %arg1[%c1_330, %c0_331, %c0_332] : memref<4x64x16xf32, #tpu.memory_space<vmem>>, vector<1x64x16xf32>
    %331 = vector.shape_cast %330 : vector<1x64x16xf32> to vector<64x16xf32>
    %cst_333 = arith.constant dense<0.000000e+00> : vector<7x16xf32>
    %332 = tpu.matmul %329, %331, %cst_333 {dimension_numbers = #tpu.dot_dimension_numbers<[1], [0], [0], [1], [0, 0, 1, 1], [], []>} : vector<7x64xf32>, vector<64x16xf32>, vector<7x16xf32> -> vector<7x16xf32>
    %333 = arith.addf %327, %332 : vector<7x16xf32>
    %c12 = arith.constant 12 : index
    %c0_334 = arith.constant 0 : index
    %c0_335 = arith.constant 0 : index
    %334 = vector.load %arg0[%c12, %c0_334, %c0_335] : memref<16x8x64xf32, #tpu.memory_space<vmem>>, vector<1x7x64xf32>
    %335 = vector.shape_cast %334 : vector<1x7x64xf32> to vector<7x64xf32>
    %c2_336 = arith.constant 2 : index
    %c0_337 = arith.constant 0 : index
    %c0_338 = arith.constant 0 : index
    %336 = vector.load %arg1[%c2_336, %c0_337, %c0_338] : memref<4x64x16xf32, #tpu.memory_space<vmem>>, vector<1x64x16xf32>
    %337 = vector.shape_cast %336 : vector<1x64x16xf32> to vector<64x16xf32>
    %cst_339 = arith.constant dense<0.000000e+00> : vector<7x16xf32>
    %338 = tpu.matmul %335, %337, %cst_339 {dimension_numbers = #tpu.dot_dimension_numbers<[1], [0], [0], [1], [0, 0, 1, 1], [], []>} : vector<7x64xf32>, vector<64x16xf32>, vector<7x16xf32> -> vector<7x16xf32>
    %339 = arith.addf %333, %338 : vector<7x16xf32>
    %c12_340 = arith.constant 12 : index
    %c1_341 = arith.constant 1 : index
    %c0_342 = arith.constant 0 : index
    %340 = vector.load %arg0[%c12_340, %c1_341, %c0_342] : memref<16x8x64xf32, #tpu.memory_space<vmem>>, vector<1x7x64xf32>
    %341 = vector.shape_cast %340 : vector<1x7x64xf32> to vector<7x64xf32>
    %c3_343 = arith.constant 3 : index
    %c0_344 = arith.constant 0 : index
    %c0_345 = arith.constant 0 : index
    %342 = vector.load %arg1[%c3_343, %c0_344, %c0_345] : memref<4x64x16xf32, #tpu.memory_space<vmem>>, vector<1x64x16xf32>
    %343 = vector.shape_cast %342 : vector<1x64x16xf32> to vector<64x16xf32>
    %cst_346 = arith.constant dense<0.000000e+00> : vector<7x16xf32>
    %344 = tpu.matmul %341, %343, %cst_346 {dimension_numbers = #tpu.dot_dimension_numbers<[1], [0], [0], [1], [0, 0, 1, 1], [], []>} : vector<7x64xf32>, vector<64x16xf32>, vector<7x16xf32> -> vector<7x16xf32>
    %345 = arith.addf %339, %344 : vector<7x16xf32>
    %346 = vector.broadcast %0 : vector<1x16xf32> to vector<7x16xf32>
    %347 = arith.addf %345, %346 : vector<7x16xf32>
    %cst_347 = arith.constant 0.000000e+00 : f32
    %348 = vector.broadcast %cst_347 : f32 to vector<7x16xf32>
    %349 = arith.maximumf %347, %348 : vector<7x16xf32>
    %c10_348 = arith.constant 10 : index
    %c0_349 = arith.constant 0 : index
    %c0_350 = arith.constant 0 : index
    %350 = vector.load %arg11[%c10_348, %c0_349, %c0_350] : memref<14x7x16xf32, #tpu.memory_space<vmem>>, vector<1x7x16xf32>
    %351 = vector.shape_cast %350 : vector<1x7x16xf32> to vector<7x16xf32>
    %352 = vector.shape_cast %349 : vector<7x16xf32> to vector<1x7x16xf32>
    tpu.vector_store %arg11[%c10_348, %c0_349, %c0_350], %352 {strides = array<i32>} : memref<14x7x16xf32, #tpu.memory_space<vmem>>, vector<1x7x16xf32>,
    %cst_351 = arith.constant 0.000000e+00 : f32
    %353 = vector.broadcast %cst_351 : f32 to vector<7x16xf32>
    %c12_352 = arith.constant 12 : index
    %c0_353 = arith.constant 0 : index
    %c0_354 = arith.constant 0 : index
    %354 = vector.load %arg0[%c12_352, %c0_353, %c0_354] : memref<16x8x64xf32, #tpu.memory_space<vmem>>, vector<1x7x64xf32>
    %355 = vector.shape_cast %354 : vector<1x7x64xf32> to vector<7x64xf32>
    %c0_355 = arith.constant 0 : index
    %c0_356 = arith.constant 0 : index
    %c0_357 = arith.constant 0 : index
    %356 = vector.load %arg1[%c0_355, %c0_356, %c0_357] : memref<4x64x16xf32, #tpu.memory_space<vmem>>, vector<1x64x16xf32>
    %357 = vector.shape_cast %356 : vector<1x64x16xf32> to vector<64x16xf32>
    %cst_358 = arith.constant dense<0.000000e+00> : vector<7x16xf32>
    %358 = tpu.matmul %355, %357, %cst_358 {dimension_numbers = #tpu.dot_dimension_numbers<[1], [0], [0], [1], [0, 0, 1, 1], [], []>} : vector<7x64xf32>, vector<64x16xf32>, vector<7x16xf32> -> vector<7x16xf32>
    %359 = arith.addf %353, %358 : vector<7x16xf32>
    %c12_359 = arith.constant 12 : index
    %c1_360 = arith.constant 1 : index
    %c0_361 = arith.constant 0 : index
    %360 = vector.load %arg0[%c12_359, %c1_360, %c0_361] : memref<16x8x64xf32, #tpu.memory_space<vmem>>, vector<1x7x64xf32>
    %361 = vector.shape_cast %360 : vector<1x7x64xf32> to vector<7x64xf32>
    %c1_362 = arith.constant 1 : index
    %c0_363 = arith.constant 0 : index
    %c0_364 = arith.constant 0 : index
    %362 = vector.load %arg1[%c1_362, %c0_363, %c0_364] : memref<4x64x16xf32, #tpu.memory_space<vmem>>, vector<1x64x16xf32>
    %363 = vector.shape_cast %362 : vector<1x64x16xf32> to vector<64x16xf32>
    %cst_365 = arith.constant dense<0.000000e+00> : vector<7x16xf32>
    %364 = tpu.matmul %361, %363, %cst_365 {dimension_numbers = #tpu.dot_dimension_numbers<[1], [0], [0], [1], [0, 0, 1, 1], [], []>} : vector<7x64xf32>, vector<64x16xf32>, vector<7x16xf32> -> vector<7x16xf32>
    %365 = arith.addf %359, %364 : vector<7x16xf32>
    %c13 = arith.constant 13 : index
    %c0_366 = arith.constant 0 : index
    %c0_367 = arith.constant 0 : index
    %366 = vector.load %arg0[%c13, %c0_366, %c0_367] : memref<16x8x64xf32, #tpu.memory_space<vmem>>, vector<1x7x64xf32>
    %367 = vector.shape_cast %366 : vector<1x7x64xf32> to vector<7x64xf32>
    %c2_368 = arith.constant 2 : index
    %c0_369 = arith.constant 0 : index
    %c0_370 = arith.constant 0 : index
    %368 = vector.load %arg1[%c2_368, %c0_369, %c0_370] : memref<4x64x16xf32, #tpu.memory_space<vmem>>, vector<1x64x16xf32>
    %369 = vector.shape_cast %368 : vector<1x64x16xf32> to vector<64x16xf32>
    %cst_371 = arith.constant dense<0.000000e+00> : vector<7x16xf32>
    %370 = tpu.matmul %367, %369, %cst_371 {dimension_numbers = #tpu.dot_dimension_numbers<[1], [0], [0], [1], [0, 0, 1, 1], [], []>} : vector<7x64xf32>, vector<64x16xf32>, vector<7x16xf32> -> vector<7x16xf32>
    %371 = arith.addf %365, %370 : vector<7x16xf32>
    %c13_372 = arith.constant 13 : index
    %c1_373 = arith.constant 1 : index
    %c0_374 = arith.constant 0 : index
    %372 = vector.load %arg0[%c13_372, %c1_373, %c0_374] : memref<16x8x64xf32, #tpu.memory_space<vmem>>, vector<1x7x64xf32>
    %373 = vector.shape_cast %372 : vector<1x7x64xf32> to vector<7x64xf32>
    %c3_375 = arith.constant 3 : index
    %c0_376 = arith.constant 0 : index
    %c0_377 = arith.constant 0 : index
    %374 = vector.load %arg1[%c3_375, %c0_376, %c0_377] : memref<4x64x16xf32, #tpu.memory_space<vmem>>, vector<1x64x16xf32>
    %375 = vector.shape_cast %374 : vector<1x64x16xf32> to vector<64x16xf32>
    %cst_378 = arith.constant dense<0.000000e+00> : vector<7x16xf32>
    %376 = tpu.matmul %373, %375, %cst_378 {dimension_numbers = #tpu.dot_dimension_numbers<[1], [0], [0], [1], [0, 0, 1, 1], [], []>} : vector<7x64xf32>, vector<64x16xf32>, vector<7x16xf32> -> vector<7x16xf32>
    %377 = arith.addf %371, %376 : vector<7x16xf32>
    %378 = vector.broadcast %0 : vector<1x16xf32> to vector<7x16xf32>
    %379 = arith.addf %377, %378 : vector<7x16xf32>
    %cst_379 = arith.constant 0.000000e+00 : f32
    %380 = vector.broadcast %cst_379 : f32 to vector<7x16xf32>
    %381 = arith.maximumf %379, %380 : vector<7x16xf32>
    %c11_380 = arith.constant 11 : index
    %c0_381 = arith.constant 0 : index
    %c0_382 = arith.constant 0 : index
    %382 = vector.load %arg11[%c11_380, %c0_381, %c0_382] : memref<14x7x16xf32, #tpu.memory_space<vmem>>, vector<1x7x16xf32>
    %383 = vector.shape_cast %382 : vector<1x7x16xf32> to vector<7x16xf32>
    %384 = vector.shape_cast %381 : vector<7x16xf32> to vector<1x7x16xf32>
    tpu.vector_store %arg11[%c11_380, %c0_381, %c0_382], %384 {strides = array<i32>} : memref<14x7x16xf32, #tpu.memory_space<vmem>>, vector<1x7x16xf32>,
    %cst_383 = arith.constant 0.000000e+00 : f32
    %385 = vector.broadcast %cst_383 : f32 to vector<7x16xf32>
    %c13_384 = arith.constant 13 : index
    %c0_385 = arith.constant 0 : index
    %c0_386 = arith.constant 0 : index
    %386 = vector.load %arg0[%c13_384, %c0_385, %c0_386] : memref<16x8x64xf32, #tpu.memory_space<vmem>>, vector<1x7x64xf32>
    %387 = vector.shape_cast %386 : vector<1x7x64xf32> to vector<7x64xf32>
    %c0_387 = arith.constant 0 : index
    %c0_388 = arith.constant 0 : index
    %c0_389 = arith.constant 0 : index
    %388 = vector.load %arg1[%c0_387, %c0_388, %c0_389] : memref<4x64x16xf32, #tpu.memory_space<vmem>>, vector<1x64x16xf32>
    %389 = vector.shape_cast %388 : vector<1x64x16xf32> to vector<64x16xf32>
    %cst_390 = arith.constant dense<0.000000e+00> : vector<7x16xf32>
    %390 = tpu.matmul %387, %389, %cst_390 {dimension_numbers = #tpu.dot_dimension_numbers<[1], [0], [0], [1], [0, 0, 1, 1], [], []>} : vector<7x64xf32>, vector<64x16xf32>, vector<7x16xf32> -> vector<7x16xf32>
    %391 = arith.addf %385, %390 : vector<7x16xf32>
    %c13_391 = arith.constant 13 : index
    %c1_392 = arith.constant 1 : index
    %c0_393 = arith.constant 0 : index
    %392 = vector.load %arg0[%c13_391, %c1_392, %c0_393] : memref<16x8x64xf32, #tpu.memory_space<vmem>>, vector<1x7x64xf32>
    %393 = vector.shape_cast %392 : vector<1x7x64xf32> to vector<7x64xf32>
    %c1_394 = arith.constant 1 : index
    %c0_395 = arith.constant 0 : index
    %c0_396 = arith.constant 0 : index
    %394 = vector.load %arg1[%c1_394, %c0_395, %c0_396] : memref<4x64x16xf32, #tpu.memory_space<vmem>>, vector<1x64x16xf32>
    %395 = vector.shape_cast %394 : vector<1x64x16xf32> to vector<64x16xf32>
    %cst_397 = arith.constant dense<0.000000e+00> : vector<7x16xf32>
    %396 = tpu.matmul %393, %395, %cst_397 {dimension_numbers = #tpu.dot_dimension_numbers<[1], [0], [0], [1], [0, 0, 1, 1], [], []>} : vector<7x64xf32>, vector<64x16xf32>, vector<7x16xf32> -> vector<7x16xf32>
    %397 = arith.addf %391, %396 : vector<7x16xf32>
    %c14 = arith.constant 14 : index
    %c0_398 = arith.constant 0 : index
    %c0_399 = arith.constant 0 : index
    %398 = vector.load %arg0[%c14, %c0_398, %c0_399] : memref<16x8x64xf32, #tpu.memory_space<vmem>>, vector<1x7x64xf32>
    %399 = vector.shape_cast %398 : vector<1x7x64xf32> to vector<7x64xf32>
    %c2_400 = arith.constant 2 : index
    %c0_401 = arith.constant 0 : index
    %c0_402 = arith.constant 0 : index
    %400 = vector.load %arg1[%c2_400, %c0_401, %c0_402] : memref<4x64x16xf32, #tpu.memory_space<vmem>>, vector<1x64x16xf32>
    %401 = vector.shape_cast %400 : vector<1x64x16xf32> to vector<64x16xf32>
    %cst_403 = arith.constant dense<0.000000e+00> : vector<7x16xf32>
    %402 = tpu.matmul %399, %401, %cst_403 {dimension_numbers = #tpu.dot_dimension_numbers<[1], [0], [0], [1], [0, 0, 1, 1], [], []>} : vector<7x64xf32>, vector<64x16xf32>, vector<7x16xf32> -> vector<7x16xf32>
    %403 = arith.addf %397, %402 : vector<7x16xf32>
    %c14_404 = arith.constant 14 : index
    %c1_405 = arith.constant 1 : index
    %c0_406 = arith.constant 0 : index
    %404 = vector.load %arg0[%c14_404, %c1_405, %c0_406] : memref<16x8x64xf32, #tpu.memory_space<vmem>>, vector<1x7x64xf32>
    %405 = vector.shape_cast %404 : vector<1x7x64xf32> to vector<7x64xf32>
    %c3_407 = arith.constant 3 : index
    %c0_408 = arith.constant 0 : index
    %c0_409 = arith.constant 0 : index
    %406 = vector.load %arg1[%c3_407, %c0_408, %c0_409] : memref<4x64x16xf32, #tpu.memory_space<vmem>>, vector<1x64x16xf32>
    %407 = vector.shape_cast %406 : vector<1x64x16xf32> to vector<64x16xf32>
    %cst_410 = arith.constant dense<0.000000e+00> : vector<7x16xf32>
    %408 = tpu.matmul %405, %407, %cst_410 {dimension_numbers = #tpu.dot_dimension_numbers<[1], [0], [0], [1], [0, 0, 1, 1], [], []>} : vector<7x64xf32>, vector<64x16xf32>, vector<7x16xf32> -> vector<7x16xf32>
    %409 = arith.addf %403, %408 : vector<7x16xf32>
    %410 = vector.broadcast %0 : vector<1x16xf32> to vector<7x16xf32>
    %411 = arith.addf %409, %410 : vector<7x16xf32>
    %cst_411 = arith.constant 0.000000e+00 : f32
    %412 = vector.broadcast %cst_411 : f32 to vector<7x16xf32>
    %413 = arith.maximumf %411, %412 : vector<7x16xf32>
    %c12_412 = arith.constant 12 : index
    %c0_413 = arith.constant 0 : index
    %c0_414 = arith.constant 0 : index
    %414 = vector.load %arg11[%c12_412, %c0_413, %c0_414] : memref<14x7x16xf32, #tpu.memory_space<vmem>>, vector<1x7x16xf32>
    %415 = vector.shape_cast %414 : vector<1x7x16xf32> to vector<7x16xf32>
    %416 = vector.shape_cast %413 : vector<7x16xf32> to vector<1x7x16xf32>
    tpu.vector_store %arg11[%c12_412, %c0_413, %c0_414], %416 {strides = array<i32>} : memref<14x7x16xf32, #tpu.memory_space<vmem>>, vector<1x7x16xf32>,
    %cst_415 = arith.constant 0.000000e+00 : f32
    %417 = vector.broadcast %cst_415 : f32 to vector<7x16xf32>
    %c14_416 = arith.constant 14 : index
    %c0_417 = arith.constant 0 : index
    %c0_418 = arith.constant 0 : index
    %418 = vector.load %arg0[%c14_416, %c0_417, %c0_418] : memref<16x8x64xf32, #tpu.memory_space<vmem>>, vector<1x7x64xf32>
    %419 = vector.shape_cast %418 : vector<1x7x64xf32> to vector<7x64xf32>
    %c0_419 = arith.constant 0 : index
    %c0_420 = arith.constant 0 : index
    %c0_421 = arith.constant 0 : index
    %420 = vector.load %arg1[%c0_419, %c0_420, %c0_421] : memref<4x64x16xf32, #tpu.memory_space<vmem>>, vector<1x64x16xf32>
    %421 = vector.shape_cast %420 : vector<1x64x16xf32> to vector<64x16xf32>
    %cst_422 = arith.constant dense<0.000000e+00> : vector<7x16xf32>
    %422 = tpu.matmul %419, %421, %cst_422 {dimension_numbers = #tpu.dot_dimension_numbers<[1], [0], [0], [1], [0, 0, 1, 1], [], []>} : vector<7x64xf32>, vector<64x16xf32>, vector<7x16xf32> -> vector<7x16xf32>
    %423 = arith.addf %417, %422 : vector<7x16xf32>
    %c14_423 = arith.constant 14 : index
    %c1_424 = arith.constant 1 : index
    %c0_425 = arith.constant 0 : index
    %424 = vector.load %arg0[%c14_423, %c1_424, %c0_425] : memref<16x8x64xf32, #tpu.memory_space<vmem>>, vector<1x7x64xf32>
    %425 = vector.shape_cast %424 : vector<1x7x64xf32> to vector<7x64xf32>
    %c1_426 = arith.constant 1 : index
    %c0_427 = arith.constant 0 : index
    %c0_428 = arith.constant 0 : index
    %426 = vector.load %arg1[%c1_426, %c0_427, %c0_428] : memref<4x64x16xf32, #tpu.memory_space<vmem>>, vector<1x64x16xf32>
    %427 = vector.shape_cast %426 : vector<1x64x16xf32> to vector<64x16xf32>
    %cst_429 = arith.constant dense<0.000000e+00> : vector<7x16xf32>
    %428 = tpu.matmul %425, %427, %cst_429 {dimension_numbers = #tpu.dot_dimension_numbers<[1], [0], [0], [1], [0, 0, 1, 1], [], []>} : vector<7x64xf32>, vector<64x16xf32>, vector<7x16xf32> -> vector<7x16xf32>
    %429 = arith.addf %423, %428 : vector<7x16xf32>
    %c15 = arith.constant 15 : index
    %c0_430 = arith.constant 0 : index
    %c0_431 = arith.constant 0 : index
    %430 = vector.load %arg0[%c15, %c0_430, %c0_431] : memref<16x8x64xf32, #tpu.memory_space<vmem>>, vector<1x7x64xf32>
    %431 = vector.shape_cast %430 : vector<1x7x64xf32> to vector<7x64xf32>
    %c2_432 = arith.constant 2 : index
    %c0_433 = arith.constant 0 : index
    %c0_434 = arith.constant 0 : index
    %432 = vector.load %arg1[%c2_432, %c0_433, %c0_434] : memref<4x64x16xf32, #tpu.memory_space<vmem>>, vector<1x64x16xf32>
    %433 = vector.shape_cast %432 : vector<1x64x16xf32> to vector<64x16xf32>
    %cst_435 = arith.constant dense<0.000000e+00> : vector<7x16xf32>
    %434 = tpu.matmul %431, %433, %cst_435 {dimension_numbers = #tpu.dot_dimension_numbers<[1], [0], [0], [1], [0, 0, 1, 1], [], []>} : vector<7x64xf32>, vector<64x16xf32>, vector<7x16xf32> -> vector<7x16xf32>
    %435 = arith.addf %429, %434 : vector<7x16xf32>
    %c15_436 = arith.constant 15 : index
    %c1_437 = arith.constant 1 : index
    %c0_438 = arith.constant 0 : index
    %436 = vector.load %arg0[%c15_436, %c1_437, %c0_438] : memref<16x8x64xf32, #tpu.memory_space<vmem>>, vector<1x7x64xf32>
    %437 = vector.shape_cast %436 : vector<1x7x64xf32> to vector<7x64xf32>
    %c3_439 = arith.constant 3 : index
    %c0_440 = arith.constant 0 : index
    %c0_441 = arith.constant 0 : index
    %438 = vector.load %arg1[%c3_439, %c0_440, %c0_441] : memref<4x64x16xf32, #tpu.memory_space<vmem>>, vector<1x64x16xf32>
    %439 = vector.shape_cast %438 : vector<1x64x16xf32> to vector<64x16xf32>
    %cst_442 = arith.constant dense<0.000000e+00> : vector<7x16xf32>
    %440 = tpu.matmul %437, %439, %cst_442 {dimension_numbers = #tpu.dot_dimension_numbers<[1], [0], [0], [1], [0, 0, 1, 1], [], []>} : vector<7x64xf32>, vector<64x16xf32>, vector<7x16xf32> -> vector<7x16xf32>
    %441 = arith.addf %435, %440 : vector<7x16xf32>
    %442 = vector.broadcast %0 : vector<1x16xf32> to vector<7x16xf32>
    %443 = arith.addf %441, %442 : vector<7x16xf32>
    %cst_443 = arith.constant 0.000000e+00 : f32
    %444 = vector.broadcast %cst_443 : f32 to vector<7x16xf32>
    %445 = arith.maximumf %443, %444 : vector<7x16xf32>
    %c13_444 = arith.constant 13 : index
    %c0_445 = arith.constant 0 : index
    %c0_446 = arith.constant 0 : index
    %446 = vector.load %arg11[%c13_444, %c0_445, %c0_446] : memref<14x7x16xf32, #tpu.memory_space<vmem>>, vector<1x7x16xf32>
    %447 = vector.shape_cast %446 : vector<1x7x16xf32> to vector<7x16xf32>
    %448 = vector.shape_cast %445 : vector<7x16xf32> to vector<1x7x16xf32>
    tpu.vector_store %arg11[%c13_444, %c0_445, %c0_446], %448 {strides = array<i32>} : memref<14x7x16xf32, #tpu.memory_space<vmem>>, vector<1x7x16xf32>,
    %c0_447 = arith.constant 0 : index
    %c0_448 = arith.constant 0 : index
    %c0_449 = arith.constant 0 : index
    %449 = vector.load %arg11[%c0_447, %c0_448, %c0_449] : memref<14x7x16xf32, #tpu.memory_space<vmem>>, vector<1x1x16xf32>
    %450 = vector.shape_cast %449 : vector<1x1x16xf32> to vector<1x16xf32>
    %c0_450 = arith.constant 0 : index
    %c0_451 = arith.constant 0 : index
    %451 = vector.load %arg12[%c0_450, %c0_451] : memref<8x256xf32, #tpu.memory_space<vmem>>, vector<1x16xf32>
    tpu.vector_store %arg12[%c0_450, %c0_451], %450 {strides = array<i32>} : memref<8x256xf32, #tpu.memory_space<vmem>>, vector<1x16xf32>,
    %c0_452 = arith.constant 0 : index
    %c1_453 = arith.constant 1 : index
    %c0_454 = arith.constant 0 : index
    %452 = vector.load %arg11[%c0_452, %c1_453, %c0_454] : memref<14x7x16xf32, #tpu.memory_space<vmem>>, vector<1x1x16xf32>
    %453 = vector.shape_cast %452 : vector<1x1x16xf32> to vector<1x16xf32>
    %c0_455 = arith.constant 0 : index
    %c16 = arith.constant 16 : index
    %454 = vector.load %arg12[%c0_455, %c16] : memref<8x256xf32, #tpu.memory_space<vmem>>, vector<1x16xf32>
    tpu.vector_store %arg12[%c0_455, %c16], %453 {strides = array<i32>} : memref<8x256xf32, #tpu.memory_space<vmem>>, vector<1x16xf32>,
    %c0_456 = arith.constant 0 : index
    %c2_457 = arith.constant 2 : index
    %c0_458 = arith.constant 0 : index
    %455 = vector.load %arg11[%c0_456, %c2_457, %c0_458] : memref<14x7x16xf32, #tpu.memory_space<vmem>>, vector<1x1x16xf32>
    %456 = vector.shape_cast %455 : vector<1x1x16xf32> to vector<1x16xf32>
    %c0_459 = arith.constant 0 : index
    %c32 = arith.constant 32 : index
    %457 = vector.load %arg12[%c0_459, %c32] : memref<8x256xf32, #tpu.memory_space<vmem>>, vector<1x16xf32>
    tpu.vector_store %arg12[%c0_459, %c32], %456 {strides = array<i32>} : memref<8x256xf32, #tpu.memory_space<vmem>>, vector<1x16xf32>,
    %c0_460 = arith.constant 0 : index
    %c3_461 = arith.constant 3 : index
    %c0_462 = arith.constant 0 : index
    %458 = vector.load %arg11[%c0_460, %c3_461, %c0_462] : memref<14x7x16xf32, #tpu.memory_space<vmem>>, vector<1x1x16xf32>
    %459 = vector.shape_cast %458 : vector<1x1x16xf32> to vector<1x16xf32>
    %c0_463 = arith.constant 0 : index
    %c48 = arith.constant 48 : index
    %460 = vector.load %arg12[%c0_463, %c48] : memref<8x256xf32, #tpu.memory_space<vmem>>, vector<1x16xf32>
    tpu.vector_store %arg12[%c0_463, %c48], %459 {strides = array<i32>} : memref<8x256xf32, #tpu.memory_space<vmem>>, vector<1x16xf32>,
    %c1_464 = arith.constant 1 : index
    %c0_465 = arith.constant 0 : index
    %c0_466 = arith.constant 0 : index
    %461 = vector.load %arg11[%c1_464, %c0_465, %c0_466] : memref<14x7x16xf32, #tpu.memory_space<vmem>>, vector<1x1x16xf32>
    %462 = vector.shape_cast %461 : vector<1x1x16xf32> to vector<1x16xf32>
    %c0_467 = arith.constant 0 : index
    %c64 = arith.constant 64 : index
    %463 = vector.load %arg12[%c0_467, %c64] : memref<8x256xf32, #tpu.memory_space<vmem>>, vector<1x16xf32>
    tpu.vector_store %arg12[%c0_467, %c64], %462 {strides = array<i32>} : memref<8x256xf32, #tpu.memory_space<vmem>>, vector<1x16xf32>,
    %c1_468 = arith.constant 1 : index
    %c1_469 = arith.constant 1 : index
    %c0_470 = arith.constant 0 : index
    %464 = vector.load %arg11[%c1_468, %c1_469, %c0_470] : memref<14x7x16xf32, #tpu.memory_space<vmem>>, vector<1x1x16xf32>
    %465 = vector.shape_cast %464 : vector<1x1x16xf32> to vector<1x16xf32>
    %c0_471 = arith.constant 0 : index
    %c80 = arith.constant 80 : index
    %466 = vector.load %arg12[%c0_471, %c80] : memref<8x256xf32, #tpu.memory_space<vmem>>, vector<1x16xf32>
    tpu.vector_store %arg12[%c0_471, %c80], %465 {strides = array<i32>} : memref<8x256xf32, #tpu.memory_space<vmem>>, vector<1x16xf32>,
    %c1_472 = arith.constant 1 : index
    %c2_473 = arith.constant 2 : index
    %c0_474 = arith.constant 0 : index
    %467 = vector.load %arg11[%c1_472, %c2_473, %c0_474] : memref<14x7x16xf32, #tpu.memory_space<vmem>>, vector<1x1x16xf32>
    %468 = vector.shape_cast %467 : vector<1x1x16xf32> to vector<1x16xf32>
    %c0_475 = arith.constant 0 : index
    %c96 = arith.constant 96 : index
    %469 = vector.load %arg12[%c0_475, %c96] : memref<8x256xf32, #tpu.memory_space<vmem>>, vector<1x16xf32>
    tpu.vector_store %arg12[%c0_475, %c96], %468 {strides = array<i32>} : memref<8x256xf32, #tpu.memory_space<vmem>>, vector<1x16xf32>,
    %c1_476 = arith.constant 1 : index
    %c3_477 = arith.constant 3 : index
    %c0_478 = arith.constant 0 : index
    %470 = vector.load %arg11[%c1_476, %c3_477, %c0_478] : memref<14x7x16xf32, #tpu.memory_space<vmem>>, vector<1x1x16xf32>
    %471 = vector.shape_cast %470 : vector<1x1x16xf32> to vector<1x16xf32>
    %c0_479 = arith.constant 0 : index
    %c112 = arith.constant 112 : index
    %472 = vector.load %arg12[%c0_479, %c112] : memref<8x256xf32, #tpu.memory_space<vmem>>, vector<1x16xf32>
    tpu.vector_store %arg12[%c0_479, %c112], %471 {strides = array<i32>} : memref<8x256xf32, #tpu.memory_space<vmem>>, vector<1x16xf32>,
    %c2_480 = arith.constant 2 : index
    %c0_481 = arith.constant 0 : index
    %c0_482 = arith.constant 0 : index
    %473 = vector.load %arg11[%c2_480, %c0_481, %c0_482] : memref<14x7x16xf32, #tpu.memory_space<vmem>>, vector<1x1x16xf32>
    %474 = vector.shape_cast %473 : vector<1x1x16xf32> to vector<1x16xf32>
    %c0_483 = arith.constant 0 : index
    %c128 = arith.constant 128 : index
    %475 = vector.load %arg12[%c0_483, %c128] : memref<8x256xf32, #tpu.memory_space<vmem>>, vector<1x16xf32>
    tpu.vector_store %arg12[%c0_483, %c128], %474 {strides = array<i32>} : memref<8x256xf32, #tpu.memory_space<vmem>>, vector<1x16xf32>,
    %c2_484 = arith.constant 2 : index
    %c1_485 = arith.constant 1 : index
    %c0_486 = arith.constant 0 : index
    %476 = vector.load %arg11[%c2_484, %c1_485, %c0_486] : memref<14x7x16xf32, #tpu.memory_space<vmem>>, vector<1x1x16xf32>
    %477 = vector.shape_cast %476 : vector<1x1x16xf32> to vector<1x16xf32>
    %c0_487 = arith.constant 0 : index
    %c144 = arith.constant 144 : index
    %478 = vector.load %arg12[%c0_487, %c144] : memref<8x256xf32, #tpu.memory_space<vmem>>, vector<1x16xf32>
    tpu.vector_store %arg12[%c0_487, %c144], %477 {strides = array<i32>} : memref<8x256xf32, #tpu.memory_space<vmem>>, vector<1x16xf32>,
    %c2_488 = arith.constant 2 : index
    %c2_489 = arith.constant 2 : index
    %c0_490 = arith.constant 0 : index
    %479 = vector.load %arg11[%c2_488, %c2_489, %c0_490] : memref<14x7x16xf32, #tpu.memory_space<vmem>>, vector<1x1x16xf32>
    %480 = vector.shape_cast %479 : vector<1x1x16xf32> to vector<1x16xf32>
    %c0_491 = arith.constant 0 : index
    %c160 = arith.constant 160 : index
    %481 = vector.load %arg12[%c0_491, %c160] : memref<8x256xf32, #tpu.memory_space<vmem>>, vector<1x16xf32>
    tpu.vector_store %arg12[%c0_491, %c160], %480 {strides = array<i32>} : memref<8x256xf32, #tpu.memory_space<vmem>>, vector<1x16xf32>,
    %c2_492 = arith.constant 2 : index
    %c3_493 = arith.constant 3 : index
    %c0_494 = arith.constant 0 : index
    %482 = vector.load %arg11[%c2_492, %c3_493, %c0_494] : memref<14x7x16xf32, #tpu.memory_space<vmem>>, vector<1x1x16xf32>
    %483 = vector.shape_cast %482 : vector<1x1x16xf32> to vector<1x16xf32>
    %c0_495 = arith.constant 0 : index
    %c176 = arith.constant 176 : index
    %484 = vector.load %arg12[%c0_495, %c176] : memref<8x256xf32, #tpu.memory_space<vmem>>, vector<1x16xf32>
    tpu.vector_store %arg12[%c0_495, %c176], %483 {strides = array<i32>} : memref<8x256xf32, #tpu.memory_space<vmem>>, vector<1x16xf32>,
    %c3_496 = arith.constant 3 : index
    %c0_497 = arith.constant 0 : index
    %c0_498 = arith.constant 0 : index
    %485 = vector.load %arg11[%c3_496, %c0_497, %c0_498] : memref<14x7x16xf32, #tpu.memory_space<vmem>>, vector<1x1x16xf32>
    %486 = vector.shape_cast %485 : vector<1x1x16xf32> to vector<1x16xf32>
    %c0_499 = arith.constant 0 : index
    %c192 = arith.constant 192 : index
    %487 = vector.load %arg12[%c0_499, %c192] : memref<8x256xf32, #tpu.memory_space<vmem>>, vector<1x16xf32>
    tpu.vector_store %arg12[%c0_499, %c192], %486 {strides = array<i32>} : memref<8x256xf32, #tpu.memory_space<vmem>>, vector<1x16xf32>,
    %c3_500 = arith.constant 3 : index
    %c1_501 = arith.constant 1 : index
    %c0_502 = arith.constant 0 : index
    %488 = vector.load %arg11[%c3_500, %c1_501, %c0_502] : memref<14x7x16xf32, #tpu.memory_space<vmem>>, vector<1x1x16xf32>
    %489 = vector.shape_cast %488 : vector<1x1x16xf32> to vector<1x16xf32>
    %c0_503 = arith.constant 0 : index
    %c208 = arith.constant 208 : index
    %490 = vector.load %arg12[%c0_503, %c208] : memref<8x256xf32, #tpu.memory_space<vmem>>, vector<1x16xf32>
    tpu.vector_store %arg12[%c0_503, %c208], %489 {strides = array<i32>} : memref<8x256xf32, #tpu.memory_space<vmem>>, vector<1x16xf32>,
    %c3_504 = arith.constant 3 : index
    %c2_505 = arith.constant 2 : index
    %c0_506 = arith.constant 0 : index
    %491 = vector.load %arg11[%c3_504, %c2_505, %c0_506] : memref<14x7x16xf32, #tpu.memory_space<vmem>>, vector<1x1x16xf32>
    %492 = vector.shape_cast %491 : vector<1x1x16xf32> to vector<1x16xf32>
    %c0_507 = arith.constant 0 : index
    %c224 = arith.constant 224 : index
    %493 = vector.load %arg12[%c0_507, %c224] : memref<8x256xf32, #tpu.memory_space<vmem>>, vector<1x16xf32>
    tpu.vector_store %arg12[%c0_507, %c224], %492 {strides = array<i32>} : memref<8x256xf32, #tpu.memory_space<vmem>>, vector<1x16xf32>,
    %c3_508 = arith.constant 3 : index
    %c3_509 = arith.constant 3 : index
    %c0_510 = arith.constant 0 : index
    %494 = vector.load %arg11[%c3_508, %c3_509, %c0_510] : memref<14x7x16xf32, #tpu.memory_space<vmem>>, vector<1x1x16xf32>
    %495 = vector.shape_cast %494 : vector<1x1x16xf32> to vector<1x16xf32>
    %c0_511 = arith.constant 0 : index
    %c240 = arith.constant 240 : index
    %496 = vector.load %arg12[%c0_511, %c240] : memref<8x256xf32, #tpu.memory_space<vmem>>, vector<1x16xf32>
    tpu.vector_store %arg12[%c0_511, %c240], %495 {strides = array<i32>} : memref<8x256xf32, #tpu.memory_space<vmem>>, vector<1x16xf32>,
    %c7_512 = arith.constant 7 : index
    %c0_513 = arith.constant 0 : index
    %c0_514 = arith.constant 0 : index
    %497 = vector.load %arg11[%c7_512, %c0_513, %c0_514] : memref<14x7x16xf32, #tpu.memory_space<vmem>>, vector<1x1x16xf32>
    %498 = vector.shape_cast %497 : vector<1x1x16xf32> to vector<1x16xf32>
    %c1_515 = arith.constant 1 : index
    %c0_516 = arith.constant 0 : index
    %499 = vector.load %arg12[%c1_515, %c0_516] : memref<8x256xf32, #tpu.memory_space<vmem>>, vector<1x16xf32>
    tpu.vector_store %arg12[%c1_515, %c0_516], %498 {strides = array<i32>} : memref<8x256xf32, #tpu.memory_space<vmem>>, vector<1x16xf32>,
    %c7_517 = arith.constant 7 : index
    %c1_518 = arith.constant 1 : index
    %c0_519 = arith.constant 0 : index
    %500 = vector.load %arg11[%c7_517, %c1_518, %c0_519] : memref<14x7x16xf32, #tpu.memory_space<vmem>>, vector<1x1x16xf32>
    %501 = vector.shape_cast %500 : vector<1x1x16xf32> to vector<1x16xf32>
    %c1_520 = arith.constant 1 : index
    %c16_521 = arith.constant 16 : index
    %502 = vector.load %arg12[%c1_520, %c16_521] : memref<8x256xf32, #tpu.memory_space<vmem>>, vector<1x16xf32>
    tpu.vector_store %arg12[%c1_520, %c16_521], %501 {strides = array<i32>} : memref<8x256xf32, #tpu.memory_space<vmem>>, vector<1x16xf32>,
    %c7_522 = arith.constant 7 : index
    %c2_523 = arith.constant 2 : index
    %c0_524 = arith.constant 0 : index
    %503 = vector.load %arg11[%c7_522, %c2_523, %c0_524] : memref<14x7x16xf32, #tpu.memory_space<vmem>>, vector<1x1x16xf32>
    %504 = vector.shape_cast %503 : vector<1x1x16xf32> to vector<1x16xf32>
    %c1_525 = arith.constant 1 : index
    %c32_526 = arith.constant 32 : index
    %505 = vector.load %arg12[%c1_525, %c32_526] : memref<8x256xf32, #tpu.memory_space<vmem>>, vector<1x16xf32>
    tpu.vector_store %arg12[%c1_525, %c32_526], %504 {strides = array<i32>} : memref<8x256xf32, #tpu.memory_space<vmem>>, vector<1x16xf32>,
    %c7_527 = arith.constant 7 : index
    %c3_528 = arith.constant 3 : index
    %c0_529 = arith.constant 0 : index
    %506 = vector.load %arg11[%c7_527, %c3_528, %c0_529] : memref<14x7x16xf32, #tpu.memory_space<vmem>>, vector<1x1x16xf32>
    %507 = vector.shape_cast %506 : vector<1x1x16xf32> to vector<1x16xf32>
    %c1_530 = arith.constant 1 : index
    %c48_531 = arith.constant 48 : index
    %508 = vector.load %arg12[%c1_530, %c48_531] : memref<8x256xf32, #tpu.memory_space<vmem>>, vector<1x16xf32>
    tpu.vector_store %arg12[%c1_530, %c48_531], %507 {strides = array<i32>} : memref<8x256xf32, #tpu.memory_space<vmem>>, vector<1x16xf32>,
    %c8_532 = arith.constant 8 : index
    %c0_533 = arith.constant 0 : index
    %c0_534 = arith.constant 0 : index
    %509 = vector.load %arg11[%c8_532, %c0_533, %c0_534] : memref<14x7x16xf32, #tpu.memory_space<vmem>>, vector<1x1x16xf32>
    %510 = vector.shape_cast %509 : vector<1x1x16xf32> to vector<1x16xf32>
    %c1_535 = arith.constant 1 : index
    %c64_536 = arith.constant 64 : index
    %511 = vector.load %arg12[%c1_535, %c64_536] : memref<8x256xf32, #tpu.memory_space<vmem>>, vector<1x16xf32>
    tpu.vector_store %arg12[%c1_535, %c64_536], %510 {strides = array<i32>} : memref<8x256xf32, #tpu.memory_space<vmem>>, vector<1x16xf32>,
    %c8_537 = arith.constant 8 : index
    %c1_538 = arith.constant 1 : index
    %c0_539 = arith.constant 0 : index
    %512 = vector.load %arg11[%c8_537, %c1_538, %c0_539] : memref<14x7x16xf32, #tpu.memory_space<vmem>>, vector<1x1x16xf32>
    %513 = vector.shape_cast %512 : vector<1x1x16xf32> to vector<1x16xf32>
    %c1_540 = arith.constant 1 : index
    %c80_541 = arith.constant 80 : index
    %514 = vector.load %arg12[%c1_540, %c80_541] : memref<8x256xf32, #tpu.memory_space<vmem>>, vector<1x16xf32>
    tpu.vector_store %arg12[%c1_540, %c80_541], %513 {strides = array<i32>} : memref<8x256xf32, #tpu.memory_space<vmem>>, vector<1x16xf32>,
    %c8_542 = arith.constant 8 : index
    %c2_543 = arith.constant 2 : index
    %c0_544 = arith.constant 0 : index
    %515 = vector.load %arg11[%c8_542, %c2_543, %c0_544] : memref<14x7x16xf32, #tpu.memory_space<vmem>>, vector<1x1x16xf32>
    %516 = vector.shape_cast %515 : vector<1x1x16xf32> to vector<1x16xf32>
    %c1_545 = arith.constant 1 : index
    %c96_546 = arith.constant 96 : index
    %517 = vector.load %arg12[%c1_545, %c96_546] : memref<8x256xf32, #tpu.memory_space<vmem>>, vector<1x16xf32>
    tpu.vector_store %arg12[%c1_545, %c96_546], %516 {strides = array<i32>} : memref<8x256xf32, #tpu.memory_space<vmem>>, vector<1x16xf32>,
    %c8_547 = arith.constant 8 : index
    %c3_548 = arith.constant 3 : index
    %c0_549 = arith.constant 0 : index
    %518 = vector.load %arg11[%c8_547, %c3_548, %c0_549] : memref<14x7x16xf32, #tpu.memory_space<vmem>>, vector<1x1x16xf32>
    %519 = vector.shape_cast %518 : vector<1x1x16xf32> to vector<1x16xf32>
    %c1_550 = arith.constant 1 : index
    %c112_551 = arith.constant 112 : index
    %520 = vector.load %arg12[%c1_550, %c112_551] : memref<8x256xf32, #tpu.memory_space<vmem>>, vector<1x16xf32>
    tpu.vector_store %arg12[%c1_550, %c112_551], %519 {strides = array<i32>} : memref<8x256xf32, #tpu.memory_space<vmem>>, vector<1x16xf32>,
    %c9_552 = arith.constant 9 : index
    %c0_553 = arith.constant 0 : index
    %c0_554 = arith.constant 0 : index
    %521 = vector.load %arg11[%c9_552, %c0_553, %c0_554] : memref<14x7x16xf32, #tpu.memory_space<vmem>>, vector<1x1x16xf32>
    %522 = vector.shape_cast %521 : vector<1x1x16xf32> to vector<1x16xf32>
    %c1_555 = arith.constant 1 : index
    %c128_556 = arith.constant 128 : index
    %523 = vector.load %arg12[%c1_555, %c128_556] : memref<8x256xf32, #tpu.memory_space<vmem>>, vector<1x16xf32>
    tpu.vector_store %arg12[%c1_555, %c128_556], %522 {strides = array<i32>} : memref<8x256xf32, #tpu.memory_space<vmem>>, vector<1x16xf32>,
    %c9_557 = arith.constant 9 : index
    %c1_558 = arith.constant 1 : index
    %c0_559 = arith.constant 0 : index
    %524 = vector.load %arg11[%c9_557, %c1_558, %c0_559] : memref<14x7x16xf32, #tpu.memory_space<vmem>>, vector<1x1x16xf32>
    %525 = vector.shape_cast %524 : vector<1x1x16xf32> to vector<1x16xf32>
    %c1_560 = arith.constant 1 : index
    %c144_561 = arith.constant 144 : index
    %526 = vector.load %arg12[%c1_560, %c144_561] : memref<8x256xf32, #tpu.memory_space<vmem>>, vector<1x16xf32>
    tpu.vector_store %arg12[%c1_560, %c144_561], %525 {strides = array<i32>} : memref<8x256xf32, #tpu.memory_space<vmem>>, vector<1x16xf32>,
    %c9_562 = arith.constant 9 : index
    %c2_563 = arith.constant 2 : index
    %c0_564 = arith.constant 0 : index
    %527 = vector.load %arg11[%c9_562, %c2_563, %c0_564] : memref<14x7x16xf32, #tpu.memory_space<vmem>>, vector<1x1x16xf32>
    %528 = vector.shape_cast %527 : vector<1x1x16xf32> to vector<1x16xf32>
    %c1_565 = arith.constant 1 : index
    %c160_566 = arith.constant 160 : index
    %529 = vector.load %arg12[%c1_565, %c160_566] : memref<8x256xf32, #tpu.memory_space<vmem>>, vector<1x16xf32>
    tpu.vector_store %arg12[%c1_565, %c160_566], %528 {strides = array<i32>} : memref<8x256xf32, #tpu.memory_space<vmem>>, vector<1x16xf32>,
    %c9_567 = arith.constant 9 : index
    %c3_568 = arith.constant 3 : index
    %c0_569 = arith.constant 0 : index
    %530 = vector.load %arg11[%c9_567, %c3_568, %c0_569] : memref<14x7x16xf32, #tpu.memory_space<vmem>>, vector<1x1x16xf32>
    %531 = vector.shape_cast %530 : vector<1x1x16xf32> to vector<1x16xf32>
    %c1_570 = arith.constant 1 : index
    %c176_571 = arith.constant 176 : index
    %532 = vector.load %arg12[%c1_570, %c176_571] : memref<8x256xf32, #tpu.memory_space<vmem>>, vector<1x16xf32>
    tpu.vector_store %arg12[%c1_570, %c176_571], %531 {strides = array<i32>} : memref<8x256xf32, #tpu.memory_space<vmem>>, vector<1x16xf32>,
    %c10_572 = arith.constant 10 : index
    %c0_573 = arith.constant 0 : index
    %c0_574 = arith.constant 0 : index
    %533 = vector.load %arg11[%c10_572, %c0_573, %c0_574] : memref<14x7x16xf32, #tpu.memory_space<vmem>>, vector<1x1x16xf32>
    %534 = vector.shape_cast %533 : vector<1x1x16xf32> to vector<1x16xf32>
    %c1_575 = arith.constant 1 : index
    %c192_576 = arith.constant 192 : index
    %535 = vector.load %arg12[%c1_575, %c192_576] : memref<8x256xf32, #tpu.memory_space<vmem>>, vector<1x16xf32>
    tpu.vector_store %arg12[%c1_575, %c192_576], %534 {strides = array<i32>} : memref<8x256xf32, #tpu.memory_space<vmem>>, vector<1x16xf32>,
    %c10_577 = arith.constant 10 : index
    %c1_578 = arith.constant 1 : index
    %c0_579 = arith.constant 0 : index
    %536 = vector.load %arg11[%c10_577, %c1_578, %c0_579] : memref<14x7x16xf32, #tpu.memory_space<vmem>>, vector<1x1x16xf32>
    %537 = vector.shape_cast %536 : vector<1x1x16xf32> to vector<1x16xf32>
    %c1_580 = arith.constant 1 : index
    %c208_581 = arith.constant 208 : index
    %538 = vector.load %arg12[%c1_580, %c208_581] : memref<8x256xf32, #tpu.memory_space<vmem>>, vector<1x16xf32>
    tpu.vector_store %arg12[%c1_580, %c208_581], %537 {strides = array<i32>} : memref<8x256xf32, #tpu.memory_space<vmem>>, vector<1x16xf32>,
    %c10_582 = arith.constant 10 : index
    %c2_583 = arith.constant 2 : index
    %c0_584 = arith.constant 0 : index
    %539 = vector.load %arg11[%c10_582, %c2_583, %c0_584] : memref<14x7x16xf32, #tpu.memory_space<vmem>>, vector<1x1x16xf32>
    %540 = vector.shape_cast %539 : vector<1x1x16xf32> to vector<1x16xf32>
    %c1_585 = arith.constant 1 : index
    %c224_586 = arith.constant 224 : index
    %541 = vector.load %arg12[%c1_585, %c224_586] : memref<8x256xf32, #tpu.memory_space<vmem>>, vector<1x16xf32>
    tpu.vector_store %arg12[%c1_585, %c224_586], %540 {strides = array<i32>} : memref<8x256xf32, #tpu.memory_space<vmem>>, vector<1x16xf32>,
    %c10_587 = arith.constant 10 : index
    %c3_588 = arith.constant 3 : index
    %c0_589 = arith.constant 0 : index
    %542 = vector.load %arg11[%c10_587, %c3_588, %c0_589] : memref<14x7x16xf32, #tpu.memory_space<vmem>>, vector<1x1x16xf32>
    %543 = vector.shape_cast %542 : vector<1x1x16xf32> to vector<1x16xf32>
    %c1_590 = arith.constant 1 : index
    %c240_591 = arith.constant 240 : index
    %544 = vector.load %arg12[%c1_590, %c240_591] : memref<8x256xf32, #tpu.memory_space<vmem>>, vector<1x16xf32>
    tpu.vector_store %arg12[%c1_590, %c240_591], %543 {strides = array<i32>} : memref<8x256xf32, #tpu.memory_space<vmem>>, vector<1x16xf32>,
    %c0_592 = arith.constant 0 : index
    %c2_593 = arith.constant 2 : index
    %c0_594 = arith.constant 0 : index
    %545 = vector.load %arg11[%c0_592, %c2_593, %c0_594] : memref<14x7x16xf32, #tpu.memory_space<vmem>>, vector<1x1x16xf32>
    %546 = vector.shape_cast %545 : vector<1x1x16xf32> to vector<1x16xf32>
    %c2_595 = arith.constant 2 : index
    %c0_596 = arith.constant 0 : index
    %547 = vector.load %arg12[%c2_595, %c0_596] : memref<8x256xf32, #tpu.memory_space<vmem>>, vector<1x16xf32>
    tpu.vector_store %arg12[%c2_595, %c0_596], %546 {strides = array<i32>} : memref<8x256xf32, #tpu.memory_space<vmem>>, vector<1x16xf32>,
    %c0_597 = arith.constant 0 : index
    %c3_598 = arith.constant 3 : index
    %c0_599 = arith.constant 0 : index
    %548 = vector.load %arg11[%c0_597, %c3_598, %c0_599] : memref<14x7x16xf32, #tpu.memory_space<vmem>>, vector<1x1x16xf32>
    %549 = vector.shape_cast %548 : vector<1x1x16xf32> to vector<1x16xf32>
    %c2_600 = arith.constant 2 : index
    %c16_601 = arith.constant 16 : index
    %550 = vector.load %arg12[%c2_600, %c16_601] : memref<8x256xf32, #tpu.memory_space<vmem>>, vector<1x16xf32>
    tpu.vector_store %arg12[%c2_600, %c16_601], %549 {strides = array<i32>} : memref<8x256xf32, #tpu.memory_space<vmem>>, vector<1x16xf32>,
    %c0_602 = arith.constant 0 : index
    %c4_603 = arith.constant 4 : index
    %c0_604 = arith.constant 0 : index
    %551 = vector.load %arg11[%c0_602, %c4_603, %c0_604] : memref<14x7x16xf32, #tpu.memory_space<vmem>>, vector<1x1x16xf32>
    %552 = vector.shape_cast %551 : vector<1x1x16xf32> to vector<1x16xf32>
    %c2_605 = arith.constant 2 : index
    %c32_606 = arith.constant 32 : index
    %553 = vector.load %arg12[%c2_605, %c32_606] : memref<8x256xf32, #tpu.memory_space<vmem>>, vector<1x16xf32>
    tpu.vector_store %arg12[%c2_605, %c32_606], %552 {strides = array<i32>} : memref<8x256xf32, #tpu.memory_space<vmem>>, vector<1x16xf32>,
    %c0_607 = arith.constant 0 : index
    %c5_608 = arith.constant 5 : index
    %c0_609 = arith.constant 0 : index
    %554 = vector.load %arg11[%c0_607, %c5_608, %c0_609] : memref<14x7x16xf32, #tpu.memory_space<vmem>>, vector<1x1x16xf32>
    %555 = vector.shape_cast %554 : vector<1x1x16xf32> to vector<1x16xf32>
    %c2_610 = arith.constant 2 : index
    %c48_611 = arith.constant 48 : index
    %556 = vector.load %arg12[%c2_610, %c48_611] : memref<8x256xf32, #tpu.memory_space<vmem>>, vector<1x16xf32>
    tpu.vector_store %arg12[%c2_610, %c48_611], %555 {strides = array<i32>} : memref<8x256xf32, #tpu.memory_space<vmem>>, vector<1x16xf32>,
    %c1_612 = arith.constant 1 : index
    %c2_613 = arith.constant 2 : index
    %c0_614 = arith.constant 0 : index
    %557 = vector.load %arg11[%c1_612, %c2_613, %c0_614] : memref<14x7x16xf32, #tpu.memory_space<vmem>>, vector<1x1x16xf32>
    %558 = vector.shape_cast %557 : vector<1x1x16xf32> to vector<1x16xf32>
    %c2_615 = arith.constant 2 : index
    %c64_616 = arith.constant 64 : index
    %559 = vector.load %arg12[%c2_615, %c64_616] : memref<8x256xf32, #tpu.memory_space<vmem>>, vector<1x16xf32>
    tpu.vector_store %arg12[%c2_615, %c64_616], %558 {strides = array<i32>} : memref<8x256xf32, #tpu.memory_space<vmem>>, vector<1x16xf32>,
    %c1_617 = arith.constant 1 : index
    %c3_618 = arith.constant 3 : index
    %c0_619 = arith.constant 0 : index
    %560 = vector.load %arg11[%c1_617, %c3_618, %c0_619] : memref<14x7x16xf32, #tpu.memory_space<vmem>>, vector<1x1x16xf32>
    %561 = vector.shape_cast %560 : vector<1x1x16xf32> to vector<1x16xf32>
    %c2_620 = arith.constant 2 : index
    %c80_621 = arith.constant 80 : index
    %562 = vector.load %arg12[%c2_620, %c80_621] : memref<8x256xf32, #tpu.memory_space<vmem>>, vector<1x16xf32>
    tpu.vector_store %arg12[%c2_620, %c80_621], %561 {strides = array<i32>} : memref<8x256xf32, #tpu.memory_space<vmem>>, vector<1x16xf32>,
    %c1_622 = arith.constant 1 : index
    %c4_623 = arith.constant 4 : index
    %c0_624 = arith.constant 0 : index
    %563 = vector.load %arg11[%c1_622, %c4_623, %c0_624] : memref<14x7x16xf32, #tpu.memory_space<vmem>>, vector<1x1x16xf32>
    %564 = vector.shape_cast %563 : vector<1x1x16xf32> to vector<1x16xf32>
    %c2_625 = arith.constant 2 : index
    %c96_626 = arith.constant 96 : index
    %565 = vector.load %arg12[%c2_625, %c96_626] : memref<8x256xf32, #tpu.memory_space<vmem>>, vector<1x16xf32>
    tpu.vector_store %arg12[%c2_625, %c96_626], %564 {strides = array<i32>} : memref<8x256xf32, #tpu.memory_space<vmem>>, vector<1x16xf32>,
    %c1_627 = arith.constant 1 : index
    %c5_628 = arith.constant 5 : index
    %c0_629 = arith.constant 0 : index
    %566 = vector.load %arg11[%c1_627, %c5_628, %c0_629] : memref<14x7x16xf32, #tpu.memory_space<vmem>>, vector<1x1x16xf32>
    %567 = vector.shape_cast %566 : vector<1x1x16xf32> to vector<1x16xf32>
    %c2_630 = arith.constant 2 : index
    %c112_631 = arith.constant 112 : index
    %568 = vector.load %arg12[%c2_630, %c112_631] : memref<8x256xf32, #tpu.memory_space<vmem>>, vector<1x16xf32>
    tpu.vector_store %arg12[%c2_630, %c112_631], %567 {strides = array<i32>} : memref<8x256xf32, #tpu.memory_space<vmem>>, vector<1x16xf32>,
    %c2_632 = arith.constant 2 : index
    %c2_633 = arith.constant 2 : index
    %c0_634 = arith.constant 0 : index
    %569 = vector.load %arg11[%c2_632, %c2_633, %c0_634] : memref<14x7x16xf32, #tpu.memory_space<vmem>>, vector<1x1x16xf32>
    %570 = vector.shape_cast %569 : vector<1x1x16xf32> to vector<1x16xf32>
    %c2_635 = arith.constant 2 : index
    %c128_636 = arith.constant 128 : index
    %571 = vector.load %arg12[%c2_635, %c128_636] : memref<8x256xf32, #tpu.memory_space<vmem>>, vector<1x16xf32>
    tpu.vector_store %arg12[%c2_635, %c128_636], %570 {strides = array<i32>} : memref<8x256xf32, #tpu.memory_space<vmem>>, vector<1x16xf32>,
    %c2_637 = arith.constant 2 : index
    %c3_638 = arith.constant 3 : index
    %c0_639 = arith.constant 0 : index
    %572 = vector.load %arg11[%c2_637, %c3_638, %c0_639] : memref<14x7x16xf32, #tpu.memory_space<vmem>>, vector<1x1x16xf32>
    %573 = vector.shape_cast %572 : vector<1x1x16xf32> to vector<1x16xf32>
    %c2_640 = arith.constant 2 : index
    %c144_641 = arith.constant 144 : index
    %574 = vector.load %arg12[%c2_640, %c144_641] : memref<8x256xf32, #tpu.memory_space<vmem>>, vector<1x16xf32>
    tpu.vector_store %arg12[%c2_640, %c144_641], %573 {strides = array<i32>} : memref<8x256xf32, #tpu.memory_space<vmem>>, vector<1x16xf32>,
    %c2_642 = arith.constant 2 : index
    %c4_643 = arith.constant 4 : index
    %c0_644 = arith.constant 0 : index
    %575 = vector.load %arg11[%c2_642, %c4_643, %c0_644] : memref<14x7x16xf32, #tpu.memory_space<vmem>>, vector<1x1x16xf32>
    %576 = vector.shape_cast %575 : vector<1x1x16xf32> to vector<1x16xf32>
    %c2_645 = arith.constant 2 : index
    %c160_646 = arith.constant 160 : index
    %577 = vector.load %arg12[%c2_645, %c160_646] : memref<8x256xf32, #tpu.memory_space<vmem>>, vector<1x16xf32>
    tpu.vector_store %arg12[%c2_645, %c160_646], %576 {strides = array<i32>} : memref<8x256xf32, #tpu.memory_space<vmem>>, vector<1x16xf32>,
    %c2_647 = arith.constant 2 : index
    %c5_648 = arith.constant 5 : index
    %c0_649 = arith.constant 0 : index
    %578 = vector.load %arg11[%c2_647, %c5_648, %c0_649] : memref<14x7x16xf32, #tpu.memory_space<vmem>>, vector<1x1x16xf32>
    %579 = vector.shape_cast %578 : vector<1x1x16xf32> to vector<1x16xf32>
    %c2_650 = arith.constant 2 : index
    %c176_651 = arith.constant 176 : index
    %580 = vector.load %arg12[%c2_650, %c176_651] : memref<8x256xf32, #tpu.memory_space<vmem>>, vector<1x16xf32>
    tpu.vector_store %arg12[%c2_650, %c176_651], %579 {strides = array<i32>} : memref<8x256xf32, #tpu.memory_space<vmem>>, vector<1x16xf32>,
    %c3_652 = arith.constant 3 : index
    %c2_653 = arith.constant 2 : index
    %c0_654 = arith.constant 0 : index
    %581 = vector.load %arg11[%c3_652, %c2_653, %c0_654] : memref<14x7x16xf32, #tpu.memory_space<vmem>>, vector<1x1x16xf32>
    %582 = vector.shape_cast %581 : vector<1x1x16xf32> to vector<1x16xf32>
    %c2_655 = arith.constant 2 : index
    %c192_656 = arith.constant 192 : index
    %583 = vector.load %arg12[%c2_655, %c192_656] : memref<8x256xf32, #tpu.memory_space<vmem>>, vector<1x16xf32>
    tpu.vector_store %arg12[%c2_655, %c192_656], %582 {strides = array<i32>} : memref<8x256xf32, #tpu.memory_space<vmem>>, vector<1x16xf32>,
    %c3_657 = arith.constant 3 : index
    %c3_658 = arith.constant 3 : index
    %c0_659 = arith.constant 0 : index
    %584 = vector.load %arg11[%c3_657, %c3_658, %c0_659] : memref<14x7x16xf32, #tpu.memory_space<vmem>>, vector<1x1x16xf32>
    %585 = vector.shape_cast %584 : vector<1x1x16xf32> to vector<1x16xf32>
    %c2_660 = arith.constant 2 : index
    %c208_661 = arith.constant 208 : index
    %586 = vector.load %arg12[%c2_660, %c208_661] : memref<8x256xf32, #tpu.memory_space<vmem>>, vector<1x16xf32>
    tpu.vector_store %arg12[%c2_660, %c208_661], %585 {strides = array<i32>} : memref<8x256xf32, #tpu.memory_space<vmem>>, vector<1x16xf32>,
    %c3_662 = arith.constant 3 : index
    %c4_663 = arith.constant 4 : index
    %c0_664 = arith.constant 0 : index
    %587 = vector.load %arg11[%c3_662, %c4_663, %c0_664] : memref<14x7x16xf32, #tpu.memory_space<vmem>>, vector<1x1x16xf32>
    %588 = vector.shape_cast %587 : vector<1x1x16xf32> to vector<1x16xf32>
    %c2_665 = arith.constant 2 : index
    %c224_666 = arith.constant 224 : index
    %589 = vector.load %arg12[%c2_665, %c224_666] : memref<8x256xf32, #tpu.memory_space<vmem>>, vector<1x16xf32>
    tpu.vector_store %arg12[%c2_665, %c224_666], %588 {strides = array<i32>} : memref<8x256xf32, #tpu.memory_space<vmem>>, vector<1x16xf32>,
    %c3_667 = arith.constant 3 : index
    %c5_668 = arith.constant 5 : index
    %c0_669 = arith.constant 0 : index
    %590 = vector.load %arg11[%c3_667, %c5_668, %c0_669] : memref<14x7x16xf32, #tpu.memory_space<vmem>>, vector<1x1x16xf32>
    %591 = vector.shape_cast %590 : vector<1x1x16xf32> to vector<1x16xf32>
    %c2_670 = arith.constant 2 : index
    %c240_671 = arith.constant 240 : index
    %592 = vector.load %arg12[%c2_670, %c240_671] : memref<8x256xf32, #tpu.memory_space<vmem>>, vector<1x16xf32>
    tpu.vector_store %arg12[%c2_670, %c240_671], %591 {strides = array<i32>} : memref<8x256xf32, #tpu.memory_space<vmem>>, vector<1x16xf32>,
    %c7_672 = arith.constant 7 : index
    %c2_673 = arith.constant 2 : index
    %c0_674 = arith.constant 0 : index
    %593 = vector.load %arg11[%c7_672, %c2_673, %c0_674] : memref<14x7x16xf32, #tpu.memory_space<vmem>>, vector<1x1x16xf32>
    %594 = vector.shape_cast %593 : vector<1x1x16xf32> to vector<1x16xf32>
    %c3_675 = arith.constant 3 : index
    %c0_676 = arith.constant 0 : index
    %595 = vector.load %arg12[%c3_675, %c0_676] : memref<8x256xf32, #tpu.memory_space<vmem>>, vector<1x16xf32>
    tpu.vector_store %arg12[%c3_675, %c0_676], %594 {strides = array<i32>} : memref<8x256xf32, #tpu.memory_space<vmem>>, vector<1x16xf32>,
    %c7_677 = arith.constant 7 : index
    %c3_678 = arith.constant 3 : index
    %c0_679 = arith.constant 0 : index
    %596 = vector.load %arg11[%c7_677, %c3_678, %c0_679] : memref<14x7x16xf32, #tpu.memory_space<vmem>>, vector<1x1x16xf32>
    %597 = vector.shape_cast %596 : vector<1x1x16xf32> to vector<1x16xf32>
    %c3_680 = arith.constant 3 : index
    %c16_681 = arith.constant 16 : index
    %598 = vector.load %arg12[%c3_680, %c16_681] : memref<8x256xf32, #tpu.memory_space<vmem>>, vector<1x16xf32>
    tpu.vector_store %arg12[%c3_680, %c16_681], %597 {strides = array<i32>} : memref<8x256xf32, #tpu.memory_space<vmem>>, vector<1x16xf32>,
    %c7_682 = arith.constant 7 : index
    %c4_683 = arith.constant 4 : index
    %c0_684 = arith.constant 0 : index
    %599 = vector.load %arg11[%c7_682, %c4_683, %c0_684] : memref<14x7x16xf32, #tpu.memory_space<vmem>>, vector<1x1x16xf32>
    %600 = vector.shape_cast %599 : vector<1x1x16xf32> to vector<1x16xf32>
    %c3_685 = arith.constant 3 : index
    %c32_686 = arith.constant 32 : index
    %601 = vector.load %arg12[%c3_685, %c32_686] : memref<8x256xf32, #tpu.memory_space<vmem>>, vector<1x16xf32>
    tpu.vector_store %arg12[%c3_685, %c32_686], %600 {strides = array<i32>} : memref<8x256xf32, #tpu.memory_space<vmem>>, vector<1x16xf32>,
    %c7_687 = arith.constant 7 : index
    %c5_688 = arith.constant 5 : index
    %c0_689 = arith.constant 0 : index
    %602 = vector.load %arg11[%c7_687, %c5_688, %c0_689] : memref<14x7x16xf32, #tpu.memory_space<vmem>>, vector<1x1x16xf32>
    %603 = vector.shape_cast %602 : vector<1x1x16xf32> to vector<1x16xf32>
    %c3_690 = arith.constant 3 : index
    %c48_691 = arith.constant 48 : index
    %604 = vector.load %arg12[%c3_690, %c48_691] : memref<8x256xf32, #tpu.memory_space<vmem>>, vector<1x16xf32>
    tpu.vector_store %arg12[%c3_690, %c48_691], %603 {strides = array<i32>} : memref<8x256xf32, #tpu.memory_space<vmem>>, vector<1x16xf32>,
    %c8_692 = arith.constant 8 : index
    %c2_693 = arith.constant 2 : index
    %c0_694 = arith.constant 0 : index
    %605 = vector.load %arg11[%c8_692, %c2_693, %c0_694] : memref<14x7x16xf32, #tpu.memory_space<vmem>>, vector<1x1x16xf32>
    %606 = vector.shape_cast %605 : vector<1x1x16xf32> to vector<1x16xf32>
    %c3_695 = arith.constant 3 : index
    %c64_696 = arith.constant 64 : index
    %607 = vector.load %arg12[%c3_695, %c64_696] : memref<8x256xf32, #tpu.memory_space<vmem>>, vector<1x16xf32>
    tpu.vector_store %arg12[%c3_695, %c64_696], %606 {strides = array<i32>} : memref<8x256xf32, #tpu.memory_space<vmem>>, vector<1x16xf32>,
    %c8_697 = arith.constant 8 : index
    %c3_698 = arith.constant 3 : index
    %c0_699 = arith.constant 0 : index
    %608 = vector.load %arg11[%c8_697, %c3_698, %c0_699] : memref<14x7x16xf32, #tpu.memory_space<vmem>>, vector<1x1x16xf32>
    %609 = vector.shape_cast %608 : vector<1x1x16xf32> to vector<1x16xf32>
    %c3_700 = arith.constant 3 : index
    %c80_701 = arith.constant 80 : index
    %610 = vector.load %arg12[%c3_700, %c80_701] : memref<8x256xf32, #tpu.memory_space<vmem>>, vector<1x16xf32>
    tpu.vector_store %arg12[%c3_700, %c80_701], %609 {strides = array<i32>} : memref<8x256xf32, #tpu.memory_space<vmem>>, vector<1x16xf32>,
    %c8_702 = arith.constant 8 : index
    %c4_703 = arith.constant 4 : index
    %c0_704 = arith.constant 0 : index
    %611 = vector.load %arg11[%c8_702, %c4_703, %c0_704] : memref<14x7x16xf32, #tpu.memory_space<vmem>>, vector<1x1x16xf32>
    %612 = vector.shape_cast %611 : vector<1x1x16xf32> to vector<1x16xf32>
    %c3_705 = arith.constant 3 : index
    %c96_706 = arith.constant 96 : index
    %613 = vector.load %arg12[%c3_705, %c96_706] : memref<8x256xf32, #tpu.memory_space<vmem>>, vector<1x16xf32>
    tpu.vector_store %arg12[%c3_705, %c96_706], %612 {strides = array<i32>} : memref<8x256xf32, #tpu.memory_space<vmem>>, vector<1x16xf32>,
    %c8_707 = arith.constant 8 : index
    %c5_708 = arith.constant 5 : index
    %c0_709 = arith.constant 0 : index
    %614 = vector.load %arg11[%c8_707, %c5_708, %c0_709] : memref<14x7x16xf32, #tpu.memory_space<vmem>>, vector<1x1x16xf32>
    %615 = vector.shape_cast %614 : vector<1x1x16xf32> to vector<1x16xf32>
    %c3_710 = arith.constant 3 : index
    %c112_711 = arith.constant 112 : index
    %616 = vector.load %arg12[%c3_710, %c112_711] : memref<8x256xf32, #tpu.memory_space<vmem>>, vector<1x16xf32>
    tpu.vector_store %arg12[%c3_710, %c112_711], %615 {strides = array<i32>} : memref<8x256xf32, #tpu.memory_space<vmem>>, vector<1x16xf32>,
    %c9_712 = arith.constant 9 : index
    %c2_713 = arith.constant 2 : index
    %c0_714 = arith.constant 0 : index
    %617 = vector.load %arg11[%c9_712, %c2_713, %c0_714] : memref<14x7x16xf32, #tpu.memory_space<vmem>>, vector<1x1x16xf32>
    %618 = vector.shape_cast %617 : vector<1x1x16xf32> to vector<1x16xf32>
    %c3_715 = arith.constant 3 : index
    %c128_716 = arith.constant 128 : index
    %619 = vector.load %arg12[%c3_715, %c128_716] : memref<8x256xf32, #tpu.memory_space<vmem>>, vector<1x16xf32>
    tpu.vector_store %arg12[%c3_715, %c128_716], %618 {strides = array<i32>} : memref<8x256xf32, #tpu.memory_space<vmem>>, vector<1x16xf32>,
    %c9_717 = arith.constant 9 : index
    %c3_718 = arith.constant 3 : index
    %c0_719 = arith.constant 0 : index
    %620 = vector.load %arg11[%c9_717, %c3_718, %c0_719] : memref<14x7x16xf32, #tpu.memory_space<vmem>>, vector<1x1x16xf32>
    %621 = vector.shape_cast %620 : vector<1x1x16xf32> to vector<1x16xf32>
    %c3_720 = arith.constant 3 : index
    %c144_721 = arith.constant 144 : index
    %622 = vector.load %arg12[%c3_720, %c144_721] : memref<8x256xf32, #tpu.memory_space<vmem>>, vector<1x16xf32>
    tpu.vector_store %arg12[%c3_720, %c144_721], %621 {strides = array<i32>} : memref<8x256xf32, #tpu.memory_space<vmem>>, vector<1x16xf32>,
    %c9_722 = arith.constant 9 : index
    %c4_723 = arith.constant 4 : index
    %c0_724 = arith.constant 0 : index
    %623 = vector.load %arg11[%c9_722, %c4_723, %c0_724] : memref<14x7x16xf32, #tpu.memory_space<vmem>>, vector<1x1x16xf32>
    %624 = vector.shape_cast %623 : vector<1x1x16xf32> to vector<1x16xf32>
    %c3_725 = arith.constant 3 : index
    %c160_726 = arith.constant 160 : index
    %625 = vector.load %arg12[%c3_725, %c160_726] : memref<8x256xf32, #tpu.memory_space<vmem>>, vector<1x16xf32>
    tpu.vector_store %arg12[%c3_725, %c160_726], %624 {strides = array<i32>} : memref<8x256xf32, #tpu.memory_space<vmem>>, vector<1x16xf32>,
    %c9_727 = arith.constant 9 : index
    %c5_728 = arith.constant 5 : index
    %c0_729 = arith.constant 0 : index
    %626 = vector.load %arg11[%c9_727, %c5_728, %c0_729] : memref<14x7x16xf32, #tpu.memory_space<vmem>>, vector<1x1x16xf32>
    %627 = vector.shape_cast %626 : vector<1x1x16xf32> to vector<1x16xf32>
    %c3_730 = arith.constant 3 : index
    %c176_731 = arith.constant 176 : index
    %628 = vector.load %arg12[%c3_730, %c176_731] : memref<8x256xf32, #tpu.memory_space<vmem>>, vector<1x16xf32>
    tpu.vector_store %arg12[%c3_730, %c176_731], %627 {strides = array<i32>} : memref<8x256xf32, #tpu.memory_space<vmem>>, vector<1x16xf32>,
    %c10_732 = arith.constant 10 : index
    %c2_733 = arith.constant 2 : index
    %c0_734 = arith.constant 0 : index
    %629 = vector.load %arg11[%c10_732, %c2_733, %c0_734] : memref<14x7x16xf32, #tpu.memory_space<vmem>>, vector<1x1x16xf32>
    %630 = vector.shape_cast %629 : vector<1x1x16xf32> to vector<1x16xf32>
    %c3_735 = arith.constant 3 : index
    %c192_736 = arith.constant 192 : index
    %631 = vector.load %arg12[%c3_735, %c192_736] : memref<8x256xf32, #tpu.memory_space<vmem>>, vector<1x16xf32>
    tpu.vector_store %arg12[%c3_735, %c192_736], %630 {strides = array<i32>} : memref<8x256xf32, #tpu.memory_space<vmem>>, vector<1x16xf32>,
    %c10_737 = arith.constant 10 : index
    %c3_738 = arith.constant 3 : index
    %c0_739 = arith.constant 0 : index
    %632 = vector.load %arg11[%c10_737, %c3_738, %c0_739] : memref<14x7x16xf32, #tpu.memory_space<vmem>>, vector<1x1x16xf32>
    %633 = vector.shape_cast %632 : vector<1x1x16xf32> to vector<1x16xf32>
    %c3_740 = arith.constant 3 : index
    %c208_741 = arith.constant 208 : index
    %634 = vector.load %arg12[%c3_740, %c208_741] : memref<8x256xf32, #tpu.memory_space<vmem>>, vector<1x16xf32>
    tpu.vector_store %arg12[%c3_740, %c208_741], %633 {strides = array<i32>} : memref<8x256xf32, #tpu.memory_space<vmem>>, vector<1x16xf32>,
    %c10_742 = arith.constant 10 : index
    %c4_743 = arith.constant 4 : index
    %c0_744 = arith.constant 0 : index
    %635 = vector.load %arg11[%c10_742, %c4_743, %c0_744] : memref<14x7x16xf32, #tpu.memory_space<vmem>>, vector<1x1x16xf32>
    %636 = vector.shape_cast %635 : vector<1x1x16xf32> to vector<1x16xf32>
    %c3_745 = arith.constant 3 : index
    %c224_746 = arith.constant 224 : index
    %637 = vector.load %arg12[%c3_745, %c224_746] : memref<8x256xf32, #tpu.memory_space<vmem>>, vector<1x16xf32>
    tpu.vector_store %arg12[%c3_745, %c224_746], %636 {strides = array<i32>} : memref<8x256xf32, #tpu.memory_space<vmem>>, vector<1x16xf32>,
    %c10_747 = arith.constant 10 : index
    %c5_748 = arith.constant 5 : index
    %c0_749 = arith.constant 0 : index
    %638 = vector.load %arg11[%c10_747, %c5_748, %c0_749] : memref<14x7x16xf32, #tpu.memory_space<vmem>>, vector<1x1x16xf32>
    %639 = vector.shape_cast %638 : vector<1x1x16xf32> to vector<1x16xf32>
    %c3_750 = arith.constant 3 : index
    %c240_751 = arith.constant 240 : index
    %640 = vector.load %arg12[%c3_750, %c240_751] : memref<8x256xf32, #tpu.memory_space<vmem>>, vector<1x16xf32>
    tpu.vector_store %arg12[%c3_750, %c240_751], %639 {strides = array<i32>} : memref<8x256xf32, #tpu.memory_space<vmem>>, vector<1x16xf32>,
    %c2_752 = arith.constant 2 : index
    %c0_753 = arith.constant 0 : index
    %c0_754 = arith.constant 0 : index
    %641 = vector.load %arg11[%c2_752, %c0_753, %c0_754] : memref<14x7x16xf32, #tpu.memory_space<vmem>>, vector<1x1x16xf32>
    %642 = vector.shape_cast %641 : vector<1x1x16xf32> to vector<1x16xf32>
    %c4_755 = arith.constant 4 : index
    %c0_756 = arith.constant 0 : index
    %643 = vector.load %arg12[%c4_755, %c0_756] : memref<8x256xf32, #tpu.memory_space<vmem>>, vector<1x16xf32>
    tpu.vector_store %arg12[%c4_755, %c0_756], %642 {strides = array<i32>} : memref<8x256xf32, #tpu.memory_space<vmem>>, vector<1x16xf32>,
    %c2_757 = arith.constant 2 : index
    %c1_758 = arith.constant 1 : index
    %c0_759 = arith.constant 0 : index
    %644 = vector.load %arg11[%c2_757, %c1_758, %c0_759] : memref<14x7x16xf32, #tpu.memory_space<vmem>>, vector<1x1x16xf32>
    %645 = vector.shape_cast %644 : vector<1x1x16xf32> to vector<1x16xf32>
    %c4_760 = arith.constant 4 : index
    %c16_761 = arith.constant 16 : index
    %646 = vector.load %arg12[%c4_760, %c16_761] : memref<8x256xf32, #tpu.memory_space<vmem>>, vector<1x16xf32>
    tpu.vector_store %arg12[%c4_760, %c16_761], %645 {strides = array<i32>} : memref<8x256xf32, #tpu.memory_space<vmem>>, vector<1x16xf32>,
    %c2_762 = arith.constant 2 : index
    %c2_763 = arith.constant 2 : index
    %c0_764 = arith.constant 0 : index
    %647 = vector.load %arg11[%c2_762, %c2_763, %c0_764] : memref<14x7x16xf32, #tpu.memory_space<vmem>>, vector<1x1x16xf32>
    %648 = vector.shape_cast %647 : vector<1x1x16xf32> to vector<1x16xf32>
    %c4_765 = arith.constant 4 : index
    %c32_766 = arith.constant 32 : index
    %649 = vector.load %arg12[%c4_765, %c32_766] : memref<8x256xf32, #tpu.memory_space<vmem>>, vector<1x16xf32>
    tpu.vector_store %arg12[%c4_765, %c32_766], %648 {strides = array<i32>} : memref<8x256xf32, #tpu.memory_space<vmem>>, vector<1x16xf32>,
    %c2_767 = arith.constant 2 : index
    %c3_768 = arith.constant 3 : index
    %c0_769 = arith.constant 0 : index
    %650 = vector.load %arg11[%c2_767, %c3_768, %c0_769] : memref<14x7x16xf32, #tpu.memory_space<vmem>>, vector<1x1x16xf32>
    %651 = vector.shape_cast %650 : vector<1x1x16xf32> to vector<1x16xf32>
    %c4_770 = arith.constant 4 : index
    %c48_771 = arith.constant 48 : index
    %652 = vector.load %arg12[%c4_770, %c48_771] : memref<8x256xf32, #tpu.memory_space<vmem>>, vector<1x16xf32>
    tpu.vector_store %arg12[%c4_770, %c48_771], %651 {strides = array<i32>} : memref<8x256xf32, #tpu.memory_space<vmem>>, vector<1x16xf32>,
    %c3_772 = arith.constant 3 : index
    %c0_773 = arith.constant 0 : index
    %c0_774 = arith.constant 0 : index
    %653 = vector.load %arg11[%c3_772, %c0_773, %c0_774] : memref<14x7x16xf32, #tpu.memory_space<vmem>>, vector<1x1x16xf32>
    %654 = vector.shape_cast %653 : vector<1x1x16xf32> to vector<1x16xf32>
    %c4_775 = arith.constant 4 : index
    %c64_776 = arith.constant 64 : index
    %655 = vector.load %arg12[%c4_775, %c64_776] : memref<8x256xf32, #tpu.memory_space<vmem>>, vector<1x16xf32>
    tpu.vector_store %arg12[%c4_775, %c64_776], %654 {strides = array<i32>} : memref<8x256xf32, #tpu.memory_space<vmem>>, vector<1x16xf32>,
    %c3_777 = arith.constant 3 : index
    %c1_778 = arith.constant 1 : index
    %c0_779 = arith.constant 0 : index
    %656 = vector.load %arg11[%c3_777, %c1_778, %c0_779] : memref<14x7x16xf32, #tpu.memory_space<vmem>>, vector<1x1x16xf32>
    %657 = vector.shape_cast %656 : vector<1x1x16xf32> to vector<1x16xf32>
    %c4_780 = arith.constant 4 : index
    %c80_781 = arith.constant 80 : index
    %658 = vector.load %arg12[%c4_780, %c80_781] : memref<8x256xf32, #tpu.memory_space<vmem>>, vector<1x16xf32>
    tpu.vector_store %arg12[%c4_780, %c80_781], %657 {strides = array<i32>} : memref<8x256xf32, #tpu.memory_space<vmem>>, vector<1x16xf32>,
    %c3_782 = arith.constant 3 : index
    %c2_783 = arith.constant 2 : index
    %c0_784 = arith.constant 0 : index
    %659 = vector.load %arg11[%c3_782, %c2_783, %c0_784] : memref<14x7x16xf32, #tpu.memory_space<vmem>>, vector<1x1x16xf32>
    %660 = vector.shape_cast %659 : vector<1x1x16xf32> to vector<1x16xf32>
    %c4_785 = arith.constant 4 : index
    %c96_786 = arith.constant 96 : index
    %661 = vector.load %arg12[%c4_785, %c96_786] : memref<8x256xf32, #tpu.memory_space<vmem>>, vector<1x16xf32>
    tpu.vector_store %arg12[%c4_785, %c96_786], %660 {strides = array<i32>} : memref<8x256xf32, #tpu.memory_space<vmem>>, vector<1x16xf32>,
    %c3_787 = arith.constant 3 : index
    %c3_788 = arith.constant 3 : index
    %c0_789 = arith.constant 0 : index
    %662 = vector.load %arg11[%c3_787, %c3_788, %c0_789] : memref<14x7x16xf32, #tpu.memory_space<vmem>>, vector<1x1x16xf32>
    %663 = vector.shape_cast %662 : vector<1x1x16xf32> to vector<1x16xf32>
    %c4_790 = arith.constant 4 : index
    %c112_791 = arith.constant 112 : index
    %664 = vector.load %arg12[%c4_790, %c112_791] : memref<8x256xf32, #tpu.memory_space<vmem>>, vector<1x16xf32>
    tpu.vector_store %arg12[%c4_790, %c112_791], %663 {strides = array<i32>} : memref<8x256xf32, #tpu.memory_space<vmem>>, vector<1x16xf32>,
    %c4_792 = arith.constant 4 : index
    %c0_793 = arith.constant 0 : index
    %c0_794 = arith.constant 0 : index
    %665 = vector.load %arg11[%c4_792, %c0_793, %c0_794] : memref<14x7x16xf32, #tpu.memory_space<vmem>>, vector<1x1x16xf32>
    %666 = vector.shape_cast %665 : vector<1x1x16xf32> to vector<1x16xf32>
    %c4_795 = arith.constant 4 : index
    %c128_796 = arith.constant 128 : index
    %667 = vector.load %arg12[%c4_795, %c128_796] : memref<8x256xf32, #tpu.memory_space<vmem>>, vector<1x16xf32>
    tpu.vector_store %arg12[%c4_795, %c128_796], %666 {strides = array<i32>} : memref<8x256xf32, #tpu.memory_space<vmem>>, vector<1x16xf32>,
    %c4_797 = arith.constant 4 : index
    %c1_798 = arith.constant 1 : index
    %c0_799 = arith.constant 0 : index
    %668 = vector.load %arg11[%c4_797, %c1_798, %c0_799] : memref<14x7x16xf32, #tpu.memory_space<vmem>>, vector<1x1x16xf32>
    %669 = vector.shape_cast %668 : vector<1x1x16xf32> to vector<1x16xf32>
    %c4_800 = arith.constant 4 : index
    %c144_801 = arith.constant 144 : index
    %670 = vector.load %arg12[%c4_800, %c144_801] : memref<8x256xf32, #tpu.memory_space<vmem>>, vector<1x16xf32>
    tpu.vector_store %arg12[%c4_800, %c144_801], %669 {strides = array<i32>} : memref<8x256xf32, #tpu.memory_space<vmem>>, vector<1x16xf32>,
    %c4_802 = arith.constant 4 : index
    %c2_803 = arith.constant 2 : index
    %c0_804 = arith.constant 0 : index
    %671 = vector.load %arg11[%c4_802, %c2_803, %c0_804] : memref<14x7x16xf32, #tpu.memory_space<vmem>>, vector<1x1x16xf32>
    %672 = vector.shape_cast %671 : vector<1x1x16xf32> to vector<1x16xf32>
    %c4_805 = arith.constant 4 : index
    %c160_806 = arith.constant 160 : index
    %673 = vector.load %arg12[%c4_805, %c160_806] : memref<8x256xf32, #tpu.memory_space<vmem>>, vector<1x16xf32>
    tpu.vector_store %arg12[%c4_805, %c160_806], %672 {strides = array<i32>} : memref<8x256xf32, #tpu.memory_space<vmem>>, vector<1x16xf32>,
    %c4_807 = arith.constant 4 : index
    %c3_808 = arith.constant 3 : index
    %c0_809 = arith.constant 0 : index
    %674 = vector.load %arg11[%c4_807, %c3_808, %c0_809] : memref<14x7x16xf32, #tpu.memory_space<vmem>>, vector<1x1x16xf32>
    %675 = vector.shape_cast %674 : vector<1x1x16xf32> to vector<1x16xf32>
    %c4_810 = arith.constant 4 : index
    %c176_811 = arith.constant 176 : index
    %676 = vector.load %arg12[%c4_810, %c176_811] : memref<8x256xf32, #tpu.memory_space<vmem>>, vector<1x16xf32>
    tpu.vector_store %arg12[%c4_810, %c176_811], %675 {strides = array<i32>} : memref<8x256xf32, #tpu.memory_space<vmem>>, vector<1x16xf32>,
    %c5_812 = arith.constant 5 : index
    %c0_813 = arith.constant 0 : index
    %c0_814 = arith.constant 0 : index
    %677 = vector.load %arg11[%c5_812, %c0_813, %c0_814] : memref<14x7x16xf32, #tpu.memory_space<vmem>>, vector<1x1x16xf32>
    %678 = vector.shape_cast %677 : vector<1x1x16xf32> to vector<1x16xf32>
    %c4_815 = arith.constant 4 : index
    %c192_816 = arith.constant 192 : index
    %679 = vector.load %arg12[%c4_815, %c192_816] : memref<8x256xf32, #tpu.memory_space<vmem>>, vector<1x16xf32>
    tpu.vector_store %arg12[%c4_815, %c192_816], %678 {strides = array<i32>} : memref<8x256xf32, #tpu.memory_space<vmem>>, vector<1x16xf32>,
    %c5_817 = arith.constant 5 : index
    %c1_818 = arith.constant 1 : index
    %c0_819 = arith.constant 0 : index
    %680 = vector.load %arg11[%c5_817, %c1_818, %c0_819] : memref<14x7x16xf32, #tpu.memory_space<vmem>>, vector<1x1x16xf32>
    %681 = vector.shape_cast %680 : vector<1x1x16xf32> to vector<1x16xf32>
    %c4_820 = arith.constant 4 : index
    %c208_821 = arith.constant 208 : index
    %682 = vector.load %arg12[%c4_820, %c208_821] : memref<8x256xf32, #tpu.memory_space<vmem>>, vector<1x16xf32>
    tpu.vector_store %arg12[%c4_820, %c208_821], %681 {strides = array<i32>} : memref<8x256xf32, #tpu.memory_space<vmem>>, vector<1x16xf32>,
    %c5_822 = arith.constant 5 : index
    %c2_823 = arith.constant 2 : index
    %c0_824 = arith.constant 0 : index
    %683 = vector.load %arg11[%c5_822, %c2_823, %c0_824] : memref<14x7x16xf32, #tpu.memory_space<vmem>>, vector<1x1x16xf32>
    %684 = vector.shape_cast %683 : vector<1x1x16xf32> to vector<1x16xf32>
    %c4_825 = arith.constant 4 : index
    %c224_826 = arith.constant 224 : index
    %685 = vector.load %arg12[%c4_825, %c224_826] : memref<8x256xf32, #tpu.memory_space<vmem>>, vector<1x16xf32>
    tpu.vector_store %arg12[%c4_825, %c224_826], %684 {strides = array<i32>} : memref<8x256xf32, #tpu.memory_space<vmem>>, vector<1x16xf32>,
    %c5_827 = arith.constant 5 : index
    %c3_828 = arith.constant 3 : index
    %c0_829 = arith.constant 0 : index
    %686 = vector.load %arg11[%c5_827, %c3_828, %c0_829] : memref<14x7x16xf32, #tpu.memory_space<vmem>>, vector<1x1x16xf32>
    %687 = vector.shape_cast %686 : vector<1x1x16xf32> to vector<1x16xf32>
    %c4_830 = arith.constant 4 : index
    %c240_831 = arith.constant 240 : index
    %688 = vector.load %arg12[%c4_830, %c240_831] : memref<8x256xf32, #tpu.memory_space<vmem>>, vector<1x16xf32>
    tpu.vector_store %arg12[%c4_830, %c240_831], %687 {strides = array<i32>} : memref<8x256xf32, #tpu.memory_space<vmem>>, vector<1x16xf32>,
    %c9_832 = arith.constant 9 : index
    %c0_833 = arith.constant 0 : index
    %c0_834 = arith.constant 0 : index
    %689 = vector.load %arg11[%c9_832, %c0_833, %c0_834] : memref<14x7x16xf32, #tpu.memory_space<vmem>>, vector<1x1x16xf32>
    %690 = vector.shape_cast %689 : vector<1x1x16xf32> to vector<1x16xf32>
    %c5_835 = arith.constant 5 : index
    %c0_836 = arith.constant 0 : index
    %691 = vector.load %arg12[%c5_835, %c0_836] : memref<8x256xf32, #tpu.memory_space<vmem>>, vector<1x16xf32>
    tpu.vector_store %arg12[%c5_835, %c0_836], %690 {strides = array<i32>} : memref<8x256xf32, #tpu.memory_space<vmem>>, vector<1x16xf32>,
    %c9_837 = arith.constant 9 : index
    %c1_838 = arith.constant 1 : index
    %c0_839 = arith.constant 0 : index
    %692 = vector.load %arg11[%c9_837, %c1_838, %c0_839] : memref<14x7x16xf32, #tpu.memory_space<vmem>>, vector<1x1x16xf32>
    %693 = vector.shape_cast %692 : vector<1x1x16xf32> to vector<1x16xf32>
    %c5_840 = arith.constant 5 : index
    %c16_841 = arith.constant 16 : index
    %694 = vector.load %arg12[%c5_840, %c16_841] : memref<8x256xf32, #tpu.memory_space<vmem>>, vector<1x16xf32>
    tpu.vector_store %arg12[%c5_840, %c16_841], %693 {strides = array<i32>} : memref<8x256xf32, #tpu.memory_space<vmem>>, vector<1x16xf32>,
    %c9_842 = arith.constant 9 : index
    %c2_843 = arith.constant 2 : index
    %c0_844 = arith.constant 0 : index
    %695 = vector.load %arg11[%c9_842, %c2_843, %c0_844] : memref<14x7x16xf32, #tpu.memory_space<vmem>>, vector<1x1x16xf32>
    %696 = vector.shape_cast %695 : vector<1x1x16xf32> to vector<1x16xf32>
    %c5_845 = arith.constant 5 : index
    %c32_846 = arith.constant 32 : index
    %697 = vector.load %arg12[%c5_845, %c32_846] : memref<8x256xf32, #tpu.memory_space<vmem>>, vector<1x16xf32>
    tpu.vector_store %arg12[%c5_845, %c32_846], %696 {strides = array<i32>} : memref<8x256xf32, #tpu.memory_space<vmem>>, vector<1x16xf32>,
    %c9_847 = arith.constant 9 : index
    %c3_848 = arith.constant 3 : index
    %c0_849 = arith.constant 0 : index
    %698 = vector.load %arg11[%c9_847, %c3_848, %c0_849] : memref<14x7x16xf32, #tpu.memory_space<vmem>>, vector<1x1x16xf32>
    %699 = vector.shape_cast %698 : vector<1x1x16xf32> to vector<1x16xf32>
    %c5_850 = arith.constant 5 : index
    %c48_851 = arith.constant 48 : index
    %700 = vector.load %arg12[%c5_850, %c48_851] : memref<8x256xf32, #tpu.memory_space<vmem>>, vector<1x16xf32>
    tpu.vector_store %arg12[%c5_850, %c48_851], %699 {strides = array<i32>} : memref<8x256xf32, #tpu.memory_space<vmem>>, vector<1x16xf32>,
    %c10_852 = arith.constant 10 : index
    %c0_853 = arith.constant 0 : index
    %c0_854 = arith.constant 0 : index
    %701 = vector.load %arg11[%c10_852, %c0_853, %c0_854] : memref<14x7x16xf32, #tpu.memory_space<vmem>>, vector<1x1x16xf32>
    %702 = vector.shape_cast %701 : vector<1x1x16xf32> to vector<1x16xf32>
    %c5_855 = arith.constant 5 : index
    %c64_856 = arith.constant 64 : index
    %703 = vector.load %arg12[%c5_855, %c64_856] : memref<8x256xf32, #tpu.memory_space<vmem>>, vector<1x16xf32>
    tpu.vector_store %arg12[%c5_855, %c64_856], %702 {strides = array<i32>} : memref<8x256xf32, #tpu.memory_space<vmem>>, vector<1x16xf32>,
    %c10_857 = arith.constant 10 : index
    %c1_858 = arith.constant 1 : index
    %c0_859 = arith.constant 0 : index
    %704 = vector.load %arg11[%c10_857, %c1_858, %c0_859] : memref<14x7x16xf32, #tpu.memory_space<vmem>>, vector<1x1x16xf32>
    %705 = vector.shape_cast %704 : vector<1x1x16xf32> to vector<1x16xf32>
    %c5_860 = arith.constant 5 : index
    %c80_861 = arith.constant 80 : index
    %706 = vector.load %arg12[%c5_860, %c80_861] : memref<8x256xf32, #tpu.memory_space<vmem>>, vector<1x16xf32>
    tpu.vector_store %arg12[%c5_860, %c80_861], %705 {strides = array<i32>} : memref<8x256xf32, #tpu.memory_space<vmem>>, vector<1x16xf32>,
    %c10_862 = arith.constant 10 : index
    %c2_863 = arith.constant 2 : index
    %c0_864 = arith.constant 0 : index
    %707 = vector.load %arg11[%c10_862, %c2_863, %c0_864] : memref<14x7x16xf32, #tpu.memory_space<vmem>>, vector<1x1x16xf32>
    %708 = vector.shape_cast %707 : vector<1x1x16xf32> to vector<1x16xf32>
    %c5_865 = arith.constant 5 : index
    %c96_866 = arith.constant 96 : index
    %709 = vector.load %arg12[%c5_865, %c96_866] : memref<8x256xf32, #tpu.memory_space<vmem>>, vector<1x16xf32>
    tpu.vector_store %arg12[%c5_865, %c96_866], %708 {strides = array<i32>} : memref<8x256xf32, #tpu.memory_space<vmem>>, vector<1x16xf32>,
    %c10_867 = arith.constant 10 : index
    %c3_868 = arith.constant 3 : index
    %c0_869 = arith.constant 0 : index
    %710 = vector.load %arg11[%c10_867, %c3_868, %c0_869] : memref<14x7x16xf32, #tpu.memory_space<vmem>>, vector<1x1x16xf32>
    %711 = vector.shape_cast %710 : vector<1x1x16xf32> to vector<1x16xf32>
    %c5_870 = arith.constant 5 : index
    %c112_871 = arith.constant 112 : index
    %712 = vector.load %arg12[%c5_870, %c112_871] : memref<8x256xf32, #tpu.memory_space<vmem>>, vector<1x16xf32>
    tpu.vector_store %arg12[%c5_870, %c112_871], %711 {strides = array<i32>} : memref<8x256xf32, #tpu.memory_space<vmem>>, vector<1x16xf32>,
    %c11_872 = arith.constant 11 : index
    %c0_873 = arith.constant 0 : index
    %c0_874 = arith.constant 0 : index
    %713 = vector.load %arg11[%c11_872, %c0_873, %c0_874] : memref<14x7x16xf32, #tpu.memory_space<vmem>>, vector<1x1x16xf32>
    %714 = vector.shape_cast %713 : vector<1x1x16xf32> to vector<1x16xf32>
    %c5_875 = arith.constant 5 : index
    %c128_876 = arith.constant 128 : index
    %715 = vector.load %arg12[%c5_875, %c128_876] : memref<8x256xf32, #tpu.memory_space<vmem>>, vector<1x16xf32>
    tpu.vector_store %arg12[%c5_875, %c128_876], %714 {strides = array<i32>} : memref<8x256xf32, #tpu.memory_space<vmem>>, vector<1x16xf32>,
    %c11_877 = arith.constant 11 : index
    %c1_878 = arith.constant 1 : index
    %c0_879 = arith.constant 0 : index
    %716 = vector.load %arg11[%c11_877, %c1_878, %c0_879] : memref<14x7x16xf32, #tpu.memory_space<vmem>>, vector<1x1x16xf32>
    %717 = vector.shape_cast %716 : vector<1x1x16xf32> to vector<1x16xf32>
    %c5_880 = arith.constant 5 : index
    %c144_881 = arith.constant 144 : index
    %718 = vector.load %arg12[%c5_880, %c144_881] : memref<8x256xf32, #tpu.memory_space<vmem>>, vector<1x16xf32>
    tpu.vector_store %arg12[%c5_880, %c144_881], %717 {strides = array<i32>} : memref<8x256xf32, #tpu.memory_space<vmem>>, vector<1x16xf32>,
    %c11_882 = arith.constant 11 : index
    %c2_883 = arith.constant 2 : index
    %c0_884 = arith.constant 0 : index
    %719 = vector.load %arg11[%c11_882, %c2_883, %c0_884] : memref<14x7x16xf32, #tpu.memory_space<vmem>>, vector<1x1x16xf32>
    %720 = vector.shape_cast %719 : vector<1x1x16xf32> to vector<1x16xf32>
    %c5_885 = arith.constant 5 : index
    %c160_886 = arith.constant 160 : index
    %721 = vector.load %arg12[%c5_885, %c160_886] : memref<8x256xf32, #tpu.memory_space<vmem>>, vector<1x16xf32>
    tpu.vector_store %arg12[%c5_885, %c160_886], %720 {strides = array<i32>} : memref<8x256xf32, #tpu.memory_space<vmem>>, vector<1x16xf32>,
    %c11_887 = arith.constant 11 : index
    %c3_888 = arith.constant 3 : index
    %c0_889 = arith.constant 0 : index
    %722 = vector.load %arg11[%c11_887, %c3_888, %c0_889] : memref<14x7x16xf32, #tpu.memory_space<vmem>>, vector<1x1x16xf32>
    %723 = vector.shape_cast %722 : vector<1x1x16xf32> to vector<1x16xf32>
    %c5_890 = arith.constant 5 : index
    %c176_891 = arith.constant 176 : index
    %724 = vector.load %arg12[%c5_890, %c176_891] : memref<8x256xf32, #tpu.memory_space<vmem>>, vector<1x16xf32>
    tpu.vector_store %arg12[%c5_890, %c176_891], %723 {strides = array<i32>} : memref<8x256xf32, #tpu.memory_space<vmem>>, vector<1x16xf32>,
    %c12_892 = arith.constant 12 : index
    %c0_893 = arith.constant 0 : index
    %c0_894 = arith.constant 0 : index
    %725 = vector.load %arg11[%c12_892, %c0_893, %c0_894] : memref<14x7x16xf32, #tpu.memory_space<vmem>>, vector<1x1x16xf32>
    %726 = vector.shape_cast %725 : vector<1x1x16xf32> to vector<1x16xf32>
    %c5_895 = arith.constant 5 : index
    %c192_896 = arith.constant 192 : index
    %727 = vector.load %arg12[%c5_895, %c192_896] : memref<8x256xf32, #tpu.memory_space<vmem>>, vector<1x16xf32>
    tpu.vector_store %arg12[%c5_895, %c192_896], %726 {strides = array<i32>} : memref<8x256xf32, #tpu.memory_space<vmem>>, vector<1x16xf32>,
    %c12_897 = arith.constant 12 : index
    %c1_898 = arith.constant 1 : index
    %c0_899 = arith.constant 0 : index
    %728 = vector.load %arg11[%c12_897, %c1_898, %c0_899] : memref<14x7x16xf32, #tpu.memory_space<vmem>>, vector<1x1x16xf32>
    %729 = vector.shape_cast %728 : vector<1x1x16xf32> to vector<1x16xf32>
    %c5_900 = arith.constant 5 : index
    %c208_901 = arith.constant 208 : index
    %730 = vector.load %arg12[%c5_900, %c208_901] : memref<8x256xf32, #tpu.memory_space<vmem>>, vector<1x16xf32>
    tpu.vector_store %arg12[%c5_900, %c208_901], %729 {strides = array<i32>} : memref<8x256xf32, #tpu.memory_space<vmem>>, vector<1x16xf32>,
    %c12_902 = arith.constant 12 : index
    %c2_903 = arith.constant 2 : index
    %c0_904 = arith.constant 0 : index
    %731 = vector.load %arg11[%c12_902, %c2_903, %c0_904] : memref<14x7x16xf32, #tpu.memory_space<vmem>>, vector<1x1x16xf32>
    %732 = vector.shape_cast %731 : vector<1x1x16xf32> to vector<1x16xf32>
    %c5_905 = arith.constant 5 : index
    %c224_906 = arith.constant 224 : index
    %733 = vector.load %arg12[%c5_905, %c224_906] : memref<8x256xf32, #tpu.memory_space<vmem>>, vector<1x16xf32>
    tpu.vector_store %arg12[%c5_905, %c224_906], %732 {strides = array<i32>} : memref<8x256xf32, #tpu.memory_space<vmem>>, vector<1x16xf32>,
    %c12_907 = arith.constant 12 : index
    %c3_908 = arith.constant 3 : index
    %c0_909 = arith.constant 0 : index
    %734 = vector.load %arg11[%c12_907, %c3_908, %c0_909] : memref<14x7x16xf32, #tpu.memory_space<vmem>>, vector<1x1x16xf32>
    %735 = vector.shape_cast %734 : vector<1x1x16xf32> to vector<1x16xf32>
    %c5_910 = arith.constant 5 : index
    %c240_911 = arith.constant 240 : index
    %736 = vector.load %arg12[%c5_910, %c240_911] : memref<8x256xf32, #tpu.memory_space<vmem>>, vector<1x16xf32>
    tpu.vector_store %arg12[%c5_910, %c240_911], %735 {strides = array<i32>} : memref<8x256xf32, #tpu.memory_space<vmem>>, vector<1x16xf32>,
    %c2_912 = arith.constant 2 : index
    %c2_913 = arith.constant 2 : index
    %c0_914 = arith.constant 0 : index
    %737 = vector.load %arg11[%c2_912, %c2_913, %c0_914] : memref<14x7x16xf32, #tpu.memory_space<vmem>>, vector<1x1x16xf32>
    %738 = vector.shape_cast %737 : vector<1x1x16xf32> to vector<1x16xf32>
    %c6_915 = arith.constant 6 : index
    %c0_916 = arith.constant 0 : index
    %739 = vector.load %arg12[%c6_915, %c0_916] : memref<8x256xf32, #tpu.memory_space<vmem>>, vector<1x16xf32>
    tpu.vector_store %arg12[%c6_915, %c0_916], %738 {strides = array<i32>} : memref<8x256xf32, #tpu.memory_space<vmem>>, vector<1x16xf32>,
    %c2_917 = arith.constant 2 : index
    %c3_918 = arith.constant 3 : index
    %c0_919 = arith.constant 0 : index
    %740 = vector.load %arg11[%c2_917, %c3_918, %c0_919] : memref<14x7x16xf32, #tpu.memory_space<vmem>>, vector<1x1x16xf32>
    %741 = vector.shape_cast %740 : vector<1x1x16xf32> to vector<1x16xf32>
    %c6_920 = arith.constant 6 : index
    %c16_921 = arith.constant 16 : index
    %742 = vector.load %arg12[%c6_920, %c16_921] : memref<8x256xf32, #tpu.memory_space<vmem>>, vector<1x16xf32>
    tpu.vector_store %arg12[%c6_920, %c16_921], %741 {strides = array<i32>} : memref<8x256xf32, #tpu.memory_space<vmem>>, vector<1x16xf32>,
    %c2_922 = arith.constant 2 : index
    %c4_923 = arith.constant 4 : index
    %c0_924 = arith.constant 0 : index
    %743 = vector.load %arg11[%c2_922, %c4_923, %c0_924] : memref<14x7x16xf32, #tpu.memory_space<vmem>>, vector<1x1x16xf32>
    %744 = vector.shape_cast %743 : vector<1x1x16xf32> to vector<1x16xf32>
    %c6_925 = arith.constant 6 : index
    %c32_926 = arith.constant 32 : index
    %745 = vector.load %arg12[%c6_925, %c32_926] : memref<8x256xf32, #tpu.memory_space<vmem>>, vector<1x16xf32>
    tpu.vector_store %arg12[%c6_925, %c32_926], %744 {strides = array<i32>} : memref<8x256xf32, #tpu.memory_space<vmem>>, vector<1x16xf32>,
    %c2_927 = arith.constant 2 : index
    %c5_928 = arith.constant 5 : index
    %c0_929 = arith.constant 0 : index
    %746 = vector.load %arg11[%c2_927, %c5_928, %c0_929] : memref<14x7x16xf32, #tpu.memory_space<vmem>>, vector<1x1x16xf32>
    %747 = vector.shape_cast %746 : vector<1x1x16xf32> to vector<1x16xf32>
    %c6_930 = arith.constant 6 : index
    %c48_931 = arith.constant 48 : index
    %748 = vector.load %arg12[%c6_930, %c48_931] : memref<8x256xf32, #tpu.memory_space<vmem>>, vector<1x16xf32>
    tpu.vector_store %arg12[%c6_930, %c48_931], %747 {strides = array<i32>} : memref<8x256xf32, #tpu.memory_space<vmem>>, vector<1x16xf32>,
    %c3_932 = arith.constant 3 : index
    %c2_933 = arith.constant 2 : index
    %c0_934 = arith.constant 0 : index
    %749 = vector.load %arg11[%c3_932, %c2_933, %c0_934] : memref<14x7x16xf32, #tpu.memory_space<vmem>>, vector<1x1x16xf32>
    %750 = vector.shape_cast %749 : vector<1x1x16xf32> to vector<1x16xf32>
    %c6_935 = arith.constant 6 : index
    %c64_936 = arith.constant 64 : index
    %751 = vector.load %arg12[%c6_935, %c64_936] : memref<8x256xf32, #tpu.memory_space<vmem>>, vector<1x16xf32>
    tpu.vector_store %arg12[%c6_935, %c64_936], %750 {strides = array<i32>} : memref<8x256xf32, #tpu.memory_space<vmem>>, vector<1x16xf32>,
    %c3_937 = arith.constant 3 : index
    %c3_938 = arith.constant 3 : index
    %c0_939 = arith.constant 0 : index
    %752 = vector.load %arg11[%c3_937, %c3_938, %c0_939] : memref<14x7x16xf32, #tpu.memory_space<vmem>>, vector<1x1x16xf32>
    %753 = vector.shape_cast %752 : vector<1x1x16xf32> to vector<1x16xf32>
    %c6_940 = arith.constant 6 : index
    %c80_941 = arith.constant 80 : index
    %754 = vector.load %arg12[%c6_940, %c80_941] : memref<8x256xf32, #tpu.memory_space<vmem>>, vector<1x16xf32>
    tpu.vector_store %arg12[%c6_940, %c80_941], %753 {strides = array<i32>} : memref<8x256xf32, #tpu.memory_space<vmem>>, vector<1x16xf32>,
    %c3_942 = arith.constant 3 : index
    %c4_943 = arith.constant 4 : index
    %c0_944 = arith.constant 0 : index
    %755 = vector.load %arg11[%c3_942, %c4_943, %c0_944] : memref<14x7x16xf32, #tpu.memory_space<vmem>>, vector<1x1x16xf32>
    %756 = vector.shape_cast %755 : vector<1x1x16xf32> to vector<1x16xf32>
    %c6_945 = arith.constant 6 : index
    %c96_946 = arith.constant 96 : index
    %757 = vector.load %arg12[%c6_945, %c96_946] : memref<8x256xf32, #tpu.memory_space<vmem>>, vector<1x16xf32>
    tpu.vector_store %arg12[%c6_945, %c96_946], %756 {strides = array<i32>} : memref<8x256xf32, #tpu.memory_space<vmem>>, vector<1x16xf32>,
    %c3_947 = arith.constant 3 : index
    %c5_948 = arith.constant 5 : index
    %c0_949 = arith.constant 0 : index
    %758 = vector.load %arg11[%c3_947, %c5_948, %c0_949] : memref<14x7x16xf32, #tpu.memory_space<vmem>>, vector<1x1x16xf32>
    %759 = vector.shape_cast %758 : vector<1x1x16xf32> to vector<1x16xf32>
    %c6_950 = arith.constant 6 : index
    %c112_951 = arith.constant 112 : index
    %760 = vector.load %arg12[%c6_950, %c112_951] : memref<8x256xf32, #tpu.memory_space<vmem>>, vector<1x16xf32>
    tpu.vector_store %arg12[%c6_950, %c112_951], %759 {strides = array<i32>} : memref<8x256xf32, #tpu.memory_space<vmem>>, vector<1x16xf32>,
    %c4_952 = arith.constant 4 : index
    %c2_953 = arith.constant 2 : index
    %c0_954 = arith.constant 0 : index
    %761 = vector.load %arg11[%c4_952, %c2_953, %c0_954] : memref<14x7x16xf32, #tpu.memory_space<vmem>>, vector<1x1x16xf32>
    %762 = vector.shape_cast %761 : vector<1x1x16xf32> to vector<1x16xf32>
    %c6_955 = arith.constant 6 : index
    %c128_956 = arith.constant 128 : index
    %763 = vector.load %arg12[%c6_955, %c128_956] : memref<8x256xf32, #tpu.memory_space<vmem>>, vector<1x16xf32>
    tpu.vector_store %arg12[%c6_955, %c128_956], %762 {strides = array<i32>} : memref<8x256xf32, #tpu.memory_space<vmem>>, vector<1x16xf32>,
    %c4_957 = arith.constant 4 : index
    %c3_958 = arith.constant 3 : index
    %c0_959 = arith.constant 0 : index
    %764 = vector.load %arg11[%c4_957, %c3_958, %c0_959] : memref<14x7x16xf32, #tpu.memory_space<vmem>>, vector<1x1x16xf32>
    %765 = vector.shape_cast %764 : vector<1x1x16xf32> to vector<1x16xf32>
    %c6_960 = arith.constant 6 : index
    %c144_961 = arith.constant 144 : index
    %766 = vector.load %arg12[%c6_960, %c144_961] : memref<8x256xf32, #tpu.memory_space<vmem>>, vector<1x16xf32>
    tpu.vector_store %arg12[%c6_960, %c144_961], %765 {strides = array<i32>} : memref<8x256xf32, #tpu.memory_space<vmem>>, vector<1x16xf32>,
    %c4_962 = arith.constant 4 : index
    %c4_963 = arith.constant 4 : index
    %c0_964 = arith.constant 0 : index
    %767 = vector.load %arg11[%c4_962, %c4_963, %c0_964] : memref<14x7x16xf32, #tpu.memory_space<vmem>>, vector<1x1x16xf32>
    %768 = vector.shape_cast %767 : vector<1x1x16xf32> to vector<1x16xf32>
    %c6_965 = arith.constant 6 : index
    %c160_966 = arith.constant 160 : index
    %769 = vector.load %arg12[%c6_965, %c160_966] : memref<8x256xf32, #tpu.memory_space<vmem>>, vector<1x16xf32>
    tpu.vector_store %arg12[%c6_965, %c160_966], %768 {strides = array<i32>} : memref<8x256xf32, #tpu.memory_space<vmem>>, vector<1x16xf32>,
    %c4_967 = arith.constant 4 : index
    %c5_968 = arith.constant 5 : index
    %c0_969 = arith.constant 0 : index
    %770 = vector.load %arg11[%c4_967, %c5_968, %c0_969] : memref<14x7x16xf32, #tpu.memory_space<vmem>>, vector<1x1x16xf32>
    %771 = vector.shape_cast %770 : vector<1x1x16xf32> to vector<1x16xf32>
    %c6_970 = arith.constant 6 : index
    %c176_971 = arith.constant 176 : index
    %772 = vector.load %arg12[%c6_970, %c176_971] : memref<8x256xf32, #tpu.memory_space<vmem>>, vector<1x16xf32>
    tpu.vector_store %arg12[%c6_970, %c176_971], %771 {strides = array<i32>} : memref<8x256xf32, #tpu.memory_space<vmem>>, vector<1x16xf32>,
    %c5_972 = arith.constant 5 : index
    %c2_973 = arith.constant 2 : index
    %c0_974 = arith.constant 0 : index
    %773 = vector.load %arg11[%c5_972, %c2_973, %c0_974] : memref<14x7x16xf32, #tpu.memory_space<vmem>>, vector<1x1x16xf32>
    %774 = vector.shape_cast %773 : vector<1x1x16xf32> to vector<1x16xf32>
    %c6_975 = arith.constant 6 : index
    %c192_976 = arith.constant 192 : index
    %775 = vector.load %arg12[%c6_975, %c192_976] : memref<8x256xf32, #tpu.memory_space<vmem>>, vector<1x16xf32>
    tpu.vector_store %arg12[%c6_975, %c192_976], %774 {strides = array<i32>} : memref<8x256xf32, #tpu.memory_space<vmem>>, vector<1x16xf32>,
    %c5_977 = arith.constant 5 : index
    %c3_978 = arith.constant 3 : index
    %c0_979 = arith.constant 0 : index
    %776 = vector.load %arg11[%c5_977, %c3_978, %c0_979] : memref<14x7x16xf32, #tpu.memory_space<vmem>>, vector<1x1x16xf32>
    %777 = vector.shape_cast %776 : vector<1x1x16xf32> to vector<1x16xf32>
    %c6_980 = arith.constant 6 : index
    %c208_981 = arith.constant 208 : index
    %778 = vector.load %arg12[%c6_980, %c208_981] : memref<8x256xf32, #tpu.memory_space<vmem>>, vector<1x16xf32>
    tpu.vector_store %arg12[%c6_980, %c208_981], %777 {strides = array<i32>} : memref<8x256xf32, #tpu.memory_space<vmem>>, vector<1x16xf32>,
    %c5_982 = arith.constant 5 : index
    %c4_983 = arith.constant 4 : index
    %c0_984 = arith.constant 0 : index
    %779 = vector.load %arg11[%c5_982, %c4_983, %c0_984] : memref<14x7x16xf32, #tpu.memory_space<vmem>>, vector<1x1x16xf32>
    %780 = vector.shape_cast %779 : vector<1x1x16xf32> to vector<1x16xf32>
    %c6_985 = arith.constant 6 : index
    %c224_986 = arith.constant 224 : index
    %781 = vector.load %arg12[%c6_985, %c224_986] : memref<8x256xf32, #tpu.memory_space<vmem>>, vector<1x16xf32>
    tpu.vector_store %arg12[%c6_985, %c224_986], %780 {strides = array<i32>} : memref<8x256xf32, #tpu.memory_space<vmem>>, vector<1x16xf32>,
    %c5_987 = arith.constant 5 : index
    %c5_988 = arith.constant 5 : index
    %c0_989 = arith.constant 0 : index
    %782 = vector.load %arg11[%c5_987, %c5_988, %c0_989] : memref<14x7x16xf32, #tpu.memory_space<vmem>>, vector<1x1x16xf32>
    %783 = vector.shape_cast %782 : vector<1x1x16xf32> to vector<1x16xf32>
    %c6_990 = arith.constant 6 : index
    %c240_991 = arith.constant 240 : index
    %784 = vector.load %arg12[%c6_990, %c240_991] : memref<8x256xf32, #tpu.memory_space<vmem>>, vector<1x16xf32>
    tpu.vector_store %arg12[%c6_990, %c240_991], %783 {strides = array<i32>} : memref<8x256xf32, #tpu.memory_space<vmem>>, vector<1x16xf32>,
    %c9_992 = arith.constant 9 : index
    %c2_993 = arith.constant 2 : index
    %c0_994 = arith.constant 0 : index
    %785 = vector.load %arg11[%c9_992, %c2_993, %c0_994] : memref<14x7x16xf32, #tpu.memory_space<vmem>>, vector<1x1x16xf32>
    %786 = vector.shape_cast %785 : vector<1x1x16xf32> to vector<1x16xf32>
    %c7_995 = arith.constant 7 : index
    %c0_996 = arith.constant 0 : index
    %787 = vector.load %arg12[%c7_995, %c0_996] : memref<8x256xf32, #tpu.memory_space<vmem>>, vector<1x16xf32>
    tpu.vector_store %arg12[%c7_995, %c0_996], %786 {strides = array<i32>} : memref<8x256xf32, #tpu.memory_space<vmem>>, vector<1x16xf32>,
    %c9_997 = arith.constant 9 : index
    %c3_998 = arith.constant 3 : index
    %c0_999 = arith.constant 0 : index
    %788 = vector.load %arg11[%c9_997, %c3_998, %c0_999] : memref<14x7x16xf32, #tpu.memory_space<vmem>>, vector<1x1x16xf32>
    %789 = vector.shape_cast %788 : vector<1x1x16xf32> to vector<1x16xf32>
    %c7_1000 = arith.constant 7 : index
    %c16_1001 = arith.constant 16 : index
    %790 = vector.load %arg12[%c7_1000, %c16_1001] : memref<8x256xf32, #tpu.memory_space<vmem>>, vector<1x16xf32>
    tpu.vector_store %arg12[%c7_1000, %c16_1001], %789 {strides = array<i32>} : memref<8x256xf32, #tpu.memory_space<vmem>>, vector<1x16xf32>,
    %c9_1002 = arith.constant 9 : index
    %c4_1003 = arith.constant 4 : index
    %c0_1004 = arith.constant 0 : index
    %791 = vector.load %arg11[%c9_1002, %c4_1003, %c0_1004] : memref<14x7x16xf32, #tpu.memory_space<vmem>>, vector<1x1x16xf32>
    %792 = vector.shape_cast %791 : vector<1x1x16xf32> to vector<1x16xf32>
    %c7_1005 = arith.constant 7 : index
    %c32_1006 = arith.constant 32 : index
    %793 = vector.load %arg12[%c7_1005, %c32_1006] : memref<8x256xf32, #tpu.memory_space<vmem>>, vector<1x16xf32>
    tpu.vector_store %arg12[%c7_1005, %c32_1006], %792 {strides = array<i32>} : memref<8x256xf32, #tpu.memory_space<vmem>>, vector<1x16xf32>,
    %c9_1007 = arith.constant 9 : index
    %c5_1008 = arith.constant 5 : index
    %c0_1009 = arith.constant 0 : index
    %794 = vector.load %arg11[%c9_1007, %c5_1008, %c0_1009] : memref<14x7x16xf32, #tpu.memory_space<vmem>>, vector<1x1x16xf32>
    %795 = vector.shape_cast %794 : vector<1x1x16xf32> to vector<1x16xf32>
    %c7_1010 = arith.constant 7 : index
    %c48_1011 = arith.constant 48 : index
    %796 = vector.load %arg12[%c7_1010, %c48_1011] : memref<8x256xf32, #tpu.memory_space<vmem>>, vector<1x16xf32>
    tpu.vector_store %arg12[%c7_1010, %c48_1011], %795 {strides = array<i32>} : memref<8x256xf32, #tpu.memory_space<vmem>>, vector<1x16xf32>,
    %c10_1012 = arith.constant 10 : index
    %c2_1013 = arith.constant 2 : index
    %c0_1014 = arith.constant 0 : index
    %797 = vector.load %arg11[%c10_1012, %c2_1013, %c0_1014] : memref<14x7x16xf32, #tpu.memory_space<vmem>>, vector<1x1x16xf32>
    %798 = vector.shape_cast %797 : vector<1x1x16xf32> to vector<1x16xf32>
    %c7_1015 = arith.constant 7 : index
    %c64_1016 = arith.constant 64 : index
    %799 = vector.load %arg12[%c7_1015, %c64_1016] : memref<8x256xf32, #tpu.memory_space<vmem>>, vector<1x16xf32>
    tpu.vector_store %arg12[%c7_1015, %c64_1016], %798 {strides = array<i32>} : memref<8x256xf32, #tpu.memory_space<vmem>>, vector<1x16xf32>,
    %c10_1017 = arith.constant 10 : index
    %c3_1018 = arith.constant 3 : index
    %c0_1019 = arith.constant 0 : index
    %800 = vector.load %arg11[%c10_1017, %c3_1018, %c0_1019] : memref<14x7x16xf32, #tpu.memory_space<vmem>>, vector<1x1x16xf32>
    %801 = vector.shape_cast %800 : vector<1x1x16xf32> to vector<1x16xf32>
    %c7_1020 = arith.constant 7 : index
    %c80_1021 = arith.constant 80 : index
    %802 = vector.load %arg12[%c7_1020, %c80_1021] : memref<8x256xf32, #tpu.memory_space<vmem>>, vector<1x16xf32>
    tpu.vector_store %arg12[%c7_1020, %c80_1021], %801 {strides = array<i32>} : memref<8x256xf32, #tpu.memory_space<vmem>>, vector<1x16xf32>,
    %c10_1022 = arith.constant 10 : index
    %c4_1023 = arith.constant 4 : index
    %c0_1024 = arith.constant 0 : index
    %803 = vector.load %arg11[%c10_1022, %c4_1023, %c0_1024] : memref<14x7x16xf32, #tpu.memory_space<vmem>>, vector<1x1x16xf32>
    %804 = vector.shape_cast %803 : vector<1x1x16xf32> to vector<1x16xf32>
    %c7_1025 = arith.constant 7 : index
    %c96_1026 = arith.constant 96 : index
    %805 = vector.load %arg12[%c7_1025, %c96_1026] : memref<8x256xf32, #tpu.memory_space<vmem>>, vector<1x16xf32>
    tpu.vector_store %arg12[%c7_1025, %c96_1026], %804 {strides = array<i32>} : memref<8x256xf32, #tpu.memory_space<vmem>>, vector<1x16xf32>,
    %c10_1027 = arith.constant 10 : index
    %c5_1028 = arith.constant 5 : index
    %c0_1029 = arith.constant 0 : index
    %806 = vector.load %arg11[%c10_1027, %c5_1028, %c0_1029] : memref<14x7x16xf32, #tpu.memory_space<vmem>>, vector<1x1x16xf32>
    %807 = vector.shape_cast %806 : vector<1x1x16xf32> to vector<1x16xf32>
    %c7_1030 = arith.constant 7 : index
    %c112_1031 = arith.constant 112 : index
    %808 = vector.load %arg12[%c7_1030, %c112_1031] : memref<8x256xf32, #tpu.memory_space<vmem>>, vector<1x16xf32>
    tpu.vector_store %arg12[%c7_1030, %c112_1031], %807 {strides = array<i32>} : memref<8x256xf32, #tpu.memory_space<vmem>>, vector<1x16xf32>,
    %c11_1032 = arith.constant 11 : index
    %c2_1033 = arith.constant 2 : index
    %c0_1034 = arith.constant 0 : index
    %809 = vector.load %arg11[%c11_1032, %c2_1033, %c0_1034] : memref<14x7x16xf32, #tpu.memory_space<vmem>>, vector<1x1x16xf32>
    %810 = vector.shape_cast %809 : vector<1x1x16xf32> to vector<1x16xf32>
    %c7_1035 = arith.constant 7 : index
    %c128_1036 = arith.constant 128 : index
    %811 = vector.load %arg12[%c7_1035, %c128_1036] : memref<8x256xf32, #tpu.memory_space<vmem>>, vector<1x16xf32>
    tpu.vector_store %arg12[%c7_1035, %c128_1036], %810 {strides = array<i32>} : memref<8x256xf32, #tpu.memory_space<vmem>>, vector<1x16xf32>,
    %c11_1037 = arith.constant 11 : index
    %c3_1038 = arith.constant 3 : index
    %c0_1039 = arith.constant 0 : index
    %812 = vector.load %arg11[%c11_1037, %c3_1038, %c0_1039] : memref<14x7x16xf32, #tpu.memory_space<vmem>>, vector<1x1x16xf32>
    %813 = vector.shape_cast %812 : vector<1x1x16xf32> to vector<1x16xf32>
    %c7_1040 = arith.constant 7 : index
    %c144_1041 = arith.constant 144 : index
    %814 = vector.load %arg12[%c7_1040, %c144_1041] : memref<8x256xf32, #tpu.memory_space<vmem>>, vector<1x16xf32>
    tpu.vector_store %arg12[%c7_1040, %c144_1041], %813 {strides = array<i32>} : memref<8x256xf32, #tpu.memory_space<vmem>>, vector<1x16xf32>,
    %c11_1042 = arith.constant 11 : index
    %c4_1043 = arith.constant 4 : index
    %c0_1044 = arith.constant 0 : index
    %815 = vector.load %arg11[%c11_1042, %c4_1043, %c0_1044] : memref<14x7x16xf32, #tpu.memory_space<vmem>>, vector<1x1x16xf32>
    %816 = vector.shape_cast %815 : vector<1x1x16xf32> to vector<1x16xf32>
    %c7_1045 = arith.constant 7 : index
    %c160_1046 = arith.constant 160 : index
    %817 = vector.load %arg12[%c7_1045, %c160_1046] : memref<8x256xf32, #tpu.memory_space<vmem>>, vector<1x16xf32>
    tpu.vector_store %arg12[%c7_1045, %c160_1046], %816 {strides = array<i32>} : memref<8x256xf32, #tpu.memory_space<vmem>>, vector<1x16xf32>,
    %c11_1047 = arith.constant 11 : index
    %c5_1048 = arith.constant 5 : index
    %c0_1049 = arith.constant 0 : index
    %818 = vector.load %arg11[%c11_1047, %c5_1048, %c0_1049] : memref<14x7x16xf32, #tpu.memory_space<vmem>>, vector<1x1x16xf32>
    %819 = vector.shape_cast %818 : vector<1x1x16xf32> to vector<1x16xf32>
    %c7_1050 = arith.constant 7 : index
    %c176_1051 = arith.constant 176 : index
    %820 = vector.load %arg12[%c7_1050, %c176_1051] : memref<8x256xf32, #tpu.memory_space<vmem>>, vector<1x16xf32>
    tpu.vector_store %arg12[%c7_1050, %c176_1051], %819 {strides = array<i32>} : memref<8x256xf32, #tpu.memory_space<vmem>>, vector<1x16xf32>,
    %c12_1052 = arith.constant 12 : index
    %c2_1053 = arith.constant 2 : index
    %c0_1054 = arith.constant 0 : index
    %821 = vector.load %arg11[%c12_1052, %c2_1053, %c0_1054] : memref<14x7x16xf32, #tpu.memory_space<vmem>>, vector<1x1x16xf32>
    %822 = vector.shape_cast %821 : vector<1x1x16xf32> to vector<1x16xf32>
    %c7_1055 = arith.constant 7 : index
    %c192_1056 = arith.constant 192 : index
    %823 = vector.load %arg12[%c7_1055, %c192_1056] : memref<8x256xf32, #tpu.memory_space<vmem>>, vector<1x16xf32>
    tpu.vector_store %arg12[%c7_1055, %c192_1056], %822 {strides = array<i32>} : memref<8x256xf32, #tpu.memory_space<vmem>>, vector<1x16xf32>,
    %c12_1057 = arith.constant 12 : index
    %c3_1058 = arith.constant 3 : index
    %c0_1059 = arith.constant 0 : index
    %824 = vector.load %arg11[%c12_1057, %c3_1058, %c0_1059] : memref<14x7x16xf32, #tpu.memory_space<vmem>>, vector<1x1x16xf32>
    %825 = vector.shape_cast %824 : vector<1x1x16xf32> to vector<1x16xf32>
    %c7_1060 = arith.constant 7 : index
    %c208_1061 = arith.constant 208 : index
    %826 = vector.load %arg12[%c7_1060, %c208_1061] : memref<8x256xf32, #tpu.memory_space<vmem>>, vector<1x16xf32>
    tpu.vector_store %arg12[%c7_1060, %c208_1061], %825 {strides = array<i32>} : memref<8x256xf32, #tpu.memory_space<vmem>>, vector<1x16xf32>,
    %c12_1062 = arith.constant 12 : index
    %c4_1063 = arith.constant 4 : index
    %c0_1064 = arith.constant 0 : index
    %827 = vector.load %arg11[%c12_1062, %c4_1063, %c0_1064] : memref<14x7x16xf32, #tpu.memory_space<vmem>>, vector<1x1x16xf32>
    %828 = vector.shape_cast %827 : vector<1x1x16xf32> to vector<1x16xf32>
    %c7_1065 = arith.constant 7 : index
    %c224_1066 = arith.constant 224 : index
    %829 = vector.load %arg12[%c7_1065, %c224_1066] : memref<8x256xf32, #tpu.memory_space<vmem>>, vector<1x16xf32>
    tpu.vector_store %arg12[%c7_1065, %c224_1066], %828 {strides = array<i32>} : memref<8x256xf32, #tpu.memory_space<vmem>>, vector<1x16xf32>,
    %c12_1067 = arith.constant 12 : index
    %c5_1068 = arith.constant 5 : index
    %c0_1069 = arith.constant 0 : index
    %830 = vector.load %arg11[%c12_1067, %c5_1068, %c0_1069] : memref<14x7x16xf32, #tpu.memory_space<vmem>>, vector<1x1x16xf32>
    %831 = vector.shape_cast %830 : vector<1x1x16xf32> to vector<1x16xf32>
    %c7_1070 = arith.constant 7 : index
    %c240_1071 = arith.constant 240 : index
    %832 = vector.load %arg12[%c7_1070, %c240_1071] : memref<8x256xf32, #tpu.memory_space<vmem>>, vector<1x16xf32>
    tpu.vector_store %arg12[%c7_1070, %c240_1071], %831 {strides = array<i32>} : memref<8x256xf32, #tpu.memory_space<vmem>>, vector<1x16xf32>,
    %c0_1072 = arith.constant 0 : index
    %c0_1073 = arith.constant 0 : index
    %833 = vector.load %arg12[%c0_1072, %c0_1073] : memref<8x256xf32, #tpu.memory_space<vmem>>, vector<8x256xf32>
    %c0_1074 = arith.constant 0 : index
    %c0_1075 = arith.constant 0 : index
    %834 = vector.load %arg3[%c0_1074, %c0_1075] : memref<256x32xf32, #tpu.memory_space<vmem>>, vector<256x32xf32>
    %cst_1076 = arith.constant dense<0.000000e+00> : vector<8x32xf32>
    %835 = tpu.matmul %833, %834, %cst_1076 {dimension_numbers = #tpu.dot_dimension_numbers<[1], [0], [0], [1], [0, 0, 1, 1], [], []>} : vector<8x256xf32>, vector<256x32xf32>, vector<8x32xf32> -> vector<8x32xf32>
    %c0_1077 = arith.constant 0 : index
    %c0_1078 = arith.constant 0 : index
    %836 = vector.load %arg4[%c0_1077, %c0_1078] : memref<1x32xf32, #tpu.memory_space<vmem>>, vector<1x32xf32>
    %837 = vector.broadcast %836 : vector<1x32xf32> to vector<8x32xf32>
    %838 = arith.addf %835, %837 : vector<8x32xf32>
    %cst_1079 = arith.constant 0.000000e+00 : f32
    %839 = vector.broadcast %cst_1079 : f32 to vector<8x32xf32>
    %840 = arith.maximumf %838, %839 : vector<8x32xf32>
    %cst_1080 = arith.constant 0.000000e+00 : f32
    %841 = vector.broadcast %cst_1080 : f32 to vector<2x512xf32>
    %842 = vector.extract_strided_slice %840 {offsets = [0, 0], sizes = [2, 32], strides = [1, 1]} : vector<8x32xf32> to vector<2x32xf32>
    %c0_1081 = arith.constant 0 : index
    %c0_1082 = arith.constant 0 : index
    %843 = vector.load %arg5[%c0_1081, %c0_1082] : memref<128x512xf32, #tpu.memory_space<vmem>>, vector<32x512xf32>
    %cst_1083 = arith.constant dense<0.000000e+00> : vector<2x512xf32>
    %844 = tpu.matmul %842, %843, %cst_1083 {dimension_numbers = #tpu.dot_dimension_numbers<[1], [0], [0], [1], [0, 0, 1, 1], [], []>} : vector<2x32xf32>, vector<32x512xf32>, vector<2x512xf32> -> vector<2x512xf32>
    %845 = arith.addf %841, %844 : vector<2x512xf32>
    %846 = vector.extract_strided_slice %840 {offsets = [2, 0], sizes = [2, 32], strides = [1, 1]} : vector<8x32xf32> to vector<2x32xf32>
    %c32_1084 = arith.constant 32 : index
    %c0_1085 = arith.constant 0 : index
    %847 = vector.load %arg5[%c32_1084, %c0_1085] : memref<128x512xf32, #tpu.memory_space<vmem>>, vector<32x512xf32>
    %cst_1086 = arith.constant dense<0.000000e+00> : vector<2x512xf32>
    %848 = tpu.matmul %846, %847, %cst_1086 {dimension_numbers = #tpu.dot_dimension_numbers<[1], [0], [0], [1], [0, 0, 1, 1], [], []>} : vector<2x32xf32>, vector<32x512xf32>, vector<2x512xf32> -> vector<2x512xf32>
    %849 = arith.addf %845, %848 : vector<2x512xf32>
    %850 = vector.extract_strided_slice %840 {offsets = [4, 0], sizes = [2, 32], strides = [1, 1]} : vector<8x32xf32> to vector<2x32xf32>
    %c64_1087 = arith.constant 64 : index
    %c0_1088 = arith.constant 0 : index
    %851 = vector.load %arg5[%c64_1087, %c0_1088] : memref<128x512xf32, #tpu.memory_space<vmem>>, vector<32x512xf32>
    %cst_1089 = arith.constant dense<0.000000e+00> : vector<2x512xf32>
    %852 = tpu.matmul %850, %851, %cst_1089 {dimension_numbers = #tpu.dot_dimension_numbers<[1], [0], [0], [1], [0, 0, 1, 1], [], []>} : vector<2x32xf32>, vector<32x512xf32>, vector<2x512xf32> -> vector<2x512xf32>
    %853 = arith.addf %849, %852 : vector<2x512xf32>
    %854 = vector.extract_strided_slice %840 {offsets = [6, 0], sizes = [2, 32], strides = [1, 1]} : vector<8x32xf32> to vector<2x32xf32>
    %c96_1090 = arith.constant 96 : index
    %c0_1091 = arith.constant 0 : index
    %855 = vector.load %arg5[%c96_1090, %c0_1091] : memref<128x512xf32, #tpu.memory_space<vmem>>, vector<32x512xf32>
    %cst_1092 = arith.constant dense<0.000000e+00> : vector<2x512xf32>
    %856 = tpu.matmul %854, %855, %cst_1092 {dimension_numbers = #tpu.dot_dimension_numbers<[1], [0], [0], [1], [0, 0, 1, 1], [], []>} : vector<2x32xf32>, vector<32x512xf32>, vector<2x512xf32> -> vector<2x512xf32>
    %857 = arith.addf %853, %856 : vector<2x512xf32>
    %c0_1093 = arith.constant 0 : index
    %c0_1094 = arith.constant 0 : index
    %858 = vector.load %arg6[%c0_1093, %c0_1094] : memref<1x512xf32, #tpu.memory_space<vmem>>, vector<1x512xf32>
    %859 = vector.broadcast %858 : vector<1x512xf32> to vector<2x512xf32>
    %860 = arith.addf %857, %859 : vector<2x512xf32>
    %cst_1095 = arith.constant 0.000000e+00 : f32
    %861 = vector.broadcast %cst_1095 : f32 to vector<2x512xf32>
    %862 = arith.maximumf %860, %861 : vector<2x512xf32>
    %c0_1096 = arith.constant 0 : index
    %c0_1097 = arith.constant 0 : index
    %863 = vector.load %arg7[%c0_1096, %c0_1097] : memref<512x7xf32, #tpu.memory_space<vmem>>, vector<512x7xf32>
    %cst_1098 = arith.constant dense<0.000000e+00> : vector<2x7xf32>
    %864 = tpu.matmul %862, %863, %cst_1098 {dimension_numbers = #tpu.dot_dimension_numbers<[1], [0], [0], [1], [0, 0, 1, 1], [], []>} : vector<2x512xf32>, vector<512x7xf32>, vector<2x7xf32> -> vector<2x7xf32>
    %c0_1099 = arith.constant 0 : index
    %c0_1100 = arith.constant 0 : index
    %865 = vector.load %arg8[%c0_1099, %c0_1100] : memref<1x7xf32, #tpu.memory_space<vmem>>, vector<1x7xf32>
    %866 = vector.broadcast %865 : vector<1x7xf32> to vector<2x7xf32>
    %867 = arith.addf %864, %866 : vector<2x7xf32>
    %868 = vector.extract_strided_slice %867 {offsets = [0, 0], sizes = [2, 1], strides = [1, 1]} : vector<2x7xf32> to vector<2x1xf32>
    %c0_1101 = arith.constant 0 : index
    %c0_1102 = arith.constant 0 : index
    %869 = vector.load %arg9[%c0_1101, %c0_1102] : memref<2x1xf32, #tpu.memory_space<vmem>>, vector<2x1xf32>
    tpu.vector_store %arg9[%c0_1101, %c0_1102], %868 {strides = array<i32>} : memref<2x1xf32, #tpu.memory_space<vmem>>, vector<2x1xf32>,
    %870 = vector.extract_strided_slice %867 {offsets = [0, 1], sizes = [2, 6], strides = [1, 1]} : vector<2x7xf32> to vector<2x6xf32>
    %cst_1103 = arith.constant dense<0xFF800000> : vector<2xf32>
    %871 = vector.multi_reduction <maximumf>, %870, %cst_1103 [1] : vector<2x6xf32> to vector<2xf32>
    %872 = vector.shape_cast %871 : vector<2xf32> to vector<2x1xf32>
    %873 = vector.broadcast %872 : vector<2x1xf32> to vector<2x6xf32>
    %874 = arith.subf %870, %873 : vector<2x6xf32>
    %875 = math.exp %874 : vector<2x6xf32>
    %cst_1104 = arith.constant dense<0.000000e+00> : vector<2xf32>
    %876 = vector.multi_reduction <add>, %875, %cst_1104 [1] : vector<2x6xf32> to vector<2xf32>
    %877 = vector.shape_cast %876 : vector<2xf32> to vector<2x1xf32>
    %878 = tpu.reciprocal %877 {approx = true} : vector<2x1xf32> -> vector<2x1xf32>
    %879 = vector.broadcast %878 : vector<2x1xf32> to vector<2x6xf32>
    %880 = arith.mulf %875, %879 : vector<2x6xf32>
    %c0_1105 = arith.constant 0 : index
    %c0_1106 = arith.constant 0 : index
    %881 = vector.load %arg10[%c0_1105, %c0_1106] : memref<2x6xf32, #tpu.memory_space<vmem>>, vector<2x6xf32>
    tpu.vector_store %arg10[%c0_1105, %c0_1106], %880 {strides = array<i32>} : memref<2x6xf32, #tpu.memory_space<vmem>>, vector<2x6xf32>,
    return
  }
}

</mosaic_0001>

<llo_original>
// kernel: forward.1
$region0: #{forward.1}
  #allocation0 [shape = 'u32[]', space=smem, size = 0x4, offset = 0x4, fixed_abs, tag = 'smem constant byte address 0x4 - core index']
  #allocation1 [shape = 'u32[144,128]{1,0:T(1,128)}', space=vmem, size = 0x12000, scoped, tag = 'internal scratch']
  #allocation2 [shape = 'f32[14,7,16]{2,1,0:T(8,128)}', space=vmem, size = 0xe000, scoped, tag = 'scratch operand']
  #allocation3 [shape = 'f32[8,256]{1,0:T(8,128)}', space=vmem, size = 0x2000, scoped, tag = 'scratch operand']
  %s0 = inlined_call_operand.vmem [shape: f32[16,8,64], index: 0, kind: input, shape index: {}]
  %s1 = inlined_call_operand.vmem [shape: f32[4,64,16], index: 1, kind: input, shape index: {}]
  %s2 = inlined_call_operand.vmem [shape: f32[1,16], index: 2, kind: input, shape index: {}]
  %s3 = inlined_call_operand.vmem [shape: f32[256,32], index: 3, kind: input, shape index: {}]
  %s4 = inlined_call_operand.vmem [shape: f32[1,32], index: 4, kind: input, shape index: {}]
  %s5 = inlined_call_operand.vmem [shape: f32[128,512], index: 5, kind: input, shape index: {}]
  %s6 = inlined_call_operand.vmem [shape: f32[1,512], index: 6, kind: input, shape index: {}]
  %s7 = inlined_call_operand.vmem [shape: f32[512,7], index: 7, kind: input, shape index: {}]
  %s8 = inlined_call_operand.vmem [shape: f32[1,7], index: 8, kind: input, shape index: {}]
  %s9 = inlined_call_operand.vmem [shape: f32[2,1], index: 9, kind: output, shape index: {0}]
  %s10 = inlined_call_operand.hbm [shape: f32[2,6], index: 10, kind: output, shape index: {1}]
  %11 = xla_tuple %s9, %s10
  %s12 = sld [smem:[#allocation0]]
  $region54: #{forward.1} parent=0
    _
  %s14 = ssub.s32 1, %s12
  %s15 = scalar_select 0, %s14, %s12
  $region1: #{forward.1} parent=0
    #allocation4 [shape = 'u8[1024]{0}', space=vmem, size = 0x400, scoped, tag = 'output window, operand 1, single buffered']
    #allocation5 [shape = 's32[1]{0}', space=sflag, size = 0x4, scoped, tag = 'scoped memory for forward.1']
    %16 = vsyncpa [#allocation5], 0
    // Predicated region
    $region2: #{forward.1} parent=1 // pred_check
      _
    $region3: #{forward.1} parent=1 // pred_check_branch
      %18 = sbr.rel (0) target = $region5
    $region4: #{forward.1} parent=1 // pred_region
      _
    $region5: #{forward.1} parent=1 // pred_fallthru
      _
    // Predicated region
    $region6: #{forward.1} parent=1 // pred_check
      _
    $region7: #{forward.1} parent=1 // pred_check_branch
      %20 = sbr.rel (0) target = $region9
    $region8: #{forward.1} parent=1 // pred_region
      _
    $region9: #{forward.1} parent=1 // pred_fallthru
      _
    // Predicated region
    $region10: #{forward.1} parent=1 // pred_check
      _
    $region11: #{forward.1} parent=1 // pred_check_branch
      %22 = sbr.rel (0) target = $region13
    $region12: #{forward.1} parent=1 // pred_region
      _
    $region13: #{forward.1} parent=1 // pred_fallthru
      _
    // Predicated region
    $region14: #{forward.1} parent=1 // pred_check
      _
    $region15: #{forward.1} parent=1 // pred_check_branch
      %24 = sbr.rel (0) target = $region17
    $region16: #{forward.1} parent=1 // pred_region
      _
    $region17: #{forward.1} parent=1 // pred_fallthru
      _
    // Predicated region
    $region18: #{forward.1} parent=1 // pred_check
      _
    $region19: #{forward.1} parent=1 // pred_check_branch
      %26 = sbr.rel (0) target = $region21
    $region20: #{forward.1} parent=1 // pred_region
      _
    $region21: #{forward.1} parent=1 // pred_fallthru
      _
    // Predicated region
    $region22: #{forward.1} parent=1 // pred_check
      _
    $region23: #{forward.1} parent=1 // pred_check_branch
      %28 = sbr.rel (0) target = $region25
    $region24: #{forward.1} parent=1 // pred_region
      _
    $region25: #{forward.1} parent=1 // pred_fallthru
      _
    // Predicated region
    $region26: #{forward.1} parent=1 // pred_check
      _
    $region27: #{forward.1} parent=1 // pred_check_branch
      %30 = sbr.rel (0) target = $region29
    $region28: #{forward.1} parent=1 // pred_region
      _
    $region29: #{forward.1} parent=1 // pred_fallthru
      _
    // Predicated region
    $region30: #{forward.1} parent=1 // pred_check
      _
    $region31: #{forward.1} parent=1 // pred_check_branch
      %32 = sbr.rel (0) target = $region33
    $region32: #{forward.1} parent=1 // pred_region
      _
    $region33: #{forward.1} parent=1 // pred_fallthru
      _
    // Predicated region
    $region34: #{forward.1} parent=1 // pred_check
      _
    $region35: #{forward.1} parent=1 // pred_check_branch
      %34 = sbr.rel (0) target = $region37
    $region36: #{forward.1} parent=1 // pred_region
      _
    $region37: #{forward.1} parent=1 // pred_fallthru
      _
    %v35 = vld [vmem:[%s2] sm:$0x1]
    %v36 = vld [vmem:[%s0] sm:$0x7f]
    %v37 = vld [vmem:[%s1] sm:$0xff]
    %v38 = vld [vmem:[%s1 + $0x8] sm:$0xff]
    %v39 = vld [vmem:[%s1 + $0x10] sm:$0xff]
    %v40 = vld [vmem:[%s1 + $0x18] sm:$0xff]
    %v41 = vld [vmem:[%s1 + $0x20] sm:$0xff]
    %v42 = vld [vmem:[%s1 + $0x28] sm:$0xff]
    %v43 = vld [vmem:[%s1 + $0x30] sm:$0xff]
    %v44 = vld [vmem:[%s1 + $0x38] sm:$0xff]
    %v45 = vld [vmem:[%s0 + $0x1] sm:$0x7f]
    %s46 = scalar_lea.vmem %s1, 64
    %v47 = vld [vmem:[%s46] sm:$0xff]
    %v48 = vld [vmem:[%s46 + $0x8] sm:$0xff]
    %v49 = vld [vmem:[%s46 + $0x10] sm:$0xff]
    %v50 = vld [vmem:[%s46 + $0x18] sm:$0xff]
    %v51 = vld [vmem:[%s46 + $0x20] sm:$0xff]
    %v52 = vld [vmem:[%s46 + $0x28] sm:$0xff]
    %v53 = vld [vmem:[%s46 + $0x30] sm:$0xff]
    %v54 = vld [vmem:[%s46 + $0x38] sm:$0xff]
    %vm55 = vcmask 523264
    %v57 = vsel %vm55, %v45, 0
    %59 = vmatprep.subr.mxu0 0.0
    %60 = vmatpush1.msra.mxu0 %v47
    %61 = vmatprep.subr.mxu0 0.0
    %62 = vmatpush1.msra.mxu0 %v48
    %63 = vmatprep.subr.mxu0 0.0
    %64 = vmatpush1.msra.mxu0 %v49
    %65 = vmatprep.subr.mxu0 0.0
    %66 = vmatpush1.msra.mxu0 %v50
    %67 = vmatprep.subr.mxu0 0.0
    %68 = vmatpush1.msra.mxu0 %v51
    %69 = vmatprep.subr.mxu0 0.0
    %70 = vmatpush1.msra.mxu0 %v52
    %71 = vmatprep.subr.mxu0 0.0
    %72 = vmatpush1.msra.mxu0 %v53
    %73 = vmatprep.subr.mxu0 0.0
    %74 = vmatpush1.msra.mxu0 %v54
    %75 = vmatprep.subr.mxu0 0.0
    %76 = vmatpush1.msra.mxu0 0.0
    %77 = vmatprep.subr.mxu0 0.0
    %78 = vmatpush1.msra.mxu0 0.0
    %79 = vmatprep.subr.mxu0 0.0
    %80 = vmatpush1.msra.mxu0 0.0
    %81 = vmatprep.subr.mxu0 0.0
    %82 = vmatpush1.msra.mxu0 0.0
    %83 = vmatprep.subr.mxu0 0.0
    %84 = vmatpush1.msra.mxu0 0.0
    %85 = vmatprep.subr.mxu0 0.0
    %86 = vmatpush1.msra.mxu0 0.0
    %87 = vmatprep.subr.mxu0 0.0
    %88 = vmatpush1.msra.mxu0 0.0
    %89 = vmatprep.subr.mxu0 0.0
    %90 = vmatpush1.msra.mxu0 0.0
    %91 = vmatprep.subr.mxu0 0.0
    %92 = vmatpush1.msra.mxu0 0.0
    %93 = vmatprep.subr.mxu0 0.0
    %94 = vmatpush1.msra.mxu0 0.0
    %95 = vmatprep.subr.mxu0 0.0
    %96 = vmatpush1.msra.mxu0 0.0
    %97 = vmatprep.subr.mxu0 0.0
    %98 = vmatpush1.msra.mxu0 0.0
    %99 = vmatprep.subr.mxu0 0.0
    %100 = vmatpush1.msra.mxu0 0.0
    %101 = vmatprep.subr.mxu0 0.0
    %102 = vmatpush1.msra.mxu0 0.0
    %103 = vmatprep.subr.mxu0 0.0
    %104 = vmatpush1.msra.mxu0 0.0
    %105 = vmatprep.subr.mxu0 0.0
    %106 = vmatpush1.msra.mxu0 0.0
    %107 = vmatprep.subr.mxu0 0.0
    %108 = vmatpush1.msra.mxu0 0.0
    %109 = vmatprep.subr.mxu0 0.0
    %110 = vmatpush1.msra.mxu0 0.0
    %111 = vmatprep.subr.mxu0 0.0
    %112 = vmatpush1.msra.mxu0 0.0
    %113 = vmatprep.subr.mxu0 0.0
    %114 = vmatpush1.msra.mxu0 0.0
    %115 = vmatprep.subr.mxu0 0.0
    %116 = vmatpush1.msra.mxu0 0.0
    %117 = vmatprep.subr.mxu0 0.0
    %118 = vmatpush1.msra.mxu0 0.0
    %119 = vmatprep.subr.mxu0 0.0
    %120 = vmatpush1.msra.mxu0 0.0
    %121 = vmatprep.subr.mxu0 0.0
    %122 = vmatpush1.msra.mxu0 0.0
    %123 = vmatprep.mubr.f32.mxu0 0.0
    %124 = vmatmul.mubr.f32.gmra.mrb[0].mxu0 %v57
    %v125 = vpop.f32.mrb[0].mxu0
    %v126 = vadd.f32 0.0, %v125
    %v127 = vpop.f32.mrb[0].mxu0
    %128 = vdwg.mxu0
    %v130 = vsel %vm55, %v36, 0
    %132 = vmatprep.subr.mxu0 0.0
    %133 = vmatpush1.msra.mxu0 %v37
    %134 = vmatprep.subr.mxu0 0.0
    %135 = vmatpush1.msra.mxu0 %v38
    %136 = vmatprep.subr.mxu0 0.0
    %137 = vmatpush1.msra.mxu0 %v39
    %138 = vmatprep.subr.mxu0 0.0
    %139 = vmatpush1.msra.mxu0 %v40
    %140 = vmatprep.subr.mxu0 0.0
    %141 = vmatpush1.msra.mxu0 %v41
    %142 = vmatprep.subr.mxu0 0.0
    %143 = vmatpush1.msra.mxu0 %v42
    %144 = vmatprep.subr.mxu0 0.0
    %145 = vmatpush1.msra.mxu0 %v43
    %146 = vmatprep.subr.mxu0 0.0
    %147 = vmatpush1.msra.mxu0 %v44
    %148 = vmatprep.subr.mxu0 0.0
    %149 = vmatpush1.msra.mxu0 0.0
    %150 = vmatprep.subr.mxu0 0.0
    %151 = vmatpush1.msra.mxu0 0.0
    %152 = vmatprep.subr.mxu0 0.0
    %153 = vmatpush1.msra.mxu0 0.0
    %154 = vmatprep.subr.mxu0 0.0
    %155 = vmatpush1.msra.mxu0 0.0
    %156 = vmatprep.subr.mxu0 0.0
    %157 = vmatpush1.msra.mxu0 0.0
    %158 = vmatprep.subr.mxu0 0.0
    %159 = vmatpush1.msra.mxu0 0.0
    %160 = vmatprep.subr.mxu0 0.0
    %161 = vmatpush1.msra.mxu0 0.0
    %162 = vmatprep.subr.mxu0 0.0
    %163 = vmatpush1.msra.mxu0 0.0
    %164 = vmatprep.subr.mxu0 0.0
    %165 = vmatpush1.msra.mxu0 0.0
    %166 = vmatprep.subr.mxu0 0.0
    %167 = vmatpush1.msra.mxu0 0.0
    %168 = vmatprep.subr.mxu0 0.0
    %169 = vmatpush1.msra.mxu0 0.0
    %170 = vmatprep.subr.mxu0 0.0
    %171 = vmatpush1.msra.mxu0 0.0
    %172 = vmatprep.subr.mxu0 0.0
    %173 = vmatpush1.msra.mxu0 0.0
    %174 = vmatprep.subr.mxu0 0.0
    %175 = vmatpush1.msra.mxu0 0.0
    %176 = vmatprep.subr.mxu0 0.0
    %177 = vmatpush1.msra.mxu0 0.0
    %178 = vmatprep.subr.mxu0 0.0
    %179 = vmatpush1.msra.mxu0 0.0
    %180 = vmatprep.subr.mxu0 0.0
    %181 = vmatpush1.msra.mxu0 0.0
    %182 = vmatprep.subr.mxu0 0.0
    %183 = vmatpush1.msra.mxu0 0.0
    %184 = vmatprep.subr.mxu0 0.0
    %185 = vmatpush1.msra.mxu0 0.0
    %186 = vmatprep.subr.mxu0 0.0
    %187 = vmatpush1.msra.mxu0 0.0
    %188 = vmatprep.subr.mxu0 0.0
    %189 = vmatpush1.msra.mxu0 0.0
    %190 = vmatprep.subr.mxu0 0.0
    %191 = vmatpush1.msra.mxu0 0.0
    %192 = vmatprep.subr.mxu0 0.0
    %193 = vmatpush1.msra.mxu0 0.0
    %194 = vmatprep.subr.mxu0 0.0
    %195 = vmatpush1.msra.mxu0 0.0
    %196 = vmatprep.mubr.f32.mxu0 0.0
    %197 = vmatmul.mubr.f32.gmra.mrb[0].mxu0 %v130
    %v198 = vpop.f32.mrb[0].mxu0
    %v199 = vadd.f32 %v126, %v198
    %v200 = vpop.f32.mrb[0].mxu0
    %201 = vdwg.mxu0
    %s202 = scalar_lea.vmem %s0, 8
    %v203 = vld [vmem:[%s202] sm:$0x7f]
    %s204 = scalar_lea.vmem %s1, 128
    %v205 = vld [vmem:[%s204] sm:$0xff]
    %v206 = vld [vmem:[%s204 + $0x8] sm:$0xff]
    %v207 = vld [vmem:[%s204 + $0x10] sm:$0xff]
    %v208 = vld [vmem:[%s204 + $0x18] sm:$0xff]
    %v209 = vld [vmem:[%s204 + $0x20] sm:$0xff]
    %v210 = vld [vmem:[%s204 + $0x28] sm:$0xff]
    %v211 = vld [vmem:[%s204 + $0x30] sm:$0xff]
    %v212 = vld [vmem:[%s204 + $0x38] sm:$0xff]
    %v214 = vsel %vm55, %v203, 0
    %216 = vmatprep.subr.mxu0 0.0
    %217 = vmatpush1.msra.mxu0 %v205
    %218 = vmatprep.subr.mxu0 0.0
    %219 = vmatpush1.msra.mxu0 %v206
    %220 = vmatprep.subr.mxu0 0.0
    %221 = vmatpush1.msra.mxu0 %v207
    %222 = vmatprep.subr.mxu0 0.0
    %223 = vmatpush1.msra.mxu0 %v208
    %224 = vmatprep.subr.mxu0 0.0
    %225 = vmatpush1.msra.mxu0 %v209
    %226 = vmatprep.subr.mxu0 0.0
    %227 = vmatpush1.msra.mxu0 %v210
    %228 = vmatprep.subr.mxu0 0.0
    %229 = vmatpush1.msra.mxu0 %v211
    %230 = vmatprep.subr.mxu0 0.0
    %231 = vmatpush1.msra.mxu0 %v212
    %232 = vmatprep.subr.mxu0 0.0
    %233 = vmatpush1.msra.mxu0 0.0
    %234 = vmatprep.subr.mxu0 0.0
    %235 = vmatpush1.msra.mxu0 0.0
    %236 = vmatprep.subr.mxu0 0.0
    %237 = vmatpush1.msra.mxu0 0.0
    %238 = vmatprep.subr.mxu0 0.0
    %239 = vmatpush1.msra.mxu0 0.0
    %240 = vmatprep.subr.mxu0 0.0
    %241 = vmatpush1.msra.mxu0 0.0
    %242 = vmatprep.subr.mxu0 0.0
    %243 = vmatpush1.msra.mxu0 0.0
    %244 = vmatprep.subr.mxu0 0.0
    %245 = vmatpush1.msra.mxu0 0.0
    %246 = vmatprep.subr.mxu0 0.0
    %247 = vmatpush1.msra.mxu0 0.0
    %248 = vmatprep.subr.mxu0 0.0
    %249 = vmatpush1.msra.mxu0 0.0
    %250 = vmatprep.subr.mxu0 0.0
    %251 = vmatpush1.msra.mxu0 0.0
    %252 = vmatprep.subr.mxu0 0.0
    %253 = vmatpush1.msra.mxu0 0.0
    %254 = vmatprep.subr.mxu0 0.0
    %255 = vmatpush1.msra.mxu0 0.0
    %256 = vmatprep.subr.mxu0 0.0
    %257 = vmatpush1.msra.mxu0 0.0
    %258 = vmatprep.subr.mxu0 0.0
    %259 = vmatpush1.msra.mxu0 0.0
    %260 = vmatprep.subr.mxu0 0.0
    %261 = vmatpush1.msra.mxu0 0.0
    %262 = vmatprep.subr.mxu0 0.0
    %263 = vmatpush1.msra.mxu0 0.0
    %264 = vmatprep.subr.mxu0 0.0
    %265 = vmatpush1.msra.mxu0 0.0
    %266 = vmatprep.subr.mxu0 0.0
    %267 = vmatpush1.msra.mxu0 0.0
    %268 = vmatprep.subr.mxu0 0.0
    %269 = vmatpush1.msra.mxu0 0.0
    %270 = vmatprep.subr.mxu0 0.0
    %271 = vmatpush1.msra.mxu0 0.0
    %272 = vmatprep.subr.mxu0 0.0
    %273 = vmatpush1.msra.mxu0 0.0
    %274 = vmatprep.subr.mxu0 0.0
    %275 = vmatpush1.msra.mxu0 0.0
    %276 = vmatprep.subr.mxu0 0.0
    %277 = vmatpush1.msra.mxu0 0.0
    %278 = vmatprep.subr.mxu0 0.0
    %279 = vmatpush1.msra.mxu0 0.0
    %280 = vmatprep.mubr.f32.mxu0 0.0
    %281 = vmatmul.mubr.f32.gmra.mrb[0].mxu0 %v214
    %v282 = vpop.f32.mrb[0].mxu0
    %v283 = vadd.f32 0.0, %v282
    %v284 = vpop.f32.mrb[0].mxu0
    %285 = vdwg.mxu0
    %v286 = vadd.f32 %v199, %v283
    %v287 = vld [vmem:[%s202 + $0x1] sm:$0x7f]
    %s288 = scalar_lea.vmem %s1, 192
    %v289 = vld [vmem:[%s288] sm:$0xff]
    %v290 = vld [vmem:[%s288 + $0x8] sm:$0xff]
    %v291 = vld [vmem:[%s288 + $0x10] sm:$0xff]
    %v292 = vld [vmem:[%s288 + $0x18] sm:$0xff]
    %v293 = vld [vmem:[%s288 + $0x20] sm:$0xff]
    %v294 = vld [vmem:[%s288 + $0x28] sm:$0xff]
    %v295 = vld [vmem:[%s288 + $0x30] sm:$0xff]
    %v296 = vld [vmem:[%s288 + $0x38] sm:$0xff]
    %v298 = vsel %vm55, %v287, 0
    %300 = vmatprep.subr.mxu0 0.0
    %301 = vmatpush1.msra.mxu0 %v289
    %302 = vmatprep.subr.mxu0 0.0
    %303 = vmatpush1.msra.mxu0 %v290
    %304 = vmatprep.subr.mxu0 0.0
    %305 = vmatpush1.msra.mxu0 %v291
    %306 = vmatprep.subr.mxu0 0.0
    %307 = vmatpush1.msra.mxu0 %v292
    %308 = vmatprep.subr.mxu0 0.0
    %309 = vmatpush1.msra.mxu0 %v293
    %310 = vmatprep.subr.mxu0 0.0
    %311 = vmatpush1.msra.mxu0 %v294
    %312 = vmatprep.subr.mxu0 0.0
    %313 = vmatpush1.msra.mxu0 %v295
    %314 = vmatprep.subr.mxu0 0.0
    %315 = vmatpush1.msra.mxu0 %v296
    %316 = vmatprep.subr.mxu0 0.0
    %317 = vmatpush1.msra.mxu0 0.0
    %318 = vmatprep.subr.mxu0 0.0
    %319 = vmatpush1.msra.mxu0 0.0
    %320 = vmatprep.subr.mxu0 0.0
    %321 = vmatpush1.msra.mxu0 0.0
    %322 = vmatprep.subr.mxu0 0.0
    %323 = vmatpush1.msra.mxu0 0.0
    %324 = vmatprep.subr.mxu0 0.0
    %325 = vmatpush1.msra.mxu0 0.0
    %326 = vmatprep.subr.mxu0 0.0
    %327 = vmatpush1.msra.mxu0 0.0
    %328 = vmatprep.subr.mxu0 0.0
    %329 = vmatpush1.msra.mxu0 0.0
    %330 = vmatprep.subr.mxu0 0.0
    %331 = vmatpush1.msra.mxu0 0.0
    %332 = vmatprep.subr.mxu0 0.0
    %333 = vmatpush1.msra.mxu0 0.0
    %334 = vmatprep.subr.mxu0 0.0
    %335 = vmatpush1.msra.mxu0 0.0
    %336 = vmatprep.subr.mxu0 0.0
    %337 = vmatpush1.msra.mxu0 0.0
    %338 = vmatprep.subr.mxu0 0.0
    %339 = vmatpush1.msra.mxu0 0.0
    %340 = vmatprep.subr.mxu0 0.0
    %341 = vmatpush1.msra.mxu0 0.0
    %342 = vmatprep.subr.mxu0 0.0
    %343 = vmatpush1.msra.mxu0 0.0
    %344 = vmatprep.subr.mxu0 0.0
    %345 = vmatpush1.msra.mxu0 0.0
    %346 = vmatprep.subr.mxu0 0.0
    %347 = vmatpush1.msra.mxu0 0.0
    %348 = vmatprep.subr.mxu0 0.0
    %349 = vmatpush1.msra.mxu0 0.0
    %350 = vmatprep.subr.mxu0 0.0
    %351 = vmatpush1.msra.mxu0 0.0
    %352 = vmatprep.subr.mxu0 0.0
    %353 = vmatpush1.msra.mxu0 0.0
    %354 = vmatprep.subr.mxu0 0.0
    %355 = vmatpush1.msra.mxu0 0.0
    %356 = vmatprep.subr.mxu0 0.0
    %357 = vmatpush1.msra.mxu0 0.0
    %358 = vmatprep.subr.mxu0 0.0
    %359 = vmatpush1.msra.mxu0 0.0
    %360 = vmatprep.subr.mxu0 0.0
    %361 = vmatpush1.msra.mxu0 0.0
    %362 = vmatprep.subr.mxu0 0.0
    %363 = vmatpush1.msra.mxu0 0.0
    %364 = vmatprep.mubr.f32.mxu0 0.0
    %365 = vmatmul.mubr.f32.gmra.mrb[0].mxu0 %v298
    %v366 = vpop.f32.mrb[0].mxu0
    %v367 = vadd.f32 0.0, %v366
    %v368 = vpop.f32.mrb[0].mxu0
    %369 = vdwg.mxu0
    %v370 = vadd.f32 %v286, %v367
    %v372 = vlaneseq
    %v373 = vshrl.u32 %v372, 7
    %v374 = vsub.s32 0, %v373
    %v375 = vrot.slane %v35, %v374
    %v377 = vadd.f32 %v370, %v375
    %v378 = vmax.f32 %v377, 0.0
    %vm379 = vcmask 129024
    %380 = vst.msk [vmem:[#allocation2] sm:$0x7f] %vm379, %v378
    %v381 = vld [vmem:[%s202] sm:$0x7f]
    %v382 = vld [vmem:[%s1] sm:$0xff]
    %v383 = vld [vmem:[%s1 + $0x8] sm:$0xff]
    %v384 = vld [vmem:[%s1 + $0x10] sm:$0xff]
    %v385 = vld [vmem:[%s1 + $0x18] sm:$0xff]
    %v386 = vld [vmem:[%s1 + $0x20] sm:$0xff]
    %v387 = vld [vmem:[%s1 + $0x28] sm:$0xff]
    %v388 = vld [vmem:[%s1 + $0x30] sm:$0xff]
    %v389 = vld [vmem:[%s1 + $0x38] sm:$0xff]
    %v390 = vld [vmem:[%s202 + $0x1] sm:$0x7f]
    %v391 = vld [vmem:[%s46] sm:$0xff]
    %v392 = vld [vmem:[%s46 + $0x8] sm:$0xff]
    %v393 = vld [vmem:[%s46 + $0x10] sm:$0xff]
    %v394 = vld [vmem:[%s46 + $0x18] sm:$0xff]
    %v395 = vld [vmem:[%s46 + $0x20] sm:$0xff]
    %v396 = vld [vmem:[%s46 + $0x28] sm:$0xff]
    %v397 = vld [vmem:[%s46 + $0x30] sm:$0xff]
    %v398 = vld [vmem:[%s46 + $0x38] sm:$0xff]
    %v400 = vsel %vm55, %v390, 0
    %402 = vmatprep.subr.mxu0 0.0
    %403 = vmatpush1.msra.mxu0 %v391
    %404 = vmatprep.subr.mxu0 0.0
    %405 = vmatpush1.msra.mxu0 %v392
    %406 = vmatprep.subr.mxu0 0.0
    %407 = vmatpush1.msra.mxu0 %v393
    %408 = vmatprep.subr.mxu0 0.0
    %409 = vmatpush1.msra.mxu0 %v394
    %410 = vmatprep.subr.mxu0 0.0
    %411 = vmatpush1.msra.mxu0 %v395
    %412 = vmatprep.subr.mxu0 0.0
    %413 = vmatpush1.msra.mxu0 %v396
    %414 = vmatprep.subr.mxu0 0.0
    %415 = vmatpush1.msra.mxu0 %v397
    %416 = vmatprep.subr.mxu0 0.0
    %417 = vmatpush1.msra.mxu0 %v398
    %418 = vmatprep.subr.mxu0 0.0
    %419 = vmatpush1.msra.mxu0 0.0
    %420 = vmatprep.subr.mxu0 0.0
    %421 = vmatpush1.msra.mxu0 0.0
    %422 = vmatprep.subr.mxu0 0.0
    %423 = vmatpush1.msra.mxu0 0.0
    %424 = vmatprep.subr.mxu0 0.0
    %425 = vmatpush1.msra.mxu0 0.0
    %426 = vmatprep.subr.mxu0 0.0
    %427 = vmatpush1.msra.mxu0 0.0
    %428 = vmatprep.subr.mxu0 0.0
    %429 = vmatpush1.msra.mxu0 0.0
    %430 = vmatprep.subr.mxu0 0.0
    %431 = vmatpush1.msra.mxu0 0.0
    %432 = vmatprep.subr.mxu0 0.0
    %433 = vmatpush1.msra.mxu0 0.0
    %434 = vmatprep.subr.mxu0 0.0
    %435 = vmatpush1.msra.mxu0 0.0
    %436 = vmatprep.subr.mxu0 0.0
    %437 = vmatpush1.msra.mxu0 0.0
    %438 = vmatprep.subr.mxu0 0.0
    %439 = vmatpush1.msra.mxu0 0.0
    %440 = vmatprep.subr.mxu0 0.0
    %441 = vmatpush1.msra.mxu0 0.0
    %442 = vmatprep.subr.mxu0 0.0
    %443 = vmatpush1.msra.mxu0 0.0
    %444 = vmatprep.subr.mxu0 0.0
    %445 = vmatpush1.msra.mxu0 0.0
    %446 = vmatprep.subr.mxu0 0.0
    %447 = vmatpush1.msra.mxu0 0.0
    %448 = vmatprep.subr.mxu0 0.0
    %449 = vmatpush1.msra.mxu0 0.0
    %450 = vmatprep.subr.mxu0 0.0
    %451 = vmatpush1.msra.mxu0 0.0
    %452 = vmatprep.subr.mxu0 0.0
    %453 = vmatpush1.msra.mxu0 0.0
    %454 = vmatprep.subr.mxu0 0.0
    %455 = vmatpush1.msra.mxu0 0.0
    %456 = vmatprep.subr.mxu0 0.0
    %457 = vmatpush1.msra.mxu0 0.0
    %458 = vmatprep.subr.mxu0 0.0
    %459 = vmatpush1.msra.mxu0 0.0
    %460 = vmatprep.subr.mxu0 0.0
    %461 = vmatpush1.msra.mxu0 0.0
    %462 = vmatprep.subr.mxu0 0.0
    %463 = vmatpush1.msra.mxu0 0.0
    %464 = vmatprep.subr.mxu0 0.0
    %465 = vmatpush1.msra.mxu0 0.0
    %466 = vmatprep.mubr.f32.mxu0 0.0
    %467 = vmatmul.mubr.f32.gmra.mrb[0].mxu0 %v400
    %v468 = vpop.f32.mrb[0].mxu0
    %v469 = vadd.f32 0.0, %v468
    %v470 = vpop.f32.mrb[0].mxu0
    %471 = vdwg.mxu0
    %v473 = vsel %vm55, %v381, 0
    %475 = vmatprep.subr.mxu0 0.0
    %476 = vmatpush1.msra.mxu0 %v382
    %477 = vmatprep.subr.mxu0 0.0
    %478 = vmatpush1.msra.mxu0 %v383
    %479 = vmatprep.subr.mxu0 0.0
    %480 = vmatpush1.msra.mxu0 %v384
    %481 = vmatprep.subr.mxu0 0.0
    %482 = vmatpush1.msra.mxu0 %v385
    %483 = vmatprep.subr.mxu0 0.0
    %484 = vmatpush1.msra.mxu0 %v386
    %485 = vmatprep.subr.mxu0 0.0
    %486 = vmatpush1.msra.mxu0 %v387
    %487 = vmatprep.subr.mxu0 0.0
    %488 = vmatpush1.msra.mxu0 %v388
    %489 = vmatprep.subr.mxu0 0.0
    %490 = vmatpush1.msra.mxu0 %v389
    %491 = vmatprep.subr.mxu0 0.0
    %492 = vmatpush1.msra.mxu0 0.0
    %493 = vmatprep.subr.mxu0 0.0
    %494 = vmatpush1.msra.mxu0 0.0
    %495 = vmatprep.subr.mxu0 0.0
    %496 = vmatpush1.msra.mxu0 0.0
    %497 = vmatprep.subr.mxu0 0.0
    %498 = vmatpush1.msra.mxu0 0.0
    %499 = vmatprep.subr.mxu0 0.0
    %500 = vmatpush1.msra.mxu0 0.0
    %501 = vmatprep.subr.mxu0 0.0
    %502 = vmatpush1.msra.mxu0 0.0
    %503 = vmatprep.subr.mxu0 0.0
    %504 = vmatpush1.msra.mxu0 0.0
    %505 = vmatprep.subr.mxu0 0.0
    %506 = vmatpush1.msra.mxu0 0.0
    %507 = vmatprep.subr.mxu0 0.0
    %508 = vmatpush1.msra.mxu0 0.0
    %509 = vmatprep.subr.mxu0 0.0
    %510 = vmatpush1.msra.mxu0 0.0
    %511 = vmatprep.subr.mxu0 0.0
    %512 = vmatpush1.msra.mxu0 0.0
    %513 = vmatprep.subr.mxu0 0.0
    %514 = vmatpush1.msra.mxu0 0.0
    %515 = vmatprep.subr.mxu0 0.0
    %516 = vmatpush1.msra.mxu0 0.0
    %517 = vmatprep.subr.mxu0 0.0
    %518 = vmatpush1.msra.mxu0 0.0
    %519 = vmatprep.subr.mxu0 0.0
    %520 = vmatpush1.msra.mxu0 0.0
    %521 = vmatprep.subr.mxu0 0.0
    %522 = vmatpush1.msra.mxu0 0.0
    %523 = vmatprep.subr.mxu0 0.0
    %524 = vmatpush1.msra.mxu0 0.0
    %525 = vmatprep.subr.mxu0 0.0
    %526 = vmatpush1.msra.mxu0 0.0
    %527 = vmatprep.subr.mxu0 0.0
    %528 = vmatpush1.msra.mxu0 0.0
    %529 = vmatprep.subr.mxu0 0.0
    %530 = vmatpush1.msra.mxu0 0.0
    %531 = vmatprep.subr.mxu0 0.0
    %532 = vmatpush1.msra.mxu0 0.0
    %533 = vmatprep.subr.mxu0 0.0
    %534 = vmatpush1.msra.mxu0 0.0
    %535 = vmatprep.subr.mxu0 0.0
    %536 = vmatpush1.msra.mxu0 0.0
    %537 = vmatprep.subr.mxu0 0.0
    %538 = vmatpush1.msra.mxu0 0.0
    %539 = vmatprep.mubr.f32.mxu0 0.0
    %540 = vmatmul.mubr.f32.gmra.mrb[0].mxu0 %v473
    %v541 = vpop.f32.mrb[0].mxu0
    %v542 = vadd.f32 %v469, %v541
    %v543 = vpop.f32.mrb[0].mxu0
    %544 = vdwg.mxu0
    %s545 = scalar_lea.vmem %s0, 16
    %v546 = vld [vmem:[%s545] sm:$0x7f]
    %v547 = vld [vmem:[%s204] sm:$0xff]
    %v548 = vld [vmem:[%s204 + $0x8] sm:$0xff]
    %v549 = vld [vmem:[%s204 + $0x10] sm:$0xff]
    %v550 = vld [vmem:[%s204 + $0x18] sm:$0xff]
    %v551 = vld [vmem:[%s204 + $0x20] sm:$0xff]
    %v552 = vld [vmem:[%s204 + $0x28] sm:$0xff]
    %v553 = vld [vmem:[%s204 + $0x30] sm:$0xff]
    %v554 = vld [vmem:[%s204 + $0x38] sm:$0xff]
    %v556 = vsel %vm55, %v546, 0
    %558 = vmatprep.subr.mxu0 0.0
    %559 = vmatpush1.msra.mxu0 %v547
    %560 = vmatprep.subr.mxu0 0.0
    %561 = vmatpush1.msra.mxu0 %v548
    %562 = vmatprep.subr.mxu0 0.0
    %563 = vmatpush1.msra.mxu0 %v549
    %564 = vmatprep.subr.mxu0 0.0
    %565 = vmatpush1.msra.mxu0 %v550
    %566 = vmatprep.subr.mxu0 0.0
    %567 = vmatpush1.msra.mxu0 %v551
    %568 = vmatprep.subr.mxu0 0.0
    %569 = vmatpush1.msra.mxu0 %v552
    %570 = vmatprep.subr.mxu0 0.0
    %571 = vmatpush1.msra.mxu0 %v553
    %572 = vmatprep.subr.mxu0 0.0
    %573 = vmatpush1.msra.mxu0 %v554
    %574 = vmatprep.subr.mxu0 0.0
    %575 = vmatpush1.msra.mxu0 0.0
    %576 = vmatprep.subr.mxu0 0.0
    %577 = vmatpush1.msra.mxu0 0.0
    %578 = vmatprep.subr.mxu0 0.0
    %579 = vmatpush1.msra.mxu0 0.0
    %580 = vmatprep.subr.mxu0 0.0
    %581 = vmatpush1.msra.mxu0 0.0
    %582 = vmatprep.subr.mxu0 0.0
    %583 = vmatpush1.msra.mxu0 0.0
    %584 = vmatprep.subr.mxu0 0.0
    %585 = vmatpush1.msra.mxu0 0.0
    %586 = vmatprep.subr.mxu0 0.0
    %587 = vmatpush1.msra.mxu0 0.0
    %588 = vmatprep.subr.mxu0 0.0
    %589 = vmatpush1.msra.mxu0 0.0
    %590 = vmatprep.subr.mxu0 0.0
    %591 = vmatpush1.msra.mxu0 0.0
    %592 = vmatprep.subr.mxu0 0.0
    %593 = vmatpush1.msra.mxu0 0.0
    %594 = vmatprep.subr.mxu0 0.0
    %595 = vmatpush1.msra.mxu0 0.0
    %596 = vmatprep.subr.mxu0 0.0
    %597 = vmatpush1.msra.mxu0 0.0
    %598 = vmatprep.subr.mxu0 0.0
    %599 = vmatpush1.msra.mxu0 0.0
    %600 = vmatprep.subr.mxu0 0.0
    %601 = vmatpush1.msra.mxu0 0.0
    %602 = vmatprep.subr.mxu0 0.0
    %603 = vmatpush1.msra.mxu0 0.0
    %604 = vmatprep.subr.mxu0 0.0
    %605 = vmatpush1.msra.mxu0 0.0
    %606 = vmatprep.subr.mxu0 0.0
    %607 = vmatpush1.msra.mxu0 0.0
    %608 = vmatprep.subr.mxu0 0.0
    %609 = vmatpush1.msra.mxu0 0.0
    %610 = vmatprep.subr.mxu0 0.0
    %611 = vmatpush1.msra.mxu0 0.0
    %612 = vmatprep.subr.mxu0 0.0
    %613 = vmatpush1.msra.mxu0 0.0
    %614 = vmatprep.subr.mxu0 0.0
    %615 = vmatpush1.msra.mxu0 0.0
    %616 = vmatprep.subr.mxu0 0.0
    %617 = vmatpush1.msra.mxu0 0.0
    %618 = vmatprep.subr.mxu0 0.0
    %619 = vmatpush1.msra.mxu0 0.0
    %620 = vmatprep.subr.mxu0 0.0
    %621 = vmatpush1.msra.mxu0 0.0
    %622 = vmatprep.mubr.f32.mxu0 0.0
    %623 = vmatmul.mubr.f32.gmra.mrb[0].mxu0 %v556
    %v624 = vpop.f32.mrb[0].mxu0
    %v625 = vadd.f32 0.0, %v624
    %v626 = vpop.f32.mrb[0].mxu0
    %627 = vdwg.mxu0
    %v628 = vadd.f32 %v542, %v625
    %v629 = vld [vmem:[%s545 + $0x1] sm:$0x7f]
    %v630 = vld [vmem:[%s288] sm:$0xff]
    %v631 = vld [vmem:[%s288 + $0x8] sm:$0xff]
    %v632 = vld [vmem:[%s288 + $0x10] sm:$0xff]
    %v633 = vld [vmem:[%s288 + $0x18] sm:$0xff]
    %v634 = vld [vmem:[%s288 + $0x20] sm:$0xff]
    %v635 = vld [vmem:[%s288 + $0x28] sm:$0xff]
    %v636 = vld [vmem:[%s288 + $0x30] sm:$0xff]
    %v637 = vld [vmem:[%s288 + $0x38] sm:$0xff]
    %v639 = vsel %vm55, %v629, 0
    %641 = vmatprep.subr.mxu0 0.0
    %642 = vmatpush1.msra.mxu0 %v630
    %643 = vmatprep.subr.mxu0 0.0
    %644 = vmatpush1.msra.mxu0 %v631
    %645 = vmatprep.subr.mxu0 0.0
    %646 = vmatpush1.msra.mxu0 %v632
    %647 = vmatprep.subr.mxu0 0.0
    %648 = vmatpush1.msra.mxu0 %v633
    %649 = vmatprep.subr.mxu0 0.0
    %650 = vmatpush1.msra.mxu0 %v634
    %651 = vmatprep.subr.mxu0 0.0
    %652 = vmatpush1.msra.mxu0 %v635
    %653 = vmatprep.subr.mxu0 0.0
    %654 = vmatpush1.msra.mxu0 %v636
    %655 = vmatprep.subr.mxu0 0.0
    %656 = vmatpush1.msra.mxu0 %v637
    %657 = vmatprep.subr.mxu0 0.0
    %658 = vmatpush1.msra.mxu0 0.0
    %659 = vmatprep.subr.mxu0 0.0
    %660 = vmatpush1.msra.mxu0 0.0
    %661 = vmatprep.subr.mxu0 0.0
    %662 = vmatpush1.msra.mxu0 0.0
    %663 = vmatprep.subr.mxu0 0.0
    %664 = vmatpush1.msra.mxu0 0.0
    %665 = vmatprep.subr.mxu0 0.0
    %666 = vmatpush1.msra.mxu0 0.0
    %667 = vmatprep.subr.mxu0 0.0
    %668 = vmatpush1.msra.mxu0 0.0
    %669 = vmatprep.subr.mxu0 0.0
    %670 = vmatpush1.msra.mxu0 0.0
    %671 = vmatprep.subr.mxu0 0.0
    %672 = vmatpush1.msra.mxu0 0.0
    %673 = vmatprep.subr.mxu0 0.0
    %674 = vmatpush1.msra.mxu0 0.0
    %675 = vmatprep.subr.mxu0 0.0
    %676 = vmatpush1.msra.mxu0 0.0
    %677 = vmatprep.subr.mxu0 0.0
    %678 = vmatpush1.msra.mxu0 0.0
    %679 = vmatprep.subr.mxu0 0.0
    %680 = vmatpush1.msra.mxu0 0.0
    %681 = vmatprep.subr.mxu0 0.0
    %682 = vmatpush1.msra.mxu0 0.0
    %683 = vmatprep.subr.mxu0 0.0
    %684 = vmatpush1.msra.mxu0 0.0
    %685 = vmatprep.subr.mxu0 0.0
    %686 = vmatpush1.msra.mxu0 0.0
    %687 = vmatprep.subr.mxu0 0.0
    %688 = vmatpush1.msra.mxu0 0.0
    %689 = vmatprep.subr.mxu0 0.0
    %690 = vmatpush1.msra.mxu0 0.0
    %691 = vmatprep.subr.mxu0 0.0
    %692 = vmatpush1.msra.mxu0 0.0
    %693 = vmatprep.subr.mxu0 0.0
    %694 = vmatpush1.msra.mxu0 0.0
    %695 = vmatprep.subr.mxu0 0.0
    %696 = vmatpush1.msra.mxu0 0.0
    %697 = vmatprep.subr.mxu0 0.0
    %698 = vmatpush1.msra.mxu0 0.0
    %699 = vmatprep.subr.mxu0 0.0
    %700 = vmatpush1.msra.mxu0 0.0
    %701 = vmatprep.subr.mxu0 0.0
    %702 = vmatpush1.msra.mxu0 0.0
    %703 = vmatprep.subr.mxu0 0.0
    %704 = vmatpush1.msra.mxu0 0.0
    %705 = vmatprep.mubr.f32.mxu0 0.0
    %706 = vmatmul.mubr.f32.gmra.mrb[0].mxu0 %v639
    %v707 = vpop.f32.mrb[0].mxu0
    %v708 = vadd.f32 0.0, %v707
    %v709 = vpop.f32.mrb[0].mxu0
    %710 = vdwg.mxu0
    %v711 = vadd.f32 %v628, %v708
    %v712 = vadd.f32 %v711, %v375
    %v713 = vmax.f32 %v712, 0.0
    %s714 = scalar_lea.vmem [#allocation2], 8
    %715 = vst.msk [vmem:[%s714] sm:$0x7f] %vm379, %v713
    %v716 = vld [vmem:[%s545] sm:$0x7f]
    %v717 = vld [vmem:[%s1] sm:$0xff]
    %v718 = vld [vmem:[%s1 + $0x8] sm:$0xff]
    %v719 = vld [vmem:[%s1 + $0x10] sm:$0xff]
    %v720 = vld [vmem:[%s1 + $0x18] sm:$0xff]
    %v721 = vld [vmem:[%s1 + $0x20] sm:$0xff]
    %v722 = vld [vmem:[%s1 + $0x28] sm:$0xff]
    %v723 = vld [vmem:[%s1 + $0x30] sm:$0xff]
    %v724 = vld [vmem:[%s1 + $0x38] sm:$0xff]
    %v725 = vld [vmem:[%s545 + $0x1] sm:$0x7f]
    %v726 = vld [vmem:[%s46] sm:$0xff]
    %v727 = vld [vmem:[%s46 + $0x8] sm:$0xff]
    %v728 = vld [vmem:[%s46 + $0x10] sm:$0xff]
    %v729 = vld [vmem:[%s46 + $0x18] sm:$0xff]
    %v730 = vld [vmem:[%s46 + $0x20] sm:$0xff]
    %v731 = vld [vmem:[%s46 + $0x28] sm:$0xff]
    %v732 = vld [vmem:[%s46 + $0x30] sm:$0xff]
    %v733 = vld [vmem:[%s46 + $0x38] sm:$0xff]
    %v735 = vsel %vm55, %v725, 0
    %737 = vmatprep.subr.mxu0 0.0
    %738 = vmatpush1.msra.mxu0 %v726
    %739 = vmatprep.subr.mxu0 0.0
    %740 = vmatpush1.msra.mxu0 %v727
    %741 = vmatprep.subr.mxu0 0.0
    %742 = vmatpush1.msra.mxu0 %v728
    %743 = vmatprep.subr.mxu0 0.0
    %744 = vmatpush1.msra.mxu0 %v729
    %745 = vmatprep.subr.mxu0 0.0
    %746 = vmatpush1.msra.mxu0 %v730
    %747 = vmatprep.subr.mxu0 0.0
    %748 = vmatpush1.msra.mxu0 %v731
    %749 = vmatprep.subr.mxu0 0.0
    %750 = vmatpush1.msra.mxu0 %v732
    %751 = vmatprep.subr.mxu0 0.0
    %752 = vmatpush1.msra.mxu0 %v733
    %753 = vmatprep.subr.mxu0 0.0
    %754 = vmatpush1.msra.mxu0 0.0
    %755 = vmatprep.subr.mxu0 0.0
    %756 = vmatpush1.msra.mxu0 0.0
    %757 = vmatprep.subr.mxu0 0.0
    %758 = vmatpush1.msra.mxu0 0.0
    %759 = vmatprep.subr.mxu0 0.0
    %760 = vmatpush1.msra.mxu0 0.0
    %761 = vmatprep.subr.mxu0 0.0
    %762 = vmatpush1.msra.mxu0 0.0
    %763 = vmatprep.subr.mxu0 0.0
    %764 = vmatpush1.msra.mxu0 0.0
    %765 = vmatprep.subr.mxu0 0.0
    %766 = vmatpush1.msra.mxu0 0.0
    %767 = vmatprep.subr.mxu0 0.0
    %768 = vmatpush1.msra.mxu0 0.0
    %769 = vmatprep.subr.mxu0 0.0
    %770 = vmatpush1.msra.mxu0 0.0
    %771 = vmatprep.subr.mxu0 0.0
    %772 = vmatpush1.msra.mxu0 0.0
    %773 = vmatprep.subr.mxu0 0.0
    %774 = vmatpush1.msra.mxu0 0.0
    %775 = vmatprep.subr.mxu0 0.0
    %776 = vmatpush1.msra.mxu0 0.0
    %777 = vmatprep.subr.mxu0 0.0
    %778 = vmatpush1.msra.mxu0 0.0
    %779 = vmatprep.subr.mxu0 0.0
    %780 = vmatpush1.msra.mxu0 0.0
    %781 = vmatprep.subr.mxu0 0.0
    %782 = vmatpush1.msra.mxu0 0.0
    %783 = vmatprep.subr.mxu0 0.0
    %784 = vmatpush1.msra.mxu0 0.0
    %785 = vmatprep.subr.mxu0 0.0
    %786 = vmatpush1.msra.mxu0 0.0
    %787 = vmatprep.subr.mxu0 0.0
    %788 = vmatpush1.msra.mxu0 0.0
    %789 = vmatprep.subr.mxu0 0.0
    %790 = vmatpush1.msra.mxu0 0.0
    %791 = vmatprep.subr.mxu0 0.0
    %792 = vmatpush1.msra.mxu0 0.0
    %793 = vmatprep.subr.mxu0 0.0
    %794 = vmatpush1.msra.mxu0 0.0
    %795 = vmatprep.subr.mxu0 0.0
    %796 = vmatpush1.msra.mxu0 0.0
    %797 = vmatprep.subr.mxu0 0.0
    %798 = vmatpush1.msra.mxu0 0.0
    %799 = vmatprep.subr.mxu0 0.0
    %800 = vmatpush1.msra.mxu0 0.0
    %801 = vmatprep.mubr.f32.mxu0 0.0
    %802 = vmatmul.mubr.f32.gmra.mrb[0].mxu0 %v735
    %v803 = vpop.f32.mrb[0].mxu0
    %v804 = vadd.f32 0.0, %v803
    %v805 = vpop.f32.mrb[0].mxu0
    %806 = vdwg.mxu0
    %v808 = vsel %vm55, %v716, 0
    %810 = vmatprep.subr.mxu0 0.0
    %811 = vmatpush1.msra.mxu0 %v717
    %812 = vmatprep.subr.mxu0 0.0
    %813 = vmatpush1.msra.mxu0 %v718
    %814 = vmatprep.subr.mxu0 0.0
    %815 = vmatpush1.msra.mxu0 %v719
    %816 = vmatprep.subr.mxu0 0.0
    %817 = vmatpush1.msra.mxu0 %v720
    %818 = vmatprep.subr.mxu0 0.0
    %819 = vmatpush1.msra.mxu0 %v721
    %820 = vmatprep.subr.mxu0 0.0
    %821 = vmatpush1.msra.mxu0 %v722
    %822 = vmatprep.subr.mxu0 0.0
    %823 = vmatpush1.msra.mxu0 %v723
    %824 = vmatprep.subr.mxu0 0.0
    %825 = vmatpush1.msra.mxu0 %v724
    %826 = vmatprep.subr.mxu0 0.0
    %827 = vmatpush1.msra.mxu0 0.0
    %828 = vmatprep.subr.mxu0 0.0
    %829 = vmatpush1.msra.mxu0 0.0
    %830 = vmatprep.subr.mxu0 0.0
    %831 = vmatpush1.msra.mxu0 0.0
    %832 = vmatprep.subr.mxu0 0.0
    %833 = vmatpush1.msra.mxu0 0.0
    %834 = vmatprep.subr.mxu0 0.0
    %835 = vmatpush1.msra.mxu0 0.0
    %836 = vmatprep.subr.mxu0 0.0
    %837 = vmatpush1.msra.mxu0 0.0
    %838 = vmatprep.subr.mxu0 0.0
    %839 = vmatpush1.msra.mxu0 0.0
    %840 = vmatprep.subr.mxu0 0.0
    %841 = vmatpush1.msra.mxu0 0.0
    %842 = vmatprep.subr.mxu0 0.0
    %843 = vmatpush1.msra.mxu0 0.0
    %844 = vmatprep.subr.mxu0 0.0
    %845 = vmatpush1.msra.mxu0 0.0
    %846 = vmatprep.subr.mxu0 0.0
    %847 = vmatpush1.msra.mxu0 0.0
    %848 = vmatprep.subr.mxu0 0.0
    %849 = vmatpush1.msra.mxu0 0.0
    %850 = vmatprep.subr.mxu0 0.0
    %851 = vmatpush1.msra.mxu0 0.0
    %852 = vmatprep.subr.mxu0 0.0
    %853 = vmatpush1.msra.mxu0 0.0
    %854 = vmatprep.subr.mxu0 0.0
    %855 = vmatpush1.msra.mxu0 0.0
    %856 = vmatprep.subr.mxu0 0.0
    %857 = vmatpush1.msra.mxu0 0.0
    %858 = vmatprep.subr.mxu0 0.0
    %859 = vmatpush1.msra.mxu0 0.0
    %860 = vmatprep.subr.mxu0 0.0
    %861 = vmatpush1.msra.mxu0 0.0
    %862 = vmatprep.subr.mxu0 0.0
    %863 = vmatpush1.msra.mxu0 0.0
    %864 = vmatprep.subr.mxu0 0.0
    %865 = vmatpush1.msra.mxu0 0.0
    %866 = vmatprep.subr.mxu0 0.0
    %867 = vmatpush1.msra.mxu0 0.0
    %868 = vmatprep.subr.mxu0 0.0
    %869 = vmatpush1.msra.mxu0 0.0
    %870 = vmatprep.subr.mxu0 0.0
    %871 = vmatpush1.msra.mxu0 0.0
    %872 = vmatprep.subr.mxu0 0.0
    %873 = vmatpush1.msra.mxu0 0.0
    %874 = vmatprep.mubr.f32.mxu0 0.0
    %875 = vmatmul.mubr.f32.gmra.mrb[0].mxu0 %v808
    %v876 = vpop.f32.mrb[0].mxu0
    %v877 = vadd.f32 %v804, %v876
    %v878 = vpop.f32.mrb[0].mxu0
    %879 = vdwg.mxu0
    %s880 = scalar_lea.vmem %s0, 24
    %v881 = vld [vmem:[%s880] sm:$0x7f]
    %v882 = vld [vmem:[%s204] sm:$0xff]
    %v883 = vld [vmem:[%s204 + $0x8] sm:$0xff]
    %v884 = vld [vmem:[%s204 + $0x10] sm:$0xff]
    %v885 = vld [vmem:[%s204 + $0x18] sm:$0xff]
    %v886 = vld [vmem:[%s204 + $0x20] sm:$0xff]
    %v887 = vld [vmem:[%s204 + $0x28] sm:$0xff]
    %v888 = vld [vmem:[%s204 + $0x30] sm:$0xff]
    %v889 = vld [vmem:[%s204 + $0x38] sm:$0xff]
    %v891 = vsel %vm55, %v881, 0
    %893 = vmatprep.subr.mxu0 0.0
    %894 = vmatpush1.msra.mxu0 %v882
    %895 = vmatprep.subr.mxu0 0.0
    %896 = vmatpush1.msra.mxu0 %v883
    %897 = vmatprep.subr.mxu0 0.0
    %898 = vmatpush1.msra.mxu0 %v884
    %899 = vmatprep.subr.mxu0 0.0
    %900 = vmatpush1.msra.mxu0 %v885
    %901 = vmatprep.subr.mxu0 0.0
    %902 = vmatpush1.msra.mxu0 %v886
    %903 = vmatprep.subr.mxu0 0.0
    %904 = vmatpush1.msra.mxu0 %v887
    %905 = vmatprep.subr.mxu0 0.0
    %906 = vmatpush1.msra.mxu0 %v888
    %907 = vmatprep.subr.mxu0 0.0
    %908 = vmatpush1.msra.mxu0 %v889
    %909 = vmatprep.subr.mxu0 0.0
    %910 = vmatpush1.msra.mxu0 0.0
    %911 = vmatprep.subr.mxu0 0.0
    %912 = vmatpush1.msra.mxu0 0.0
    %913 = vmatprep.subr.mxu0 0.0
    %914 = vmatpush1.msra.mxu0 0.0
    %915 = vmatprep.subr.mxu0 0.0
    %916 = vmatpush1.msra.mxu0 0.0
    %917 = vmatprep.subr.mxu0 0.0
    %918 = vmatpush1.msra.mxu0 0.0
    %919 = vmatprep.subr.mxu0 0.0
    %920 = vmatpush1.msra.mxu0 0.0
    %921 = vmatprep.subr.mxu0 0.0
    %922 = vmatpush1.msra.mxu0 0.0
    %923 = vmatprep.subr.mxu0 0.0
    %924 = vmatpush1.msra.mxu0 0.0
    %925 = vmatprep.subr.mxu0 0.0
    %926 = vmatpush1.msra.mxu0 0.0
    %927 = vmatprep.subr.mxu0 0.0
    %928 = vmatpush1.msra.mxu0 0.0
    %929 = vmatprep.subr.mxu0 0.0
    %930 = vmatpush1.msra.mxu0 0.0
    %931 = vmatprep.subr.mxu0 0.0
    %932 = vmatpush1.msra.mxu0 0.0
    %933 = vmatprep.subr.mxu0 0.0
    %934 = vmatpush1.msra.mxu0 0.0
    %935 = vmatprep.subr.mxu0 0.0
    %936 = vmatpush1.msra.mxu0 0.0
    %937 = vmatprep.subr.mxu0 0.0
    %938 = vmatpush1.msra.mxu0 0.0
    %939 = vmatprep.subr.mxu0 0.0
    %940 = vmatpush1.msra.mxu0 0.0
    %941 = vmatprep.subr.mxu0 0.0
    %942 = vmatpush1.msra.mxu0 0.0
    %943 = vmatprep.subr.mxu0 0.0
    %944 = vmatpush1.msra.mxu0 0.0
    %945 = vmatprep.subr.mxu0 0.0
    %946 = vmatpush1.msra.mxu0 0.0
    %947 = vmatprep.subr.mxu0 0.0
    %948 = vmatpush1.msra.mxu0 0.0
    %949 = vmatprep.subr.mxu0 0.0
    %950 = vmatpush1.msra.mxu0 0.0
    %951 = vmatprep.subr.mxu0 0.0
    %952 = vmatpush1.msra.mxu0 0.0
    %953 = vmatprep.subr.mxu0 0.0
    %954 = vmatpush1.msra.mxu0 0.0
    %955 = vmatprep.subr.mxu0 0.0
    %956 = vmatpush1.msra.mxu0 0.0
    %957 = vmatprep.mubr.f32.mxu0 0.0
    %958 = vmatmul.mubr.f32.gmra.mrb[0].mxu0 %v891
    %v959 = vpop.f32.mrb[0].mxu0
    %v960 = vadd.f32 0.0, %v959
    %v961 = vpop.f32.mrb[0].mxu0
    %962 = vdwg.mxu0
    %v963 = vadd.f32 %v877, %v960
    %v964 = vld [vmem:[%s880 + $0x1] sm:$0x7f]
    %v965 = vld [vmem:[%s288] sm:$0xff]
    %v966 = vld [vmem:[%s288 + $0x8] sm:$0xff]
    %v967 = vld [vmem:[%s288 + $0x10] sm:$0xff]
    %v968 = vld [vmem:[%s288 + $0x18] sm:$0xff]
    %v969 = vld [vmem:[%s288 + $0x20] sm:$0xff]
    %v970 = vld [vmem:[%s288 + $0x28] sm:$0xff]
    %v971 = vld [vmem:[%s288 + $0x30] sm:$0xff]
    %v972 = vld [vmem:[%s288 + $0x38] sm:$0xff]
    %v974 = vsel %vm55, %v964, 0
    %976 = vmatprep.subr.mxu0 0.0
    %977 = vmatpush1.msra.mxu0 %v965
    %978 = vmatprep.subr.mxu0 0.0
    %979 = vmatpush1.msra.mxu0 %v966
    %980 = vmatprep.subr.mxu0 0.0
    %981 = vmatpush1.msra.mxu0 %v967
    %982 = vmatprep.subr.mxu0 0.0
    %983 = vmatpush1.msra.mxu0 %v968
    %984 = vmatprep.subr.mxu0 0.0
    %985 = vmatpush1.msra.mxu0 %v969
    %986 = vmatprep.subr.mxu0 0.0
    %987 = vmatpush1.msra.mxu0 %v970
    %988 = vmatprep.subr.mxu0 0.0
    %989 = vmatpush1.msra.mxu0 %v971
    %990 = vmatprep.subr.mxu0 0.0
    %991 = vmatpush1.msra.mxu0 %v972
    %992 = vmatprep.subr.mxu0 0.0
    %993 = vmatpush1.msra.mxu0 0.0
    %994 = vmatprep.subr.mxu0 0.0
    %995 = vmatpush1.msra.mxu0 0.0
    %996 = vmatprep.subr.mxu0 0.0
    %997 = vmatpush1.msra.mxu0 0.0
    %998 = vmatprep.subr.mxu0 0.0
    %999 = vmatpush1.msra.mxu0 0.0
    %1000 = vmatprep.subr.mxu0 0.0
    %1001 = vmatpush1.msra.mxu0 0.0
    %1002 = vmatprep.subr.mxu0 0.0
    %1003 = vmatpush1.msra.mxu0 0.0
    %1004 = vmatprep.subr.mxu0 0.0
    %1005 = vmatpush1.msra.mxu0 0.0
    %1006 = vmatprep.subr.mxu0 0.0
    %1007 = vmatpush1.msra.mxu0 0.0
    %1008 = vmatprep.subr.mxu0 0.0
    %1009 = vmatpush1.msra.mxu0 0.0
    %1010 = vmatprep.subr.mxu0 0.0
    %1011 = vmatpush1.msra.mxu0 0.0
    %1012 = vmatprep.subr.mxu0 0.0
    %1013 = vmatpush1.msra.mxu0 0.0
    %1014 = vmatprep.subr.mxu0 0.0
    %1015 = vmatpush1.msra.mxu0 0.0
    %1016 = vmatprep.subr.mxu0 0.0
    %1017 = vmatpush1.msra.mxu0 0.0
    %1018 = vmatprep.subr.mxu0 0.0
    %1019 = vmatpush1.msra.mxu0 0.0
    %1020 = vmatprep.subr.mxu0 0.0
    %1021 = vmatpush1.msra.mxu0 0.0
    %1022 = vmatprep.subr.mxu0 0.0
    %1023 = vmatpush1.msra.mxu0 0.0
    %1024 = vmatprep.subr.mxu0 0.0
    %1025 = vmatpush1.msra.mxu0 0.0
    %1026 = vmatprep.subr.mxu0 0.0
    %1027 = vmatpush1.msra.mxu0 0.0
    %1028 = vmatprep.subr.mxu0 0.0
    %1029 = vmatpush1.msra.mxu0 0.0
    %1030 = vmatprep.subr.mxu0 0.0
    %1031 = vmatpush1.msra.mxu0 0.0
    %1032 = vmatprep.subr.mxu0 0.0
    %1033 = vmatpush1.msra.mxu0 0.0
    %1034 = vmatprep.subr.mxu0 0.0
    %1035 = vmatpush1.msra.mxu0 0.0
    %1036 = vmatprep.subr.mxu0 0.0
    %1037 = vmatpush1.msra.mxu0 0.0
    %1038 = vmatprep.subr.mxu0 0.0
    %1039 = vmatpush1.msra.mxu0 0.0
    %1040 = vmatprep.mubr.f32.mxu0 0.0
    %1041 = vmatmul.mubr.f32.gmra.mrb[0].mxu0 %v974
    %v1042 = vpop.f32.mrb[0].mxu0
    %v1043 = vadd.f32 0.0, %v1042
    %v1044 = vpop.f32.mrb[0].mxu0
    %1045 = vdwg.mxu0
    %v1046 = vadd.f32 %v963, %v1043
    %v1047 = vadd.f32 %v1046, %v375
    %v1048 = vmax.f32 %v1047, 0.0
    %s1049 = scalar_lea.vmem [#allocation2], 16
    %1050 = vst.msk [vmem:[%s1049] sm:$0x7f] %vm379, %v1048
    %v1051 = vld [vmem:[%s880] sm:$0x7f]
    %v1052 = vld [vmem:[%s1] sm:$0xff]
    %v1053 = vld [vmem:[%s1 + $0x8] sm:$0xff]
    %v1054 = vld [vmem:[%s1 + $0x10] sm:$0xff]
    %v1055 = vld [vmem:[%s1 + $0x18] sm:$0xff]
    %v1056 = vld [vmem:[%s1 + $0x20] sm:$0xff]
    %v1057 = vld [vmem:[%s1 + $0x28] sm:$0xff]
    %v1058 = vld [vmem:[%s1 + $0x30] sm:$0xff]
    %v1059 = vld [vmem:[%s1 + $0x38] sm:$0xff]
    %v1060 = vld [vmem:[%s880 + $0x1] sm:$0x7f]
    %v1061 = vld [vmem:[%s46] sm:$0xff]
    %v1062 = vld [vmem:[%s46 + $0x8] sm:$0xff]
    %v1063 = vld [vmem:[%s46 + $0x10] sm:$0xff]
    %v1064 = vld [vmem:[%s46 + $0x18] sm:$0xff]
    %v1065 = vld [vmem:[%s46 + $0x20] sm:$0xff]
    %v1066 = vld [vmem:[%s46 + $0x28] sm:$0xff]
    %v1067 = vld [vmem:[%s46 + $0x30] sm:$0xff]
    %v1068 = vld [vmem:[%s46 + $0x38] sm:$0xff]
    %v1070 = vsel %vm55, %v1060, 0
    %1072 = vmatprep.subr.mxu0 0.0
    %1073 = vmatpush1.msra.mxu0 %v1061
    %1074 = vmatprep.subr.mxu0 0.0
    %1075 = vmatpush1.msra.mxu0 %v1062
    %1076 = vmatprep.subr.mxu0 0.0
    %1077 = vmatpush1.msra.mxu0 %v1063
    %1078 = vmatprep.subr.mxu0 0.0
    %1079 = vmatpush1.msra.mxu0 %v1064
    %1080 = vmatprep.subr.mxu0 0.0
    %1081 = vmatpush1.msra.mxu0 %v1065
    %1082 = vmatprep.subr.mxu0 0.0
    %1083 = vmatpush1.msra.mxu0 %v1066
    %1084 = vmatprep.subr.mxu0 0.0
    %1085 = vmatpush1.msra.mxu0 %v1067
    %1086 = vmatprep.subr.mxu0 0.0
    %1087 = vmatpush1.msra.mxu0 %v1068
    %1088 = vmatprep.subr.mxu0 0.0
    %1089 = vmatpush1.msra.mxu0 0.0
    %1090 = vmatprep.subr.mxu0 0.0
    %1091 = vmatpush1.msra.mxu0 0.0
    %1092 = vmatprep.subr.mxu0 0.0
    %1093 = vmatpush1.msra.mxu0 0.0
    %1094 = vmatprep.subr.mxu0 0.0
    %1095 = vmatpush1.msra.mxu0 0.0
    %1096 = vmatprep.subr.mxu0 0.0
    %1097 = vmatpush1.msra.mxu0 0.0
    %1098 = vmatprep.subr.mxu0 0.0
    %1099 = vmatpush1.msra.mxu0 0.0
    %1100 = vmatprep.subr.mxu0 0.0
    %1101 = vmatpush1.msra.mxu0 0.0
    %1102 = vmatprep.subr.mxu0 0.0
    %1103 = vmatpush1.msra.mxu0 0.0
    %1104 = vmatprep.subr.mxu0 0.0
    %1105 = vmatpush1.msra.mxu0 0.0
    %1106 = vmatprep.subr.mxu0 0.0
    %1107 = vmatpush1.msra.mxu0 0.0
    %1108 = vmatprep.subr.mxu0 0.0
    %1109 = vmatpush1.msra.mxu0 0.0
    %1110 = vmatprep.subr.mxu0 0.0
    %1111 = vmatpush1.msra.mxu0 0.0
    %1112 = vmatprep.subr.mxu0 0.0
    %1113 = vmatpush1.msra.mxu0 0.0
    %1114 = vmatprep.subr.mxu0 0.0
    %1115 = vmatpush1.msra.mxu0 0.0
    %1116 = vmatprep.subr.mxu0 0.0
    %1117 = vmatpush1.msra.mxu0 0.0
    %1118 = vmatprep.subr.mxu0 0.0
    %1119 = vmatpush1.msra.mxu0 0.0
    %1120 = vmatprep.subr.mxu0 0.0
    %1121 = vmatpush1.msra.mxu0 0.0
    %1122 = vmatprep.subr.mxu0 0.0
    %1123 = vmatpush1.msra.mxu0 0.0
    %1124 = vmatprep.subr.mxu0 0.0
    %1125 = vmatpush1.msra.mxu0 0.0
    %1126 = vmatprep.subr.mxu0 0.0
    %1127 = vmatpush1.msra.mxu0 0.0
    %1128 = vmatprep.subr.mxu0 0.0
    %1129 = vmatpush1.msra.mxu0 0.0
    %1130 = vmatprep.subr.mxu0 0.0
    %1131 = vmatpush1.msra.mxu0 0.0
    %1132 = vmatprep.subr.mxu0 0.0
    %1133 = vmatpush1.msra.mxu0 0.0
    %1134 = vmatprep.subr.mxu0 0.0
    %1135 = vmatpush1.msra.mxu0 0.0
    %1136 = vmatprep.mubr.f32.mxu0 0.0
    %1137 = vmatmul.mubr.f32.gmra.mrb[0].mxu0 %v1070
    %v1138 = vpop.f32.mrb[0].mxu0
    %v1139 = vadd.f32 0.0, %v1138
    %v1140 = vpop.f32.mrb[0].mxu0
    %1141 = vdwg.mxu0
    %v1143 = vsel %vm55, %v1051, 0
    %1145 = vmatprep.subr.mxu0 0.0
    %1146 = vmatpush1.msra.mxu0 %v1052
    %1147 = vmatprep.subr.mxu0 0.0
    %1148 = vmatpush1.msra.mxu0 %v1053
    %1149 = vmatprep.subr.mxu0 0.0
    %1150 = vmatpush1.msra.mxu0 %v1054
    %1151 = vmatprep.subr.mxu0 0.0
    %1152 = vmatpush1.msra.mxu0 %v1055
    %1153 = vmatprep.subr.mxu0 0.0
    %1154 = vmatpush1.msra.mxu0 %v1056
    %1155 = vmatprep.subr.mxu0 0.0
    %1156 = vmatpush1.msra.mxu0 %v1057
    %1157 = vmatprep.subr.mxu0 0.0
    %1158 = vmatpush1.msra.mxu0 %v1058
    %1159 = vmatprep.subr.mxu0 0.0
    %1160 = vmatpush1.msra.mxu0 %v1059
    %1161 = vmatprep.subr.mxu0 0.0
    %1162 = vmatpush1.msra.mxu0 0.0
    %1163 = vmatprep.subr.mxu0 0.0
    %1164 = vmatpush1.msra.mxu0 0.0
    %1165 = vmatprep.subr.mxu0 0.0
    %1166 = vmatpush1.msra.mxu0 0.0
    %1167 = vmatprep.subr.mxu0 0.0
    %1168 = vmatpush1.msra.mxu0 0.0
    %1169 = vmatprep.subr.mxu0 0.0
    %1170 = vmatpush1.msra.mxu0 0.0
    %1171 = vmatprep.subr.mxu0 0.0
    %1172 = vmatpush1.msra.mxu0 0.0
    %1173 = vmatprep.subr.mxu0 0.0
    %1174 = vmatpush1.msra.mxu0 0.0
    %1175 = vmatprep.subr.mxu0 0.0
    %1176 = vmatpush1.msra.mxu0 0.0
    %1177 = vmatprep.subr.mxu0 0.0
    %1178 = vmatpush1.msra.mxu0 0.0
    %1179 = vmatprep.subr.mxu0 0.0
    %1180 = vmatpush1.msra.mxu0 0.0
    %1181 = vmatprep.subr.mxu0 0.0
    %1182 = vmatpush1.msra.mxu0 0.0
    %1183 = vmatprep.subr.mxu0 0.0
    %1184 = vmatpush1.msra.mxu0 0.0
    %1185 = vmatprep.subr.mxu0 0.0
    %1186 = vmatpush1.msra.mxu0 0.0
    %1187 = vmatprep.subr.mxu0 0.0
    %1188 = vmatpush1.msra.mxu0 0.0
    %1189 = vmatprep.subr.mxu0 0.0
    %1190 = vmatpush1.msra.mxu0 0.0
    %1191 = vmatprep.subr.mxu0 0.0
    %1192 = vmatpush1.msra.mxu0 0.0
    %1193 = vmatprep.subr.mxu0 0.0
    %1194 = vmatpush1.msra.mxu0 0.0
    %1195 = vmatprep.subr.mxu0 0.0
    %1196 = vmatpush1.msra.mxu0 0.0
    %1197 = vmatprep.subr.mxu0 0.0
    %1198 = vmatpush1.msra.mxu0 0.0
    %1199 = vmatprep.subr.mxu0 0.0
    %1200 = vmatpush1.msra.mxu0 0.0
    %1201 = vmatprep.subr.mxu0 0.0
    %1202 = vmatpush1.msra.mxu0 0.0
    %1203 = vmatprep.subr.mxu0 0.0
    %1204 = vmatpush1.msra.mxu0 0.0
    %1205 = vmatprep.subr.mxu0 0.0
    %1206 = vmatpush1.msra.mxu0 0.0
    %1207 = vmatprep.subr.mxu0 0.0
    %1208 = vmatpush1.msra.mxu0 0.0
    %1209 = vmatprep.mubr.f32.mxu0 0.0
    %1210 = vmatmul.mubr.f32.gmra.mrb[0].mxu0 %v1143
    %v1211 = vpop.f32.mrb[0].mxu0
    %v1212 = vadd.f32 %v1139, %v1211
    %v1213 = vpop.f32.mrb[0].mxu0
    %1214 = vdwg.mxu0
    %s1215 = scalar_lea.vmem %s0, 32
    %v1216 = vld [vmem:[%s1215] sm:$0x7f]
    %v1217 = vld [vmem:[%s204] sm:$0xff]
    %v1218 = vld [vmem:[%s204 + $0x8] sm:$0xff]
    %v1219 = vld [vmem:[%s204 + $0x10] sm:$0xff]
    %v1220 = vld [vmem:[%s204 + $0x18] sm:$0xff]
    %v1221 = vld [vmem:[%s204 + $0x20] sm:$0xff]
    %v1222 = vld [vmem:[%s204 + $0x28] sm:$0xff]
    %v1223 = vld [vmem:[%s204 + $0x30] sm:$0xff]
    %v1224 = vld [vmem:[%s204 + $0x38] sm:$0xff]
    %v1226 = vsel %vm55, %v1216, 0
    %1228 = vmatprep.subr.mxu0 0.0
    %1229 = vmatpush1.msra.mxu0 %v1217
    %1230 = vmatprep.subr.mxu0 0.0
    %1231 = vmatpush1.msra.mxu0 %v1218
    %1232 = vmatprep.subr.mxu0 0.0
    %1233 = vmatpush1.msra.mxu0 %v1219
    %1234 = vmatprep.subr.mxu0 0.0
    %1235 = vmatpush1.msra.mxu0 %v1220
    %1236 = vmatprep.subr.mxu0 0.0
    %1237 = vmatpush1.msra.mxu0 %v1221
    %1238 = vmatprep.subr.mxu0 0.0
    %1239 = vmatpush1.msra.mxu0 %v1222
    %1240 = vmatprep.subr.mxu0 0.0
    %1241 = vmatpush1.msra.mxu0 %v1223
    %1242 = vmatprep.subr.mxu0 0.0
    %1243 = vmatpush1.msra.mxu0 %v1224
    %1244 = vmatprep.subr.mxu0 0.0
    %1245 = vmatpush1.msra.mxu0 0.0
    %1246 = vmatprep.subr.mxu0 0.0
    %1247 = vmatpush1.msra.mxu0 0.0
    %1248 = vmatprep.subr.mxu0 0.0
    %1249 = vmatpush1.msra.mxu0 0.0
    %1250 = vmatprep.subr.mxu0 0.0
    %1251 = vmatpush1.msra.mxu0 0.0
    %1252 = vmatprep.subr.mxu0 0.0
    %1253 = vmatpush1.msra.mxu0 0.0
    %1254 = vmatprep.subr.mxu0 0.0
    %1255 = vmatpush1.msra.mxu0 0.0
    %1256 = vmatprep.subr.mxu0 0.0
    %1257 = vmatpush1.msra.mxu0 0.0
    %1258 = vmatprep.subr.mxu0 0.0
    %1259 = vmatpush1.msra.mxu0 0.0
    %1260 = vmatprep.subr.mxu0 0.0
    %1261 = vmatpush1.msra.mxu0 0.0
    %1262 = vmatprep.subr.mxu0 0.0
    %1263 = vmatpush1.msra.mxu0 0.0
    %1264 = vmatprep.subr.mxu0 0.0
    %1265 = vmatpush1.msra.mxu0 0.0
    %1266 = vmatprep.subr.mxu0 0.0
    %1267 = vmatpush1.msra.mxu0 0.0
    %1268 = vmatprep.subr.mxu0 0.0
    %1269 = vmatpush1.msra.mxu0 0.0
    %1270 = vmatprep.subr.mxu0 0.0
    %1271 = vmatpush1.msra.mxu0 0.0
    %1272 = vmatprep.subr.mxu0 0.0
    %1273 = vmatpush1.msra.mxu0 0.0
    %1274 = vmatprep.subr.mxu0 0.0
    %1275 = vmatpush1.msra.mxu0 0.0
    %1276 = vmatprep.subr.mxu0 0.0
    %1277 = vmatpush1.msra.mxu0 0.0
    %1278 = vmatprep.subr.mxu0 0.0
    %1279 = vmatpush1.msra.mxu0 0.0
    %1280 = vmatprep.subr.mxu0 0.0
    %1281 = vmatpush1.msra.mxu0 0.0
    %1282 = vmatprep.subr.mxu0 0.0
    %1283 = vmatpush1.msra.mxu0 0.0
    %1284 = vmatprep.subr.mxu0 0.0
    %1285 = vmatpush1.msra.mxu0 0.0
    %1286 = vmatprep.subr.mxu0 0.0
    %1287 = vmatpush1.msra.mxu0 0.0
    %1288 = vmatprep.subr.mxu0 0.0
    %1289 = vmatpush1.msra.mxu0 0.0
    %1290 = vmatprep.subr.mxu0 0.0
    %1291 = vmatpush1.msra.mxu0 0.0
    %1292 = vmatprep.mubr.f32.mxu0 0.0
    %1293 = vmatmul.mubr.f32.gmra.mrb[0].mxu0 %v1226
    %v1294 = vpop.f32.mrb[0].mxu0
    %v1295 = vadd.f32 0.0, %v1294
    %v1296 = vpop.f32.mrb[0].mxu0
    %1297 = vdwg.mxu0
    %v1298 = vadd.f32 %v1212, %v1295
    %v1299 = vld [vmem:[%s1215 + $0x1] sm:$0x7f]
    %v1300 = vld [vmem:[%s288] sm:$0xff]
    %v1301 = vld [vmem:[%s288 + $0x8] sm:$0xff]
    %v1302 = vld [vmem:[%s288 + $0x10] sm:$0xff]
    %v1303 = vld [vmem:[%s288 + $0x18] sm:$0xff]
    %v1304 = vld [vmem:[%s288 + $0x20] sm:$0xff]
    %v1305 = vld [vmem:[%s288 + $0x28] sm:$0xff]
    %v1306 = vld [vmem:[%s288 + $0x30] sm:$0xff]
    %v1307 = vld [vmem:[%s288 + $0x38] sm:$0xff]
    %v1309 = vsel %vm55, %v1299, 0
    %1311 = vmatprep.subr.mxu0 0.0
    %1312 = vmatpush1.msra.mxu0 %v1300
    %1313 = vmatprep.subr.mxu0 0.0
    %1314 = vmatpush1.msra.mxu0 %v1301
    %1315 = vmatprep.subr.mxu0 0.0
    %1316 = vmatpush1.msra.mxu0 %v1302
    %1317 = vmatprep.subr.mxu0 0.0
    %1318 = vmatpush1.msra.mxu0 %v1303
    %1319 = vmatprep.subr.mxu0 0.0
    %1320 = vmatpush1.msra.mxu0 %v1304
    %1321 = vmatprep.subr.mxu0 0.0
    %1322 = vmatpush1.msra.mxu0 %v1305
    %1323 = vmatprep.subr.mxu0 0.0
    %1324 = vmatpush1.msra.mxu0 %v1306
    %1325 = vmatprep.subr.mxu0 0.0
    %1326 = vmatpush1.msra.mxu0 %v1307
    %1327 = vmatprep.subr.mxu0 0.0
    %1328 = vmatpush1.msra.mxu0 0.0
    %1329 = vmatprep.subr.mxu0 0.0
    %1330 = vmatpush1.msra.mxu0 0.0
    %1331 = vmatprep.subr.mxu0 0.0
    %1332 = vmatpush1.msra.mxu0 0.0
    %1333 = vmatprep.subr.mxu0 0.0
    %1334 = vmatpush1.msra.mxu0 0.0
    %1335 = vmatprep.subr.mxu0 0.0
    %1336 = vmatpush1.msra.mxu0 0.0
    %1337 = vmatprep.subr.mxu0 0.0
    %1338 = vmatpush1.msra.mxu0 0.0
    %1339 = vmatprep.subr.mxu0 0.0
    %1340 = vmatpush1.msra.mxu0 0.0
    %1341 = vmatprep.subr.mxu0 0.0
    %1342 = vmatpush1.msra.mxu0 0.0
    %1343 = vmatprep.subr.mxu0 0.0
    %1344 = vmatpush1.msra.mxu0 0.0
    %1345 = vmatprep.subr.mxu0 0.0
    %1346 = vmatpush1.msra.mxu0 0.0
    %1347 = vmatprep.subr.mxu0 0.0
    %1348 = vmatpush1.msra.mxu0 0.0
    %1349 = vmatprep.subr.mxu0 0.0
    %1350 = vmatpush1.msra.mxu0 0.0
    %1351 = vmatprep.subr.mxu0 0.0
    %1352 = vmatpush1.msra.mxu0 0.0
    %1353 = vmatprep.subr.mxu0 0.0
    %1354 = vmatpush1.msra.mxu0 0.0
    %1355 = vmatprep.subr.mxu0 0.0
    %1356 = vmatpush1.msra.mxu0 0.0
    %1357 = vmatprep.subr.mxu0 0.0
    %1358 = vmatpush1.msra.mxu0 0.0
    %1359 = vmatprep.subr.mxu0 0.0
    %1360 = vmatpush1.msra.mxu0 0.0
    %1361 = vmatprep.subr.mxu0 0.0
    %1362 = vmatpush1.msra.mxu0 0.0
    %1363 = vmatprep.subr.mxu0 0.0
    %1364 = vmatpush1.msra.mxu0 0.0
    %1365 = vmatprep.subr.mxu0 0.0
    %1366 = vmatpush1.msra.mxu0 0.0
    %1367 = vmatprep.subr.mxu0 0.0
    %1368 = vmatpush1.msra.mxu0 0.0
    %1369 = vmatprep.subr.mxu0 0.0
    %1370 = vmatpush1.msra.mxu0 0.0
    %1371 = vmatprep.subr.mxu0 0.0
    %1372 = vmatpush1.msra.mxu0 0.0
    %1373 = vmatprep.subr.mxu0 0.0
    %1374 = vmatpush1.msra.mxu0 0.0
    %1375 = vmatprep.mubr.f32.mxu0 0.0
    %1376 = vmatmul.mubr.f32.gmra.mrb[0].mxu0 %v1309
    %v1377 = vpop.f32.mrb[0].mxu0
    %v1378 = vadd.f32 0.0, %v1377
    %v1379 = vpop.f32.mrb[0].mxu0
    %1380 = vdwg.mxu0
    %v1381 = vadd.f32 %v1298, %v1378
    %v1382 = vadd.f32 %v1381, %v375
    %v1383 = vmax.f32 %v1382, 0.0
    %s1384 = scalar_lea.vmem [#allocation2], 24
    %1385 = vst.msk [vmem:[%s1384] sm:$0x7f] %vm379, %v1383
    %v1386 = vld [vmem:[%s1215] sm:$0x7f]
    %v1387 = vld [vmem:[%s1] sm:$0xff]
    %v1388 = vld [vmem:[%s1 + $0x8] sm:$0xff]
    %v1389 = vld [vmem:[%s1 + $0x10] sm:$0xff]
    %v1390 = vld [vmem:[%s1 + $0x18] sm:$0xff]
    %v1391 = vld [vmem:[%s1 + $0x20] sm:$0xff]
    %v1392 = vld [vmem:[%s1 + $0x28] sm:$0xff]
    %v1393 = vld [vmem:[%s1 + $0x30] sm:$0xff]
    %v1394 = vld [vmem:[%s1 + $0x38] sm:$0xff]
    %v1395 = vld [vmem:[%s1215 + $0x1] sm:$0x7f]
    %v1396 = vld [vmem:[%s46] sm:$0xff]
    %v1397 = vld [vmem:[%s46 + $0x8] sm:$0xff]
    %v1398 = vld [vmem:[%s46 + $0x10] sm:$0xff]
    %v1399 = vld [vmem:[%s46 + $0x18] sm:$0xff]
    %v1400 = vld [vmem:[%s46 + $0x20] sm:$0xff]
    %v1401 = vld [vmem:[%s46 + $0x28] sm:$0xff]
    %v1402 = vld [vmem:[%s46 + $0x30] sm:$0xff]
    %v1403 = vld [vmem:[%s46 + $0x38] sm:$0xff]
    %v1405 = vsel %vm55, %v1395, 0
    %1407 = vmatprep.subr.mxu0 0.0
    %1408 = vmatpush1.msra.mxu0 %v1396
    %1409 = vmatprep.subr.mxu0 0.0
    %1410 = vmatpush1.msra.mxu0 %v1397
    %1411 = vmatprep.subr.mxu0 0.0
    %1412 = vmatpush1.msra.mxu0 %v1398
    %1413 = vmatprep.subr.mxu0 0.0
    %1414 = vmatpush1.msra.mxu0 %v1399
    %1415 = vmatprep.subr.mxu0 0.0
    %1416 = vmatpush1.msra.mxu0 %v1400
    %1417 = vmatprep.subr.mxu0 0.0
    %1418 = vmatpush1.msra.mxu0 %v1401
    %1419 = vmatprep.subr.mxu0 0.0
    %1420 = vmatpush1.msra.mxu0 %v1402
    %1421 = vmatprep.subr.mxu0 0.0
    %1422 = vmatpush1.msra.mxu0 %v1403
    %1423 = vmatprep.subr.mxu0 0.0
    %1424 = vmatpush1.msra.mxu0 0.0
    %1425 = vmatprep.subr.mxu0 0.0
    %1426 = vmatpush1.msra.mxu0 0.0
    %1427 = vmatprep.subr.mxu0 0.0
    %1428 = vmatpush1.msra.mxu0 0.0
    %1429 = vmatprep.subr.mxu0 0.0
    %1430 = vmatpush1.msra.mxu0 0.0
    %1431 = vmatprep.subr.mxu0 0.0
    %1432 = vmatpush1.msra.mxu0 0.0
    %1433 = vmatprep.subr.mxu0 0.0
    %1434 = vmatpush1.msra.mxu0 0.0
    %1435 = vmatprep.subr.mxu0 0.0
    %1436 = vmatpush1.msra.mxu0 0.0
    %1437 = vmatprep.subr.mxu0 0.0
    %1438 = vmatpush1.msra.mxu0 0.0
    %1439 = vmatprep.subr.mxu0 0.0
    %1440 = vmatpush1.msra.mxu0 0.0
    %1441 = vmatprep.subr.mxu0 0.0
    %1442 = vmatpush1.msra.mxu0 0.0
    %1443 = vmatprep.subr.mxu0 0.0
    %1444 = vmatpush1.msra.mxu0 0.0
    %1445 = vmatprep.subr.mxu0 0.0
    %1446 = vmatpush1.msra.mxu0 0.0
    %1447 = vmatprep.subr.mxu0 0.0
    %1448 = vmatpush1.msra.mxu0 0.0
    %1449 = vmatprep.subr.mxu0 0.0
    %1450 = vmatpush1.msra.mxu0 0.0
    %1451 = vmatprep.subr.mxu0 0.0
    %1452 = vmatpush1.msra.mxu0 0.0
    %1453 = vmatprep.subr.mxu0 0.0
    %1454 = vmatpush1.msra.mxu0 0.0
    %1455 = vmatprep.subr.mxu0 0.0
    %1456 = vmatpush1.msra.mxu0 0.0
    %1457 = vmatprep.subr.mxu0 0.0
    %1458 = vmatpush1.msra.mxu0 0.0
    %1459 = vmatprep.subr.mxu0 0.0
    %1460 = vmatpush1.msra.mxu0 0.0
    %1461 = vmatprep.subr.mxu0 0.0
    %1462 = vmatpush1.msra.mxu0 0.0
    %1463 = vmatprep.subr.mxu0 0.0
    %1464 = vmatpush1.msra.mxu0 0.0
    %1465 = vmatprep.subr.mxu0 0.0
    %1466 = vmatpush1.msra.mxu0 0.0
    %1467 = vmatprep.subr.mxu0 0.0
    %1468 = vmatpush1.msra.mxu0 0.0
    %1469 = vmatprep.subr.mxu0 0.0
    %1470 = vmatpush1.msra.mxu0 0.0
    %1471 = vmatprep.mubr.f32.mxu0 0.0
    %1472 = vmatmul.mubr.f32.gmra.mrb[0].mxu0 %v1405
    %v1473 = vpop.f32.mrb[0].mxu0
    %v1474 = vadd.f32 0.0, %v1473
    %v1475 = vpop.f32.mrb[0].mxu0
    %1476 = vdwg.mxu0
    %v1478 = vsel %vm55, %v1386, 0
    %1480 = vmatprep.subr.mxu0 0.0
    %1481 = vmatpush1.msra.mxu0 %v1387
    %1482 = vmatprep.subr.mxu0 0.0
    %1483 = vmatpush1.msra.mxu0 %v1388
    %1484 = vmatprep.subr.mxu0 0.0
    %1485 = vmatpush1.msra.mxu0 %v1389
    %1486 = vmatprep.subr.mxu0 0.0
    %1487 = vmatpush1.msra.mxu0 %v1390
    %1488 = vmatprep.subr.mxu0 0.0
    %1489 = vmatpush1.msra.mxu0 %v1391
    %1490 = vmatprep.subr.mxu0 0.0
    %1491 = vmatpush1.msra.mxu0 %v1392
    %1492 = vmatprep.subr.mxu0 0.0
    %1493 = vmatpush1.msra.mxu0 %v1393
    %1494 = vmatprep.subr.mxu0 0.0
    %1495 = vmatpush1.msra.mxu0 %v1394
    %1496 = vmatprep.subr.mxu0 0.0
    %1497 = vmatpush1.msra.mxu0 0.0
    %1498 = vmatprep.subr.mxu0 0.0
    %1499 = vmatpush1.msra.mxu0 0.0
    %1500 = vmatprep.subr.mxu0 0.0
    %1501 = vmatpush1.msra.mxu0 0.0
    %1502 = vmatprep.subr.mxu0 0.0
    %1503 = vmatpush1.msra.mxu0 0.0
    %1504 = vmatprep.subr.mxu0 0.0
    %1505 = vmatpush1.msra.mxu0 0.0
    %1506 = vmatprep.subr.mxu0 0.0
    %1507 = vmatpush1.msra.mxu0 0.0
    %1508 = vmatprep.subr.mxu0 0.0
    %1509 = vmatpush1.msra.mxu0 0.0
    %1510 = vmatprep.subr.mxu0 0.0
    %1511 = vmatpush1.msra.mxu0 0.0
    %1512 = vmatprep.subr.mxu0 0.0
    %1513 = vmatpush1.msra.mxu0 0.0
    %1514 = vmatprep.subr.mxu0 0.0
    %1515 = vmatpush1.msra.mxu0 0.0
    %1516 = vmatprep.subr.mxu0 0.0
    %1517 = vmatpush1.msra.mxu0 0.0
    %1518 = vmatprep.subr.mxu0 0.0
    %1519 = vmatpush1.msra.mxu0 0.0
    %1520 = vmatprep.subr.mxu0 0.0
    %1521 = vmatpush1.msra.mxu0 0.0
    %1522 = vmatprep.subr.mxu0 0.0
    %1523 = vmatpush1.msra.mxu0 0.0
    %1524 = vmatprep.subr.mxu0 0.0
    %1525 = vmatpush1.msra.mxu0 0.0
    %1526 = vmatprep.subr.mxu0 0.0
    %1527 = vmatpush1.msra.mxu0 0.0
    %1528 = vmatprep.subr.mxu0 0.0
    %1529 = vmatpush1.msra.mxu0 0.0
    %1530 = vmatprep.subr.mxu0 0.0
    %1531 = vmatpush1.msra.mxu0 0.0
    %1532 = vmatprep.subr.mxu0 0.0
    %1533 = vmatpush1.msra.mxu0 0.0
    %1534 = vmatprep.subr.mxu0 0.0
    %1535 = vmatpush1.msra.mxu0 0.0
    %1536 = vmatprep.subr.mxu0 0.0
    %1537 = vmatpush1.msra.mxu0 0.0
    %1538 = vmatprep.subr.mxu0 0.0
    %1539 = vmatpush1.msra.mxu0 0.0
    %1540 = vmatprep.subr.mxu0 0.0
    %1541 = vmatpush1.msra.mxu0 0.0
    %1542 = vmatprep.subr.mxu0 0.0
    %1543 = vmatpush1.msra.mxu0 0.0
    %1544 = vmatprep.mubr.f32.mxu0 0.0
    %1545 = vmatmul.mubr.f32.gmra.mrb[0].mxu0 %v1478
    %v1546 = vpop.f32.mrb[0].mxu0
    %v1547 = vadd.f32 %v1474, %v1546
    %v1548 = vpop.f32.mrb[0].mxu0
    %1549 = vdwg.mxu0
    %s1550 = scalar_lea.vmem %s0, 40
    %v1551 = vld [vmem:[%s1550] sm:$0x7f]
    %v1552 = vld [vmem:[%s204] sm:$0xff]
    %v1553 = vld [vmem:[%s204 + $0x8] sm:$0xff]
    %v1554 = vld [vmem:[%s204 + $0x10] sm:$0xff]
    %v1555 = vld [vmem:[%s204 + $0x18] sm:$0xff]
    %v1556 = vld [vmem:[%s204 + $0x20] sm:$0xff]
    %v1557 = vld [vmem:[%s204 + $0x28] sm:$0xff]
    %v1558 = vld [vmem:[%s204 + $0x30] sm:$0xff]
    %v1559 = vld [vmem:[%s204 + $0x38] sm:$0xff]
    %v1561 = vsel %vm55, %v1551, 0
    %1563 = vmatprep.subr.mxu0 0.0
    %1564 = vmatpush1.msra.mxu0 %v1552
    %1565 = vmatprep.subr.mxu0 0.0
    %1566 = vmatpush1.msra.mxu0 %v1553
    %1567 = vmatprep.subr.mxu0 0.0
    %1568 = vmatpush1.msra.mxu0 %v1554
    %1569 = vmatprep.subr.mxu0 0.0
    %1570 = vmatpush1.msra.mxu0 %v1555
    %1571 = vmatprep.subr.mxu0 0.0
    %1572 = vmatpush1.msra.mxu0 %v1556
    %1573 = vmatprep.subr.mxu0 0.0
    %1574 = vmatpush1.msra.mxu0 %v1557
    %1575 = vmatprep.subr.mxu0 0.0
    %1576 = vmatpush1.msra.mxu0 %v1558
    %1577 = vmatprep.subr.mxu0 0.0
    %1578 = vmatpush1.msra.mxu0 %v1559
    %1579 = vmatprep.subr.mxu0 0.0
    %1580 = vmatpush1.msra.mxu0 0.0
    %1581 = vmatprep.subr.mxu0 0.0
    %1582 = vmatpush1.msra.mxu0 0.0
    %1583 = vmatprep.subr.mxu0 0.0
    %1584 = vmatpush1.msra.mxu0 0.0
    %1585 = vmatprep.subr.mxu0 0.0
    %1586 = vmatpush1.msra.mxu0 0.0
    %1587 = vmatprep.subr.mxu0 0.0
    %1588 = vmatpush1.msra.mxu0 0.0
    %1589 = vmatprep.subr.mxu0 0.0
    %1590 = vmatpush1.msra.mxu0 0.0
    %1591 = vmatprep.subr.mxu0 0.0
    %1592 = vmatpush1.msra.mxu0 0.0
    %1593 = vmatprep.subr.mxu0 0.0
    %1594 = vmatpush1.msra.mxu0 0.0
    %1595 = vmatprep.subr.mxu0 0.0
    %1596 = vmatpush1.msra.mxu0 0.0
    %1597 = vmatprep.subr.mxu0 0.0
    %1598 = vmatpush1.msra.mxu0 0.0
    %1599 = vmatprep.subr.mxu0 0.0
    %1600 = vmatpush1.msra.mxu0 0.0
    %1601 = vmatprep.subr.mxu0 0.0
    %1602 = vmatpush1.msra.mxu0 0.0
    %1603 = vmatprep.subr.mxu0 0.0
    %1604 = vmatpush1.msra.mxu0 0.0
    %1605 = vmatprep.subr.mxu0 0.0
    %1606 = vmatpush1.msra.mxu0 0.0
    %1607 = vmatprep.subr.mxu0 0.0
    %1608 = vmatpush1.msra.mxu0 0.0
    %1609 = vmatprep.subr.mxu0 0.0
    %1610 = vmatpush1.msra.mxu0 0.0
    %1611 = vmatprep.subr.mxu0 0.0
    %1612 = vmatpush1.msra.mxu0 0.0
    %1613 = vmatprep.subr.mxu0 0.0
    %1614 = vmatpush1.msra.mxu0 0.0
    %1615 = vmatprep.subr.mxu0 0.0
    %1616 = vmatpush1.msra.mxu0 0.0
    %1617 = vmatprep.subr.mxu0 0.0
    %1618 = vmatpush1.msra.mxu0 0.0
    %1619 = vmatprep.subr.mxu0 0.0
    %1620 = vmatpush1.msra.mxu0 0.0
    %1621 = vmatprep.subr.mxu0 0.0
    %1622 = vmatpush1.msra.mxu0 0.0
    %1623 = vmatprep.subr.mxu0 0.0
    %1624 = vmatpush1.msra.mxu0 0.0
    %1625 = vmatprep.subr.mxu0 0.0
    %1626 = vmatpush1.msra.mxu0 0.0
    %1627 = vmatprep.mubr.f32.mxu0 0.0
    %1628 = vmatmul.mubr.f32.gmra.mrb[0].mxu0 %v1561
    %v1629 = vpop.f32.mrb[0].mxu0
    %v1630 = vadd.f32 0.0, %v1629
    %v1631 = vpop.f32.mrb[0].mxu0
    %1632 = vdwg.mxu0
    %v1633 = vadd.f32 %v1547, %v1630
    %v1634 = vld [vmem:[%s1550 + $0x1] sm:$0x7f]
    %v1635 = vld [vmem:[%s288] sm:$0xff]
    %v1636 = vld [vmem:[%s288 + $0x8] sm:$0xff]
    %v1637 = vld [vmem:[%s288 + $0x10] sm:$0xff]
    %v1638 = vld [vmem:[%s288 + $0x18] sm:$0xff]
    %v1639 = vld [vmem:[%s288 + $0x20] sm:$0xff]
    %v1640 = vld [vmem:[%s288 + $0x28] sm:$0xff]
    %v1641 = vld [vmem:[%s288 + $0x30] sm:$0xff]
    %v1642 = vld [vmem:[%s288 + $0x38] sm:$0xff]
    %v1644 = vsel %vm55, %v1634, 0
    %1646 = vmatprep.subr.mxu0 0.0
    %1647 = vmatpush1.msra.mxu0 %v1635
    %1648 = vmatprep.subr.mxu0 0.0
    %1649 = vmatpush1.msra.mxu0 %v1636
    %1650 = vmatprep.subr.mxu0 0.0
    %1651 = vmatpush1.msra.mxu0 %v1637
    %1652 = vmatprep.subr.mxu0 0.0
    %1653 = vmatpush1.msra.mxu0 %v1638
    %1654 = vmatprep.subr.mxu0 0.0
    %1655 = vmatpush1.msra.mxu0 %v1639
    %1656 = vmatprep.subr.mxu0 0.0
    %1657 = vmatpush1.msra.mxu0 %v1640
    %1658 = vmatprep.subr.mxu0 0.0
    %1659 = vmatpush1.msra.mxu0 %v1641
    %1660 = vmatprep.subr.mxu0 0.0
    %1661 = vmatpush1.msra.mxu0 %v1642
    %1662 = vmatprep.subr.mxu0 0.0
    %1663 = vmatpush1.msra.mxu0 0.0
    %1664 = vmatprep.subr.mxu0 0.0
    %1665 = vmatpush1.msra.mxu0 0.0
    %1666 = vmatprep.subr.mxu0 0.0
    %1667 = vmatpush1.msra.mxu0 0.0
    %1668 = vmatprep.subr.mxu0 0.0
    %1669 = vmatpush1.msra.mxu0 0.0
    %1670 = vmatprep.subr.mxu0 0.0
    %1671 = vmatpush1.msra.mxu0 0.0
    %1672 = vmatprep.subr.mxu0 0.0
    %1673 = vmatpush1.msra.mxu0 0.0
    %1674 = vmatprep.subr.mxu0 0.0
    %1675 = vmatpush1.msra.mxu0 0.0
    %1676 = vmatprep.subr.mxu0 0.0
    %1677 = vmatpush1.msra.mxu0 0.0
    %1678 = vmatprep.subr.mxu0 0.0
    %1679 = vmatpush1.msra.mxu0 0.0
    %1680 = vmatprep.subr.mxu0 0.0
    %1681 = vmatpush1.msra.mxu0 0.0
    %1682 = vmatprep.subr.mxu0 0.0
    %1683 = vmatpush1.msra.mxu0 0.0
    %1684 = vmatprep.subr.mxu0 0.0
    %1685 = vmatpush1.msra.mxu0 0.0
    %1686 = vmatprep.subr.mxu0 0.0
    %1687 = vmatpush1.msra.mxu0 0.0
    %1688 = vmatprep.subr.mxu0 0.0
    %1689 = vmatpush1.msra.mxu0 0.0
    %1690 = vmatprep.subr.mxu0 0.0
    %1691 = vmatpush1.msra.mxu0 0.0
    %1692 = vmatprep.subr.mxu0 0.0
    %1693 = vmatpush1.msra.mxu0 0.0
    %1694 = vmatprep.subr.mxu0 0.0
    %1695 = vmatpush1.msra.mxu0 0.0
    %1696 = vmatprep.subr.mxu0 0.0
    %1697 = vmatpush1.msra.mxu0 0.0
    %1698 = vmatprep.subr.mxu0 0.0
    %1699 = vmatpush1.msra.mxu0 0.0
    %1700 = vmatprep.subr.mxu0 0.0
    %1701 = vmatpush1.msra.mxu0 0.0
    %1702 = vmatprep.subr.mxu0 0.0
    %1703 = vmatpush1.msra.mxu0 0.0
    %1704 = vmatprep.subr.mxu0 0.0
    %1705 = vmatpush1.msra.mxu0 0.0
    %1706 = vmatprep.subr.mxu0 0.0
    %1707 = vmatpush1.msra.mxu0 0.0
    %1708 = vmatprep.subr.mxu0 0.0
    %1709 = vmatpush1.msra.mxu0 0.0
    %1710 = vmatprep.mubr.f32.mxu0 0.0
    %1711 = vmatmul.mubr.f32.gmra.mrb[0].mxu0 %v1644
    %v1712 = vpop.f32.mrb[0].mxu0
    %v1713 = vadd.f32 0.0, %v1712
    %v1714 = vpop.f32.mrb[0].mxu0
    %1715 = vdwg.mxu0
    %v1716 = vadd.f32 %v1633, %v1713
    %v1717 = vadd.f32 %v1716, %v375
    %v1718 = vmax.f32 %v1717, 0.0
    %s1719 = scalar_lea.vmem [#allocation2], 32
    %1720 = vst.msk [vmem:[%s1719] sm:$0x7f] %vm379, %v1718
    %v1721 = vld [vmem:[%s1550] sm:$0x7f]
    %v1722 = vld [vmem:[%s1] sm:$0xff]
    %v1723 = vld [vmem:[%s1 + $0x8] sm:$0xff]
    %v1724 = vld [vmem:[%s1 + $0x10] sm:$0xff]
    %v1725 = vld [vmem:[%s1 + $0x18] sm:$0xff]
    %v1726 = vld [vmem:[%s1 + $0x20] sm:$0xff]
    %v1727 = vld [vmem:[%s1 + $0x28] sm:$0xff]
    %v1728 = vld [vmem:[%s1 + $0x30] sm:$0xff]
    %v1729 = vld [vmem:[%s1 + $0x38] sm:$0xff]
    %v1730 = vld [vmem:[%s1550 + $0x1] sm:$0x7f]
    %v1731 = vld [vmem:[%s46] sm:$0xff]
    %v1732 = vld [vmem:[%s46 + $0x8] sm:$0xff]
    %v1733 = vld [vmem:[%s46 + $0x10] sm:$0xff]
    %v1734 = vld [vmem:[%s46 + $0x18] sm:$0xff]
    %v1735 = vld [vmem:[%s46 + $0x20] sm:$0xff]
    %v1736 = vld [vmem:[%s46 + $0x28] sm:$0xff]
    %v1737 = vld [vmem:[%s46 + $0x30] sm:$0xff]
    %v1738 = vld [vmem:[%s46 + $0x38] sm:$0xff]
    %v1740 = vsel %vm55, %v1730, 0
    %1742 = vmatprep.subr.mxu0 0.0
    %1743 = vmatpush1.msra.mxu0 %v1731
    %1744 = vmatprep.subr.mxu0 0.0
    %1745 = vmatpush1.msra.mxu0 %v1732
    %1746 = vmatprep.subr.mxu0 0.0
    %1747 = vmatpush1.msra.mxu0 %v1733
    %1748 = vmatprep.subr.mxu0 0.0
    %1749 = vmatpush1.msra.mxu0 %v1734
    %1750 = vmatprep.subr.mxu0 0.0
    %1751 = vmatpush1.msra.mxu0 %v1735
    %1752 = vmatprep.subr.mxu0 0.0
    %1753 = vmatpush1.msra.mxu0 %v1736
    %1754 = vmatprep.subr.mxu0 0.0
    %1755 = vmatpush1.msra.mxu0 %v1737
    %1756 = vmatprep.subr.mxu0 0.0
    %1757 = vmatpush1.msra.mxu0 %v1738
    %1758 = vmatprep.subr.mxu0 0.0
    %1759 = vmatpush1.msra.mxu0 0.0
    %1760 = vmatprep.subr.mxu0 0.0
    %1761 = vmatpush1.msra.mxu0 0.0
    %1762 = vmatprep.subr.mxu0 0.0
    %1763 = vmatpush1.msra.mxu0 0.0
    %1764 = vmatprep.subr.mxu0 0.0
    %1765 = vmatpush1.msra.mxu0 0.0
    %1766 = vmatprep.subr.mxu0 0.0
    %1767 = vmatpush1.msra.mxu0 0.0
    %1768 = vmatprep.subr.mxu0 0.0
    %1769 = vmatpush1.msra.mxu0 0.0
    %1770 = vmatprep.subr.mxu0 0.0
    %1771 = vmatpush1.msra.mxu0 0.0
    %1772 = vmatprep.subr.mxu0 0.0
    %1773 = vmatpush1.msra.mxu0 0.0
    %1774 = vmatprep.subr.mxu0 0.0
    %1775 = vmatpush1.msra.mxu0 0.0
    %1776 = vmatprep.subr.mxu0 0.0
    %1777 = vmatpush1.msra.mxu0 0.0
    %1778 = vmatprep.subr.mxu0 0.0
    %1779 = vmatpush1.msra.mxu0 0.0
    %1780 = vmatprep.subr.mxu0 0.0
    %1781 = vmatpush1.msra.mxu0 0.0
    %1782 = vmatprep.subr.mxu0 0.0
    %1783 = vmatpush1.msra.mxu0 0.0
    %1784 = vmatprep.subr.mxu0 0.0
    %1785 = vmatpush1.msra.mxu0 0.0
    %1786 = vmatprep.subr.mxu0 0.0
    %1787 = vmatpush1.msra.mxu0 0.0
    %1788 = vmatprep.subr.mxu0 0.0
    %1789 = vmatpush1.msra.mxu0 0.0
    %1790 = vmatprep.subr.mxu0 0.0
    %1791 = vmatpush1.msra.mxu0 0.0
    %1792 = vmatprep.subr.mxu0 0.0
    %1793 = vmatpush1.msra.mxu0 0.0
    %1794 = vmatprep.subr.mxu0 0.0
    %1795 = vmatpush1.msra.mxu0 0.0
    %1796 = vmatprep.subr.mxu0 0.0
    %1797 = vmatpush1.msra.mxu0 0.0
    %1798 = vmatprep.subr.mxu0 0.0
    %1799 = vmatpush1.msra.mxu0 0.0
    %1800 = vmatprep.subr.mxu0 0.0
    %1801 = vmatpush1.msra.mxu0 0.0
    %1802 = vmatprep.subr.mxu0 0.0
    %1803 = vmatpush1.msra.mxu0 0.0
    %1804 = vmatprep.subr.mxu0 0.0
    %1805 = vmatpush1.msra.mxu0 0.0
    %1806 = vmatprep.mubr.f32.mxu0 0.0
    %1807 = vmatmul.mubr.f32.gmra.mrb[0].mxu0 %v1740
    %v1808 = vpop.f32.mrb[0].mxu0
    %v1809 = vadd.f32 0.0, %v1808
    %v1810 = vpop.f32.mrb[0].mxu0
    %1811 = vdwg.mxu0
    %v1813 = vsel %vm55, %v1721, 0
    %1815 = vmatprep.subr.mxu0 0.0
    %1816 = vmatpush1.msra.mxu0 %v1722
    %1817 = vmatprep.subr.mxu0 0.0
    %1818 = vmatpush1.msra.mxu0 %v1723
    %1819 = vmatprep.subr.mxu0 0.0
    %1820 = vmatpush1.msra.mxu0 %v1724
    %1821 = vmatprep.subr.mxu0 0.0
    %1822 = vmatpush1.msra.mxu0 %v1725
    %1823 = vmatprep.subr.mxu0 0.0
    %1824 = vmatpush1.msra.mxu0 %v1726
    %1825 = vmatprep.subr.mxu0 0.0
    %1826 = vmatpush1.msra.mxu0 %v1727
    %1827 = vmatprep.subr.mxu0 0.0
    %1828 = vmatpush1.msra.mxu0 %v1728
    %1829 = vmatprep.subr.mxu0 0.0
    %1830 = vmatpush1.msra.mxu0 %v1729
    %1831 = vmatprep.subr.mxu0 0.0
    %1832 = vmatpush1.msra.mxu0 0.0
    %1833 = vmatprep.subr.mxu0 0.0
    %1834 = vmatpush1.msra.mxu0 0.0
    %1835 = vmatprep.subr.mxu0 0.0
    %1836 = vmatpush1.msra.mxu0 0.0
    %1837 = vmatprep.subr.mxu0 0.0
    %1838 = vmatpush1.msra.mxu0 0.0
    %1839 = vmatprep.subr.mxu0 0.0
    %1840 = vmatpush1.msra.mxu0 0.0
    %1841 = vmatprep.subr.mxu0 0.0
    %1842 = vmatpush1.msra.mxu0 0.0
    %1843 = vmatprep.subr.mxu0 0.0
    %1844 = vmatpush1.msra.mxu0 0.0
    %1845 = vmatprep.subr.mxu0 0.0
    %1846 = vmatpush1.msra.mxu0 0.0
    %1847 = vmatprep.subr.mxu0 0.0
    %1848 = vmatpush1.msra.mxu0 0.0
    %1849 = vmatprep.subr.mxu0 0.0
    %1850 = vmatpush1.msra.mxu0 0.0
    %1851 = vmatprep.subr.mxu0 0.0
    %1852 = vmatpush1.msra.mxu0 0.0
    %1853 = vmatprep.subr.mxu0 0.0
    %1854 = vmatpush1.msra.mxu0 0.0
    %1855 = vmatprep.subr.mxu0 0.0
    %1856 = vmatpush1.msra.mxu0 0.0
    %1857 = vmatprep.subr.mxu0 0.0
    %1858 = vmatpush1.msra.mxu0 0.0
    %1859 = vmatprep.subr.mxu0 0.0
    %1860 = vmatpush1.msra.mxu0 0.0
    %1861 = vmatprep.subr.mxu0 0.0
    %1862 = vmatpush1.msra.mxu0 0.0
    %1863 = vmatprep.subr.mxu0 0.0
    %1864 = vmatpush1.msra.mxu0 0.0
    %1865 = vmatprep.subr.mxu0 0.0
    %1866 = vmatpush1.msra.mxu0 0.0
    %1867 = vmatprep.subr.mxu0 0.0
    %1868 = vmatpush1.msra.mxu0 0.0
    %1869 = vmatprep.subr.mxu0 0.0
    %1870 = vmatpush1.msra.mxu0 0.0
    %1871 = vmatprep.subr.mxu0 0.0
    %1872 = vmatpush1.msra.mxu0 0.0
    %1873 = vmatprep.subr.mxu0 0.0
    %1874 = vmatpush1.msra.mxu0 0.0
    %1875 = vmatprep.subr.mxu0 0.0
    %1876 = vmatpush1.msra.mxu0 0.0
    %1877 = vmatprep.subr.mxu0 0.0
    %1878 = vmatpush1.msra.mxu0 0.0
    %1879 = vmatprep.mubr.f32.mxu0 0.0
    %1880 = vmatmul.mubr.f32.gmra.mrb[0].mxu0 %v1813
    %v1881 = vpop.f32.mrb[0].mxu0
    %v1882 = vadd.f32 %v1809, %v1881
    %v1883 = vpop.f32.mrb[0].mxu0
    %1884 = vdwg.mxu0
    %s1885 = scalar_lea.vmem %s0, 48
    %v1886 = vld [vmem:[%s1885] sm:$0x7f]
    %v1887 = vld [vmem:[%s204] sm:$0xff]
    %v1888 = vld [vmem:[%s204 + $0x8] sm:$0xff]
    %v1889 = vld [vmem:[%s204 + $0x10] sm:$0xff]
    %v1890 = vld [vmem:[%s204 + $0x18] sm:$0xff]
    %v1891 = vld [vmem:[%s204 + $0x20] sm:$0xff]
    %v1892 = vld [vmem:[%s204 + $0x28] sm:$0xff]
    %v1893 = vld [vmem:[%s204 + $0x30] sm:$0xff]
    %v1894 = vld [vmem:[%s204 + $0x38] sm:$0xff]
    %v1896 = vsel %vm55, %v1886, 0
    %1898 = vmatprep.subr.mxu0 0.0
    %1899 = vmatpush1.msra.mxu0 %v1887
    %1900 = vmatprep.subr.mxu0 0.0
    %1901 = vmatpush1.msra.mxu0 %v1888
    %1902 = vmatprep.subr.mxu0 0.0
    %1903 = vmatpush1.msra.mxu0 %v1889
    %1904 = vmatprep.subr.mxu0 0.0
    %1905 = vmatpush1.msra.mxu0 %v1890
    %1906 = vmatprep.subr.mxu0 0.0
    %1907 = vmatpush1.msra.mxu0 %v1891
    %1908 = vmatprep.subr.mxu0 0.0
    %1909 = vmatpush1.msra.mxu0 %v1892
    %1910 = vmatprep.subr.mxu0 0.0
    %1911 = vmatpush1.msra.mxu0 %v1893
    %1912 = vmatprep.subr.mxu0 0.0
    %1913 = vmatpush1.msra.mxu0 %v1894
    %1914 = vmatprep.subr.mxu0 0.0
    %1915 = vmatpush1.msra.mxu0 0.0
    %1916 = vmatprep.subr.mxu0 0.0
    %1917 = vmatpush1.msra.mxu0 0.0
    %1918 = vmatprep.subr.mxu0 0.0
    %1919 = vmatpush1.msra.mxu0 0.0
    %1920 = vmatprep.subr.mxu0 0.0
    %1921 = vmatpush1.msra.mxu0 0.0
    %1922 = vmatprep.subr.mxu0 0.0
    %1923 = vmatpush1.msra.mxu0 0.0
    %1924 = vmatprep.subr.mxu0 0.0
    %1925 = vmatpush1.msra.mxu0 0.0
    %1926 = vmatprep.subr.mxu0 0.0
    %1927 = vmatpush1.msra.mxu0 0.0
    %1928 = vmatprep.subr.mxu0 0.0
    %1929 = vmatpush1.msra.mxu0 0.0
    %1930 = vmatprep.subr.mxu0 0.0
    %1931 = vmatpush1.msra.mxu0 0.0
    %1932 = vmatprep.subr.mxu0 0.0
    %1933 = vmatpush1.msra.mxu0 0.0
    %1934 = vmatprep.subr.mxu0 0.0
    %1935 = vmatpush1.msra.mxu0 0.0
    %1936 = vmatprep.subr.mxu0 0.0
    %1937 = vmatpush1.msra.mxu0 0.0
    %1938 = vmatprep.subr.mxu0 0.0
    %1939 = vmatpush1.msra.mxu0 0.0
    %1940 = vmatprep.subr.mxu0 0.0
    %1941 = vmatpush1.msra.mxu0 0.0
    %1942 = vmatprep.subr.mxu0 0.0
    %1943 = vmatpush1.msra.mxu0 0.0
    %1944 = vmatprep.subr.mxu0 0.0
    %1945 = vmatpush1.msra.mxu0 0.0
    %1946 = vmatprep.subr.mxu0 0.0
    %1947 = vmatpush1.msra.mxu0 0.0
    %1948 = vmatprep.subr.mxu0 0.0
    %1949 = vmatpush1.msra.mxu0 0.0
    %1950 = vmatprep.subr.mxu0 0.0
    %1951 = vmatpush1.msra.mxu0 0.0
    %1952 = vmatprep.subr.mxu0 0.0
    %1953 = vmatpush1.msra.mxu0 0.0
    %1954 = vmatprep.subr.mxu0 0.0
    %1955 = vmatpush1.msra.mxu0 0.0
    %1956 = vmatprep.subr.mxu0 0.0
    %1957 = vmatpush1.msra.mxu0 0.0
    %1958 = vmatprep.subr.mxu0 0.0
    %1959 = vmatpush1.msra.mxu0 0.0
    %1960 = vmatprep.subr.mxu0 0.0
    %1961 = vmatpush1.msra.mxu0 0.0
    %1962 = vmatprep.mubr.f32.mxu0 0.0
    %1963 = vmatmul.mubr.f32.gmra.mrb[0].mxu0 %v1896
    %v1964 = vpop.f32.mrb[0].mxu0
    %v1965 = vadd.f32 0.0, %v1964
    %v1966 = vpop.f32.mrb[0].mxu0
    %1967 = vdwg.mxu0
    %v1968 = vadd.f32 %v1882, %v1965
    %v1969 = vld [vmem:[%s1885 + $0x1] sm:$0x7f]
    %v1970 = vld [vmem:[%s288] sm:$0xff]
    %v1971 = vld [vmem:[%s288 + $0x8] sm:$0xff]
    %v1972 = vld [vmem:[%s288 + $0x10] sm:$0xff]
    %v1973 = vld [vmem:[%s288 + $0x18] sm:$0xff]
    %v1974 = vld [vmem:[%s288 + $0x20] sm:$0xff]
    %v1975 = vld [vmem:[%s288 + $0x28] sm:$0xff]
    %v1976 = vld [vmem:[%s288 + $0x30] sm:$0xff]
    %v1977 = vld [vmem:[%s288 + $0x38] sm:$0xff]
    %v1979 = vsel %vm55, %v1969, 0
    %1981 = vmatprep.subr.mxu0 0.0
    %1982 = vmatpush1.msra.mxu0 %v1970
    %1983 = vmatprep.subr.mxu0 0.0
    %1984 = vmatpush1.msra.mxu0 %v1971
    %1985 = vmatprep.subr.mxu0 0.0
    %1986 = vmatpush1.msra.mxu0 %v1972
    %1987 = vmatprep.subr.mxu0 0.0
    %1988 = vmatpush1.msra.mxu0 %v1973
    %1989 = vmatprep.subr.mxu0 0.0
    %1990 = vmatpush1.msra.mxu0 %v1974
    %1991 = vmatprep.subr.mxu0 0.0
    %1992 = vmatpush1.msra.mxu0 %v1975
    %1993 = vmatprep.subr.mxu0 0.0
    %1994 = vmatpush1.msra.mxu0 %v1976
    %1995 = vmatprep.subr.mxu0 0.0
    %1996 = vmatpush1.msra.mxu0 %v1977
    %1997 = vmatprep.subr.mxu0 0.0
    %1998 = vmatpush1.msra.mxu0 0.0
    %1999 = vmatprep.subr.mxu0 0.0
    %2000 = vmatpush1.msra.mxu0 0.0
    %2001 = vmatprep.subr.mxu0 0.0
    %2002 = vmatpush1.msra.mxu0 0.0
    %2003 = vmatprep.subr.mxu0 0.0
    %2004 = vmatpush1.msra.mxu0 0.0
    %2005 = vmatprep.subr.mxu0 0.0
    %2006 = vmatpush1.msra.mxu0 0.0
    %2007 = vmatprep.subr.mxu0 0.0
    %2008 = vmatpush1.msra.mxu0 0.0
    %2009 = vmatprep.subr.mxu0 0.0
    %2010 = vmatpush1.msra.mxu0 0.0
    %2011 = vmatprep.subr.mxu0 0.0
    %2012 = vmatpush1.msra.mxu0 0.0
    %2013 = vmatprep.subr.mxu0 0.0
    %2014 = vmatpush1.msra.mxu0 0.0
    %2015 = vmatprep.subr.mxu0 0.0
    %2016 = vmatpush1.msra.mxu0 0.0
    %2017 = vmatprep.subr.mxu0 0.0
    %2018 = vmatpush1.msra.mxu0 0.0
    %2019 = vmatprep.subr.mxu0 0.0
    %2020 = vmatpush1.msra.mxu0 0.0
    %2021 = vmatprep.subr.mxu0 0.0
    %2022 = vmatpush1.msra.mxu0 0.0
    %2023 = vmatprep.subr.mxu0 0.0
    %2024 = vmatpush1.msra.mxu0 0.0
    %2025 = vmatprep.subr.mxu0 0.0
    %2026 = vmatpush1.msra.mxu0 0.0
    %2027 = vmatprep.subr.mxu0 0.0
    %2028 = vmatpush1.msra.mxu0 0.0
    %2029 = vmatprep.subr.mxu0 0.0
    %2030 = vmatpush1.msra.mxu0 0.0
    %2031 = vmatprep.subr.mxu0 0.0
    %2032 = vmatpush1.msra.mxu0 0.0
    %2033 = vmatprep.subr.mxu0 0.0
    %2034 = vmatpush1.msra.mxu0 0.0
    %2035 = vmatprep.subr.mxu0 0.0
    %2036 = vmatpush1.msra.mxu0 0.0
    %2037 = vmatprep.subr.mxu0 0.0
    %2038 = vmatpush1.msra.mxu0 0.0
    %2039 = vmatprep.subr.mxu0 0.0
    %2040 = vmatpush1.msra.mxu0 0.0
    %2041 = vmatprep.subr.mxu0 0.0
    %2042 = vmatpush1.msra.mxu0 0.0
    %2043 = vmatprep.subr.mxu0 0.0
    %2044 = vmatpush1.msra.mxu0 0.0
    %2045 = vmatprep.mubr.f32.mxu0 0.0
    %2046 = vmatmul.mubr.f32.gmra.mrb[0].mxu0 %v1979
    %v2047 = vpop.f32.mrb[0].mxu0
    %v2048 = vadd.f32 0.0, %v2047
    %v2049 = vpop.f32.mrb[0].mxu0
    %2050 = vdwg.mxu0
    %v2051 = vadd.f32 %v1968, %v2048
    %v2052 = vadd.f32 %v2051, %v375
    %v2053 = vmax.f32 %v2052, 0.0
    %s2054 = scalar_lea.vmem [#allocation2], 40
    %2055 = vst.msk [vmem:[%s2054] sm:$0x7f] %vm379, %v2053
    %v2056 = vld [vmem:[%s1885] sm:$0x7f]
    %v2057 = vld [vmem:[%s1] sm:$0xff]
    %v2058 = vld [vmem:[%s1 + $0x8] sm:$0xff]
    %v2059 = vld [vmem:[%s1 + $0x10] sm:$0xff]
    %v2060 = vld [vmem:[%s1 + $0x18] sm:$0xff]
    %v2061 = vld [vmem:[%s1 + $0x20] sm:$0xff]
    %v2062 = vld [vmem:[%s1 + $0x28] sm:$0xff]
    %v2063 = vld [vmem:[%s1 + $0x30] sm:$0xff]
    %v2064 = vld [vmem:[%s1 + $0x38] sm:$0xff]
    %v2065 = vld [vmem:[%s1885 + $0x1] sm:$0x7f]
    %v2066 = vld [vmem:[%s46] sm:$0xff]
    %v2067 = vld [vmem:[%s46 + $0x8] sm:$0xff]
    %v2068 = vld [vmem:[%s46 + $0x10] sm:$0xff]
    %v2069 = vld [vmem:[%s46 + $0x18] sm:$0xff]
    %v2070 = vld [vmem:[%s46 + $0x20] sm:$0xff]
    %v2071 = vld [vmem:[%s46 + $0x28] sm:$0xff]
    %v2072 = vld [vmem:[%s46 + $0x30] sm:$0xff]
    %v2073 = vld [vmem:[%s46 + $0x38] sm:$0xff]
    %v2075 = vsel %vm55, %v2065, 0
    %2077 = vmatprep.subr.mxu0 0.0
    %2078 = vmatpush1.msra.mxu0 %v2066
    %2079 = vmatprep.subr.mxu0 0.0
    %2080 = vmatpush1.msra.mxu0 %v2067
    %2081 = vmatprep.subr.mxu0 0.0
    %2082 = vmatpush1.msra.mxu0 %v2068
    %2083 = vmatprep.subr.mxu0 0.0
    %2084 = vmatpush1.msra.mxu0 %v2069
    %2085 = vmatprep.subr.mxu0 0.0
    %2086 = vmatpush1.msra.mxu0 %v2070
    %2087 = vmatprep.subr.mxu0 0.0
    %2088 = vmatpush1.msra.mxu0 %v2071
    %2089 = vmatprep.subr.mxu0 0.0
    %2090 = vmatpush1.msra.mxu0 %v2072
    %2091 = vmatprep.subr.mxu0 0.0
    %2092 = vmatpush1.msra.mxu0 %v2073
    %2093 = vmatprep.subr.mxu0 0.0
    %2094 = vmatpush1.msra.mxu0 0.0
    %2095 = vmatprep.subr.mxu0 0.0
    %2096 = vmatpush1.msra.mxu0 0.0
    %2097 = vmatprep.subr.mxu0 0.0
    %2098 = vmatpush1.msra.mxu0 0.0
    %2099 = vmatprep.subr.mxu0 0.0
    %2100 = vmatpush1.msra.mxu0 0.0
    %2101 = vmatprep.subr.mxu0 0.0
    %2102 = vmatpush1.msra.mxu0 0.0
    %2103 = vmatprep.subr.mxu0 0.0
    %2104 = vmatpush1.msra.mxu0 0.0
    %2105 = vmatprep.subr.mxu0 0.0
    %2106 = vmatpush1.msra.mxu0 0.0
    %2107 = vmatprep.subr.mxu0 0.0
    %2108 = vmatpush1.msra.mxu0 0.0
    %2109 = vmatprep.subr.mxu0 0.0
    %2110 = vmatpush1.msra.mxu0 0.0
    %2111 = vmatprep.subr.mxu0 0.0
    %2112 = vmatpush1.msra.mxu0 0.0
    %2113 = vmatprep.subr.mxu0 0.0
    %2114 = vmatpush1.msra.mxu0 0.0
    %2115 = vmatprep.subr.mxu0 0.0
    %2116 = vmatpush1.msra.mxu0 0.0
    %2117 = vmatprep.subr.mxu0 0.0
    %2118 = vmatpush1.msra.mxu0 0.0
    %2119 = vmatprep.subr.mxu0 0.0
    %2120 = vmatpush1.msra.mxu0 0.0
    %2121 = vmatprep.subr.mxu0 0.0
    %2122 = vmatpush1.msra.mxu0 0.0
    %2123 = vmatprep.subr.mxu0 0.0
    %2124 = vmatpush1.msra.mxu0 0.0
    %2125 = vmatprep.subr.mxu0 0.0
    %2126 = vmatpush1.msra.mxu0 0.0
    %2127 = vmatprep.subr.mxu0 0.0
    %2128 = vmatpush1.msra.mxu0 0.0
    %2129 = vmatprep.subr.mxu0 0.0
    %2130 = vmatpush1.msra.mxu0 0.0
    %2131 = vmatprep.subr.mxu0 0.0
    %2132 = vmatpush1.msra.mxu0 0.0
    %2133 = vmatprep.subr.mxu0 0.0
    %2134 = vmatpush1.msra.mxu0 0.0
    %2135 = vmatprep.subr.mxu0 0.0
    %2136 = vmatpush1.msra.mxu0 0.0
    %2137 = vmatprep.subr.mxu0 0.0
    %2138 = vmatpush1.msra.mxu0 0.0
    %2139 = vmatprep.subr.mxu0 0.0
    %2140 = vmatpush1.msra.mxu0 0.0
    %2141 = vmatprep.mubr.f32.mxu0 0.0
    %2142 = vmatmul.mubr.f32.gmra.mrb[0].mxu0 %v2075
    %v2143 = vpop.f32.mrb[0].mxu0
    %v2144 = vadd.f32 0.0, %v2143
    %v2145 = vpop.f32.mrb[0].mxu0
    %2146 = vdwg.mxu0
    %v2148 = vsel %vm55, %v2056, 0
    %2150 = vmatprep.subr.mxu0 0.0
    %2151 = vmatpush1.msra.mxu0 %v2057
    %2152 = vmatprep.subr.mxu0 0.0
    %2153 = vmatpush1.msra.mxu0 %v2058
    %2154 = vmatprep.subr.mxu0 0.0
    %2155 = vmatpush1.msra.mxu0 %v2059
    %2156 = vmatprep.subr.mxu0 0.0
    %2157 = vmatpush1.msra.mxu0 %v2060
    %2158 = vmatprep.subr.mxu0 0.0
    %2159 = vmatpush1.msra.mxu0 %v2061
    %2160 = vmatprep.subr.mxu0 0.0
    %2161 = vmatpush1.msra.mxu0 %v2062
    %2162 = vmatprep.subr.mxu0 0.0
    %2163 = vmatpush1.msra.mxu0 %v2063
    %2164 = vmatprep.subr.mxu0 0.0
    %2165 = vmatpush1.msra.mxu0 %v2064
    %2166 = vmatprep.subr.mxu0 0.0
    %2167 = vmatpush1.msra.mxu0 0.0
    %2168 = vmatprep.subr.mxu0 0.0
    %2169 = vmatpush1.msra.mxu0 0.0
    %2170 = vmatprep.subr.mxu0 0.0
    %2171 = vmatpush1.msra.mxu0 0.0
    %2172 = vmatprep.subr.mxu0 0.0
    %2173 = vmatpush1.msra.mxu0 0.0
    %2174 = vmatprep.subr.mxu0 0.0
    %2175 = vmatpush1.msra.mxu0 0.0
    %2176 = vmatprep.subr.mxu0 0.0
    %2177 = vmatpush1.msra.mxu0 0.0
    %2178 = vmatprep.subr.mxu0 0.0
    %2179 = vmatpush1.msra.mxu0 0.0
    %2180 = vmatprep.subr.mxu0 0.0
    %2181 = vmatpush1.msra.mxu0 0.0
    %2182 = vmatprep.subr.mxu0 0.0
    %2183 = vmatpush1.msra.mxu0 0.0
    %2184 = vmatprep.subr.mxu0 0.0
    %2185 = vmatpush1.msra.mxu0 0.0
    %2186 = vmatprep.subr.mxu0 0.0
    %2187 = vmatpush1.msra.mxu0 0.0
    %2188 = vmatprep.subr.mxu0 0.0
    %2189 = vmatpush1.msra.mxu0 0.0
    %2190 = vmatprep.subr.mxu0 0.0
    %2191 = vmatpush1.msra.mxu0 0.0
    %2192 = vmatprep.subr.mxu0 0.0
    %2193 = vmatpush1.msra.mxu0 0.0
    %2194 = vmatprep.subr.mxu0 0.0
    %2195 = vmatpush1.msra.mxu0 0.0
    %2196 = vmatprep.subr.mxu0 0.0
    %2197 = vmatpush1.msra.mxu0 0.0
    %2198 = vmatprep.subr.mxu0 0.0
    %2199 = vmatpush1.msra.mxu0 0.0
    %2200 = vmatprep.subr.mxu0 0.0
    %2201 = vmatpush1.msra.mxu0 0.0
    %2202 = vmatprep.subr.mxu0 0.0
    %2203 = vmatpush1.msra.mxu0 0.0
    %2204 = vmatprep.subr.mxu0 0.0
    %2205 = vmatpush1.msra.mxu0 0.0
    %2206 = vmatprep.subr.mxu0 0.0
    %2207 = vmatpush1.msra.mxu0 0.0
    %2208 = vmatprep.subr.mxu0 0.0
    %2209 = vmatpush1.msra.mxu0 0.0
    %2210 = vmatprep.subr.mxu0 0.0
    %2211 = vmatpush1.msra.mxu0 0.0
    %2212 = vmatprep.subr.mxu0 0.0
    %2213 = vmatpush1.msra.mxu0 0.0
    %2214 = vmatprep.mubr.f32.mxu0 0.0
    %2215 = vmatmul.mubr.f32.gmra.mrb[0].mxu0 %v2148
    %v2216 = vpop.f32.mrb[0].mxu0
    %v2217 = vadd.f32 %v2144, %v2216
    %v2218 = vpop.f32.mrb[0].mxu0
    %2219 = vdwg.mxu0
    %s2220 = scalar_lea.vmem %s0, 56
    %v2221 = vld [vmem:[%s2220] sm:$0x7f]
    %v2222 = vld [vmem:[%s204] sm:$0xff]
    %v2223 = vld [vmem:[%s204 + $0x8] sm:$0xff]
    %v2224 = vld [vmem:[%s204 + $0x10] sm:$0xff]
    %v2225 = vld [vmem:[%s204 + $0x18] sm:$0xff]
    %v2226 = vld [vmem:[%s204 + $0x20] sm:$0xff]
    %v2227 = vld [vmem:[%s204 + $0x28] sm:$0xff]
    %v2228 = vld [vmem:[%s204 + $0x30] sm:$0xff]
    %v2229 = vld [vmem:[%s204 + $0x38] sm:$0xff]
    %v2231 = vsel %vm55, %v2221, 0
    %2233 = vmatprep.subr.mxu0 0.0
    %2234 = vmatpush1.msra.mxu0 %v2222
    %2235 = vmatprep.subr.mxu0 0.0
    %2236 = vmatpush1.msra.mxu0 %v2223
    %2237 = vmatprep.subr.mxu0 0.0
    %2238 = vmatpush1.msra.mxu0 %v2224
    %2239 = vmatprep.subr.mxu0 0.0
    %2240 = vmatpush1.msra.mxu0 %v2225
    %2241 = vmatprep.subr.mxu0 0.0
    %2242 = vmatpush1.msra.mxu0 %v2226
    %2243 = vmatprep.subr.mxu0 0.0
    %2244 = vmatpush1.msra.mxu0 %v2227
    %2245 = vmatprep.subr.mxu0 0.0
    %2246 = vmatpush1.msra.mxu0 %v2228
    %2247 = vmatprep.subr.mxu0 0.0
    %2248 = vmatpush1.msra.mxu0 %v2229
    %2249 = vmatprep.subr.mxu0 0.0
    %2250 = vmatpush1.msra.mxu0 0.0
    %2251 = vmatprep.subr.mxu0 0.0
    %2252 = vmatpush1.msra.mxu0 0.0
    %2253 = vmatprep.subr.mxu0 0.0
    %2254 = vmatpush1.msra.mxu0 0.0
    %2255 = vmatprep.subr.mxu0 0.0
    %2256 = vmatpush1.msra.mxu0 0.0
    %2257 = vmatprep.subr.mxu0 0.0
    %2258 = vmatpush1.msra.mxu0 0.0
    %2259 = vmatprep.subr.mxu0 0.0
    %2260 = vmatpush1.msra.mxu0 0.0
    %2261 = vmatprep.subr.mxu0 0.0
    %2262 = vmatpush1.msra.mxu0 0.0
    %2263 = vmatprep.subr.mxu0 0.0
    %2264 = vmatpush1.msra.mxu0 0.0
    %2265 = vmatprep.subr.mxu0 0.0
    %2266 = vmatpush1.msra.mxu0 0.0
    %2267 = vmatprep.subr.mxu0 0.0
    %2268 = vmatpush1.msra.mxu0 0.0
    %2269 = vmatprep.subr.mxu0 0.0
    %2270 = vmatpush1.msra.mxu0 0.0
    %2271 = vmatprep.subr.mxu0 0.0
    %2272 = vmatpush1.msra.mxu0 0.0
    %2273 = vmatprep.subr.mxu0 0.0
    %2274 = vmatpush1.msra.mxu0 0.0
    %2275 = vmatprep.subr.mxu0 0.0
    %2276 = vmatpush1.msra.mxu0 0.0
    %2277 = vmatprep.subr.mxu0 0.0
    %2278 = vmatpush1.msra.mxu0 0.0
    %2279 = vmatprep.subr.mxu0 0.0
    %2280 = vmatpush1.msra.mxu0 0.0
    %2281 = vmatprep.subr.mxu0 0.0
    %2282 = vmatpush1.msra.mxu0 0.0
    %2283 = vmatprep.subr.mxu0 0.0
    %2284 = vmatpush1.msra.mxu0 0.0
    %2285 = vmatprep.subr.mxu0 0.0
    %2286 = vmatpush1.msra.mxu0 0.0
    %2287 = vmatprep.subr.mxu0 0.0
    %2288 = vmatpush1.msra.mxu0 0.0
    %2289 = vmatprep.subr.mxu0 0.0
    %2290 = vmatpush1.msra.mxu0 0.0
    %2291 = vmatprep.subr.mxu0 0.0
    %2292 = vmatpush1.msra.mxu0 0.0
    %2293 = vmatprep.subr.mxu0 0.0
    %2294 = vmatpush1.msra.mxu0 0.0
    %2295 = vmatprep.subr.mxu0 0.0
    %2296 = vmatpush1.msra.mxu0 0.0
    %2297 = vmatprep.mubr.f32.mxu0 0.0
    %2298 = vmatmul.mubr.f32.gmra.mrb[0].mxu0 %v2231
    %v2299 = vpop.f32.mrb[0].mxu0
    %v2300 = vadd.f32 0.0, %v2299
    %v2301 = vpop.f32.mrb[0].mxu0
    %2302 = vdwg.mxu0
    %v2303 = vadd.f32 %v2217, %v2300
    %v2304 = vld [vmem:[%s2220 + $0x1] sm:$0x7f]
    %v2305 = vld [vmem:[%s288] sm:$0xff]
    %v2306 = vld [vmem:[%s288 + $0x8] sm:$0xff]
    %v2307 = vld [vmem:[%s288 + $0x10] sm:$0xff]
    %v2308 = vld [vmem:[%s288 + $0x18] sm:$0xff]
    %v2309 = vld [vmem:[%s288 + $0x20] sm:$0xff]
    %v2310 = vld [vmem:[%s288 + $0x28] sm:$0xff]
    %v2311 = vld [vmem:[%s288 + $0x30] sm:$0xff]
    %v2312 = vld [vmem:[%s288 + $0x38] sm:$0xff]
    %v2314 = vsel %vm55, %v2304, 0
    %2316 = vmatprep.subr.mxu0 0.0
    %2317 = vmatpush1.msra.mxu0 %v2305
    %2318 = vmatprep.subr.mxu0 0.0
    %2319 = vmatpush1.msra.mxu0 %v2306
    %2320 = vmatprep.subr.mxu0 0.0
    %2321 = vmatpush1.msra.mxu0 %v2307
    %2322 = vmatprep.subr.mxu0 0.0
    %2323 = vmatpush1.msra.mxu0 %v2308
    %2324 = vmatprep.subr.mxu0 0.0
    %2325 = vmatpush1.msra.mxu0 %v2309
    %2326 = vmatprep.subr.mxu0 0.0
    %2327 = vmatpush1.msra.mxu0 %v2310
    %2328 = vmatprep.subr.mxu0 0.0
    %2329 = vmatpush1.msra.mxu0 %v2311
    %2330 = vmatprep.subr.mxu0 0.0
    %2331 = vmatpush1.msra.mxu0 %v2312
    %2332 = vmatprep.subr.mxu0 0.0
    %2333 = vmatpush1.msra.mxu0 0.0
    %2334 = vmatprep.subr.mxu0 0.0
    %2335 = vmatpush1.msra.mxu0 0.0
    %2336 = vmatprep.subr.mxu0 0.0
    %2337 = vmatpush1.msra.mxu0 0.0
    %2338 = vmatprep.subr.mxu0 0.0
    %2339 = vmatpush1.msra.mxu0 0.0
    %2340 = vmatprep.subr.mxu0 0.0
    %2341 = vmatpush1.msra.mxu0 0.0
    %2342 = vmatprep.subr.mxu0 0.0
    %2343 = vmatpush1.msra.mxu0 0.0
    %2344 = vmatprep.subr.mxu0 0.0
    %2345 = vmatpush1.msra.mxu0 0.0
    %2346 = vmatprep.subr.mxu0 0.0
    %2347 = vmatpush1.msra.mxu0 0.0
    %2348 = vmatprep.subr.mxu0 0.0
    %2349 = vmatpush1.msra.mxu0 0.0
    %2350 = vmatprep.subr.mxu0 0.0
    %2351 = vmatpush1.msra.mxu0 0.0
    %2352 = vmatprep.subr.mxu0 0.0
    %2353 = vmatpush1.msra.mxu0 0.0
    %2354 = vmatprep.subr.mxu0 0.0
    %2355 = vmatpush1.msra.mxu0 0.0
    %2356 = vmatprep.subr.mxu0 0.0
    %2357 = vmatpush1.msra.mxu0 0.0
    %2358 = vmatprep.subr.mxu0 0.0
    %2359 = vmatpush1.msra.mxu0 0.0
    %2360 = vmatprep.subr.mxu0 0.0
    %2361 = vmatpush1.msra.mxu0 0.0
    %2362 = vmatprep.subr.mxu0 0.0
    %2363 = vmatpush1.msra.mxu0 0.0
    %2364 = vmatprep.subr.mxu0 0.0
    %2365 = vmatpush1.msra.mxu0 0.0
    %2366 = vmatprep.subr.mxu0 0.0
    %2367 = vmatpush1.msra.mxu0 0.0
    %2368 = vmatprep.subr.mxu0 0.0
    %2369 = vmatpush1.msra.mxu0 0.0
    %2370 = vmatprep.subr.mxu0 0.0
    %2371 = vmatpush1.msra.mxu0 0.0
    %2372 = vmatprep.subr.mxu0 0.0
    %2373 = vmatpush1.msra.mxu0 0.0
    %2374 = vmatprep.subr.mxu0 0.0
    %2375 = vmatpush1.msra.mxu0 0.0
    %2376 = vmatprep.subr.mxu0 0.0
    %2377 = vmatpush1.msra.mxu0 0.0
    %2378 = vmatprep.subr.mxu0 0.0
    %2379 = vmatpush1.msra.mxu0 0.0
    %2380 = vmatprep.mubr.f32.mxu0 0.0
    %2381 = vmatmul.mubr.f32.gmra.mrb[0].mxu0 %v2314
    %v2382 = vpop.f32.mrb[0].mxu0
    %v2383 = vadd.f32 0.0, %v2382
    %v2384 = vpop.f32.mrb[0].mxu0
    %2385 = vdwg.mxu0
    %v2386 = vadd.f32 %v2303, %v2383
    %v2387 = vadd.f32 %v2386, %v375
    %v2388 = vmax.f32 %v2387, 0.0
    %s2389 = scalar_lea.vmem [#allocation2], 48
    %2390 = vst.msk [vmem:[%s2389] sm:$0x7f] %vm379, %v2388
    %s2391 = scalar_lea.vmem %s0, 64
    %v2392 = vld [vmem:[%s2391] sm:$0x7f]
    %v2393 = vld [vmem:[%s1] sm:$0xff]
    %v2394 = vld [vmem:[%s1 + $0x8] sm:$0xff]
    %v2395 = vld [vmem:[%s1 + $0x10] sm:$0xff]
    %v2396 = vld [vmem:[%s1 + $0x18] sm:$0xff]
    %v2397 = vld [vmem:[%s1 + $0x20] sm:$0xff]
    %v2398 = vld [vmem:[%s1 + $0x28] sm:$0xff]
    %v2399 = vld [vmem:[%s1 + $0x30] sm:$0xff]
    %v2400 = vld [vmem:[%s1 + $0x38] sm:$0xff]
    %v2401 = vld [vmem:[%s2391 + $0x1] sm:$0x7f]
    %v2402 = vld [vmem:[%s46] sm:$0xff]
    %v2403 = vld [vmem:[%s46 + $0x8] sm:$0xff]
    %v2404 = vld [vmem:[%s46 + $0x10] sm:$0xff]
    %v2405 = vld [vmem:[%s46 + $0x18] sm:$0xff]
    %v2406 = vld [vmem:[%s46 + $0x20] sm:$0xff]
    %v2407 = vld [vmem:[%s46 + $0x28] sm:$0xff]
    %v2408 = vld [vmem:[%s46 + $0x30] sm:$0xff]
    %v2409 = vld [vmem:[%s46 + $0x38] sm:$0xff]
    %v2411 = vsel %vm55, %v2401, 0
    %2413 = vmatprep.subr.mxu0 0.0
    %2414 = vmatpush1.msra.mxu0 %v2402
    %2415 = vmatprep.subr.mxu0 0.0
    %2416 = vmatpush1.msra.mxu0 %v2403
    %2417 = vmatprep.subr.mxu0 0.0
    %2418 = vmatpush1.msra.mxu0 %v2404
    %2419 = vmatprep.subr.mxu0 0.0
    %2420 = vmatpush1.msra.mxu0 %v2405
    %2421 = vmatprep.subr.mxu0 0.0
    %2422 = vmatpush1.msra.mxu0 %v2406
    %2423 = vmatprep.subr.mxu0 0.0
    %2424 = vmatpush1.msra.mxu0 %v2407
    %2425 = vmatprep.subr.mxu0 0.0
    %2426 = vmatpush1.msra.mxu0 %v2408
    %2427 = vmatprep.subr.mxu0 0.0
    %2428 = vmatpush1.msra.mxu0 %v2409
    %2429 = vmatprep.subr.mxu0 0.0
    %2430 = vmatpush1.msra.mxu0 0.0
    %2431 = vmatprep.subr.mxu0 0.0
    %2432 = vmatpush1.msra.mxu0 0.0
    %2433 = vmatprep.subr.mxu0 0.0
    %2434 = vmatpush1.msra.mxu0 0.0
    %2435 = vmatprep.subr.mxu0 0.0
    %2436 = vmatpush1.msra.mxu0 0.0
    %2437 = vmatprep.subr.mxu0 0.0
    %2438 = vmatpush1.msra.mxu0 0.0
    %2439 = vmatprep.subr.mxu0 0.0
    %2440 = vmatpush1.msra.mxu0 0.0
    %2441 = vmatprep.subr.mxu0 0.0
    %2442 = vmatpush1.msra.mxu0 0.0
    %2443 = vmatprep.subr.mxu0 0.0
    %2444 = vmatpush1.msra.mxu0 0.0
    %2445 = vmatprep.subr.mxu0 0.0
    %2446 = vmatpush1.msra.mxu0 0.0
    %2447 = vmatprep.subr.mxu0 0.0
    %2448 = vmatpush1.msra.mxu0 0.0
    %2449 = vmatprep.subr.mxu0 0.0
    %2450 = vmatpush1.msra.mxu0 0.0
    %2451 = vmatprep.subr.mxu0 0.0
    %2452 = vmatpush1.msra.mxu0 0.0
    %2453 = vmatprep.subr.mxu0 0.0
    %2454 = vmatpush1.msra.mxu0 0.0
    %2455 = vmatprep.subr.mxu0 0.0
    %2456 = vmatpush1.msra.mxu0 0.0
    %2457 = vmatprep.subr.mxu0 0.0
    %2458 = vmatpush1.msra.mxu0 0.0
    %2459 = vmatprep.subr.mxu0 0.0
    %2460 = vmatpush1.msra.mxu0 0.0
    %2461 = vmatprep.subr.mxu0 0.0
    %2462 = vmatpush1.msra.mxu0 0.0
    %2463 = vmatprep.subr.mxu0 0.0
    %2464 = vmatpush1.msra.mxu0 0.0
    %2465 = vmatprep.subr.mxu0 0.0
    %2466 = vmatpush1.msra.mxu0 0.0
    %2467 = vmatprep.subr.mxu0 0.0
    %2468 = vmatpush1.msra.mxu0 0.0
    %2469 = vmatprep.subr.mxu0 0.0
    %2470 = vmatpush1.msra.mxu0 0.0
    %2471 = vmatprep.subr.mxu0 0.0
    %2472 = vmatpush1.msra.mxu0 0.0
    %2473 = vmatprep.subr.mxu0 0.0
    %2474 = vmatpush1.msra.mxu0 0.0
    %2475 = vmatprep.subr.mxu0 0.0
    %2476 = vmatpush1.msra.mxu0 0.0
    %2477 = vmatprep.mubr.f32.mxu0 0.0
    %2478 = vmatmul.mubr.f32.gmra.mrb[0].mxu0 %v2411
    %v2479 = vpop.f32.mrb[0].mxu0
    %v2480 = vadd.f32 0.0, %v2479
    %v2481 = vpop.f32.mrb[0].mxu0
    %2482 = vdwg.mxu0
    %v2484 = vsel %vm55, %v2392, 0
    %2486 = vmatprep.subr.mxu0 0.0
    %2487 = vmatpush1.msra.mxu0 %v2393
    %2488 = vmatprep.subr.mxu0 0.0
    %2489 = vmatpush1.msra.mxu0 %v2394
    %2490 = vmatprep.subr.mxu0 0.0
    %2491 = vmatpush1.msra.mxu0 %v2395
    %2492 = vmatprep.subr.mxu0 0.0
    %2493 = vmatpush1.msra.mxu0 %v2396
    %2494 = vmatprep.subr.mxu0 0.0
    %2495 = vmatpush1.msra.mxu0 %v2397
    %2496 = vmatprep.subr.mxu0 0.0
    %2497 = vmatpush1.msra.mxu0 %v2398
    %2498 = vmatprep.subr.mxu0 0.0
    %2499 = vmatpush1.msra.mxu0 %v2399
    %2500 = vmatprep.subr.mxu0 0.0
    %2501 = vmatpush1.msra.mxu0 %v2400
    %2502 = vmatprep.subr.mxu0 0.0
    %2503 = vmatpush1.msra.mxu0 0.0
    %2504 = vmatprep.subr.mxu0 0.0
    %2505 = vmatpush1.msra.mxu0 0.0
    %2506 = vmatprep.subr.mxu0 0.0
    %2507 = vmatpush1.msra.mxu0 0.0
    %2508 = vmatprep.subr.mxu0 0.0
    %2509 = vmatpush1.msra.mxu0 0.0
    %2510 = vmatprep.subr.mxu0 0.0
    %2511 = vmatpush1.msra.mxu0 0.0
    %2512 = vmatprep.subr.mxu0 0.0
    %2513 = vmatpush1.msra.mxu0 0.0
    %2514 = vmatprep.subr.mxu0 0.0
    %2515 = vmatpush1.msra.mxu0 0.0
    %2516 = vmatprep.subr.mxu0 0.0
    %2517 = vmatpush1.msra.mxu0 0.0
    %2518 = vmatprep.subr.mxu0 0.0
    %2519 = vmatpush1.msra.mxu0 0.0
    %2520 = vmatprep.subr.mxu0 0.0
    %2521 = vmatpush1.msra.mxu0 0.0
    %2522 = vmatprep.subr.mxu0 0.0
    %2523 = vmatpush1.msra.mxu0 0.0
    %2524 = vmatprep.subr.mxu0 0.0
    %2525 = vmatpush1.msra.mxu0 0.0
    %2526 = vmatprep.subr.mxu0 0.0
    %2527 = vmatpush1.msra.mxu0 0.0
    %2528 = vmatprep.subr.mxu0 0.0
    %2529 = vmatpush1.msra.mxu0 0.0
    %2530 = vmatprep.subr.mxu0 0.0
    %2531 = vmatpush1.msra.mxu0 0.0
    %2532 = vmatprep.subr.mxu0 0.0
    %2533 = vmatpush1.msra.mxu0 0.0
    %2534 = vmatprep.subr.mxu0 0.0
    %2535 = vmatpush1.msra.mxu0 0.0
    %2536 = vmatprep.subr.mxu0 0.0
    %2537 = vmatpush1.msra.mxu0 0.0
    %2538 = vmatprep.subr.mxu0 0.0
    %2539 = vmatpush1.msra.mxu0 0.0
    %2540 = vmatprep.subr.mxu0 0.0
    %2541 = vmatpush1.msra.mxu0 0.0
    %2542 = vmatprep.subr.mxu0 0.0
    %2543 = vmatpush1.msra.mxu0 0.0
    %2544 = vmatprep.subr.mxu0 0.0
    %2545 = vmatpush1.msra.mxu0 0.0
    %2546 = vmatprep.subr.mxu0 0.0
    %2547 = vmatpush1.msra.mxu0 0.0
    %2548 = vmatprep.subr.mxu0 0.0
    %2549 = vmatpush1.msra.mxu0 0.0
    %2550 = vmatprep.mubr.f32.mxu0 0.0
    %2551 = vmatmul.mubr.f32.gmra.mrb[0].mxu0 %v2484
    %v2552 = vpop.f32.mrb[0].mxu0
    %v2553 = vadd.f32 %v2480, %v2552
    %v2554 = vpop.f32.mrb[0].mxu0
    %2555 = vdwg.mxu0
    %s2556 = scalar_lea.vmem %s0, 72
    %v2557 = vld [vmem:[%s2556] sm:$0x7f]
    %v2558 = vld [vmem:[%s204] sm:$0xff]
    %v2559 = vld [vmem:[%s204 + $0x8] sm:$0xff]
    %v2560 = vld [vmem:[%s204 + $0x10] sm:$0xff]
    %v2561 = vld [vmem:[%s204 + $0x18] sm:$0xff]
    %v2562 = vld [vmem:[%s204 + $0x20] sm:$0xff]
    %v2563 = vld [vmem:[%s204 + $0x28] sm:$0xff]
    %v2564 = vld [vmem:[%s204 + $0x30] sm:$0xff]
    %v2565 = vld [vmem:[%s204 + $0x38] sm:$0xff]
    %v2567 = vsel %vm55, %v2557, 0
    %2569 = vmatprep.subr.mxu0 0.0
    %2570 = vmatpush1.msra.mxu0 %v2558
    %2571 = vmatprep.subr.mxu0 0.0
    %2572 = vmatpush1.msra.mxu0 %v2559
    %2573 = vmatprep.subr.mxu0 0.0
    %2574 = vmatpush1.msra.mxu0 %v2560
    %2575 = vmatprep.subr.mxu0 0.0
    %2576 = vmatpush1.msra.mxu0 %v2561
    %2577 = vmatprep.subr.mxu0 0.0
    %2578 = vmatpush1.msra.mxu0 %v2562
    %2579 = vmatprep.subr.mxu0 0.0
    %2580 = vmatpush1.msra.mxu0 %v2563
    %2581 = vmatprep.subr.mxu0 0.0
    %2582 = vmatpush1.msra.mxu0 %v2564
    %2583 = vmatprep.subr.mxu0 0.0
    %2584 = vmatpush1.msra.mxu0 %v2565
    %2585 = vmatprep.subr.mxu0 0.0
    %2586 = vmatpush1.msra.mxu0 0.0
    %2587 = vmatprep.subr.mxu0 0.0
    %2588 = vmatpush1.msra.mxu0 0.0
    %2589 = vmatprep.subr.mxu0 0.0
    %2590 = vmatpush1.msra.mxu0 0.0
    %2591 = vmatprep.subr.mxu0 0.0
    %2592 = vmatpush1.msra.mxu0 0.0
    %2593 = vmatprep.subr.mxu0 0.0
    %2594 = vmatpush1.msra.mxu0 0.0
    %2595 = vmatprep.subr.mxu0 0.0
    %2596 = vmatpush1.msra.mxu0 0.0
    %2597 = vmatprep.subr.mxu0 0.0
    %2598 = vmatpush1.msra.mxu0 0.0
    %2599 = vmatprep.subr.mxu0 0.0
    %2600 = vmatpush1.msra.mxu0 0.0
    %2601 = vmatprep.subr.mxu0 0.0
    %2602 = vmatpush1.msra.mxu0 0.0
    %2603 = vmatprep.subr.mxu0 0.0
    %2604 = vmatpush1.msra.mxu0 0.0
    %2605 = vmatprep.subr.mxu0 0.0
    %2606 = vmatpush1.msra.mxu0 0.0
    %2607 = vmatprep.subr.mxu0 0.0
    %2608 = vmatpush1.msra.mxu0 0.0
    %2609 = vmatprep.subr.mxu0 0.0
    %2610 = vmatpush1.msra.mxu0 0.0
    %2611 = vmatprep.subr.mxu0 0.0
    %2612 = vmatpush1.msra.mxu0 0.0
    %2613 = vmatprep.subr.mxu0 0.0
    %2614 = vmatpush1.msra.mxu0 0.0
    %2615 = vmatprep.subr.mxu0 0.0
    %2616 = vmatpush1.msra.mxu0 0.0
    %2617 = vmatprep.subr.mxu0 0.0
    %2618 = vmatpush1.msra.mxu0 0.0
    %2619 = vmatprep.subr.mxu0 0.0
    %2620 = vmatpush1.msra.mxu0 0.0
    %2621 = vmatprep.subr.mxu0 0.0
    %2622 = vmatpush1.msra.mxu0 0.0
    %2623 = vmatprep.subr.mxu0 0.0
    %2624 = vmatpush1.msra.mxu0 0.0
    %2625 = vmatprep.subr.mxu0 0.0
    %2626 = vmatpush1.msra.mxu0 0.0
    %2627 = vmatprep.subr.mxu0 0.0
    %2628 = vmatpush1.msra.mxu0 0.0
    %2629 = vmatprep.subr.mxu0 0.0
    %2630 = vmatpush1.msra.mxu0 0.0
    %2631 = vmatprep.subr.mxu0 0.0
    %2632 = vmatpush1.msra.mxu0 0.0
    %2633 = vmatprep.mubr.f32.mxu0 0.0
    %2634 = vmatmul.mubr.f32.gmra.mrb[0].mxu0 %v2567
    %v2635 = vpop.f32.mrb[0].mxu0
    %v2636 = vadd.f32 0.0, %v2635
    %v2637 = vpop.f32.mrb[0].mxu0
    %2638 = vdwg.mxu0
    %v2639 = vadd.f32 %v2553, %v2636
    %v2640 = vld [vmem:[%s2556 + $0x1] sm:$0x7f]
    %v2641 = vld [vmem:[%s288] sm:$0xff]
    %v2642 = vld [vmem:[%s288 + $0x8] sm:$0xff]
    %v2643 = vld [vmem:[%s288 + $0x10] sm:$0xff]
    %v2644 = vld [vmem:[%s288 + $0x18] sm:$0xff]
    %v2645 = vld [vmem:[%s288 + $0x20] sm:$0xff]
    %v2646 = vld [vmem:[%s288 + $0x28] sm:$0xff]
    %v2647 = vld [vmem:[%s288 + $0x30] sm:$0xff]
    %v2648 = vld [vmem:[%s288 + $0x38] sm:$0xff]
    %v2650 = vsel %vm55, %v2640, 0
    %2652 = vmatprep.subr.mxu0 0.0
    %2653 = vmatpush1.msra.mxu0 %v2641
    %2654 = vmatprep.subr.mxu0 0.0
    %2655 = vmatpush1.msra.mxu0 %v2642
    %2656 = vmatprep.subr.mxu0 0.0
    %2657 = vmatpush1.msra.mxu0 %v2643
    %2658 = vmatprep.subr.mxu0 0.0
    %2659 = vmatpush1.msra.mxu0 %v2644
    %2660 = vmatprep.subr.mxu0 0.0
    %2661 = vmatpush1.msra.mxu0 %v2645
    %2662 = vmatprep.subr.mxu0 0.0
    %2663 = vmatpush1.msra.mxu0 %v2646
    %2664 = vmatprep.subr.mxu0 0.0
    %2665 = vmatpush1.msra.mxu0 %v2647
    %2666 = vmatprep.subr.mxu0 0.0
    %2667 = vmatpush1.msra.mxu0 %v2648
    %2668 = vmatprep.subr.mxu0 0.0
    %2669 = vmatpush1.msra.mxu0 0.0
    %2670 = vmatprep.subr.mxu0 0.0
    %2671 = vmatpush1.msra.mxu0 0.0
    %2672 = vmatprep.subr.mxu0 0.0
    %2673 = vmatpush1.msra.mxu0 0.0
    %2674 = vmatprep.subr.mxu0 0.0
    %2675 = vmatpush1.msra.mxu0 0.0
    %2676 = vmatprep.subr.mxu0 0.0
    %2677 = vmatpush1.msra.mxu0 0.0
    %2678 = vmatprep.subr.mxu0 0.0
    %2679 = vmatpush1.msra.mxu0 0.0
    %2680 = vmatprep.subr.mxu0 0.0
    %2681 = vmatpush1.msra.mxu0 0.0
    %2682 = vmatprep.subr.mxu0 0.0
    %2683 = vmatpush1.msra.mxu0 0.0
    %2684 = vmatprep.subr.mxu0 0.0
    %2685 = vmatpush1.msra.mxu0 0.0
    %2686 = vmatprep.subr.mxu0 0.0
    %2687 = vmatpush1.msra.mxu0 0.0
    %2688 = vmatprep.subr.mxu0 0.0
    %2689 = vmatpush1.msra.mxu0 0.0
    %2690 = vmatprep.subr.mxu0 0.0
    %2691 = vmatpush1.msra.mxu0 0.0
    %2692 = vmatprep.subr.mxu0 0.0
    %2693 = vmatpush1.msra.mxu0 0.0
    %2694 = vmatprep.subr.mxu0 0.0
    %2695 = vmatpush1.msra.mxu0 0.0
    %2696 = vmatprep.subr.mxu0 0.0
    %2697 = vmatpush1.msra.mxu0 0.0
    %2698 = vmatprep.subr.mxu0 0.0
    %2699 = vmatpush1.msra.mxu0 0.0
    %2700 = vmatprep.subr.mxu0 0.0
    %2701 = vmatpush1.msra.mxu0 0.0
    %2702 = vmatprep.subr.mxu0 0.0
    %2703 = vmatpush1.msra.mxu0 0.0
    %2704 = vmatprep.subr.mxu0 0.0
    %2705 = vmatpush1.msra.mxu0 0.0
    %2706 = vmatprep.subr.mxu0 0.0
    %2707 = vmatpush1.msra.mxu0 0.0
    %2708 = vmatprep.subr.mxu0 0.0
    %2709 = vmatpush1.msra.mxu0 0.0
    %2710 = vmatprep.subr.mxu0 0.0
    %2711 = vmatpush1.msra.mxu0 0.0
    %2712 = vmatprep.subr.mxu0 0.0
    %2713 = vmatpush1.msra.mxu0 0.0
    %2714 = vmatprep.subr.mxu0 0.0
    %2715 = vmatpush1.msra.mxu0 0.0
    %2716 = vmatprep.mubr.f32.mxu0 0.0
    %2717 = vmatmul.mubr.f32.gmra.mrb[0].mxu0 %v2650
    %v2718 = vpop.f32.mrb[0].mxu0
    %v2719 = vadd.f32 0.0, %v2718
    %v2720 = vpop.f32.mrb[0].mxu0
    %2721 = vdwg.mxu0
    %v2722 = vadd.f32 %v2639, %v2719
    %v2723 = vadd.f32 %v2722, %v375
    %v2724 = vmax.f32 %v2723, 0.0
    %s2725 = scalar_lea.vmem [#allocation2], 56
    %2726 = vst.msk [vmem:[%s2725] sm:$0x7f] %vm379, %v2724
    %v2727 = vld [vmem:[%s2556] sm:$0x7f]
    %v2728 = vld [vmem:[%s1] sm:$0xff]
    %v2729 = vld [vmem:[%s1 + $0x8] sm:$0xff]
    %v2730 = vld [vmem:[%s1 + $0x10] sm:$0xff]
    %v2731 = vld [vmem:[%s1 + $0x18] sm:$0xff]
    %v2732 = vld [vmem:[%s1 + $0x20] sm:$0xff]
    %v2733 = vld [vmem:[%s1 + $0x28] sm:$0xff]
    %v2734 = vld [vmem:[%s1 + $0x30] sm:$0xff]
    %v2735 = vld [vmem:[%s1 + $0x38] sm:$0xff]
    %v2736 = vld [vmem:[%s2556 + $0x1] sm:$0x7f]
    %v2737 = vld [vmem:[%s46] sm:$0xff]
    %v2738 = vld [vmem:[%s46 + $0x8] sm:$0xff]
    %v2739 = vld [vmem:[%s46 + $0x10] sm:$0xff]
    %v2740 = vld [vmem:[%s46 + $0x18] sm:$0xff]
    %v2741 = vld [vmem:[%s46 + $0x20] sm:$0xff]
    %v2742 = vld [vmem:[%s46 + $0x28] sm:$0xff]
    %v2743 = vld [vmem:[%s46 + $0x30] sm:$0xff]
    %v2744 = vld [vmem:[%s46 + $0x38] sm:$0xff]
    %v2746 = vsel %vm55, %v2736, 0
    %2748 = vmatprep.subr.mxu0 0.0
    %2749 = vmatpush1.msra.mxu0 %v2737
    %2750 = vmatprep.subr.mxu0 0.0
    %2751 = vmatpush1.msra.mxu0 %v2738
    %2752 = vmatprep.subr.mxu0 0.0
    %2753 = vmatpush1.msra.mxu0 %v2739
    %2754 = vmatprep.subr.mxu0 0.0
    %2755 = vmatpush1.msra.mxu0 %v2740
    %2756 = vmatprep.subr.mxu0 0.0
    %2757 = vmatpush1.msra.mxu0 %v2741
    %2758 = vmatprep.subr.mxu0 0.0
    %2759 = vmatpush1.msra.mxu0 %v2742
    %2760 = vmatprep.subr.mxu0 0.0
    %2761 = vmatpush1.msra.mxu0 %v2743
    %2762 = vmatprep.subr.mxu0 0.0
    %2763 = vmatpush1.msra.mxu0 %v2744
    %2764 = vmatprep.subr.mxu0 0.0
    %2765 = vmatpush1.msra.mxu0 0.0
    %2766 = vmatprep.subr.mxu0 0.0
    %2767 = vmatpush1.msra.mxu0 0.0
    %2768 = vmatprep.subr.mxu0 0.0
    %2769 = vmatpush1.msra.mxu0 0.0
    %2770 = vmatprep.subr.mxu0 0.0
    %2771 = vmatpush1.msra.mxu0 0.0
    %2772 = vmatprep.subr.mxu0 0.0
    %2773 = vmatpush1.msra.mxu0 0.0
    %2774 = vmatprep.subr.mxu0 0.0
    %2775 = vmatpush1.msra.mxu0 0.0
    %2776 = vmatprep.subr.mxu0 0.0
    %2777 = vmatpush1.msra.mxu0 0.0
    %2778 = vmatprep.subr.mxu0 0.0
    %2779 = vmatpush1.msra.mxu0 0.0
    %2780 = vmatprep.subr.mxu0 0.0
    %2781 = vmatpush1.msra.mxu0 0.0
    %2782 = vmatprep.subr.mxu0 0.0
    %2783 = vmatpush1.msra.mxu0 0.0
    %2784 = vmatprep.subr.mxu0 0.0
    %2785 = vmatpush1.msra.mxu0 0.0
    %2786 = vmatprep.subr.mxu0 0.0
    %2787 = vmatpush1.msra.mxu0 0.0
    %2788 = vmatprep.subr.mxu0 0.0
    %2789 = vmatpush1.msra.mxu0 0.0
    %2790 = vmatprep.subr.mxu0 0.0
    %2791 = vmatpush1.msra.mxu0 0.0
    %2792 = vmatprep.subr.mxu0 0.0
    %2793 = vmatpush1.msra.mxu0 0.0
    %2794 = vmatprep.subr.mxu0 0.0
    %2795 = vmatpush1.msra.mxu0 0.0
    %2796 = vmatprep.subr.mxu0 0.0
    %2797 = vmatpush1.msra.mxu0 0.0
    %2798 = vmatprep.subr.mxu0 0.0
    %2799 = vmatpush1.msra.mxu0 0.0
    %2800 = vmatprep.subr.mxu0 0.0
    %2801 = vmatpush1.msra.mxu0 0.0
    %2802 = vmatprep.subr.mxu0 0.0
    %2803 = vmatpush1.msra.mxu0 0.0
    %2804 = vmatprep.subr.mxu0 0.0
    %2805 = vmatpush1.msra.mxu0 0.0
    %2806 = vmatprep.subr.mxu0 0.0
    %2807 = vmatpush1.msra.mxu0 0.0
    %2808 = vmatprep.subr.mxu0 0.0
    %2809 = vmatpush1.msra.mxu0 0.0
    %2810 = vmatprep.subr.mxu0 0.0
    %2811 = vmatpush1.msra.mxu0 0.0
    %2812 = vmatprep.mubr.f32.mxu0 0.0
    %2813 = vmatmul.mubr.f32.gmra.mrb[0].mxu0 %v2746
    %v2814 = vpop.f32.mrb[0].mxu0
    %v2815 = vadd.f32 0.0, %v2814
    %v2816 = vpop.f32.mrb[0].mxu0
    %2817 = vdwg.mxu0
    %v2819 = vsel %vm55, %v2727, 0
    %2821 = vmatprep.subr.mxu0 0.0
    %2822 = vmatpush1.msra.mxu0 %v2728
    %2823 = vmatprep.subr.mxu0 0.0
    %2824 = vmatpush1.msra.mxu0 %v2729
    %2825 = vmatprep.subr.mxu0 0.0
    %2826 = vmatpush1.msra.mxu0 %v2730
    %2827 = vmatprep.subr.mxu0 0.0
    %2828 = vmatpush1.msra.mxu0 %v2731
    %2829 = vmatprep.subr.mxu0 0.0
    %2830 = vmatpush1.msra.mxu0 %v2732
    %2831 = vmatprep.subr.mxu0 0.0
    %2832 = vmatpush1.msra.mxu0 %v2733
    %2833 = vmatprep.subr.mxu0 0.0
    %2834 = vmatpush1.msra.mxu0 %v2734
    %2835 = vmatprep.subr.mxu0 0.0
    %2836 = vmatpush1.msra.mxu0 %v2735
    %2837 = vmatprep.subr.mxu0 0.0
    %2838 = vmatpush1.msra.mxu0 0.0
    %2839 = vmatprep.subr.mxu0 0.0
    %2840 = vmatpush1.msra.mxu0 0.0
    %2841 = vmatprep.subr.mxu0 0.0
    %2842 = vmatpush1.msra.mxu0 0.0
    %2843 = vmatprep.subr.mxu0 0.0
    %2844 = vmatpush1.msra.mxu0 0.0
    %2845 = vmatprep.subr.mxu0 0.0
    %2846 = vmatpush1.msra.mxu0 0.0
    %2847 = vmatprep.subr.mxu0 0.0
    %2848 = vmatpush1.msra.mxu0 0.0
    %2849 = vmatprep.subr.mxu0 0.0
    %2850 = vmatpush1.msra.mxu0 0.0
    %2851 = vmatprep.subr.mxu0 0.0
    %2852 = vmatpush1.msra.mxu0 0.0
    %2853 = vmatprep.subr.mxu0 0.0
    %2854 = vmatpush1.msra.mxu0 0.0
    %2855 = vmatprep.subr.mxu0 0.0
    %2856 = vmatpush1.msra.mxu0 0.0
    %2857 = vmatprep.subr.mxu0 0.0
    %2858 = vmatpush1.msra.mxu0 0.0
    %2859 = vmatprep.subr.mxu0 0.0
    %2860 = vmatpush1.msra.mxu0 0.0
    %2861 = vmatprep.subr.mxu0 0.0
    %2862 = vmatpush1.msra.mxu0 0.0
    %2863 = vmatprep.subr.mxu0 0.0
    %2864 = vmatpush1.msra.mxu0 0.0
    %2865 = vmatprep.subr.mxu0 0.0
    %2866 = vmatpush1.msra.mxu0 0.0
    %2867 = vmatprep.subr.mxu0 0.0
    %2868 = vmatpush1.msra.mxu0 0.0
    %2869 = vmatprep.subr.mxu0 0.0
    %2870 = vmatpush1.msra.mxu0 0.0
    %2871 = vmatprep.subr.mxu0 0.0
    %2872 = vmatpush1.msra.mxu0 0.0
    %2873 = vmatprep.subr.mxu0 0.0
    %2874 = vmatpush1.msra.mxu0 0.0
    %2875 = vmatprep.subr.mxu0 0.0
    %2876 = vmatpush1.msra.mxu0 0.0
    %2877 = vmatprep.subr.mxu0 0.0
    %2878 = vmatpush1.msra.mxu0 0.0
    %2879 = vmatprep.subr.mxu0 0.0
    %2880 = vmatpush1.msra.mxu0 0.0
    %2881 = vmatprep.subr.mxu0 0.0
    %2882 = vmatpush1.msra.mxu0 0.0
    %2883 = vmatprep.subr.mxu0 0.0
    %2884 = vmatpush1.msra.mxu0 0.0
    %2885 = vmatprep.mubr.f32.mxu0 0.0
    %2886 = vmatmul.mubr.f32.gmra.mrb[0].mxu0 %v2819
    %v2887 = vpop.f32.mrb[0].mxu0
    %v2888 = vadd.f32 %v2815, %v2887
    %v2889 = vpop.f32.mrb[0].mxu0
    %2890 = vdwg.mxu0
    %s2891 = scalar_lea.vmem %s0, 80
    %v2892 = vld [vmem:[%s2891] sm:$0x7f]
    %v2893 = vld [vmem:[%s204] sm:$0xff]
    %v2894 = vld [vmem:[%s204 + $0x8] sm:$0xff]
    %v2895 = vld [vmem:[%s204 + $0x10] sm:$0xff]
    %v2896 = vld [vmem:[%s204 + $0x18] sm:$0xff]
    %v2897 = vld [vmem:[%s204 + $0x20] sm:$0xff]
    %v2898 = vld [vmem:[%s204 + $0x28] sm:$0xff]
    %v2899 = vld [vmem:[%s204 + $0x30] sm:$0xff]
    %v2900 = vld [vmem:[%s204 + $0x38] sm:$0xff]
    %v2902 = vsel %vm55, %v2892, 0
    %2904 = vmatprep.subr.mxu0 0.0
    %2905 = vmatpush1.msra.mxu0 %v2893
    %2906 = vmatprep.subr.mxu0 0.0
    %2907 = vmatpush1.msra.mxu0 %v2894
    %2908 = vmatprep.subr.mxu0 0.0
    %2909 = vmatpush1.msra.mxu0 %v2895
    %2910 = vmatprep.subr.mxu0 0.0
    %2911 = vmatpush1.msra.mxu0 %v2896
    %2912 = vmatprep.subr.mxu0 0.0
    %2913 = vmatpush1.msra.mxu0 %v2897
    %2914 = vmatprep.subr.mxu0 0.0
    %2915 = vmatpush1.msra.mxu0 %v2898
    %2916 = vmatprep.subr.mxu0 0.0
    %2917 = vmatpush1.msra.mxu0 %v2899
    %2918 = vmatprep.subr.mxu0 0.0
    %2919 = vmatpush1.msra.mxu0 %v2900
    %2920 = vmatprep.subr.mxu0 0.0
    %2921 = vmatpush1.msra.mxu0 0.0
    %2922 = vmatprep.subr.mxu0 0.0
    %2923 = vmatpush1.msra.mxu0 0.0
    %2924 = vmatprep.subr.mxu0 0.0
    %2925 = vmatpush1.msra.mxu0 0.0
    %2926 = vmatprep.subr.mxu0 0.0
    %2927 = vmatpush1.msra.mxu0 0.0
    %2928 = vmatprep.subr.mxu0 0.0
    %2929 = vmatpush1.msra.mxu0 0.0
    %2930 = vmatprep.subr.mxu0 0.0
    %2931 = vmatpush1.msra.mxu0 0.0
    %2932 = vmatprep.subr.mxu0 0.0
    %2933 = vmatpush1.msra.mxu0 0.0
    %2934 = vmatprep.subr.mxu0 0.0
    %2935 = vmatpush1.msra.mxu0 0.0
    %2936 = vmatprep.subr.mxu0 0.0
    %2937 = vmatpush1.msra.mxu0 0.0
    %2938 = vmatprep.subr.mxu0 0.0
    %2939 = vmatpush1.msra.mxu0 0.0
    %2940 = vmatprep.subr.mxu0 0.0
    %2941 = vmatpush1.msra.mxu0 0.0
    %2942 = vmatprep.subr.mxu0 0.0
    %2943 = vmatpush1.msra.mxu0 0.0
    %2944 = vmatprep.subr.mxu0 0.0
    %2945 = vmatpush1.msra.mxu0 0.0
    %2946 = vmatprep.subr.mxu0 0.0
    %2947 = vmatpush1.msra.mxu0 0.0
    %2948 = vmatprep.subr.mxu0 0.0
    %2949 = vmatpush1.msra.mxu0 0.0
    %2950 = vmatprep.subr.mxu0 0.0
    %2951 = vmatpush1.msra.mxu0 0.0
    %2952 = vmatprep.subr.mxu0 0.0
    %2953 = vmatpush1.msra.mxu0 0.0
    %2954 = vmatprep.subr.mxu0 0.0
    %2955 = vmatpush1.msra.mxu0 0.0
    %2956 = vmatprep.subr.mxu0 0.0
    %2957 = vmatpush1.msra.mxu0 0.0
    %2958 = vmatprep.subr.mxu0 0.0
    %2959 = vmatpush1.msra.mxu0 0.0
    %2960 = vmatprep.subr.mxu0 0.0
    %2961 = vmatpush1.msra.mxu0 0.0
    %2962 = vmatprep.subr.mxu0 0.0
    %2963 = vmatpush1.msra.mxu0 0.0
    %2964 = vmatprep.subr.mxu0 0.0
    %2965 = vmatpush1.msra.mxu0 0.0
    %2966 = vmatprep.subr.mxu0 0.0
    %2967 = vmatpush1.msra.mxu0 0.0
    %2968 = vmatprep.mubr.f32.mxu0 0.0
    %2969 = vmatmul.mubr.f32.gmra.mrb[0].mxu0 %v2902
    %v2970 = vpop.f32.mrb[0].mxu0
    %v2971 = vadd.f32 0.0, %v2970
    %v2972 = vpop.f32.mrb[0].mxu0
    %2973 = vdwg.mxu0
    %v2974 = vadd.f32 %v2888, %v2971
    %v2975 = vld [vmem:[%s2891 + $0x1] sm:$0x7f]
    %v2976 = vld [vmem:[%s288] sm:$0xff]
    %v2977 = vld [vmem:[%s288 + $0x8] sm:$0xff]
    %v2978 = vld [vmem:[%s288 + $0x10] sm:$0xff]
    %v2979 = vld [vmem:[%s288 + $0x18] sm:$0xff]
    %v2980 = vld [vmem:[%s288 + $0x20] sm:$0xff]
    %v2981 = vld [vmem:[%s288 + $0x28] sm:$0xff]
    %v2982 = vld [vmem:[%s288 + $0x30] sm:$0xff]
    %v2983 = vld [vmem:[%s288 + $0x38] sm:$0xff]
    %v2985 = vsel %vm55, %v2975, 0
    %2987 = vmatprep.subr.mxu0 0.0
    %2988 = vmatpush1.msra.mxu0 %v2976
    %2989 = vmatprep.subr.mxu0 0.0
    %2990 = vmatpush1.msra.mxu0 %v2977
    %2991 = vmatprep.subr.mxu0 0.0
    %2992 = vmatpush1.msra.mxu0 %v2978
    %2993 = vmatprep.subr.mxu0 0.0
    %2994 = vmatpush1.msra.mxu0 %v2979
    %2995 = vmatprep.subr.mxu0 0.0
    %2996 = vmatpush1.msra.mxu0 %v2980
    %2997 = vmatprep.subr.mxu0 0.0
    %2998 = vmatpush1.msra.mxu0 %v2981
    %2999 = vmatprep.subr.mxu0 0.0
    %3000 = vmatpush1.msra.mxu0 %v2982
    %3001 = vmatprep.subr.mxu0 0.0
    %3002 = vmatpush1.msra.mxu0 %v2983
    %3003 = vmatprep.subr.mxu0 0.0
    %3004 = vmatpush1.msra.mxu0 0.0
    %3005 = vmatprep.subr.mxu0 0.0
    %3006 = vmatpush1.msra.mxu0 0.0
    %3007 = vmatprep.subr.mxu0 0.0
    %3008 = vmatpush1.msra.mxu0 0.0
    %3009 = vmatprep.subr.mxu0 0.0
    %3010 = vmatpush1.msra.mxu0 0.0
    %3011 = vmatprep.subr.mxu0 0.0
    %3012 = vmatpush1.msra.mxu0 0.0
    %3013 = vmatprep.subr.mxu0 0.0
    %3014 = vmatpush1.msra.mxu0 0.0
    %3015 = vmatprep.subr.mxu0 0.0
    %3016 = vmatpush1.msra.mxu0 0.0
    %3017 = vmatprep.subr.mxu0 0.0
    %3018 = vmatpush1.msra.mxu0 0.0
    %3019 = vmatprep.subr.mxu0 0.0
    %3020 = vmatpush1.msra.mxu0 0.0
    %3021 = vmatprep.subr.mxu0 0.0
    %3022 = vmatpush1.msra.mxu0 0.0
    %3023 = vmatprep.subr.mxu0 0.0
    %3024 = vmatpush1.msra.mxu0 0.0
    %3025 = vmatprep.subr.mxu0 0.0
    %3026 = vmatpush1.msra.mxu0 0.0
    %3027 = vmatprep.subr.mxu0 0.0
    %3028 = vmatpush1.msra.mxu0 0.0
    %3029 = vmatprep.subr.mxu0 0.0
    %3030 = vmatpush1.msra.mxu0 0.0
    %3031 = vmatprep.subr.mxu0 0.0
    %3032 = vmatpush1.msra.mxu0 0.0
    %3033 = vmatprep.subr.mxu0 0.0
    %3034 = vmatpush1.msra.mxu0 0.0
    %3035 = vmatprep.subr.mxu0 0.0
    %3036 = vmatpush1.msra.mxu0 0.0
    %3037 = vmatprep.subr.mxu0 0.0
    %3038 = vmatpush1.msra.mxu0 0.0
    %3039 = vmatprep.subr.mxu0 0.0
    %3040 = vmatpush1.msra.mxu0 0.0
    %3041 = vmatprep.subr.mxu0 0.0
    %3042 = vmatpush1.msra.mxu0 0.0
    %3043 = vmatprep.subr.mxu0 0.0
    %3044 = vmatpush1.msra.mxu0 0.0
    %3045 = vmatprep.subr.mxu0 0.0
    %3046 = vmatpush1.msra.mxu0 0.0
    %3047 = vmatprep.subr.mxu0 0.0
    %3048 = vmatpush1.msra.mxu0 0.0
    %3049 = vmatprep.subr.mxu0 0.0
    %3050 = vmatpush1.msra.mxu0 0.0
    %3051 = vmatprep.mubr.f32.mxu0 0.0
    %3052 = vmatmul.mubr.f32.gmra.mrb[0].mxu0 %v2985
    %v3053 = vpop.f32.mrb[0].mxu0
    %v3054 = vadd.f32 0.0, %v3053
    %v3055 = vpop.f32.mrb[0].mxu0
    %3056 = vdwg.mxu0
    %v3057 = vadd.f32 %v2974, %v3054
    %v3058 = vadd.f32 %v3057, %v375
    %v3059 = vmax.f32 %v3058, 0.0
    %s3060 = scalar_lea.vmem [#allocation2], 64
    %3061 = vst.msk [vmem:[%s3060] sm:$0x7f] %vm379, %v3059
    %v3062 = vld [vmem:[%s2891] sm:$0x7f]
    %v3063 = vld [vmem:[%s1] sm:$0xff]
    %v3064 = vld [vmem:[%s1 + $0x8] sm:$0xff]
    %v3065 = vld [vmem:[%s1 + $0x10] sm:$0xff]
    %v3066 = vld [vmem:[%s1 + $0x18] sm:$0xff]
    %v3067 = vld [vmem:[%s1 + $0x20] sm:$0xff]
    %v3068 = vld [vmem:[%s1 + $0x28] sm:$0xff]
    %v3069 = vld [vmem:[%s1 + $0x30] sm:$0xff]
    %v3070 = vld [vmem:[%s1 + $0x38] sm:$0xff]
    %v3071 = vld [vmem:[%s2891 + $0x1] sm:$0x7f]
    %v3072 = vld [vmem:[%s46] sm:$0xff]
    %v3073 = vld [vmem:[%s46 + $0x8] sm:$0xff]
    %v3074 = vld [vmem:[%s46 + $0x10] sm:$0xff]
    %v3075 = vld [vmem:[%s46 + $0x18] sm:$0xff]
    %v3076 = vld [vmem:[%s46 + $0x20] sm:$0xff]
    %v3077 = vld [vmem:[%s46 + $0x28] sm:$0xff]
    %v3078 = vld [vmem:[%s46 + $0x30] sm:$0xff]
    %v3079 = vld [vmem:[%s46 + $0x38] sm:$0xff]
    %v3081 = vsel %vm55, %v3071, 0
    %3083 = vmatprep.subr.mxu0 0.0
    %3084 = vmatpush1.msra.mxu0 %v3072
    %3085 = vmatprep.subr.mxu0 0.0
    %3086 = vmatpush1.msra.mxu0 %v3073
    %3087 = vmatprep.subr.mxu0 0.0
    %3088 = vmatpush1.msra.mxu0 %v3074
    %3089 = vmatprep.subr.mxu0 0.0
    %3090 = vmatpush1.msra.mxu0 %v3075
    %3091 = vmatprep.subr.mxu0 0.0
    %3092 = vmatpush1.msra.mxu0 %v3076
    %3093 = vmatprep.subr.mxu0 0.0
    %3094 = vmatpush1.msra.mxu0 %v3077
    %3095 = vmatprep.subr.mxu0 0.0
    %3096 = vmatpush1.msra.mxu0 %v3078
    %3097 = vmatprep.subr.mxu0 0.0
    %3098 = vmatpush1.msra.mxu0 %v3079
    %3099 = vmatprep.subr.mxu0 0.0
    %3100 = vmatpush1.msra.mxu0 0.0
    %3101 = vmatprep.subr.mxu0 0.0
    %3102 = vmatpush1.msra.mxu0 0.0
    %3103 = vmatprep.subr.mxu0 0.0
    %3104 = vmatpush1.msra.mxu0 0.0
    %3105 = vmatprep.subr.mxu0 0.0
    %3106 = vmatpush1.msra.mxu0 0.0
    %3107 = vmatprep.subr.mxu0 0.0
    %3108 = vmatpush1.msra.mxu0 0.0
    %3109 = vmatprep.subr.mxu0 0.0
    %3110 = vmatpush1.msra.mxu0 0.0
    %3111 = vmatprep.subr.mxu0 0.0
    %3112 = vmatpush1.msra.mxu0 0.0
    %3113 = vmatprep.subr.mxu0 0.0
    %3114 = vmatpush1.msra.mxu0 0.0
    %3115 = vmatprep.subr.mxu0 0.0
    %3116 = vmatpush1.msra.mxu0 0.0
    %3117 = vmatprep.subr.mxu0 0.0
    %3118 = vmatpush1.msra.mxu0 0.0
    %3119 = vmatprep.subr.mxu0 0.0
    %3120 = vmatpush1.msra.mxu0 0.0
    %3121 = vmatprep.subr.mxu0 0.0
    %3122 = vmatpush1.msra.mxu0 0.0
    %3123 = vmatprep.subr.mxu0 0.0
    %3124 = vmatpush1.msra.mxu0 0.0
    %3125 = vmatprep.subr.mxu0 0.0
    %3126 = vmatpush1.msra.mxu0 0.0
    %3127 = vmatprep.subr.mxu0 0.0
    %3128 = vmatpush1.msra.mxu0 0.0
    %3129 = vmatprep.subr.mxu0 0.0
    %3130 = vmatpush1.msra.mxu0 0.0
    %3131 = vmatprep.subr.mxu0 0.0
    %3132 = vmatpush1.msra.mxu0 0.0
    %3133 = vmatprep.subr.mxu0 0.0
    %3134 = vmatpush1.msra.mxu0 0.0
    %3135 = vmatprep.subr.mxu0 0.0
    %3136 = vmatpush1.msra.mxu0 0.0
    %3137 = vmatprep.subr.mxu0 0.0
    %3138 = vmatpush1.msra.mxu0 0.0
    %3139 = vmatprep.subr.mxu0 0.0
    %3140 = vmatpush1.msra.mxu0 0.0
    %3141 = vmatprep.subr.mxu0 0.0
    %3142 = vmatpush1.msra.mxu0 0.0
    %3143 = vmatprep.subr.mxu0 0.0
    %3144 = vmatpush1.msra.mxu0 0.0
    %3145 = vmatprep.subr.mxu0 0.0
    %3146 = vmatpush1.msra.mxu0 0.0
    %3147 = vmatprep.mubr.f32.mxu0 0.0
    %3148 = vmatmul.mubr.f32.gmra.mrb[0].mxu0 %v3081
    %v3149 = vpop.f32.mrb[0].mxu0
    %v3150 = vadd.f32 0.0, %v3149
    %v3151 = vpop.f32.mrb[0].mxu0
    %3152 = vdwg.mxu0
    %v3154 = vsel %vm55, %v3062, 0
    %3156 = vmatprep.subr.mxu0 0.0
    %3157 = vmatpush1.msra.mxu0 %v3063
    %3158 = vmatprep.subr.mxu0 0.0
    %3159 = vmatpush1.msra.mxu0 %v3064
    %3160 = vmatprep.subr.mxu0 0.0
    %3161 = vmatpush1.msra.mxu0 %v3065
    %3162 = vmatprep.subr.mxu0 0.0
    %3163 = vmatpush1.msra.mxu0 %v3066
    %3164 = vmatprep.subr.mxu0 0.0
    %3165 = vmatpush1.msra.mxu0 %v3067
    %3166 = vmatprep.subr.mxu0 0.0
    %3167 = vmatpush1.msra.mxu0 %v3068
    %3168 = vmatprep.subr.mxu0 0.0
    %3169 = vmatpush1.msra.mxu0 %v3069
    %3170 = vmatprep.subr.mxu0 0.0
    %3171 = vmatpush1.msra.mxu0 %v3070
    %3172 = vmatprep.subr.mxu0 0.0
    %3173 = vmatpush1.msra.mxu0 0.0
    %3174 = vmatprep.subr.mxu0 0.0
    %3175 = vmatpush1.msra.mxu0 0.0
    %3176 = vmatprep.subr.mxu0 0.0
    %3177 = vmatpush1.msra.mxu0 0.0
    %3178 = vmatprep.subr.mxu0 0.0
    %3179 = vmatpush1.msra.mxu0 0.0
    %3180 = vmatprep.subr.mxu0 0.0
    %3181 = vmatpush1.msra.mxu0 0.0
    %3182 = vmatprep.subr.mxu0 0.0
    %3183 = vmatpush1.msra.mxu0 0.0
    %3184 = vmatprep.subr.mxu0 0.0
    %3185 = vmatpush1.msra.mxu0 0.0
    %3186 = vmatprep.subr.mxu0 0.0
    %3187 = vmatpush1.msra.mxu0 0.0
    %3188 = vmatprep.subr.mxu0 0.0
    %3189 = vmatpush1.msra.mxu0 0.0
    %3190 = vmatprep.subr.mxu0 0.0
    %3191 = vmatpush1.msra.mxu0 0.0
    %3192 = vmatprep.subr.mxu0 0.0
    %3193 = vmatpush1.msra.mxu0 0.0
    %3194 = vmatprep.subr.mxu0 0.0
    %3195 = vmatpush1.msra.mxu0 0.0
    %3196 = vmatprep.subr.mxu0 0.0
    %3197 = vmatpush1.msra.mxu0 0.0
    %3198 = vmatprep.subr.mxu0 0.0
    %3199 = vmatpush1.msra.mxu0 0.0
    %3200 = vmatprep.subr.mxu0 0.0
    %3201 = vmatpush1.msra.mxu0 0.0
    %3202 = vmatprep.subr.mxu0 0.0
    %3203 = vmatpush1.msra.mxu0 0.0
    %3204 = vmatprep.subr.mxu0 0.0
    %3205 = vmatpush1.msra.mxu0 0.0
    %3206 = vmatprep.subr.mxu0 0.0
    %3207 = vmatpush1.msra.mxu0 0.0
    %3208 = vmatprep.subr.mxu0 0.0
    %3209 = vmatpush1.msra.mxu0 0.0
    %3210 = vmatprep.subr.mxu0 0.0
    %3211 = vmatpush1.msra.mxu0 0.0
    %3212 = vmatprep.subr.mxu0 0.0
    %3213 = vmatpush1.msra.mxu0 0.0
    %3214 = vmatprep.subr.mxu0 0.0
    %3215 = vmatpush1.msra.mxu0 0.0
    %3216 = vmatprep.subr.mxu0 0.0
    %3217 = vmatpush1.msra.mxu0 0.0
    %3218 = vmatprep.subr.mxu0 0.0
    %3219 = vmatpush1.msra.mxu0 0.0
    %3220 = vmatprep.mubr.f32.mxu0 0.0
    %3221 = vmatmul.mubr.f32.gmra.mrb[0].mxu0 %v3154
    %v3222 = vpop.f32.mrb[0].mxu0
    %v3223 = vadd.f32 %v3150, %v3222
    %v3224 = vpop.f32.mrb[0].mxu0
    %3225 = vdwg.mxu0
    %s3226 = scalar_lea.vmem %s0, 88
    %v3227 = vld [vmem:[%s3226] sm:$0x7f]
    %v3228 = vld [vmem:[%s204] sm:$0xff]
    %v3229 = vld [vmem:[%s204 + $0x8] sm:$0xff]
    %v3230 = vld [vmem:[%s204 + $0x10] sm:$0xff]
    %v3231 = vld [vmem:[%s204 + $0x18] sm:$0xff]
    %v3232 = vld [vmem:[%s204 + $0x20] sm:$0xff]
    %v3233 = vld [vmem:[%s204 + $0x28] sm:$0xff]
    %v3234 = vld [vmem:[%s204 + $0x30] sm:$0xff]
    %v3235 = vld [vmem:[%s204 + $0x38] sm:$0xff]
    %v3237 = vsel %vm55, %v3227, 0
    %3239 = vmatprep.subr.mxu0 0.0
    %3240 = vmatpush1.msra.mxu0 %v3228
    %3241 = vmatprep.subr.mxu0 0.0
    %3242 = vmatpush1.msra.mxu0 %v3229
    %3243 = vmatprep.subr.mxu0 0.0
    %3244 = vmatpush1.msra.mxu0 %v3230
    %3245 = vmatprep.subr.mxu0 0.0
    %3246 = vmatpush1.msra.mxu0 %v3231
    %3247 = vmatprep.subr.mxu0 0.0
    %3248 = vmatpush1.msra.mxu0 %v3232
    %3249 = vmatprep.subr.mxu0 0.0
    %3250 = vmatpush1.msra.mxu0 %v3233
    %3251 = vmatprep.subr.mxu0 0.0
    %3252 = vmatpush1.msra.mxu0 %v3234
    %3253 = vmatprep.subr.mxu0 0.0
    %3254 = vmatpush1.msra.mxu0 %v3235
    %3255 = vmatprep.subr.mxu0 0.0
    %3256 = vmatpush1.msra.mxu0 0.0
    %3257 = vmatprep.subr.mxu0 0.0
    %3258 = vmatpush1.msra.mxu0 0.0
    %3259 = vmatprep.subr.mxu0 0.0
    %3260 = vmatpush1.msra.mxu0 0.0
    %3261 = vmatprep.subr.mxu0 0.0
    %3262 = vmatpush1.msra.mxu0 0.0
    %3263 = vmatprep.subr.mxu0 0.0
    %3264 = vmatpush1.msra.mxu0 0.0
    %3265 = vmatprep.subr.mxu0 0.0
    %3266 = vmatpush1.msra.mxu0 0.0
    %3267 = vmatprep.subr.mxu0 0.0
    %3268 = vmatpush1.msra.mxu0 0.0
    %3269 = vmatprep.subr.mxu0 0.0
    %3270 = vmatpush1.msra.mxu0 0.0
    %3271 = vmatprep.subr.mxu0 0.0
    %3272 = vmatpush1.msra.mxu0 0.0
    %3273 = vmatprep.subr.mxu0 0.0
    %3274 = vmatpush1.msra.mxu0 0.0
    %3275 = vmatprep.subr.mxu0 0.0
    %3276 = vmatpush1.msra.mxu0 0.0
    %3277 = vmatprep.subr.mxu0 0.0
    %3278 = vmatpush1.msra.mxu0 0.0
    %3279 = vmatprep.subr.mxu0 0.0
    %3280 = vmatpush1.msra.mxu0 0.0
    %3281 = vmatprep.subr.mxu0 0.0
    %3282 = vmatpush1.msra.mxu0 0.0
    %3283 = vmatprep.subr.mxu0 0.0
    %3284 = vmatpush1.msra.mxu0 0.0
    %3285 = vmatprep.subr.mxu0 0.0
    %3286 = vmatpush1.msra.mxu0 0.0
    %3287 = vmatprep.subr.mxu0 0.0
    %3288 = vmatpush1.msra.mxu0 0.0
    %3289 = vmatprep.subr.mxu0 0.0
    %3290 = vmatpush1.msra.mxu0 0.0
    %3291 = vmatprep.subr.mxu0 0.0
    %3292 = vmatpush1.msra.mxu0 0.0
    %3293 = vmatprep.subr.mxu0 0.0
    %3294 = vmatpush1.msra.mxu0 0.0
    %3295 = vmatprep.subr.mxu0 0.0
    %3296 = vmatpush1.msra.mxu0 0.0
    %3297 = vmatprep.subr.mxu0 0.0
    %3298 = vmatpush1.msra.mxu0 0.0
    %3299 = vmatprep.subr.mxu0 0.0
    %3300 = vmatpush1.msra.mxu0 0.0
    %3301 = vmatprep.subr.mxu0 0.0
    %3302 = vmatpush1.msra.mxu0 0.0
    %3303 = vmatprep.mubr.f32.mxu0 0.0
    %3304 = vmatmul.mubr.f32.gmra.mrb[0].mxu0 %v3237
    %v3305 = vpop.f32.mrb[0].mxu0
    %v3306 = vadd.f32 0.0, %v3305
    %v3307 = vpop.f32.mrb[0].mxu0
    %3308 = vdwg.mxu0
    %v3309 = vadd.f32 %v3223, %v3306
    %v3310 = vld [vmem:[%s3226 + $0x1] sm:$0x7f]
    %v3311 = vld [vmem:[%s288] sm:$0xff]
    %v3312 = vld [vmem:[%s288 + $0x8] sm:$0xff]
    %v3313 = vld [vmem:[%s288 + $0x10] sm:$0xff]
    %v3314 = vld [vmem:[%s288 + $0x18] sm:$0xff]
    %v3315 = vld [vmem:[%s288 + $0x20] sm:$0xff]
    %v3316 = vld [vmem:[%s288 + $0x28] sm:$0xff]
    %v3317 = vld [vmem:[%s288 + $0x30] sm:$0xff]
    %v3318 = vld [vmem:[%s288 + $0x38] sm:$0xff]
    %v3320 = vsel %vm55, %v3310, 0
    %3322 = vmatprep.subr.mxu0 0.0
    %3323 = vmatpush1.msra.mxu0 %v3311
    %3324 = vmatprep.subr.mxu0 0.0
    %3325 = vmatpush1.msra.mxu0 %v3312
    %3326 = vmatprep.subr.mxu0 0.0
    %3327 = vmatpush1.msra.mxu0 %v3313
    %3328 = vmatprep.subr.mxu0 0.0
    %3329 = vmatpush1.msra.mxu0 %v3314
    %3330 = vmatprep.subr.mxu0 0.0
    %3331 = vmatpush1.msra.mxu0 %v3315
    %3332 = vmatprep.subr.mxu0 0.0
    %3333 = vmatpush1.msra.mxu0 %v3316
    %3334 = vmatprep.subr.mxu0 0.0
    %3335 = vmatpush1.msra.mxu0 %v3317
    %3336 = vmatprep.subr.mxu0 0.0
    %3337 = vmatpush1.msra.mxu0 %v3318
    %3338 = vmatprep.subr.mxu0 0.0
    %3339 = vmatpush1.msra.mxu0 0.0
    %3340 = vmatprep.subr.mxu0 0.0
    %3341 = vmatpush1.msra.mxu0 0.0
    %3342 = vmatprep.subr.mxu0 0.0
    %3343 = vmatpush1.msra.mxu0 0.0
    %3344 = vmatprep.subr.mxu0 0.0
    %3345 = vmatpush1.msra.mxu0 0.0
    %3346 = vmatprep.subr.mxu0 0.0
    %3347 = vmatpush1.msra.mxu0 0.0
    %3348 = vmatprep.subr.mxu0 0.0
    %3349 = vmatpush1.msra.mxu0 0.0
    %3350 = vmatprep.subr.mxu0 0.0
    %3351 = vmatpush1.msra.mxu0 0.0
    %3352 = vmatprep.subr.mxu0 0.0
    %3353 = vmatpush1.msra.mxu0 0.0
    %3354 = vmatprep.subr.mxu0 0.0
    %3355 = vmatpush1.msra.mxu0 0.0
    %3356 = vmatprep.subr.mxu0 0.0
    %3357 = vmatpush1.msra.mxu0 0.0
    %3358 = vmatprep.subr.mxu0 0.0
    %3359 = vmatpush1.msra.mxu0 0.0
    %3360 = vmatprep.subr.mxu0 0.0
    %3361 = vmatpush1.msra.mxu0 0.0
    %3362 = vmatprep.subr.mxu0 0.0
    %3363 = vmatpush1.msra.mxu0 0.0
    %3364 = vmatprep.subr.mxu0 0.0
    %3365 = vmatpush1.msra.mxu0 0.0
    %3366 = vmatprep.subr.mxu0 0.0
    %3367 = vmatpush1.msra.mxu0 0.0
    %3368 = vmatprep.subr.mxu0 0.0
    %3369 = vmatpush1.msra.mxu0 0.0
    %3370 = vmatprep.subr.mxu0 0.0
    %3371 = vmatpush1.msra.mxu0 0.0
    %3372 = vmatprep.subr.mxu0 0.0
    %3373 = vmatpush1.msra.mxu0 0.0
    %3374 = vmatprep.subr.mxu0 0.0
    %3375 = vmatpush1.msra.mxu0 0.0
    %3376 = vmatprep.subr.mxu0 0.0
    %3377 = vmatpush1.msra.mxu0 0.0
    %3378 = vmatprep.subr.mxu0 0.0
    %3379 = vmatpush1.msra.mxu0 0.0
    %3380 = vmatprep.subr.mxu0 0.0
    %3381 = vmatpush1.msra.mxu0 0.0
    %3382 = vmatprep.subr.mxu0 0.0
    %3383 = vmatpush1.msra.mxu0 0.0
    %3384 = vmatprep.subr.mxu0 0.0
    %3385 = vmatpush1.msra.mxu0 0.0
    %3386 = vmatprep.mubr.f32.mxu0 0.0
    %3387 = vmatmul.mubr.f32.gmra.mrb[0].mxu0 %v3320
    %v3388 = vpop.f32.mrb[0].mxu0
    %v3389 = vadd.f32 0.0, %v3388
    %v3390 = vpop.f32.mrb[0].mxu0
    %3391 = vdwg.mxu0
    %v3392 = vadd.f32 %v3309, %v3389
    %v3393 = vadd.f32 %v3392, %v375
    %v3394 = vmax.f32 %v3393, 0.0
    %s3395 = scalar_lea.vmem [#allocation2], 72
    %3396 = vst.msk [vmem:[%s3395] sm:$0x7f] %vm379, %v3394
    %v3397 = vld [vmem:[%s3226] sm:$0x7f]
    %v3398 = vld [vmem:[%s1] sm:$0xff]
    %v3399 = vld [vmem:[%s1 + $0x8] sm:$0xff]
    %v3400 = vld [vmem:[%s1 + $0x10] sm:$0xff]
    %v3401 = vld [vmem:[%s1 + $0x18] sm:$0xff]
    %v3402 = vld [vmem:[%s1 + $0x20] sm:$0xff]
    %v3403 = vld [vmem:[%s1 + $0x28] sm:$0xff]
    %v3404 = vld [vmem:[%s1 + $0x30] sm:$0xff]
    %v3405 = vld [vmem:[%s1 + $0x38] sm:$0xff]
    %v3406 = vld [vmem:[%s3226 + $0x1] sm:$0x7f]
    %v3407 = vld [vmem:[%s46] sm:$0xff]
    %v3408 = vld [vmem:[%s46 + $0x8] sm:$0xff]
    %v3409 = vld [vmem:[%s46 + $0x10] sm:$0xff]
    %v3410 = vld [vmem:[%s46 + $0x18] sm:$0xff]
    %v3411 = vld [vmem:[%s46 + $0x20] sm:$0xff]
    %v3412 = vld [vmem:[%s46 + $0x28] sm:$0xff]
    %v3413 = vld [vmem:[%s46 + $0x30] sm:$0xff]
    %v3414 = vld [vmem:[%s46 + $0x38] sm:$0xff]
    %v3416 = vsel %vm55, %v3406, 0
    %3418 = vmatprep.subr.mxu0 0.0
    %3419 = vmatpush1.msra.mxu0 %v3407
    %3420 = vmatprep.subr.mxu0 0.0
    %3421 = vmatpush1.msra.mxu0 %v3408
    %3422 = vmatprep.subr.mxu0 0.0
    %3423 = vmatpush1.msra.mxu0 %v3409
    %3424 = vmatprep.subr.mxu0 0.0
    %3425 = vmatpush1.msra.mxu0 %v3410
    %3426 = vmatprep.subr.mxu0 0.0
    %3427 = vmatpush1.msra.mxu0 %v3411
    %3428 = vmatprep.subr.mxu0 0.0
    %3429 = vmatpush1.msra.mxu0 %v3412
    %3430 = vmatprep.subr.mxu0 0.0
    %3431 = vmatpush1.msra.mxu0 %v3413
    %3432 = vmatprep.subr.mxu0 0.0
    %3433 = vmatpush1.msra.mxu0 %v3414
    %3434 = vmatprep.subr.mxu0 0.0
    %3435 = vmatpush1.msra.mxu0 0.0
    %3436 = vmatprep.subr.mxu0 0.0
    %3437 = vmatpush1.msra.mxu0 0.0
    %3438 = vmatprep.subr.mxu0 0.0
    %3439 = vmatpush1.msra.mxu0 0.0
    %3440 = vmatprep.subr.mxu0 0.0
    %3441 = vmatpush1.msra.mxu0 0.0
    %3442 = vmatprep.subr.mxu0 0.0
    %3443 = vmatpush1.msra.mxu0 0.0
    %3444 = vmatprep.subr.mxu0 0.0
    %3445 = vmatpush1.msra.mxu0 0.0
    %3446 = vmatprep.subr.mxu0 0.0
    %3447 = vmatpush1.msra.mxu0 0.0
    %3448 = vmatprep.subr.mxu0 0.0
    %3449 = vmatpush1.msra.mxu0 0.0
    %3450 = vmatprep.subr.mxu0 0.0
    %3451 = vmatpush1.msra.mxu0 0.0
    %3452 = vmatprep.subr.mxu0 0.0
    %3453 = vmatpush1.msra.mxu0 0.0
    %3454 = vmatprep.subr.mxu0 0.0
    %3455 = vmatpush1.msra.mxu0 0.0
    %3456 = vmatprep.subr.mxu0 0.0
    %3457 = vmatpush1.msra.mxu0 0.0
    %3458 = vmatprep.subr.mxu0 0.0
    %3459 = vmatpush1.msra.mxu0 0.0
    %3460 = vmatprep.subr.mxu0 0.0
    %3461 = vmatpush1.msra.mxu0 0.0
    %3462 = vmatprep.subr.mxu0 0.0
    %3463 = vmatpush1.msra.mxu0 0.0
    %3464 = vmatprep.subr.mxu0 0.0
    %3465 = vmatpush1.msra.mxu0 0.0
    %3466 = vmatprep.subr.mxu0 0.0
    %3467 = vmatpush1.msra.mxu0 0.0
    %3468 = vmatprep.subr.mxu0 0.0
    %3469 = vmatpush1.msra.mxu0 0.0
    %3470 = vmatprep.subr.mxu0 0.0
    %3471 = vmatpush1.msra.mxu0 0.0
    %3472 = vmatprep.subr.mxu0 0.0
    %3473 = vmatpush1.msra.mxu0 0.0
    %3474 = vmatprep.subr.mxu0 0.0
    %3475 = vmatpush1.msra.mxu0 0.0
    %3476 = vmatprep.subr.mxu0 0.0
    %3477 = vmatpush1.msra.mxu0 0.0
    %3478 = vmatprep.subr.mxu0 0.0
    %3479 = vmatpush1.msra.mxu0 0.0
    %3480 = vmatprep.subr.mxu0 0.0
    %3481 = vmatpush1.msra.mxu0 0.0
    %3482 = vmatprep.mubr.f32.mxu0 0.0
    %3483 = vmatmul.mubr.f32.gmra.mrb[0].mxu0 %v3416
    %v3484 = vpop.f32.mrb[0].mxu0
    %v3485 = vadd.f32 0.0, %v3484
    %v3486 = vpop.f32.mrb[0].mxu0
    %3487 = vdwg.mxu0
    %v3489 = vsel %vm55, %v3397, 0
    %3491 = vmatprep.subr.mxu0 0.0
    %3492 = vmatpush1.msra.mxu0 %v3398
    %3493 = vmatprep.subr.mxu0 0.0
    %3494 = vmatpush1.msra.mxu0 %v3399
    %3495 = vmatprep.subr.mxu0 0.0
    %3496 = vmatpush1.msra.mxu0 %v3400
    %3497 = vmatprep.subr.mxu0 0.0
    %3498 = vmatpush1.msra.mxu0 %v3401
    %3499 = vmatprep.subr.mxu0 0.0
    %3500 = vmatpush1.msra.mxu0 %v3402
    %3501 = vmatprep.subr.mxu0 0.0
    %3502 = vmatpush1.msra.mxu0 %v3403
    %3503 = vmatprep.subr.mxu0 0.0
    %3504 = vmatpush1.msra.mxu0 %v3404
    %3505 = vmatprep.subr.mxu0 0.0
    %3506 = vmatpush1.msra.mxu0 %v3405
    %3507 = vmatprep.subr.mxu0 0.0
    %3508 = vmatpush1.msra.mxu0 0.0
    %3509 = vmatprep.subr.mxu0 0.0
    %3510 = vmatpush1.msra.mxu0 0.0
    %3511 = vmatprep.subr.mxu0 0.0
    %3512 = vmatpush1.msra.mxu0 0.0
    %3513 = vmatprep.subr.mxu0 0.0
    %3514 = vmatpush1.msra.mxu0 0.0
    %3515 = vmatprep.subr.mxu0 0.0
    %3516 = vmatpush1.msra.mxu0 0.0
    %3517 = vmatprep.subr.mxu0 0.0
    %3518 = vmatpush1.msra.mxu0 0.0
    %3519 = vmatprep.subr.mxu0 0.0
    %3520 = vmatpush1.msra.mxu0 0.0
    %3521 = vmatprep.subr.mxu0 0.0
    %3522 = vmatpush1.msra.mxu0 0.0
    %3523 = vmatprep.subr.mxu0 0.0
    %3524 = vmatpush1.msra.mxu0 0.0
    %3525 = vmatprep.subr.mxu0 0.0
    %3526 = vmatpush1.msra.mxu0 0.0
    %3527 = vmatprep.subr.mxu0 0.0
    %3528 = vmatpush1.msra.mxu0 0.0
    %3529 = vmatprep.subr.mxu0 0.0
    %3530 = vmatpush1.msra.mxu0 0.0
    %3531 = vmatprep.subr.mxu0 0.0
    %3532 = vmatpush1.msra.mxu0 0.0
    %3533 = vmatprep.subr.mxu0 0.0
    %3534 = vmatpush1.msra.mxu0 0.0
    %3535 = vmatprep.subr.mxu0 0.0
    %3536 = vmatpush1.msra.mxu0 0.0
    %3537 = vmatprep.subr.mxu0 0.0
    %3538 = vmatpush1.msra.mxu0 0.0
    %3539 = vmatprep.subr.mxu0 0.0
    %3540 = vmatpush1.msra.mxu0 0.0
    %3541 = vmatprep.subr.mxu0 0.0
    %3542 = vmatpush1.msra.mxu0 0.0
    %3543 = vmatprep.subr.mxu0 0.0
    %3544 = vmatpush1.msra.mxu0 0.0
    %3545 = vmatprep.subr.mxu0 0.0
    %3546 = vmatpush1.msra.mxu0 0.0
    %3547 = vmatprep.subr.mxu0 0.0
    %3548 = vmatpush1.msra.mxu0 0.0
    %3549 = vmatprep.subr.mxu0 0.0
    %3550 = vmatpush1.msra.mxu0 0.0
    %3551 = vmatprep.subr.mxu0 0.0
    %3552 = vmatpush1.msra.mxu0 0.0
    %3553 = vmatprep.subr.mxu0 0.0
    %3554 = vmatpush1.msra.mxu0 0.0
    %3555 = vmatprep.mubr.f32.mxu0 0.0
    %3556 = vmatmul.mubr.f32.gmra.mrb[0].mxu0 %v3489
    %v3557 = vpop.f32.mrb[0].mxu0
    %v3558 = vadd.f32 %v3485, %v3557
    %v3559 = vpop.f32.mrb[0].mxu0
    %3560 = vdwg.mxu0
    %s3561 = scalar_lea.vmem %s0, 96
    %v3562 = vld [vmem:[%s3561] sm:$0x7f]
    %v3563 = vld [vmem:[%s204] sm:$0xff]
    %v3564 = vld [vmem:[%s204 + $0x8] sm:$0xff]
    %v3565 = vld [vmem:[%s204 + $0x10] sm:$0xff]
    %v3566 = vld [vmem:[%s204 + $0x18] sm:$0xff]
    %v3567 = vld [vmem:[%s204 + $0x20] sm:$0xff]
    %v3568 = vld [vmem:[%s204 + $0x28] sm:$0xff]
    %v3569 = vld [vmem:[%s204 + $0x30] sm:$0xff]
    %v3570 = vld [vmem:[%s204 + $0x38] sm:$0xff]
    %v3572 = vsel %vm55, %v3562, 0
    %3574 = vmatprep.subr.mxu0 0.0
    %3575 = vmatpush1.msra.mxu0 %v3563
    %3576 = vmatprep.subr.mxu0 0.0
    %3577 = vmatpush1.msra.mxu0 %v3564
    %3578 = vmatprep.subr.mxu0 0.0
    %3579 = vmatpush1.msra.mxu0 %v3565
    %3580 = vmatprep.subr.mxu0 0.0
    %3581 = vmatpush1.msra.mxu0 %v3566
    %3582 = vmatprep.subr.mxu0 0.0
    %3583 = vmatpush1.msra.mxu0 %v3567
    %3584 = vmatprep.subr.mxu0 0.0
    %3585 = vmatpush1.msra.mxu0 %v3568
    %3586 = vmatprep.subr.mxu0 0.0
    %3587 = vmatpush1.msra.mxu0 %v3569
    %3588 = vmatprep.subr.mxu0 0.0
    %3589 = vmatpush1.msra.mxu0 %v3570
    %3590 = vmatprep.subr.mxu0 0.0
    %3591 = vmatpush1.msra.mxu0 0.0
    %3592 = vmatprep.subr.mxu0 0.0
    %3593 = vmatpush1.msra.mxu0 0.0
    %3594 = vmatprep.subr.mxu0 0.0
    %3595 = vmatpush1.msra.mxu0 0.0
    %3596 = vmatprep.subr.mxu0 0.0
    %3597 = vmatpush1.msra.mxu0 0.0
    %3598 = vmatprep.subr.mxu0 0.0
    %3599 = vmatpush1.msra.mxu0 0.0
    %3600 = vmatprep.subr.mxu0 0.0
    %3601 = vmatpush1.msra.mxu0 0.0
    %3602 = vmatprep.subr.mxu0 0.0
    %3603 = vmatpush1.msra.mxu0 0.0
    %3604 = vmatprep.subr.mxu0 0.0
    %3605 = vmatpush1.msra.mxu0 0.0
    %3606 = vmatprep.subr.mxu0 0.0
    %3607 = vmatpush1.msra.mxu0 0.0
    %3608 = vmatprep.subr.mxu0 0.0
    %3609 = vmatpush1.msra.mxu0 0.0
    %3610 = vmatprep.subr.mxu0 0.0
    %3611 = vmatpush1.msra.mxu0 0.0
    %3612 = vmatprep.subr.mxu0 0.0
    %3613 = vmatpush1.msra.mxu0 0.0
    %3614 = vmatprep.subr.mxu0 0.0
    %3615 = vmatpush1.msra.mxu0 0.0
    %3616 = vmatprep.subr.mxu0 0.0
    %3617 = vmatpush1.msra.mxu0 0.0
    %3618 = vmatprep.subr.mxu0 0.0
    %3619 = vmatpush1.msra.mxu0 0.0
    %3620 = vmatprep.subr.mxu0 0.0
    %3621 = vmatpush1.msra.mxu0 0.0
    %3622 = vmatprep.subr.mxu0 0.0
    %3623 = vmatpush1.msra.mxu0 0.0
    %3624 = vmatprep.subr.mxu0 0.0
    %3625 = vmatpush1.msra.mxu0 0.0
    %3626 = vmatprep.subr.mxu0 0.0
    %3627 = vmatpush1.msra.mxu0 0.0
    %3628 = vmatprep.subr.mxu0 0.0
    %3629 = vmatpush1.msra.mxu0 0.0
    %3630 = vmatprep.subr.mxu0 0.0
    %3631 = vmatpush1.msra.mxu0 0.0
    %3632 = vmatprep.subr.mxu0 0.0
    %3633 = vmatpush1.msra.mxu0 0.0
    %3634 = vmatprep.subr.mxu0 0.0
    %3635 = vmatpush1.msra.mxu0 0.0
    %3636 = vmatprep.subr.mxu0 0.0
    %3637 = vmatpush1.msra.mxu0 0.0
    %3638 = vmatprep.mubr.f32.mxu0 0.0
    %3639 = vmatmul.mubr.f32.gmra.mrb[0].mxu0 %v3572
    %v3640 = vpop.f32.mrb[0].mxu0
    %v3641 = vadd.f32 0.0, %v3640
    %v3642 = vpop.f32.mrb[0].mxu0
    %3643 = vdwg.mxu0
    %v3644 = vadd.f32 %v3558, %v3641
    %v3645 = vld [vmem:[%s3561 + $0x1] sm:$0x7f]
    %v3646 = vld [vmem:[%s288] sm:$0xff]
    %v3647 = vld [vmem:[%s288 + $0x8] sm:$0xff]
    %v3648 = vld [vmem:[%s288 + $0x10] sm:$0xff]
    %v3649 = vld [vmem:[%s288 + $0x18] sm:$0xff]
    %v3650 = vld [vmem:[%s288 + $0x20] sm:$0xff]
    %v3651 = vld [vmem:[%s288 + $0x28] sm:$0xff]
    %v3652 = vld [vmem:[%s288 + $0x30] sm:$0xff]
    %v3653 = vld [vmem:[%s288 + $0x38] sm:$0xff]
    %v3655 = vsel %vm55, %v3645, 0
    %3657 = vmatprep.subr.mxu0 0.0
    %3658 = vmatpush1.msra.mxu0 %v3646
    %3659 = vmatprep.subr.mxu0 0.0
    %3660 = vmatpush1.msra.mxu0 %v3647
    %3661 = vmatprep.subr.mxu0 0.0
    %3662 = vmatpush1.msra.mxu0 %v3648
    %3663 = vmatprep.subr.mxu0 0.0
    %3664 = vmatpush1.msra.mxu0 %v3649
    %3665 = vmatprep.subr.mxu0 0.0
    %3666 = vmatpush1.msra.mxu0 %v3650
    %3667 = vmatprep.subr.mxu0 0.0
    %3668 = vmatpush1.msra.mxu0 %v3651
    %3669 = vmatprep.subr.mxu0 0.0
    %3670 = vmatpush1.msra.mxu0 %v3652
    %3671 = vmatprep.subr.mxu0 0.0
    %3672 = vmatpush1.msra.mxu0 %v3653
    %3673 = vmatprep.subr.mxu0 0.0
    %3674 = vmatpush1.msra.mxu0 0.0
    %3675 = vmatprep.subr.mxu0 0.0
    %3676 = vmatpush1.msra.mxu0 0.0
    %3677 = vmatprep.subr.mxu0 0.0
    %3678 = vmatpush1.msra.mxu0 0.0
    %3679 = vmatprep.subr.mxu0 0.0
    %3680 = vmatpush1.msra.mxu0 0.0
    %3681 = vmatprep.subr.mxu0 0.0
    %3682 = vmatpush1.msra.mxu0 0.0
    %3683 = vmatprep.subr.mxu0 0.0
    %3684 = vmatpush1.msra.mxu0 0.0
    %3685 = vmatprep.subr.mxu0 0.0
    %3686 = vmatpush1.msra.mxu0 0.0
    %3687 = vmatprep.subr.mxu0 0.0
    %3688 = vmatpush1.msra.mxu0 0.0
    %3689 = vmatprep.subr.mxu0 0.0
    %3690 = vmatpush1.msra.mxu0 0.0
    %3691 = vmatprep.subr.mxu0 0.0
    %3692 = vmatpush1.msra.mxu0 0.0
    %3693 = vmatprep.subr.mxu0 0.0
    %3694 = vmatpush1.msra.mxu0 0.0
    %3695 = vmatprep.subr.mxu0 0.0
    %3696 = vmatpush1.msra.mxu0 0.0
    %3697 = vmatprep.subr.mxu0 0.0
    %3698 = vmatpush1.msra.mxu0 0.0
    %3699 = vmatprep.subr.mxu0 0.0
    %3700 = vmatpush1.msra.mxu0 0.0
    %3701 = vmatprep.subr.mxu0 0.0
    %3702 = vmatpush1.msra.mxu0 0.0
    %3703 = vmatprep.subr.mxu0 0.0
    %3704 = vmatpush1.msra.mxu0 0.0
    %3705 = vmatprep.subr.mxu0 0.0
    %3706 = vmatpush1.msra.mxu0 0.0
    %3707 = vmatprep.subr.mxu0 0.0
    %3708 = vmatpush1.msra.mxu0 0.0
    %3709 = vmatprep.subr.mxu0 0.0
    %3710 = vmatpush1.msra.mxu0 0.0
    %3711 = vmatprep.subr.mxu0 0.0
    %3712 = vmatpush1.msra.mxu0 0.0
    %3713 = vmatprep.subr.mxu0 0.0
    %3714 = vmatpush1.msra.mxu0 0.0
    %3715 = vmatprep.subr.mxu0 0.0
    %3716 = vmatpush1.msra.mxu0 0.0
    %3717 = vmatprep.subr.mxu0 0.0
    %3718 = vmatpush1.msra.mxu0 0.0
    %3719 = vmatprep.subr.mxu0 0.0
    %3720 = vmatpush1.msra.mxu0 0.0
    %3721 = vmatprep.mubr.f32.mxu0 0.0
    %3722 = vmatmul.mubr.f32.gmra.mrb[0].mxu0 %v3655
    %v3723 = vpop.f32.mrb[0].mxu0
    %v3724 = vadd.f32 0.0, %v3723
    %v3725 = vpop.f32.mrb[0].mxu0
    %3726 = vdwg.mxu0
    %v3727 = vadd.f32 %v3644, %v3724
    %v3728 = vadd.f32 %v3727, %v375
    %v3729 = vmax.f32 %v3728, 0.0
    %s3730 = scalar_lea.vmem [#allocation2], 80
    %3731 = vst.msk [vmem:[%s3730] sm:$0x7f] %vm379, %v3729
    %v3732 = vld [vmem:[%s3561] sm:$0x7f]
    %v3733 = vld [vmem:[%s1] sm:$0xff]
    %v3734 = vld [vmem:[%s1 + $0x8] sm:$0xff]
    %v3735 = vld [vmem:[%s1 + $0x10] sm:$0xff]
    %v3736 = vld [vmem:[%s1 + $0x18] sm:$0xff]
    %v3737 = vld [vmem:[%s1 + $0x20] sm:$0xff]
    %v3738 = vld [vmem:[%s1 + $0x28] sm:$0xff]
    %v3739 = vld [vmem:[%s1 + $0x30] sm:$0xff]
    %v3740 = vld [vmem:[%s1 + $0x38] sm:$0xff]
    %v3741 = vld [vmem:[%s3561 + $0x1] sm:$0x7f]
    %v3742 = vld [vmem:[%s46] sm:$0xff]
    %v3743 = vld [vmem:[%s46 + $0x8] sm:$0xff]
    %v3744 = vld [vmem:[%s46 + $0x10] sm:$0xff]
    %v3745 = vld [vmem:[%s46 + $0x18] sm:$0xff]
    %v3746 = vld [vmem:[%s46 + $0x20] sm:$0xff]
    %v3747 = vld [vmem:[%s46 + $0x28] sm:$0xff]
    %v3748 = vld [vmem:[%s46 + $0x30] sm:$0xff]
    %v3749 = vld [vmem:[%s46 + $0x38] sm:$0xff]
    %v3751 = vsel %vm55, %v3741, 0
    %3753 = vmatprep.subr.mxu0 0.0
    %3754 = vmatpush1.msra.mxu0 %v3742
    %3755 = vmatprep.subr.mxu0 0.0
    %3756 = vmatpush1.msra.mxu0 %v3743
    %3757 = vmatprep.subr.mxu0 0.0
    %3758 = vmatpush1.msra.mxu0 %v3744
    %3759 = vmatprep.subr.mxu0 0.0
    %3760 = vmatpush1.msra.mxu0 %v3745
    %3761 = vmatprep.subr.mxu0 0.0
    %3762 = vmatpush1.msra.mxu0 %v3746
    %3763 = vmatprep.subr.mxu0 0.0
    %3764 = vmatpush1.msra.mxu0 %v3747
    %3765 = vmatprep.subr.mxu0 0.0
    %3766 = vmatpush1.msra.mxu0 %v3748
    %3767 = vmatprep.subr.mxu0 0.0
    %3768 = vmatpush1.msra.mxu0 %v3749
    %3769 = vmatprep.subr.mxu0 0.0
    %3770 = vmatpush1.msra.mxu0 0.0
    %3771 = vmatprep.subr.mxu0 0.0
    %3772 = vmatpush1.msra.mxu0 0.0
    %3773 = vmatprep.subr.mxu0 0.0
    %3774 = vmatpush1.msra.mxu0 0.0
    %3775 = vmatprep.subr.mxu0 0.0
    %3776 = vmatpush1.msra.mxu0 0.0
    %3777 = vmatprep.subr.mxu0 0.0
    %3778 = vmatpush1.msra.mxu0 0.0
    %3779 = vmatprep.subr.mxu0 0.0
    %3780 = vmatpush1.msra.mxu0 0.0
    %3781 = vmatprep.subr.mxu0 0.0
    %3782 = vmatpush1.msra.mxu0 0.0
    %3783 = vmatprep.subr.mxu0 0.0
    %3784 = vmatpush1.msra.mxu0 0.0
    %3785 = vmatprep.subr.mxu0 0.0
    %3786 = vmatpush1.msra.mxu0 0.0
    %3787 = vmatprep.subr.mxu0 0.0
    %3788 = vmatpush1.msra.mxu0 0.0
    %3789 = vmatprep.subr.mxu0 0.0
    %3790 = vmatpush1.msra.mxu0 0.0
    %3791 = vmatprep.subr.mxu0 0.0
    %3792 = vmatpush1.msra.mxu0 0.0
    %3793 = vmatprep.subr.mxu0 0.0
    %3794 = vmatpush1.msra.mxu0 0.0
    %3795 = vmatprep.subr.mxu0 0.0
    %3796 = vmatpush1.msra.mxu0 0.0
    %3797 = vmatprep.subr.mxu0 0.0
    %3798 = vmatpush1.msra.mxu0 0.0
    %3799 = vmatprep.subr.mxu0 0.0
    %3800 = vmatpush1.msra.mxu0 0.0
    %3801 = vmatprep.subr.mxu0 0.0
    %3802 = vmatpush1.msra.mxu0 0.0
    %3803 = vmatprep.subr.mxu0 0.0
    %3804 = vmatpush1.msra.mxu0 0.0
    %3805 = vmatprep.subr.mxu0 0.0
    %3806 = vmatpush1.msra.mxu0 0.0
    %3807 = vmatprep.subr.mxu0 0.0
    %3808 = vmatpush1.msra.mxu0 0.0
    %3809 = vmatprep.subr.mxu0 0.0
    %3810 = vmatpush1.msra.mxu0 0.0
    %3811 = vmatprep.subr.mxu0 0.0
    %3812 = vmatpush1.msra.mxu0 0.0
    %3813 = vmatprep.subr.mxu0 0.0
    %3814 = vmatpush1.msra.mxu0 0.0
    %3815 = vmatprep.subr.mxu0 0.0
    %3816 = vmatpush1.msra.mxu0 0.0
    %3817 = vmatprep.mubr.f32.mxu0 0.0
    %3818 = vmatmul.mubr.f32.gmra.mrb[0].mxu0 %v3751
    %v3819 = vpop.f32.mrb[0].mxu0
    %v3820 = vadd.f32 0.0, %v3819
    %v3821 = vpop.f32.mrb[0].mxu0
    %3822 = vdwg.mxu0
    %v3824 = vsel %vm55, %v3732, 0
    %3826 = vmatprep.subr.mxu0 0.0
    %3827 = vmatpush1.msra.mxu0 %v3733
    %3828 = vmatprep.subr.mxu0 0.0
    %3829 = vmatpush1.msra.mxu0 %v3734
    %3830 = vmatprep.subr.mxu0 0.0
    %3831 = vmatpush1.msra.mxu0 %v3735
    %3832 = vmatprep.subr.mxu0 0.0
    %3833 = vmatpush1.msra.mxu0 %v3736
    %3834 = vmatprep.subr.mxu0 0.0
    %3835 = vmatpush1.msra.mxu0 %v3737
    %3836 = vmatprep.subr.mxu0 0.0
    %3837 = vmatpush1.msra.mxu0 %v3738
    %3838 = vmatprep.subr.mxu0 0.0
    %3839 = vmatpush1.msra.mxu0 %v3739
    %3840 = vmatprep.subr.mxu0 0.0
    %3841 = vmatpush1.msra.mxu0 %v3740
    %3842 = vmatprep.subr.mxu0 0.0
    %3843 = vmatpush1.msra.mxu0 0.0
    %3844 = vmatprep.subr.mxu0 0.0
    %3845 = vmatpush1.msra.mxu0 0.0
    %3846 = vmatprep.subr.mxu0 0.0
    %3847 = vmatpush1.msra.mxu0 0.0
    %3848 = vmatprep.subr.mxu0 0.0
    %3849 = vmatpush1.msra.mxu0 0.0
    %3850 = vmatprep.subr.mxu0 0.0
    %3851 = vmatpush1.msra.mxu0 0.0
    %3852 = vmatprep.subr.mxu0 0.0
    %3853 = vmatpush1.msra.mxu0 0.0
    %3854 = vmatprep.subr.mxu0 0.0
    %3855 = vmatpush1.msra.mxu0 0.0
    %3856 = vmatprep.subr.mxu0 0.0
    %3857 = vmatpush1.msra.mxu0 0.0
    %3858 = vmatprep.subr.mxu0 0.0
    %3859 = vmatpush1.msra.mxu0 0.0
    %3860 = vmatprep.subr.mxu0 0.0
    %3861 = vmatpush1.msra.mxu0 0.0
    %3862 = vmatprep.subr.mxu0 0.0
    %3863 = vmatpush1.msra.mxu0 0.0
    %3864 = vmatprep.subr.mxu0 0.0
    %3865 = vmatpush1.msra.mxu0 0.0
    %3866 = vmatprep.subr.mxu0 0.0
    %3867 = vmatpush1.msra.mxu0 0.0
    %3868 = vmatprep.subr.mxu0 0.0
    %3869 = vmatpush1.msra.mxu0 0.0
    %3870 = vmatprep.subr.mxu0 0.0
    %3871 = vmatpush1.msra.mxu0 0.0
    %3872 = vmatprep.subr.mxu0 0.0
    %3873 = vmatpush1.msra.mxu0 0.0
    %3874 = vmatprep.subr.mxu0 0.0
    %3875 = vmatpush1.msra.mxu0 0.0
    %3876 = vmatprep.subr.mxu0 0.0
    %3877 = vmatpush1.msra.mxu0 0.0
    %3878 = vmatprep.subr.mxu0 0.0
    %3879 = vmatpush1.msra.mxu0 0.0
    %3880 = vmatprep.subr.mxu0 0.0
    %3881 = vmatpush1.msra.mxu0 0.0
    %3882 = vmatprep.subr.mxu0 0.0
    %3883 = vmatpush1.msra.mxu0 0.0
    %3884 = vmatprep.subr.mxu0 0.0
    %3885 = vmatpush1.msra.mxu0 0.0
    %3886 = vmatprep.subr.mxu0 0.0
    %3887 = vmatpush1.msra.mxu0 0.0
    %3888 = vmatprep.subr.mxu0 0.0
    %3889 = vmatpush1.msra.mxu0 0.0
    %3890 = vmatprep.mubr.f32.mxu0 0.0
    %3891 = vmatmul.mubr.f32.gmra.mrb[0].mxu0 %v3824
    %v3892 = vpop.f32.mrb[0].mxu0
    %v3893 = vadd.f32 %v3820, %v3892
    %v3894 = vpop.f32.mrb[0].mxu0
    %3895 = vdwg.mxu0
    %s3896 = scalar_lea.vmem %s0, 104
    %v3897 = vld [vmem:[%s3896] sm:$0x7f]
    %v3898 = vld [vmem:[%s204] sm:$0xff]
    %v3899 = vld [vmem:[%s204 + $0x8] sm:$0xff]
    %v3900 = vld [vmem:[%s204 + $0x10] sm:$0xff]
    %v3901 = vld [vmem:[%s204 + $0x18] sm:$0xff]
    %v3902 = vld [vmem:[%s204 + $0x20] sm:$0xff]
    %v3903 = vld [vmem:[%s204 + $0x28] sm:$0xff]
    %v3904 = vld [vmem:[%s204 + $0x30] sm:$0xff]
    %v3905 = vld [vmem:[%s204 + $0x38] sm:$0xff]
    %v3907 = vsel %vm55, %v3897, 0
    %3909 = vmatprep.subr.mxu0 0.0
    %3910 = vmatpush1.msra.mxu0 %v3898
    %3911 = vmatprep.subr.mxu0 0.0
    %3912 = vmatpush1.msra.mxu0 %v3899
    %3913 = vmatprep.subr.mxu0 0.0
    %3914 = vmatpush1.msra.mxu0 %v3900
    %3915 = vmatprep.subr.mxu0 0.0
    %3916 = vmatpush1.msra.mxu0 %v3901
    %3917 = vmatprep.subr.mxu0 0.0
    %3918 = vmatpush1.msra.mxu0 %v3902
    %3919 = vmatprep.subr.mxu0 0.0
    %3920 = vmatpush1.msra.mxu0 %v3903
    %3921 = vmatprep.subr.mxu0 0.0
    %3922 = vmatpush1.msra.mxu0 %v3904
    %3923 = vmatprep.subr.mxu0 0.0
    %3924 = vmatpush1.msra.mxu0 %v3905
    %3925 = vmatprep.subr.mxu0 0.0
    %3926 = vmatpush1.msra.mxu0 0.0
    %3927 = vmatprep.subr.mxu0 0.0
    %3928 = vmatpush1.msra.mxu0 0.0
    %3929 = vmatprep.subr.mxu0 0.0
    %3930 = vmatpush1.msra.mxu0 0.0
    %3931 = vmatprep.subr.mxu0 0.0
    %3932 = vmatpush1.msra.mxu0 0.0
    %3933 = vmatprep.subr.mxu0 0.0
    %3934 = vmatpush1.msra.mxu0 0.0
    %3935 = vmatprep.subr.mxu0 0.0
    %3936 = vmatpush1.msra.mxu0 0.0
    %3937 = vmatprep.subr.mxu0 0.0
    %3938 = vmatpush1.msra.mxu0 0.0
    %3939 = vmatprep.subr.mxu0 0.0
    %3940 = vmatpush1.msra.mxu0 0.0
    %3941 = vmatprep.subr.mxu0 0.0
    %3942 = vmatpush1.msra.mxu0 0.0
    %3943 = vmatprep.subr.mxu0 0.0
    %3944 = vmatpush1.msra.mxu0 0.0
    %3945 = vmatprep.subr.mxu0 0.0
    %3946 = vmatpush1.msra.mxu0 0.0
    %3947 = vmatprep.subr.mxu0 0.0
    %3948 = vmatpush1.msra.mxu0 0.0
    %3949 = vmatprep.subr.mxu0 0.0
    %3950 = vmatpush1.msra.mxu0 0.0
    %3951 = vmatprep.subr.mxu0 0.0
    %3952 = vmatpush1.msra.mxu0 0.0
    %3953 = vmatprep.subr.mxu0 0.0
    %3954 = vmatpush1.msra.mxu0 0.0
    %3955 = vmatprep.subr.mxu0 0.0
    %3956 = vmatpush1.msra.mxu0 0.0
    %3957 = vmatprep.subr.mxu0 0.0
    %3958 = vmatpush1.msra.mxu0 0.0
    %3959 = vmatprep.subr.mxu0 0.0
    %3960 = vmatpush1.msra.mxu0 0.0
    %3961 = vmatprep.subr.mxu0 0.0
    %3962 = vmatpush1.msra.mxu0 0.0
    %3963 = vmatprep.subr.mxu0 0.0
    %3964 = vmatpush1.msra.mxu0 0.0
    %3965 = vmatprep.subr.mxu0 0.0
    %3966 = vmatpush1.msra.mxu0 0.0
    %3967 = vmatprep.subr.mxu0 0.0
    %3968 = vmatpush1.msra.mxu0 0.0
    %3969 = vmatprep.subr.mxu0 0.0
    %3970 = vmatpush1.msra.mxu0 0.0
    %3971 = vmatprep.subr.mxu0 0.0
    %3972 = vmatpush1.msra.mxu0 0.0
    %3973 = vmatprep.mubr.f32.mxu0 0.0
    %3974 = vmatmul.mubr.f32.gmra.mrb[0].mxu0 %v3907
    %v3975 = vpop.f32.mrb[0].mxu0
    %v3976 = vadd.f32 0.0, %v3975
    %v3977 = vpop.f32.mrb[0].mxu0
    %3978 = vdwg.mxu0
    %v3979 = vadd.f32 %v3893, %v3976
    %v3980 = vld [vmem:[%s3896 + $0x1] sm:$0x7f]
    %v3981 = vld [vmem:[%s288] sm:$0xff]
    %v3982 = vld [vmem:[%s288 + $0x8] sm:$0xff]
    %v3983 = vld [vmem:[%s288 + $0x10] sm:$0xff]
    %v3984 = vld [vmem:[%s288 + $0x18] sm:$0xff]
    %v3985 = vld [vmem:[%s288 + $0x20] sm:$0xff]
    %v3986 = vld [vmem:[%s288 + $0x28] sm:$0xff]
    %v3987 = vld [vmem:[%s288 + $0x30] sm:$0xff]
    %v3988 = vld [vmem:[%s288 + $0x38] sm:$0xff]
    %v3990 = vsel %vm55, %v3980, 0
    %3992 = vmatprep.subr.mxu0 0.0
    %3993 = vmatpush1.msra.mxu0 %v3981
    %3994 = vmatprep.subr.mxu0 0.0
    %3995 = vmatpush1.msra.mxu0 %v3982
    %3996 = vmatprep.subr.mxu0 0.0
    %3997 = vmatpush1.msra.mxu0 %v3983
    %3998 = vmatprep.subr.mxu0 0.0
    %3999 = vmatpush1.msra.mxu0 %v3984
    %4000 = vmatprep.subr.mxu0 0.0
    %4001 = vmatpush1.msra.mxu0 %v3985
    %4002 = vmatprep.subr.mxu0 0.0
    %4003 = vmatpush1.msra.mxu0 %v3986
    %4004 = vmatprep.subr.mxu0 0.0
    %4005 = vmatpush1.msra.mxu0 %v3987
    %4006 = vmatprep.subr.mxu0 0.0
    %4007 = vmatpush1.msra.mxu0 %v3988
    %4008 = vmatprep.subr.mxu0 0.0
    %4009 = vmatpush1.msra.mxu0 0.0
    %4010 = vmatprep.subr.mxu0 0.0
    %4011 = vmatpush1.msra.mxu0 0.0
    %4012 = vmatprep.subr.mxu0 0.0
    %4013 = vmatpush1.msra.mxu0 0.0
    %4014 = vmatprep.subr.mxu0 0.0
    %4015 = vmatpush1.msra.mxu0 0.0
    %4016 = vmatprep.subr.mxu0 0.0
    %4017 = vmatpush1.msra.mxu0 0.0
    %4018 = vmatprep.subr.mxu0 0.0
    %4019 = vmatpush1.msra.mxu0 0.0
    %4020 = vmatprep.subr.mxu0 0.0
    %4021 = vmatpush1.msra.mxu0 0.0
    %4022 = vmatprep.subr.mxu0 0.0
    %4023 = vmatpush1.msra.mxu0 0.0
    %4024 = vmatprep.subr.mxu0 0.0
    %4025 = vmatpush1.msra.mxu0 0.0
    %4026 = vmatprep.subr.mxu0 0.0
    %4027 = vmatpush1.msra.mxu0 0.0
    %4028 = vmatprep.subr.mxu0 0.0
    %4029 = vmatpush1.msra.mxu0 0.0
    %4030 = vmatprep.subr.mxu0 0.0
    %4031 = vmatpush1.msra.mxu0 0.0
    %4032 = vmatprep.subr.mxu0 0.0
    %4033 = vmatpush1.msra.mxu0 0.0
    %4034 = vmatprep.subr.mxu0 0.0
    %4035 = vmatpush1.msra.mxu0 0.0
    %4036 = vmatprep.subr.mxu0 0.0
    %4037 = vmatpush1.msra.mxu0 0.0
    %4038 = vmatprep.subr.mxu0 0.0
    %4039 = vmatpush1.msra.mxu0 0.0
    %4040 = vmatprep.subr.mxu0 0.0
    %4041 = vmatpush1.msra.mxu0 0.0
    %4042 = vmatprep.subr.mxu0 0.0
    %4043 = vmatpush1.msra.mxu0 0.0
    %4044 = vmatprep.subr.mxu0 0.0
    %4045 = vmatpush1.msra.mxu0 0.0
    %4046 = vmatprep.subr.mxu0 0.0
    %4047 = vmatpush1.msra.mxu0 0.0
    %4048 = vmatprep.subr.mxu0 0.0
    %4049 = vmatpush1.msra.mxu0 0.0
    %4050 = vmatprep.subr.mxu0 0.0
    %4051 = vmatpush1.msra.mxu0 0.0
    %4052 = vmatprep.subr.mxu0 0.0
    %4053 = vmatpush1.msra.mxu0 0.0
    %4054 = vmatprep.subr.mxu0 0.0
    %4055 = vmatpush1.msra.mxu0 0.0
    %4056 = vmatprep.mubr.f32.mxu0 0.0
    %4057 = vmatmul.mubr.f32.gmra.mrb[0].mxu0 %v3990
    %v4058 = vpop.f32.mrb[0].mxu0
    %v4059 = vadd.f32 0.0, %v4058
    %v4060 = vpop.f32.mrb[0].mxu0
    %4061 = vdwg.mxu0
    %v4062 = vadd.f32 %v3979, %v4059
    %v4063 = vadd.f32 %v4062, %v375
    %v4064 = vmax.f32 %v4063, 0.0
    %s4065 = scalar_lea.vmem [#allocation2], 88
    %4066 = vst.msk [vmem:[%s4065] sm:$0x7f] %vm379, %v4064
    %v4067 = vld [vmem:[%s3896] sm:$0x7f]
    %v4068 = vld [vmem:[%s1] sm:$0xff]
    %v4069 = vld [vmem:[%s1 + $0x8] sm:$0xff]
    %v4070 = vld [vmem:[%s1 + $0x10] sm:$0xff]
    %v4071 = vld [vmem:[%s1 + $0x18] sm:$0xff]
    %v4072 = vld [vmem:[%s1 + $0x20] sm:$0xff]
    %v4073 = vld [vmem:[%s1 + $0x28] sm:$0xff]
    %v4074 = vld [vmem:[%s1 + $0x30] sm:$0xff]
    %v4075 = vld [vmem:[%s1 + $0x38] sm:$0xff]
    %v4076 = vld [vmem:[%s3896 + $0x1] sm:$0x7f]
    %v4077 = vld [vmem:[%s46] sm:$0xff]
    %v4078 = vld [vmem:[%s46 + $0x8] sm:$0xff]
    %v4079 = vld [vmem:[%s46 + $0x10] sm:$0xff]
    %v4080 = vld [vmem:[%s46 + $0x18] sm:$0xff]
    %v4081 = vld [vmem:[%s46 + $0x20] sm:$0xff]
    %v4082 = vld [vmem:[%s46 + $0x28] sm:$0xff]
    %v4083 = vld [vmem:[%s46 + $0x30] sm:$0xff]
    %v4084 = vld [vmem:[%s46 + $0x38] sm:$0xff]
    %v4086 = vsel %vm55, %v4076, 0
    %4088 = vmatprep.subr.mxu0 0.0
    %4089 = vmatpush1.msra.mxu0 %v4077
    %4090 = vmatprep.subr.mxu0 0.0
    %4091 = vmatpush1.msra.mxu0 %v4078
    %4092 = vmatprep.subr.mxu0 0.0
    %4093 = vmatpush1.msra.mxu0 %v4079
    %4094 = vmatprep.subr.mxu0 0.0
    %4095 = vmatpush1.msra.mxu0 %v4080
    %4096 = vmatprep.subr.mxu0 0.0
    %4097 = vmatpush1.msra.mxu0 %v4081
    %4098 = vmatprep.subr.mxu0 0.0
    %4099 = vmatpush1.msra.mxu0 %v4082
    %4100 = vmatprep.subr.mxu0 0.0
    %4101 = vmatpush1.msra.mxu0 %v4083
    %4102 = vmatprep.subr.mxu0 0.0
    %4103 = vmatpush1.msra.mxu0 %v4084
    %4104 = vmatprep.subr.mxu0 0.0
    %4105 = vmatpush1.msra.mxu0 0.0
    %4106 = vmatprep.subr.mxu0 0.0
    %4107 = vmatpush1.msra.mxu0 0.0
    %4108 = vmatprep.subr.mxu0 0.0
    %4109 = vmatpush1.msra.mxu0 0.0
    %4110 = vmatprep.subr.mxu0 0.0
    %4111 = vmatpush1.msra.mxu0 0.0
    %4112 = vmatprep.subr.mxu0 0.0
    %4113 = vmatpush1.msra.mxu0 0.0
    %4114 = vmatprep.subr.mxu0 0.0
    %4115 = vmatpush1.msra.mxu0 0.0
    %4116 = vmatprep.subr.mxu0 0.0
    %4117 = vmatpush1.msra.mxu0 0.0
    %4118 = vmatprep.subr.mxu0 0.0
    %4119 = vmatpush1.msra.mxu0 0.0
    %4120 = vmatprep.subr.mxu0 0.0
    %4121 = vmatpush1.msra.mxu0 0.0
    %4122 = vmatprep.subr.mxu0 0.0
    %4123 = vmatpush1.msra.mxu0 0.0
    %4124 = vmatprep.subr.mxu0 0.0
    %4125 = vmatpush1.msra.mxu0 0.0
    %4126 = vmatprep.subr.mxu0 0.0
    %4127 = vmatpush1.msra.mxu0 0.0
    %4128 = vmatprep.subr.mxu0 0.0
    %4129 = vmatpush1.msra.mxu0 0.0
    %4130 = vmatprep.subr.mxu0 0.0
    %4131 = vmatpush1.msra.mxu0 0.0
    %4132 = vmatprep.subr.mxu0 0.0
    %4133 = vmatpush1.msra.mxu0 0.0
    %4134 = vmatprep.subr.mxu0 0.0
    %4135 = vmatpush1.msra.mxu0 0.0
    %4136 = vmatprep.subr.mxu0 0.0
    %4137 = vmatpush1.msra.mxu0 0.0
    %4138 = vmatprep.subr.mxu0 0.0
    %4139 = vmatpush1.msra.mxu0 0.0
    %4140 = vmatprep.subr.mxu0 0.0
    %4141 = vmatpush1.msra.mxu0 0.0
    %4142 = vmatprep.subr.mxu0 0.0
    %4143 = vmatpush1.msra.mxu0 0.0
    %4144 = vmatprep.subr.mxu0 0.0
    %4145 = vmatpush1.msra.mxu0 0.0
    %4146 = vmatprep.subr.mxu0 0.0
    %4147 = vmatpush1.msra.mxu0 0.0
    %4148 = vmatprep.subr.mxu0 0.0
    %4149 = vmatpush1.msra.mxu0 0.0
    %4150 = vmatprep.subr.mxu0 0.0
    %4151 = vmatpush1.msra.mxu0 0.0
    %4152 = vmatprep.mubr.f32.mxu0 0.0
    %4153 = vmatmul.mubr.f32.gmra.mrb[0].mxu0 %v4086
    %v4154 = vpop.f32.mrb[0].mxu0
    %v4155 = vadd.f32 0.0, %v4154
    %v4156 = vpop.f32.mrb[0].mxu0
    %4157 = vdwg.mxu0
    %v4159 = vsel %vm55, %v4067, 0
    %4161 = vmatprep.subr.mxu0 0.0
    %4162 = vmatpush1.msra.mxu0 %v4068
    %4163 = vmatprep.subr.mxu0 0.0
    %4164 = vmatpush1.msra.mxu0 %v4069
    %4165 = vmatprep.subr.mxu0 0.0
    %4166 = vmatpush1.msra.mxu0 %v4070
    %4167 = vmatprep.subr.mxu0 0.0
    %4168 = vmatpush1.msra.mxu0 %v4071
    %4169 = vmatprep.subr.mxu0 0.0
    %4170 = vmatpush1.msra.mxu0 %v4072
    %4171 = vmatprep.subr.mxu0 0.0
    %4172 = vmatpush1.msra.mxu0 %v4073
    %4173 = vmatprep.subr.mxu0 0.0
    %4174 = vmatpush1.msra.mxu0 %v4074
    %4175 = vmatprep.subr.mxu0 0.0
    %4176 = vmatpush1.msra.mxu0 %v4075
    %4177 = vmatprep.subr.mxu0 0.0
    %4178 = vmatpush1.msra.mxu0 0.0
    %4179 = vmatprep.subr.mxu0 0.0
    %4180 = vmatpush1.msra.mxu0 0.0
    %4181 = vmatprep.subr.mxu0 0.0
    %4182 = vmatpush1.msra.mxu0 0.0
    %4183 = vmatprep.subr.mxu0 0.0
    %4184 = vmatpush1.msra.mxu0 0.0
    %4185 = vmatprep.subr.mxu0 0.0
    %4186 = vmatpush1.msra.mxu0 0.0
    %4187 = vmatprep.subr.mxu0 0.0
    %4188 = vmatpush1.msra.mxu0 0.0
    %4189 = vmatprep.subr.mxu0 0.0
    %4190 = vmatpush1.msra.mxu0 0.0
    %4191 = vmatprep.subr.mxu0 0.0
    %4192 = vmatpush1.msra.mxu0 0.0
    %4193 = vmatprep.subr.mxu0 0.0
    %4194 = vmatpush1.msra.mxu0 0.0
    %4195 = vmatprep.subr.mxu0 0.0
    %4196 = vmatpush1.msra.mxu0 0.0
    %4197 = vmatprep.subr.mxu0 0.0
    %4198 = vmatpush1.msra.mxu0 0.0
    %4199 = vmatprep.subr.mxu0 0.0
    %4200 = vmatpush1.msra.mxu0 0.0
    %4201 = vmatprep.subr.mxu0 0.0
    %4202 = vmatpush1.msra.mxu0 0.0
    %4203 = vmatprep.subr.mxu0 0.0
    %4204 = vmatpush1.msra.mxu0 0.0
    %4205 = vmatprep.subr.mxu0 0.0
    %4206 = vmatpush1.msra.mxu0 0.0
    %4207 = vmatprep.subr.mxu0 0.0
    %4208 = vmatpush1.msra.mxu0 0.0
    %4209 = vmatprep.subr.mxu0 0.0
    %4210 = vmatpush1.msra.mxu0 0.0
    %4211 = vmatprep.subr.mxu0 0.0
    %4212 = vmatpush1.msra.mxu0 0.0
    %4213 = vmatprep.subr.mxu0 0.0
    %4214 = vmatpush1.msra.mxu0 0.0
    %4215 = vmatprep.subr.mxu0 0.0
    %4216 = vmatpush1.msra.mxu0 0.0
    %4217 = vmatprep.subr.mxu0 0.0
    %4218 = vmatpush1.msra.mxu0 0.0
    %4219 = vmatprep.subr.mxu0 0.0
    %4220 = vmatpush1.msra.mxu0 0.0
    %4221 = vmatprep.subr.mxu0 0.0
    %4222 = vmatpush1.msra.mxu0 0.0
    %4223 = vmatprep.subr.mxu0 0.0
    %4224 = vmatpush1.msra.mxu0 0.0
    %4225 = vmatprep.mubr.f32.mxu0 0.0
    %4226 = vmatmul.mubr.f32.gmra.mrb[0].mxu0 %v4159
    %v4227 = vpop.f32.mrb[0].mxu0
    %v4228 = vadd.f32 %v4155, %v4227
    %v4229 = vpop.f32.mrb[0].mxu0
    %4230 = vdwg.mxu0
    %s4231 = scalar_lea.vmem %s0, 112
    %v4232 = vld [vmem:[%s4231] sm:$0x7f]
    %v4233 = vld [vmem:[%s204] sm:$0xff]
    %v4234 = vld [vmem:[%s204 + $0x8] sm:$0xff]
    %v4235 = vld [vmem:[%s204 + $0x10] sm:$0xff]
    %v4236 = vld [vmem:[%s204 + $0x18] sm:$0xff]
    %v4237 = vld [vmem:[%s204 + $0x20] sm:$0xff]
    %v4238 = vld [vmem:[%s204 + $0x28] sm:$0xff]
    %v4239 = vld [vmem:[%s204 + $0x30] sm:$0xff]
    %v4240 = vld [vmem:[%s204 + $0x38] sm:$0xff]
    %v4242 = vsel %vm55, %v4232, 0
    %4244 = vmatprep.subr.mxu0 0.0
    %4245 = vmatpush1.msra.mxu0 %v4233
    %4246 = vmatprep.subr.mxu0 0.0
    %4247 = vmatpush1.msra.mxu0 %v4234
    %4248 = vmatprep.subr.mxu0 0.0
    %4249 = vmatpush1.msra.mxu0 %v4235
    %4250 = vmatprep.subr.mxu0 0.0
    %4251 = vmatpush1.msra.mxu0 %v4236
    %4252 = vmatprep.subr.mxu0 0.0
    %4253 = vmatpush1.msra.mxu0 %v4237
    %4254 = vmatprep.subr.mxu0 0.0
    %4255 = vmatpush1.msra.mxu0 %v4238
    %4256 = vmatprep.subr.mxu0 0.0
    %4257 = vmatpush1.msra.mxu0 %v4239
    %4258 = vmatprep.subr.mxu0 0.0
    %4259 = vmatpush1.msra.mxu0 %v4240
    %4260 = vmatprep.subr.mxu0 0.0
    %4261 = vmatpush1.msra.mxu0 0.0
    %4262 = vmatprep.subr.mxu0 0.0
    %4263 = vmatpush1.msra.mxu0 0.0
    %4264 = vmatprep.subr.mxu0 0.0
    %4265 = vmatpush1.msra.mxu0 0.0
    %4266 = vmatprep.subr.mxu0 0.0
    %4267 = vmatpush1.msra.mxu0 0.0
    %4268 = vmatprep.subr.mxu0 0.0
    %4269 = vmatpush1.msra.mxu0 0.0
    %4270 = vmatprep.subr.mxu0 0.0
    %4271 = vmatpush1.msra.mxu0 0.0
    %4272 = vmatprep.subr.mxu0 0.0
    %4273 = vmatpush1.msra.mxu0 0.0
    %4274 = vmatprep.subr.mxu0 0.0
    %4275 = vmatpush1.msra.mxu0 0.0
    %4276 = vmatprep.subr.mxu0 0.0
    %4277 = vmatpush1.msra.mxu0 0.0
    %4278 = vmatprep.subr.mxu0 0.0
    %4279 = vmatpush1.msra.mxu0 0.0
    %4280 = vmatprep.subr.mxu0 0.0
    %4281 = vmatpush1.msra.mxu0 0.0
    %4282 = vmatprep.subr.mxu0 0.0
    %4283 = vmatpush1.msra.mxu0 0.0
    %4284 = vmatprep.subr.mxu0 0.0
    %4285 = vmatpush1.msra.mxu0 0.0
    %4286 = vmatprep.subr.mxu0 0.0
    %4287 = vmatpush1.msra.mxu0 0.0
    %4288 = vmatprep.subr.mxu0 0.0
    %4289 = vmatpush1.msra.mxu0 0.0
    %4290 = vmatprep.subr.mxu0 0.0
    %4291 = vmatpush1.msra.mxu0 0.0
    %4292 = vmatprep.subr.mxu0 0.0
    %4293 = vmatpush1.msra.mxu0 0.0
    %4294 = vmatprep.subr.mxu0 0.0
    %4295 = vmatpush1.msra.mxu0 0.0
    %4296 = vmatprep.subr.mxu0 0.0
    %4297 = vmatpush1.msra.mxu0 0.0
    %4298 = vmatprep.subr.mxu0 0.0
    %4299 = vmatpush1.msra.mxu0 0.0
    %4300 = vmatprep.subr.mxu0 0.0
    %4301 = vmatpush1.msra.mxu0 0.0
    %4302 = vmatprep.subr.mxu0 0.0
    %4303 = vmatpush1.msra.mxu0 0.0
    %4304 = vmatprep.subr.mxu0 0.0
    %4305 = vmatpush1.msra.mxu0 0.0
    %4306 = vmatprep.subr.mxu0 0.0
    %4307 = vmatpush1.msra.mxu0 0.0
    %4308 = vmatprep.mubr.f32.mxu0 0.0
    %4309 = vmatmul.mubr.f32.gmra.mrb[0].mxu0 %v4242
    %v4310 = vpop.f32.mrb[0].mxu0
    %v4311 = vadd.f32 0.0, %v4310
    %v4312 = vpop.f32.mrb[0].mxu0
    %4313 = vdwg.mxu0
    %v4314 = vadd.f32 %v4228, %v4311
    %v4315 = vld [vmem:[%s4231 + $0x1] sm:$0x7f]
    %v4316 = vld [vmem:[%s288] sm:$0xff]
    %v4317 = vld [vmem:[%s288 + $0x8] sm:$0xff]
    %v4318 = vld [vmem:[%s288 + $0x10] sm:$0xff]
    %v4319 = vld [vmem:[%s288 + $0x18] sm:$0xff]
    %v4320 = vld [vmem:[%s288 + $0x20] sm:$0xff]
    %v4321 = vld [vmem:[%s288 + $0x28] sm:$0xff]
    %v4322 = vld [vmem:[%s288 + $0x30] sm:$0xff]
    %v4323 = vld [vmem:[%s288 + $0x38] sm:$0xff]
    %v4325 = vsel %vm55, %v4315, 0
    %4327 = vmatprep.subr.mxu0 0.0
    %4328 = vmatpush1.msra.mxu0 %v4316
    %4329 = vmatprep.subr.mxu0 0.0
    %4330 = vmatpush1.msra.mxu0 %v4317
    %4331 = vmatprep.subr.mxu0 0.0
    %4332 = vmatpush1.msra.mxu0 %v4318
    %4333 = vmatprep.subr.mxu0 0.0
    %4334 = vmatpush1.msra.mxu0 %v4319
    %4335 = vmatprep.subr.mxu0 0.0
    %4336 = vmatpush1.msra.mxu0 %v4320
    %4337 = vmatprep.subr.mxu0 0.0
    %4338 = vmatpush1.msra.mxu0 %v4321
    %4339 = vmatprep.subr.mxu0 0.0
    %4340 = vmatpush1.msra.mxu0 %v4322
    %4341 = vmatprep.subr.mxu0 0.0
    %4342 = vmatpush1.msra.mxu0 %v4323
    %4343 = vmatprep.subr.mxu0 0.0
    %4344 = vmatpush1.msra.mxu0 0.0
    %4345 = vmatprep.subr.mxu0 0.0
    %4346 = vmatpush1.msra.mxu0 0.0
    %4347 = vmatprep.subr.mxu0 0.0
    %4348 = vmatpush1.msra.mxu0 0.0
    %4349 = vmatprep.subr.mxu0 0.0
    %4350 = vmatpush1.msra.mxu0 0.0
    %4351 = vmatprep.subr.mxu0 0.0
    %4352 = vmatpush1.msra.mxu0 0.0
    %4353 = vmatprep.subr.mxu0 0.0
    %4354 = vmatpush1.msra.mxu0 0.0
    %4355 = vmatprep.subr.mxu0 0.0
    %4356 = vmatpush1.msra.mxu0 0.0
    %4357 = vmatprep.subr.mxu0 0.0
    %4358 = vmatpush1.msra.mxu0 0.0
    %4359 = vmatprep.subr.mxu0 0.0
    %4360 = vmatpush1.msra.mxu0 0.0
    %4361 = vmatprep.subr.mxu0 0.0
    %4362 = vmatpush1.msra.mxu0 0.0
    %4363 = vmatprep.subr.mxu0 0.0
    %4364 = vmatpush1.msra.mxu0 0.0
    %4365 = vmatprep.subr.mxu0 0.0
    %4366 = vmatpush1.msra.mxu0 0.0
    %4367 = vmatprep.subr.mxu0 0.0
    %4368 = vmatpush1.msra.mxu0 0.0
    %4369 = vmatprep.subr.mxu0 0.0
    %4370 = vmatpush1.msra.mxu0 0.0
    %4371 = vmatprep.subr.mxu0 0.0
    %4372 = vmatpush1.msra.mxu0 0.0
    %4373 = vmatprep.subr.mxu0 0.0
    %4374 = vmatpush1.msra.mxu0 0.0
    %4375 = vmatprep.subr.mxu0 0.0
    %4376 = vmatpush1.msra.mxu0 0.0
    %4377 = vmatprep.subr.mxu0 0.0
    %4378 = vmatpush1.msra.mxu0 0.0
    %4379 = vmatprep.subr.mxu0 0.0
    %4380 = vmatpush1.msra.mxu0 0.0
    %4381 = vmatprep.subr.mxu0 0.0
    %4382 = vmatpush1.msra.mxu0 0.0
    %4383 = vmatprep.subr.mxu0 0.0
    %4384 = vmatpush1.msra.mxu0 0.0
    %4385 = vmatprep.subr.mxu0 0.0
    %4386 = vmatpush1.msra.mxu0 0.0
    %4387 = vmatprep.subr.mxu0 0.0
    %4388 = vmatpush1.msra.mxu0 0.0
    %4389 = vmatprep.subr.mxu0 0.0
    %4390 = vmatpush1.msra.mxu0 0.0
    %4391 = vmatprep.mubr.f32.mxu0 0.0
    %4392 = vmatmul.mubr.f32.gmra.mrb[0].mxu0 %v4325
    %v4393 = vpop.f32.mrb[0].mxu0
    %v4394 = vadd.f32 0.0, %v4393
    %v4395 = vpop.f32.mrb[0].mxu0
    %4396 = vdwg.mxu0
    %v4397 = vadd.f32 %v4314, %v4394
    %v4398 = vadd.f32 %v4397, %v375
    %v4399 = vmax.f32 %v4398, 0.0
    %s4400 = scalar_lea.vmem [#allocation2], 96
    %4401 = vst.msk [vmem:[%s4400] sm:$0x7f] %vm379, %v4399
    %v4402 = vld [vmem:[%s4231] sm:$0x7f]
    %v4403 = vld [vmem:[%s1] sm:$0xff]
    %v4404 = vld [vmem:[%s1 + $0x8] sm:$0xff]
    %v4405 = vld [vmem:[%s1 + $0x10] sm:$0xff]
    %v4406 = vld [vmem:[%s1 + $0x18] sm:$0xff]
    %v4407 = vld [vmem:[%s1 + $0x20] sm:$0xff]
    %v4408 = vld [vmem:[%s1 + $0x28] sm:$0xff]
    %v4409 = vld [vmem:[%s1 + $0x30] sm:$0xff]
    %v4410 = vld [vmem:[%s1 + $0x38] sm:$0xff]
    %v4411 = vld [vmem:[%s4231 + $0x1] sm:$0x7f]
    %v4412 = vld [vmem:[%s46] sm:$0xff]
    %v4413 = vld [vmem:[%s46 + $0x8] sm:$0xff]
    %v4414 = vld [vmem:[%s46 + $0x10] sm:$0xff]
    %v4415 = vld [vmem:[%s46 + $0x18] sm:$0xff]
    %v4416 = vld [vmem:[%s46 + $0x20] sm:$0xff]
    %v4417 = vld [vmem:[%s46 + $0x28] sm:$0xff]
    %v4418 = vld [vmem:[%s46 + $0x30] sm:$0xff]
    %v4419 = vld [vmem:[%s46 + $0x38] sm:$0xff]
    %v4421 = vsel %vm55, %v4411, 0
    %4423 = vmatprep.subr.mxu0 0.0
    %4424 = vmatpush1.msra.mxu0 %v4412
    %4425 = vmatprep.subr.mxu0 0.0
    %4426 = vmatpush1.msra.mxu0 %v4413
    %4427 = vmatprep.subr.mxu0 0.0
    %4428 = vmatpush1.msra.mxu0 %v4414
    %4429 = vmatprep.subr.mxu0 0.0
    %4430 = vmatpush1.msra.mxu0 %v4415
    %4431 = vmatprep.subr.mxu0 0.0
    %4432 = vmatpush1.msra.mxu0 %v4416
    %4433 = vmatprep.subr.mxu0 0.0
    %4434 = vmatpush1.msra.mxu0 %v4417
    %4435 = vmatprep.subr.mxu0 0.0
    %4436 = vmatpush1.msra.mxu0 %v4418
    %4437 = vmatprep.subr.mxu0 0.0
    %4438 = vmatpush1.msra.mxu0 %v4419
    %4439 = vmatprep.subr.mxu0 0.0
    %4440 = vmatpush1.msra.mxu0 0.0
    %4441 = vmatprep.subr.mxu0 0.0
    %4442 = vmatpush1.msra.mxu0 0.0
    %4443 = vmatprep.subr.mxu0 0.0
    %4444 = vmatpush1.msra.mxu0 0.0
    %4445 = vmatprep.subr.mxu0 0.0
    %4446 = vmatpush1.msra.mxu0 0.0
    %4447 = vmatprep.subr.mxu0 0.0
    %4448 = vmatpush1.msra.mxu0 0.0
    %4449 = vmatprep.subr.mxu0 0.0
    %4450 = vmatpush1.msra.mxu0 0.0
    %4451 = vmatprep.subr.mxu0 0.0
    %4452 = vmatpush1.msra.mxu0 0.0
    %4453 = vmatprep.subr.mxu0 0.0
    %4454 = vmatpush1.msra.mxu0 0.0
    %4455 = vmatprep.subr.mxu0 0.0
    %4456 = vmatpush1.msra.mxu0 0.0
    %4457 = vmatprep.subr.mxu0 0.0
    %4458 = vmatpush1.msra.mxu0 0.0
    %4459 = vmatprep.subr.mxu0 0.0
    %4460 = vmatpush1.msra.mxu0 0.0
    %4461 = vmatprep.subr.mxu0 0.0
    %4462 = vmatpush1.msra.mxu0 0.0
    %4463 = vmatprep.subr.mxu0 0.0
    %4464 = vmatpush1.msra.mxu0 0.0
    %4465 = vmatprep.subr.mxu0 0.0
    %4466 = vmatpush1.msra.mxu0 0.0
    %4467 = vmatprep.subr.mxu0 0.0
    %4468 = vmatpush1.msra.mxu0 0.0
    %4469 = vmatprep.subr.mxu0 0.0
    %4470 = vmatpush1.msra.mxu0 0.0
    %4471 = vmatprep.subr.mxu0 0.0
    %4472 = vmatpush1.msra.mxu0 0.0
    %4473 = vmatprep.subr.mxu0 0.0
    %4474 = vmatpush1.msra.mxu0 0.0
    %4475 = vmatprep.subr.mxu0 0.0
    %4476 = vmatpush1.msra.mxu0 0.0
    %4477 = vmatprep.subr.mxu0 0.0
    %4478 = vmatpush1.msra.mxu0 0.0
    %4479 = vmatprep.subr.mxu0 0.0
    %4480 = vmatpush1.msra.mxu0 0.0
    %4481 = vmatprep.subr.mxu0 0.0
    %4482 = vmatpush1.msra.mxu0 0.0
    %4483 = vmatprep.subr.mxu0 0.0
    %4484 = vmatpush1.msra.mxu0 0.0
    %4485 = vmatprep.subr.mxu0 0.0
    %4486 = vmatpush1.msra.mxu0 0.0
    %4487 = vmatprep.mubr.f32.mxu0 0.0
    %4488 = vmatmul.mubr.f32.gmra.mrb[0].mxu0 %v4421
    %v4489 = vpop.f32.mrb[0].mxu0
    %v4490 = vadd.f32 0.0, %v4489
    %v4491 = vpop.f32.mrb[0].mxu0
    %4492 = vdwg.mxu0
    %v4494 = vsel %vm55, %v4402, 0
    %4496 = vmatprep.subr.mxu0 0.0
    %4497 = vmatpush1.msra.mxu0 %v4403
    %4498 = vmatprep.subr.mxu0 0.0
    %4499 = vmatpush1.msra.mxu0 %v4404
    %4500 = vmatprep.subr.mxu0 0.0
    %4501 = vmatpush1.msra.mxu0 %v4405
    %4502 = vmatprep.subr.mxu0 0.0
    %4503 = vmatpush1.msra.mxu0 %v4406
    %4504 = vmatprep.subr.mxu0 0.0
    %4505 = vmatpush1.msra.mxu0 %v4407
    %4506 = vmatprep.subr.mxu0 0.0
    %4507 = vmatpush1.msra.mxu0 %v4408
    %4508 = vmatprep.subr.mxu0 0.0
    %4509 = vmatpush1.msra.mxu0 %v4409
    %4510 = vmatprep.subr.mxu0 0.0
    %4511 = vmatpush1.msra.mxu0 %v4410
    %4512 = vmatprep.subr.mxu0 0.0
    %4513 = vmatpush1.msra.mxu0 0.0
    %4514 = vmatprep.subr.mxu0 0.0
    %4515 = vmatpush1.msra.mxu0 0.0
    %4516 = vmatprep.subr.mxu0 0.0
    %4517 = vmatpush1.msra.mxu0 0.0
    %4518 = vmatprep.subr.mxu0 0.0
    %4519 = vmatpush1.msra.mxu0 0.0
    %4520 = vmatprep.subr.mxu0 0.0
    %4521 = vmatpush1.msra.mxu0 0.0
    %4522 = vmatprep.subr.mxu0 0.0
    %4523 = vmatpush1.msra.mxu0 0.0
    %4524 = vmatprep.subr.mxu0 0.0
    %4525 = vmatpush1.msra.mxu0 0.0
    %4526 = vmatprep.subr.mxu0 0.0
    %4527 = vmatpush1.msra.mxu0 0.0
    %4528 = vmatprep.subr.mxu0 0.0
    %4529 = vmatpush1.msra.mxu0 0.0
    %4530 = vmatprep.subr.mxu0 0.0
    %4531 = vmatpush1.msra.mxu0 0.0
    %4532 = vmatprep.subr.mxu0 0.0
    %4533 = vmatpush1.msra.mxu0 0.0
    %4534 = vmatprep.subr.mxu0 0.0
    %4535 = vmatpush1.msra.mxu0 0.0
    %4536 = vmatprep.subr.mxu0 0.0
    %4537 = vmatpush1.msra.mxu0 0.0
    %4538 = vmatprep.subr.mxu0 0.0
    %4539 = vmatpush1.msra.mxu0 0.0
    %4540 = vmatprep.subr.mxu0 0.0
    %4541 = vmatpush1.msra.mxu0 0.0
    %4542 = vmatprep.subr.mxu0 0.0
    %4543 = vmatpush1.msra.mxu0 0.0
    %4544 = vmatprep.subr.mxu0 0.0
    %4545 = vmatpush1.msra.mxu0 0.0
    %4546 = vmatprep.subr.mxu0 0.0
    %4547 = vmatpush1.msra.mxu0 0.0
    %4548 = vmatprep.subr.mxu0 0.0
    %4549 = vmatpush1.msra.mxu0 0.0
    %4550 = vmatprep.subr.mxu0 0.0
    %4551 = vmatpush1.msra.mxu0 0.0
    %4552 = vmatprep.subr.mxu0 0.0
    %4553 = vmatpush1.msra.mxu0 0.0
    %4554 = vmatprep.subr.mxu0 0.0
    %4555 = vmatpush1.msra.mxu0 0.0
    %4556 = vmatprep.subr.mxu0 0.0
    %4557 = vmatpush1.msra.mxu0 0.0
    %4558 = vmatprep.subr.mxu0 0.0
    %4559 = vmatpush1.msra.mxu0 0.0
    %4560 = vmatprep.mubr.f32.mxu0 0.0
    %4561 = vmatmul.mubr.f32.gmra.mrb[0].mxu0 %v4494
    %v4562 = vpop.f32.mrb[0].mxu0
    %v4563 = vadd.f32 %v4490, %v4562
    %v4564 = vpop.f32.mrb[0].mxu0
    %4565 = vdwg.mxu0
    %s4566 = scalar_lea.vmem %s0, 120
    %v4567 = vld [vmem:[%s4566] sm:$0x7f]
    %v4568 = vld [vmem:[%s204] sm:$0xff]
    %v4569 = vld [vmem:[%s204 + $0x8] sm:$0xff]
    %v4570 = vld [vmem:[%s204 + $0x10] sm:$0xff]
    %v4571 = vld [vmem:[%s204 + $0x18] sm:$0xff]
    %v4572 = vld [vmem:[%s204 + $0x20] sm:$0xff]
    %v4573 = vld [vmem:[%s204 + $0x28] sm:$0xff]
    %v4574 = vld [vmem:[%s204 + $0x30] sm:$0xff]
    %v4575 = vld [vmem:[%s204 + $0x38] sm:$0xff]
    %v4577 = vsel %vm55, %v4567, 0
    %4579 = vmatprep.subr.mxu0 0.0
    %4580 = vmatpush1.msra.mxu0 %v4568
    %4581 = vmatprep.subr.mxu0 0.0
    %4582 = vmatpush1.msra.mxu0 %v4569
    %4583 = vmatprep.subr.mxu0 0.0
    %4584 = vmatpush1.msra.mxu0 %v4570
    %4585 = vmatprep.subr.mxu0 0.0
    %4586 = vmatpush1.msra.mxu0 %v4571
    %4587 = vmatprep.subr.mxu0 0.0
    %4588 = vmatpush1.msra.mxu0 %v4572
    %4589 = vmatprep.subr.mxu0 0.0
    %4590 = vmatpush1.msra.mxu0 %v4573
    %4591 = vmatprep.subr.mxu0 0.0
    %4592 = vmatpush1.msra.mxu0 %v4574
    %4593 = vmatprep.subr.mxu0 0.0
    %4594 = vmatpush1.msra.mxu0 %v4575
    %4595 = vmatprep.subr.mxu0 0.0
    %4596 = vmatpush1.msra.mxu0 0.0
    %4597 = vmatprep.subr.mxu0 0.0
    %4598 = vmatpush1.msra.mxu0 0.0
    %4599 = vmatprep.subr.mxu0 0.0
    %4600 = vmatpush1.msra.mxu0 0.0
    %4601 = vmatprep.subr.mxu0 0.0
    %4602 = vmatpush1.msra.mxu0 0.0
    %4603 = vmatprep.subr.mxu0 0.0
    %4604 = vmatpush1.msra.mxu0 0.0
    %4605 = vmatprep.subr.mxu0 0.0
    %4606 = vmatpush1.msra.mxu0 0.0
    %4607 = vmatprep.subr.mxu0 0.0
    %4608 = vmatpush1.msra.mxu0 0.0
    %4609 = vmatprep.subr.mxu0 0.0
    %4610 = vmatpush1.msra.mxu0 0.0
    %4611 = vmatprep.subr.mxu0 0.0
    %4612 = vmatpush1.msra.mxu0 0.0
    %4613 = vmatprep.subr.mxu0 0.0
    %4614 = vmatpush1.msra.mxu0 0.0
    %4615 = vmatprep.subr.mxu0 0.0
    %4616 = vmatpush1.msra.mxu0 0.0
    %4617 = vmatprep.subr.mxu0 0.0
    %4618 = vmatpush1.msra.mxu0 0.0
    %4619 = vmatprep.subr.mxu0 0.0
    %4620 = vmatpush1.msra.mxu0 0.0
    %4621 = vmatprep.subr.mxu0 0.0
    %4622 = vmatpush1.msra.mxu0 0.0
    %4623 = vmatprep.subr.mxu0 0.0
    %4624 = vmatpush1.msra.mxu0 0.0
    %4625 = vmatprep.subr.mxu0 0.0
    %4626 = vmatpush1.msra.mxu0 0.0
    %4627 = vmatprep.subr.mxu0 0.0
    %4628 = vmatpush1.msra.mxu0 0.0
    %4629 = vmatprep.subr.mxu0 0.0
    %4630 = vmatpush1.msra.mxu0 0.0
    %4631 = vmatprep.subr.mxu0 0.0
    %4632 = vmatpush1.msra.mxu0 0.0
    %4633 = vmatprep.subr.mxu0 0.0
    %4634 = vmatpush1.msra.mxu0 0.0
    %4635 = vmatprep.subr.mxu0 0.0
    %4636 = vmatpush1.msra.mxu0 0.0
    %4637 = vmatprep.subr.mxu0 0.0
    %4638 = vmatpush1.msra.mxu0 0.0
    %4639 = vmatprep.subr.mxu0 0.0
    %4640 = vmatpush1.msra.mxu0 0.0
    %4641 = vmatprep.subr.mxu0 0.0
    %4642 = vmatpush1.msra.mxu0 0.0
    %4643 = vmatprep.mubr.f32.mxu0 0.0
    %4644 = vmatmul.mubr.f32.gmra.mrb[0].mxu0 %v4577
    %v4645 = vpop.f32.mrb[0].mxu0
    %v4646 = vadd.f32 0.0, %v4645
    %v4647 = vpop.f32.mrb[0].mxu0
    %4648 = vdwg.mxu0
    %v4649 = vadd.f32 %v4563, %v4646
    %v4650 = vld [vmem:[%s4566 + $0x1] sm:$0x7f]
    %v4651 = vld [vmem:[%s288] sm:$0xff]
    %v4652 = vld [vmem:[%s288 + $0x8] sm:$0xff]
    %v4653 = vld [vmem:[%s288 + $0x10] sm:$0xff]
    %v4654 = vld [vmem:[%s288 + $0x18] sm:$0xff]
    %v4655 = vld [vmem:[%s288 + $0x20] sm:$0xff]
    %v4656 = vld [vmem:[%s288 + $0x28] sm:$0xff]
    %v4657 = vld [vmem:[%s288 + $0x30] sm:$0xff]
    %v4658 = vld [vmem:[%s288 + $0x38] sm:$0xff]
    %v4660 = vsel %vm55, %v4650, 0
    %4662 = vmatprep.subr.mxu0 0.0
    %4663 = vmatpush1.msra.mxu0 %v4651
    %4664 = vmatprep.subr.mxu0 0.0
    %4665 = vmatpush1.msra.mxu0 %v4652
    %4666 = vmatprep.subr.mxu0 0.0
    %4667 = vmatpush1.msra.mxu0 %v4653
    %4668 = vmatprep.subr.mxu0 0.0
    %4669 = vmatpush1.msra.mxu0 %v4654
    %4670 = vmatprep.subr.mxu0 0.0
    %4671 = vmatpush1.msra.mxu0 %v4655
    %4672 = vmatprep.subr.mxu0 0.0
    %4673 = vmatpush1.msra.mxu0 %v4656
    %4674 = vmatprep.subr.mxu0 0.0
    %4675 = vmatpush1.msra.mxu0 %v4657
    %4676 = vmatprep.subr.mxu0 0.0
    %4677 = vmatpush1.msra.mxu0 %v4658
    %4678 = vmatprep.subr.mxu0 0.0
    %4679 = vmatpush1.msra.mxu0 0.0
    %4680 = vmatprep.subr.mxu0 0.0
    %4681 = vmatpush1.msra.mxu0 0.0
    %4682 = vmatprep.subr.mxu0 0.0
    %4683 = vmatpush1.msra.mxu0 0.0
    %4684 = vmatprep.subr.mxu0 0.0
    %4685 = vmatpush1.msra.mxu0 0.0
    %4686 = vmatprep.subr.mxu0 0.0
    %4687 = vmatpush1.msra.mxu0 0.0
    %4688 = vmatprep.subr.mxu0 0.0
    %4689 = vmatpush1.msra.mxu0 0.0
    %4690 = vmatprep.subr.mxu0 0.0
    %4691 = vmatpush1.msra.mxu0 0.0
    %4692 = vmatprep.subr.mxu0 0.0
    %4693 = vmatpush1.msra.mxu0 0.0
    %4694 = vmatprep.subr.mxu0 0.0
    %4695 = vmatpush1.msra.mxu0 0.0
    %4696 = vmatprep.subr.mxu0 0.0
    %4697 = vmatpush1.msra.mxu0 0.0
    %4698 = vmatprep.subr.mxu0 0.0
    %4699 = vmatpush1.msra.mxu0 0.0
    %4700 = vmatprep.subr.mxu0 0.0
    %4701 = vmatpush1.msra.mxu0 0.0
    %4702 = vmatprep.subr.mxu0 0.0
    %4703 = vmatpush1.msra.mxu0 0.0
    %4704 = vmatprep.subr.mxu0 0.0
    %4705 = vmatpush1.msra.mxu0 0.0
    %4706 = vmatprep.subr.mxu0 0.0
    %4707 = vmatpush1.msra.mxu0 0.0
    %4708 = vmatprep.subr.mxu0 0.0
    %4709 = vmatpush1.msra.mxu0 0.0
    %4710 = vmatprep.subr.mxu0 0.0
    %4711 = vmatpush1.msra.mxu0 0.0
    %4712 = vmatprep.subr.mxu0 0.0
    %4713 = vmatpush1.msra.mxu0 0.0
    %4714 = vmatprep.subr.mxu0 0.0
    %4715 = vmatpush1.msra.mxu0 0.0
    %4716 = vmatprep.subr.mxu0 0.0
    %4717 = vmatpush1.msra.mxu0 0.0
    %4718 = vmatprep.subr.mxu0 0.0
    %4719 = vmatpush1.msra.mxu0 0.0
    %4720 = vmatprep.subr.mxu0 0.0
    %4721 = vmatpush1.msra.mxu0 0.0
    %4722 = vmatprep.subr.mxu0 0.0
    %4723 = vmatpush1.msra.mxu0 0.0
    %4724 = vmatprep.subr.mxu0 0.0
    %4725 = vmatpush1.msra.mxu0 0.0
    %4726 = vmatprep.mubr.f32.mxu0 0.0
    %4727 = vmatmul.mubr.f32.gmra.mrb[0].mxu0 %v4660
    %v4728 = vpop.f32.mrb[0].mxu0
    %v4729 = vadd.f32 0.0, %v4728
    %v4730 = vpop.f32.mrb[0].mxu0
    %4731 = vdwg.mxu0
    %v4732 = vadd.f32 %v4649, %v4729
    %v4733 = vadd.f32 %v4732, %v375
    %v4734 = vmax.f32 %v4733, 0.0
    %s4735 = scalar_lea.vmem [#allocation2], 104
    %4736 = vst.msk [vmem:[%s4735] sm:$0x7f] %vm379, %v4734
    %v4737 = vld [vmem:[#allocation2] sm:$0x1]
    %vm4738 = vcmask 122880
    %4739 = vst.msk [vmem:[#allocation3] sm:$0x1] %vm4738, %v4737
    %v4740 = vld [vmem:[#allocation2 + $0x1] sm:$0x1]
    %4742 = vrot.lane.b32.xlu0 %v4740, 16
    %v4743 = vpop.permute.xlu0 %4742
    %vm4745 = vcmask 254080
    %4746 = vst.msk [vmem:[#allocation3] sm:$0x1] %vm4745, %v4743
    %v4747 = vld [vmem:[#allocation2 + $0x2] sm:$0x1]
    %4749 = vrot.lane.b32.xlu0 %v4747, 32
    %v4750 = vpop.permute.xlu0 %4749
    %vm4752 = vcmask 385280
    %4753 = vst.msk [vmem:[#allocation3] sm:$0x1] %vm4752, %v4750
    %v4754 = vld [vmem:[#allocation2 + $0x3] sm:$0x1]
    %4756 = vrot.lane.b32.xlu0 %v4754, 48
    %v4757 = vpop.permute.xlu0 %4756
    %vm4759 = vcmask 516480
    %4760 = vst.msk [vmem:[#allocation3] sm:$0x1] %vm4759, %v4757
    %v4761 = vld [vmem:[%s714] sm:$0x1]
    %4763 = vrot.lane.b32.xlu0 %v4761, 64
    %v4764 = vpop.permute.xlu0 %4763
    %vm4766 = vcmask 647680
    %4767 = vst.msk [vmem:[#allocation3] sm:$0x1] %vm4766, %v4764
    %v4768 = vld [vmem:[%s714 + $0x1] sm:$0x1]
    %4770 = vrot.lane.b32.xlu0 %v4768, 80
    %v4771 = vpop.permute.xlu0 %4770
    %vm4773 = vcmask 778880
    %4774 = vst.msk [vmem:[#allocation3] sm:$0x1] %vm4773, %v4771
    %v4775 = vld [vmem:[%s714 + $0x2] sm:$0x1]
    %4777 = vrot.lane.b32.xlu0 %v4775, 96
    %v4778 = vpop.permute.xlu0 %4777
    %vm4780 = vcmask 910080
    %4781 = vst.msk [vmem:[#allocation3] sm:$0x1] %vm4780, %v4778
    %v4782 = vld [vmem:[%s714 + $0x3] sm:$0x1]
    %4784 = vrot.lane.b32.xlu0 %v4782, 112
    %v4785 = vpop.permute.xlu0 %4784
    %vm4787 = vcmask 1041280
    %4788 = vst.msk [vmem:[#allocation3] sm:$0x1] %vm4787, %v4785
    %v4789 = vld [vmem:[%s1049] sm:$0x1]
    %4790 = vst.msk [vmem:[#allocation3 + $0x8] sm:$0x1] %vm4738, %v4789
    %v4791 = vld [vmem:[%s1049 + $0x1] sm:$0x1]
    %4793 = vrot.lane.b32.xlu0 %v4791, 16
    %v4794 = vpop.permute.xlu0 %4793
    %4796 = vst.msk [vmem:[#allocation3 + $0x8] sm:$0x1] %vm4745, %v4794
    %v4797 = vld [vmem:[%s1049 + $0x2] sm:$0x1]
    %4799 = vrot.lane.b32.xlu0 %v4797, 32
    %v4800 = vpop.permute.xlu0 %4799
    %4802 = vst.msk [vmem:[#allocation3 + $0x8] sm:$0x1] %vm4752, %v4800
    %v4803 = vld [vmem:[%s1049 + $0x3] sm:$0x1]
    %4805 = vrot.lane.b32.xlu0 %v4803, 48
    %v4806 = vpop.permute.xlu0 %4805
    %4808 = vst.msk [vmem:[#allocation3 + $0x8] sm:$0x1] %vm4759, %v4806
    %v4809 = vld [vmem:[%s1384] sm:$0x1]
    %4811 = vrot.lane.b32.xlu0 %v4809, 64
    %v4812 = vpop.permute.xlu0 %4811
    %4814 = vst.msk [vmem:[#allocation3 + $0x8] sm:$0x1] %vm4766, %v4812
    %v4815 = vld [vmem:[%s1384 + $0x1] sm:$0x1]
    %4817 = vrot.lane.b32.xlu0 %v4815, 80
    %v4818 = vpop.permute.xlu0 %4817
    %4820 = vst.msk [vmem:[#allocation3 + $0x8] sm:$0x1] %vm4773, %v4818
    %v4821 = vld [vmem:[%s1384 + $0x2] sm:$0x1]
    %4823 = vrot.lane.b32.xlu0 %v4821, 96
    %v4824 = vpop.permute.xlu0 %4823
    %4826 = vst.msk [vmem:[#allocation3 + $0x8] sm:$0x1] %vm4780, %v4824
    %v4827 = vld [vmem:[%s1384 + $0x3] sm:$0x1]
    %4829 = vrot.lane.b32.xlu0 %v4827, 112
    %v4830 = vpop.permute.xlu0 %4829
    %4832 = vst.msk [vmem:[#allocation3 + $0x8] sm:$0x1] %vm4787, %v4830
    %v4833 = vld [vmem:[%s2725] sm:$0x1]
    %4834 = vst.msk [vmem:[#allocation3 + $0x1] sm:$0x1] %vm4738, %v4833
    %v4835 = vld [vmem:[%s2725 + $0x1] sm:$0x1]
    %4837 = vrot.lane.b32.xlu0 %v4835, 16
    %v4838 = vpop.permute.xlu0 %4837
    %4840 = vst.msk [vmem:[#allocation3 + $0x1] sm:$0x1] %vm4745, %v4838
    %v4841 = vld [vmem:[%s2725 + $0x2] sm:$0x1]
    %4843 = vrot.lane.b32.xlu0 %v4841, 32
    %v4844 = vpop.permute.xlu0 %4843
    %4846 = vst.msk [vmem:[#allocation3 + $0x1] sm:$0x1] %vm4752, %v4844
    %v4847 = vld [vmem:[%s2725 + $0x3] sm:$0x1]
    %4849 = vrot.lane.b32.xlu0 %v4847, 48
    %v4850 = vpop.permute.xlu0 %4849
    %4852 = vst.msk [vmem:[#allocation3 + $0x1] sm:$0x1] %vm4759, %v4850
    %v4853 = vld [vmem:[%s3060] sm:$0x1]
    %4855 = vrot.lane.b32.xlu0 %v4853, 64
    %v4856 = vpop.permute.xlu0 %4855
    %4858 = vst.msk [vmem:[#allocation3 + $0x1] sm:$0x1] %vm4766, %v4856
    %v4859 = vld [vmem:[%s3060 + $0x1] sm:$0x1]
    %4861 = vrot.lane.b32.xlu0 %v4859, 80
    %v4862 = vpop.permute.xlu0 %4861
    %4864 = vst.msk [vmem:[#allocation3 + $0x1] sm:$0x1] %vm4773, %v4862
    %v4865 = vld [vmem:[%s3060 + $0x2] sm:$0x1]
    %4867 = vrot.lane.b32.xlu0 %v4865, 96
    %v4868 = vpop.permute.xlu0 %4867
    %4870 = vst.msk [vmem:[#allocation3 + $0x1] sm:$0x1] %vm4780, %v4868
    %v4871 = vld [vmem:[%s3060 + $0x3] sm:$0x1]
    %4873 = vrot.lane.b32.xlu0 %v4871, 112
    %v4874 = vpop.permute.xlu0 %4873
    %4876 = vst.msk [vmem:[#allocation3 + $0x1] sm:$0x1] %vm4787, %v4874
    %v4877 = vld [vmem:[%s3395] sm:$0x1]
    %4878 = vst.msk [vmem:[#allocation3 + $0x9] sm:$0x1] %vm4738, %v4877
    %v4879 = vld [vmem:[%s3395 + $0x1] sm:$0x1]
    %4881 = vrot.lane.b32.xlu0 %v4879, 16
    %v4882 = vpop.permute.xlu0 %4881
    %4884 = vst.msk [vmem:[#allocation3 + $0x9] sm:$0x1] %vm4745, %v4882
    %v4885 = vld [vmem:[%s3395 + $0x2] sm:$0x1]
    %4887 = vrot.lane.b32.xlu0 %v4885, 32
    %v4888 = vpop.permute.xlu0 %4887
    %4890 = vst.msk [vmem:[#allocation3 + $0x9] sm:$0x1] %vm4752, %v4888
    %v4891 = vld [vmem:[%s3395 + $0x3] sm:$0x1]
    %4893 = vrot.lane.b32.xlu0 %v4891, 48
    %v4894 = vpop.permute.xlu0 %4893
    %4896 = vst.msk [vmem:[#allocation3 + $0x9] sm:$0x1] %vm4759, %v4894
    %v4897 = vld [vmem:[%s3730] sm:$0x1]
    %4899 = vrot.lane.b32.xlu0 %v4897, 64
    %v4900 = vpop.permute.xlu0 %4899
    %4902 = vst.msk [vmem:[#allocation3 + $0x9] sm:$0x1] %vm4766, %v4900
    %v4903 = vld [vmem:[%s3730 + $0x1] sm:$0x1]
    %4905 = vrot.lane.b32.xlu0 %v4903, 80
    %v4906 = vpop.permute.xlu0 %4905
    %4908 = vst.msk [vmem:[#allocation3 + $0x9] sm:$0x1] %vm4773, %v4906
    %v4909 = vld [vmem:[%s3730 + $0x2] sm:$0x1]
    %4911 = vrot.lane.b32.xlu0 %v4909, 96
    %v4912 = vpop.permute.xlu0 %4911
    %4914 = vst.msk [vmem:[#allocation3 + $0x9] sm:$0x1] %vm4780, %v4912
    %v4915 = vld [vmem:[%s3730 + $0x3] sm:$0x1]
    %4917 = vrot.lane.b32.xlu0 %v4915, 112
    %v4918 = vpop.permute.xlu0 %4917
    %4920 = vst.msk [vmem:[#allocation3 + $0x9] sm:$0x1] %vm4787, %v4918
    %v4921 = vld [vmem:[#allocation2 + $0x2] sm:$0x1]
    %4922 = vst.msk [vmem:[#allocation3 + $0x2] sm:$0x1] %vm4738, %v4921
    %v4923 = vld [vmem:[#allocation2 + $0x3] sm:$0x1]
    %4925 = vrot.lane.b32.xlu0 %v4923, 16
    %v4926 = vpop.permute.xlu0 %4925
    %4928 = vst.msk [vmem:[#allocation3 + $0x2] sm:$0x1] %vm4745, %v4926
    %v4929 = vld [vmem:[#allocation2 + $0x4] sm:$0x1]
    %4931 = vrot.lane.b32.xlu0 %v4929, 32
    %v4932 = vpop.permute.xlu0 %4931
    %4934 = vst.msk [vmem:[#allocation3 + $0x2] sm:$0x1] %vm4752, %v4932
    %v4935 = vld [vmem:[#allocation2 + $0x5] sm:$0x1]
    %4937 = vrot.lane.b32.xlu0 %v4935, 48
    %v4938 = vpop.permute.xlu0 %4937
    %4940 = vst.msk [vmem:[#allocation3 + $0x2] sm:$0x1] %vm4759, %v4938
    %v4941 = vld [vmem:[%s714 + $0x2] sm:$0x1]
    %4943 = vrot.lane.b32.xlu0 %v4941, 64
    %v4944 = vpop.permute.xlu0 %4943
    %4946 = vst.msk [vmem:[#allocation3 + $0x2] sm:$0x1] %vm4766, %v4944
    %v4947 = vld [vmem:[%s714 + $0x3] sm:$0x1]
    %4949 = vrot.lane.b32.xlu0 %v4947, 80
    %v4950 = vpop.permute.xlu0 %4949
    %4952 = vst.msk [vmem:[#allocation3 + $0x2] sm:$0x1] %vm4773, %v4950
    %v4953 = vld [vmem:[%s714 + $0x4] sm:$0x1]
    %4955 = vrot.lane.b32.xlu0 %v4953, 96
    %v4956 = vpop.permute.xlu0 %4955
    %4958 = vst.msk [vmem:[#allocation3 + $0x2] sm:$0x1] %vm4780, %v4956
    %v4959 = vld [vmem:[%s714 + $0x5] sm:$0x1]
    %4961 = vrot.lane.b32.xlu0 %v4959, 112
    %v4962 = vpop.permute.xlu0 %4961
    %4964 = vst.msk [vmem:[#allocation3 + $0x2] sm:$0x1] %vm4787, %v4962
    %v4965 = vld [vmem:[%s1049 + $0x2] sm:$0x1]
    %4966 = vst.msk [vmem:[#allocation3 + $0xa] sm:$0x1] %vm4738, %v4965
    %v4967 = vld [vmem:[%s1049 + $0x3] sm:$0x1]
    %4969 = vrot.lane.b32.xlu0 %v4967, 16
    %v4970 = vpop.permute.xlu0 %4969
    %4972 = vst.msk [vmem:[#allocation3 + $0xa] sm:$0x1] %vm4745, %v4970
    %v4973 = vld [vmem:[%s1049 + $0x4] sm:$0x1]
    %4975 = vrot.lane.b32.xlu0 %v4973, 32
    %v4976 = vpop.permute.xlu0 %4975
    %4978 = vst.msk [vmem:[#allocation3 + $0xa] sm:$0x1] %vm4752, %v4976
    %v4979 = vld [vmem:[%s1049 + $0x5] sm:$0x1]
    %4981 = vrot.lane.b32.xlu0 %v4979, 48
    %v4982 = vpop.permute.xlu0 %4981
    %4984 = vst.msk [vmem:[#allocation3 + $0xa] sm:$0x1] %vm4759, %v4982
    %v4985 = vld [vmem:[%s1384 + $0x2] sm:$0x1]
    %4987 = vrot.lane.b32.xlu0 %v4985, 64
    %v4988 = vpop.permute.xlu0 %4987
    %4990 = vst.msk [vmem:[#allocation3 + $0xa] sm:$0x1] %vm4766, %v4988
    %v4991 = vld [vmem:[%s1384 + $0x3] sm:$0x1]
    %4993 = vrot.lane.b32.xlu0 %v4991, 80
    %v4994 = vpop.permute.xlu0 %4993
    %4996 = vst.msk [vmem:[#allocation3 + $0xa] sm:$0x1] %vm4773, %v4994
    %v4997 = vld [vmem:[%s1384 + $0x4] sm:$0x1]
    %4999 = vrot.lane.b32.xlu0 %v4997, 96
    %v5000 = vpop.permute.xlu0 %4999
    %5002 = vst.msk [vmem:[#allocation3 + $0xa] sm:$0x1] %vm4780, %v5000
    %v5003 = vld [vmem:[%s1384 + $0x5] sm:$0x1]
    %5005 = vrot.lane.b32.xlu0 %v5003, 112
    %v5006 = vpop.permute.xlu0 %5005
    %5008 = vst.msk [vmem:[#allocation3 + $0xa] sm:$0x1] %vm4787, %v5006
    %v5009 = vld [vmem:[%s2725 + $0x2] sm:$0x1]
    %5010 = vst.msk [vmem:[#allocation3 + $0x3] sm:$0x1] %vm4738, %v5009
    %v5011 = vld [vmem:[%s2725 + $0x3] sm:$0x1]
    %5013 = vrot.lane.b32.xlu0 %v5011, 16
    %v5014 = vpop.permute.xlu0 %5013
    %5016 = vst.msk [vmem:[#allocation3 + $0x3] sm:$0x1] %vm4745, %v5014
    %v5017 = vld [vmem:[%s2725 + $0x4] sm:$0x1]
    %5019 = vrot.lane.b32.xlu0 %v5017, 32
    %v5020 = vpop.permute.xlu0 %5019
    %5022 = vst.msk [vmem:[#allocation3 + $0x3] sm:$0x1] %vm4752, %v5020
    %v5023 = vld [vmem:[%s2725 + $0x5] sm:$0x1]
    %5025 = vrot.lane.b32.xlu0 %v5023, 48
    %v5026 = vpop.permute.xlu0 %5025
    %5028 = vst.msk [vmem:[#allocation3 + $0x3] sm:$0x1] %vm4759, %v5026
    %v5029 = vld [vmem:[%s3060 + $0x2] sm:$0x1]
    %5031 = vrot.lane.b32.xlu0 %v5029, 64
    %v5032 = vpop.permute.xlu0 %5031
    %5034 = vst.msk [vmem:[#allocation3 + $0x3] sm:$0x1] %vm4766, %v5032
    %v5035 = vld [vmem:[%s3060 + $0x3] sm:$0x1]
    %5037 = vrot.lane.b32.xlu0 %v5035, 80
    %v5038 = vpop.permute.xlu0 %5037
    %5040 = vst.msk [vmem:[#allocation3 + $0x3] sm:$0x1] %vm4773, %v5038
    %v5041 = vld [vmem:[%s3060 + $0x4] sm:$0x1]
    %5043 = vrot.lane.b32.xlu0 %v5041, 96
    %v5044 = vpop.permute.xlu0 %5043
    %5046 = vst.msk [vmem:[#allocation3 + $0x3] sm:$0x1] %vm4780, %v5044
    %v5047 = vld [vmem:[%s3060 + $0x5] sm:$0x1]
    %5049 = vrot.lane.b32.xlu0 %v5047, 112
    %v5050 = vpop.permute.xlu0 %5049
    %5052 = vst.msk [vmem:[#allocation3 + $0x3] sm:$0x1] %vm4787, %v5050
    %v5053 = vld [vmem:[%s3395 + $0x2] sm:$0x1]
    %5054 = vst.msk [vmem:[#allocation3 + $0xb] sm:$0x1] %vm4738, %v5053
    %v5055 = vld [vmem:[%s3395 + $0x3] sm:$0x1]
    %5057 = vrot.lane.b32.xlu0 %v5055, 16
    %v5058 = vpop.permute.xlu0 %5057
    %5060 = vst.msk [vmem:[#allocation3 + $0xb] sm:$0x1] %vm4745, %v5058
    %v5061 = vld [vmem:[%s3395 + $0x4] sm:$0x1]
    %5063 = vrot.lane.b32.xlu0 %v5061, 32
    %v5064 = vpop.permute.xlu0 %5063
    %5066 = vst.msk [vmem:[#allocation3 + $0xb] sm:$0x1] %vm4752, %v5064
    %v5067 = vld [vmem:[%s3395 + $0x5] sm:$0x1]
    %5069 = vrot.lane.b32.xlu0 %v5067, 48
    %v5070 = vpop.permute.xlu0 %5069
    %5072 = vst.msk [vmem:[#allocation3 + $0xb] sm:$0x1] %vm4759, %v5070
    %v5073 = vld [vmem:[%s3730 + $0x2] sm:$0x1]
    %5075 = vrot.lane.b32.xlu0 %v5073, 64
    %v5076 = vpop.permute.xlu0 %5075
    %5078 = vst.msk [vmem:[#allocation3 + $0xb] sm:$0x1] %vm4766, %v5076
    %v5079 = vld [vmem:[%s3730 + $0x3] sm:$0x1]
    %5081 = vrot.lane.b32.xlu0 %v5079, 80
    %v5082 = vpop.permute.xlu0 %5081
    %5084 = vst.msk [vmem:[#allocation3 + $0xb] sm:$0x1] %vm4773, %v5082
    %v5085 = vld [vmem:[%s3730 + $0x4] sm:$0x1]
    %5087 = vrot.lane.b32.xlu0 %v5085, 96
    %v5088 = vpop.permute.xlu0 %5087
    %5090 = vst.msk [vmem:[#allocation3 + $0xb] sm:$0x1] %vm4780, %v5088
    %v5091 = vld [vmem:[%s3730 + $0x5] sm:$0x1]
    %5093 = vrot.lane.b32.xlu0 %v5091, 112
    %v5094 = vpop.permute.xlu0 %5093
    %5096 = vst.msk [vmem:[#allocation3 + $0xb] sm:$0x1] %vm4787, %v5094
    %v5097 = vld [vmem:[%s1049] sm:$0x1]
    %5098 = vst.msk [vmem:[#allocation3 + $0x4] sm:$0x1] %vm4738, %v5097
    %v5099 = vld [vmem:[%s1049 + $0x1] sm:$0x1]
    %5101 = vrot.lane.b32.xlu0 %v5099, 16
    %v5102 = vpop.permute.xlu0 %5101
    %5104 = vst.msk [vmem:[#allocation3 + $0x4] sm:$0x1] %vm4745, %v5102
    %v5105 = vld [vmem:[%s1049 + $0x2] sm:$0x1]
    %5107 = vrot.lane.b32.xlu0 %v5105, 32
    %v5108 = vpop.permute.xlu0 %5107
    %5110 = vst.msk [vmem:[#allocation3 + $0x4] sm:$0x1] %vm4752, %v5108
    %v5111 = vld [vmem:[%s1049 + $0x3] sm:$0x1]
    %5113 = vrot.lane.b32.xlu0 %v5111, 48
    %v5114 = vpop.permute.xlu0 %5113
    %5116 = vst.msk [vmem:[#allocation3 + $0x4] sm:$0x1] %vm4759, %v5114
    %v5117 = vld [vmem:[%s1384] sm:$0x1]
    %5119 = vrot.lane.b32.xlu0 %v5117, 64
    %v5120 = vpop.permute.xlu0 %5119
    %5122 = vst.msk [vmem:[#allocation3 + $0x4] sm:$0x1] %vm4766, %v5120
    %v5123 = vld [vmem:[%s1384 + $0x1] sm:$0x1]
    %5125 = vrot.lane.b32.xlu0 %v5123, 80
    %v5126 = vpop.permute.xlu0 %5125
    %5128 = vst.msk [vmem:[#allocation3 + $0x4] sm:$0x1] %vm4773, %v5126
    %v5129 = vld [vmem:[%s1384 + $0x2] sm:$0x1]
    %5131 = vrot.lane.b32.xlu0 %v5129, 96
    %v5132 = vpop.permute.xlu0 %5131
    %5134 = vst.msk [vmem:[#allocation3 + $0x4] sm:$0x1] %vm4780, %v5132
    %v5135 = vld [vmem:[%s1384 + $0x3] sm:$0x1]
    %5137 = vrot.lane.b32.xlu0 %v5135, 112
    %v5138 = vpop.permute.xlu0 %5137
    %5140 = vst.msk [vmem:[#allocation3 + $0x4] sm:$0x1] %vm4787, %v5138
    %v5141 = vld [vmem:[%s1719] sm:$0x1]
    %5142 = vst.msk [vmem:[#allocation3 + $0xc] sm:$0x1] %vm4738, %v5141
    %v5143 = vld [vmem:[%s1719 + $0x1] sm:$0x1]
    %5145 = vrot.lane.b32.xlu0 %v5143, 16
    %v5146 = vpop.permute.xlu0 %5145
    %5148 = vst.msk [vmem:[#allocation3 + $0xc] sm:$0x1] %vm4745, %v5146
    %v5149 = vld [vmem:[%s1719 + $0x2] sm:$0x1]
    %5151 = vrot.lane.b32.xlu0 %v5149, 32
    %v5152 = vpop.permute.xlu0 %5151
    %5154 = vst.msk [vmem:[#allocation3 + $0xc] sm:$0x1] %vm4752, %v5152
    %v5155 = vld [vmem:[%s1719 + $0x3] sm:$0x1]
    %5157 = vrot.lane.b32.xlu0 %v5155, 48
    %v5158 = vpop.permute.xlu0 %5157
    %5160 = vst.msk [vmem:[#allocation3 + $0xc] sm:$0x1] %vm4759, %v5158
    %v5161 = vld [vmem:[%s2054] sm:$0x1]
    %5163 = vrot.lane.b32.xlu0 %v5161, 64
    %v5164 = vpop.permute.xlu0 %5163
    %5166 = vst.msk [vmem:[#allocation3 + $0xc] sm:$0x1] %vm4766, %v5164
    %v5167 = vld [vmem:[%s2054 + $0x1] sm:$0x1]
    %5169 = vrot.lane.b32.xlu0 %v5167, 80
    %v5170 = vpop.permute.xlu0 %5169
    %5172 = vst.msk [vmem:[#allocation3 + $0xc] sm:$0x1] %vm4773, %v5170
    %v5173 = vld [vmem:[%s2054 + $0x2] sm:$0x1]
    %5175 = vrot.lane.b32.xlu0 %v5173, 96
    %v5176 = vpop.permute.xlu0 %5175
    %5178 = vst.msk [vmem:[#allocation3 + $0xc] sm:$0x1] %vm4780, %v5176
    %v5179 = vld [vmem:[%s2054 + $0x3] sm:$0x1]
    %5181 = vrot.lane.b32.xlu0 %v5179, 112
    %v5182 = vpop.permute.xlu0 %5181
    %5184 = vst.msk [vmem:[#allocation3 + $0xc] sm:$0x1] %vm4787, %v5182
    %v5185 = vld [vmem:[%s3395] sm:$0x1]
    %5186 = vst.msk [vmem:[#allocation3 + $0x5] sm:$0x1] %vm4738, %v5185
    %v5187 = vld [vmem:[%s3395 + $0x1] sm:$0x1]
    %5189 = vrot.lane.b32.xlu0 %v5187, 16
    %v5190 = vpop.permute.xlu0 %5189
    %5192 = vst.msk [vmem:[#allocation3 + $0x5] sm:$0x1] %vm4745, %v5190
    %v5193 = vld [vmem:[%s3395 + $0x2] sm:$0x1]
    %5195 = vrot.lane.b32.xlu0 %v5193, 32
    %v5196 = vpop.permute.xlu0 %5195
    %5198 = vst.msk [vmem:[#allocation3 + $0x5] sm:$0x1] %vm4752, %v5196
    %v5199 = vld [vmem:[%s3395 + $0x3] sm:$0x1]
    %5201 = vrot.lane.b32.xlu0 %v5199, 48
    %v5202 = vpop.permute.xlu0 %5201
    %5204 = vst.msk [vmem:[#allocation3 + $0x5] sm:$0x1] %vm4759, %v5202
    %v5205 = vld [vmem:[%s3730] sm:$0x1]
    %5207 = vrot.lane.b32.xlu0 %v5205, 64
    %v5208 = vpop.permute.xlu0 %5207
    %5210 = vst.msk [vmem:[#allocation3 + $0x5] sm:$0x1] %vm4766, %v5208
    %v5211 = vld [vmem:[%s3730 + $0x1] sm:$0x1]
    %5213 = vrot.lane.b32.xlu0 %v5211, 80
    %v5214 = vpop.permute.xlu0 %5213
    %5216 = vst.msk [vmem:[#allocation3 + $0x5] sm:$0x1] %vm4773, %v5214
    %v5217 = vld [vmem:[%s3730 + $0x2] sm:$0x1]
    %5219 = vrot.lane.b32.xlu0 %v5217, 96
    %v5220 = vpop.permute.xlu0 %5219
    %5222 = vst.msk [vmem:[#allocation3 + $0x5] sm:$0x1] %vm4780, %v5220
    %v5223 = vld [vmem:[%s3730 + $0x3] sm:$0x1]
    %5225 = vrot.lane.b32.xlu0 %v5223, 112
    %v5226 = vpop.permute.xlu0 %5225
    %5228 = vst.msk [vmem:[#allocation3 + $0x5] sm:$0x1] %vm4787, %v5226
    %v5229 = vld [vmem:[%s4065] sm:$0x1]
    %5230 = vst.msk [vmem:[#allocation3 + $0xd] sm:$0x1] %vm4738, %v5229
    %v5231 = vld [vmem:[%s4065 + $0x1] sm:$0x1]
    %5233 = vrot.lane.b32.xlu0 %v5231, 16
    %v5234 = vpop.permute.xlu0 %5233
    %5236 = vst.msk [vmem:[#allocation3 + $0xd] sm:$0x1] %vm4745, %v5234
    %v5237 = vld [vmem:[%s4065 + $0x2] sm:$0x1]
    %5239 = vrot.lane.b32.xlu0 %v5237, 32
    %v5240 = vpop.permute.xlu0 %5239
    %5242 = vst.msk [vmem:[#allocation3 + $0xd] sm:$0x1] %vm4752, %v5240
    %v5243 = vld [vmem:[%s4065 + $0x3] sm:$0x1]
    %5245 = vrot.lane.b32.xlu0 %v5243, 48
    %v5246 = vpop.permute.xlu0 %5245
    %5248 = vst.msk [vmem:[#allocation3 + $0xd] sm:$0x1] %vm4759, %v5246
    %v5249 = vld [vmem:[%s4400] sm:$0x1]
    %5251 = vrot.lane.b32.xlu0 %v5249, 64
    %v5252 = vpop.permute.xlu0 %5251
    %5254 = vst.msk [vmem:[#allocation3 + $0xd] sm:$0x1] %vm4766, %v5252
    %v5255 = vld [vmem:[%s4400 + $0x1] sm:$0x1]
    %5257 = vrot.lane.b32.xlu0 %v5255, 80
    %v5258 = vpop.permute.xlu0 %5257
    %5260 = vst.msk [vmem:[#allocation3 + $0xd] sm:$0x1] %vm4773, %v5258
    %v5261 = vld [vmem:[%s4400 + $0x2] sm:$0x1]
    %5263 = vrot.lane.b32.xlu0 %v5261, 96
    %v5264 = vpop.permute.xlu0 %5263
    %5266 = vst.msk [vmem:[#allocation3 + $0xd] sm:$0x1] %vm4780, %v5264
    %v5267 = vld [vmem:[%s4400 + $0x3] sm:$0x1]
    %5269 = vrot.lane.b32.xlu0 %v5267, 112
    %v5270 = vpop.permute.xlu0 %5269
    %5272 = vst.msk [vmem:[#allocation3 + $0xd] sm:$0x1] %vm4787, %v5270
    %v5273 = vld [vmem:[%s1049 + $0x2] sm:$0x1]
    %5274 = vst.msk [vmem:[#allocation3 + $0x6] sm:$0x1] %vm4738, %v5273
    %v5275 = vld [vmem:[%s1049 + $0x3] sm:$0x1]
    %5277 = vrot.lane.b32.xlu0 %v5275, 16
    %v5278 = vpop.permute.xlu0 %5277
    %5280 = vst.msk [vmem:[#allocation3 + $0x6] sm:$0x1] %vm4745, %v5278
    %v5281 = vld [vmem:[%s1049 + $0x4] sm:$0x1]
    %5283 = vrot.lane.b32.xlu0 %v5281, 32
    %v5284 = vpop.permute.xlu0 %5283
    %5286 = vst.msk [vmem:[#allocation3 + $0x6] sm:$0x1] %vm4752, %v5284
    %v5287 = vld [vmem:[%s1049 + $0x5] sm:$0x1]
    %5289 = vrot.lane.b32.xlu0 %v5287, 48
    %v5290 = vpop.permute.xlu0 %5289
    %5292 = vst.msk [vmem:[#allocation3 + $0x6] sm:$0x1] %vm4759, %v5290
    %v5293 = vld [vmem:[%s1384 + $0x2] sm:$0x1]
    %5295 = vrot.lane.b32.xlu0 %v5293, 64
    %v5296 = vpop.permute.xlu0 %5295
    %5298 = vst.msk [vmem:[#allocation3 + $0x6] sm:$0x1] %vm4766, %v5296
    %v5299 = vld [vmem:[%s1384 + $0x3] sm:$0x1]
    %5301 = vrot.lane.b32.xlu0 %v5299, 80
    %v5302 = vpop.permute.xlu0 %5301
    %5304 = vst.msk [vmem:[#allocation3 + $0x6] sm:$0x1] %vm4773, %v5302
    %v5305 = vld [vmem:[%s1384 + $0x4] sm:$0x1]
    %5307 = vrot.lane.b32.xlu0 %v5305, 96
    %v5308 = vpop.permute.xlu0 %5307
    %5310 = vst.msk [vmem:[#allocation3 + $0x6] sm:$0x1] %vm4780, %v5308
    %v5311 = vld [vmem:[%s1384 + $0x5] sm:$0x1]
    %5313 = vrot.lane.b32.xlu0 %v5311, 112
    %v5314 = vpop.permute.xlu0 %5313
    %5316 = vst.msk [vmem:[#allocation3 + $0x6] sm:$0x1] %vm4787, %v5314
    %v5317 = vld [vmem:[%s1719 + $0x2] sm:$0x1]
    %5318 = vst.msk [vmem:[#allocation3 + $0xe] sm:$0x1] %vm4738, %v5317
    %v5319 = vld [vmem:[%s1719 + $0x3] sm:$0x1]
    %5321 = vrot.lane.b32.xlu0 %v5319, 16
    %v5322 = vpop.permute.xlu0 %5321
    %5324 = vst.msk [vmem:[#allocation3 + $0xe] sm:$0x1] %vm4745, %v5322
    %v5325 = vld [vmem:[%s1719 + $0x4] sm:$0x1]
    %5327 = vrot.lane.b32.xlu0 %v5325, 32
    %v5328 = vpop.permute.xlu0 %5327
    %5330 = vst.msk [vmem:[#allocation3 + $0xe] sm:$0x1] %vm4752, %v5328
    %v5331 = vld [vmem:[%s1719 + $0x5] sm:$0x1]
    %5333 = vrot.lane.b32.xlu0 %v5331, 48
    %v5334 = vpop.permute.xlu0 %5333
    %5336 = vst.msk [vmem:[#allocation3 + $0xe] sm:$0x1] %vm4759, %v5334
    %v5337 = vld [vmem:[%s2054 + $0x2] sm:$0x1]
    %5339 = vrot.lane.b32.xlu0 %v5337, 64
    %v5340 = vpop.permute.xlu0 %5339
    %5342 = vst.msk [vmem:[#allocation3 + $0xe] sm:$0x1] %vm4766, %v5340
    %v5343 = vld [vmem:[%s2054 + $0x3] sm:$0x1]
    %5345 = vrot.lane.b32.xlu0 %v5343, 80
    %v5346 = vpop.permute.xlu0 %5345
    %5348 = vst.msk [vmem:[#allocation3 + $0xe] sm:$0x1] %vm4773, %v5346
    %v5349 = vld [vmem:[%s2054 + $0x4] sm:$0x1]
    %5351 = vrot.lane.b32.xlu0 %v5349, 96
    %v5352 = vpop.permute.xlu0 %5351
    %5354 = vst.msk [vmem:[#allocation3 + $0xe] sm:$0x1] %vm4780, %v5352
    %v5355 = vld [vmem:[%s2054 + $0x5] sm:$0x1]
    %5357 = vrot.lane.b32.xlu0 %v5355, 112
    %v5358 = vpop.permute.xlu0 %5357
    %5360 = vst.msk [vmem:[#allocation3 + $0xe] sm:$0x1] %vm4787, %v5358
    %v5361 = vld [vmem:[%s3395 + $0x2] sm:$0x1]
    %5362 = vst.msk [vmem:[#allocation3 + $0x7] sm:$0x1] %vm4738, %v5361
    %v5363 = vld [vmem:[%s3395 + $0x3] sm:$0x1]
    %5365 = vrot.lane.b32.xlu0 %v5363, 16
    %v5366 = vpop.permute.xlu0 %5365
    %5368 = vst.msk [vmem:[#allocation3 + $0x7] sm:$0x1] %vm4745, %v5366
    %v5369 = vld [vmem:[%s3395 + $0x4] sm:$0x1]
    %5371 = vrot.lane.b32.xlu0 %v5369, 32
    %v5372 = vpop.permute.xlu0 %5371
    %5374 = vst.msk [vmem:[#allocation3 + $0x7] sm:$0x1] %vm4752, %v5372
    %v5375 = vld [vmem:[%s3395 + $0x5] sm:$0x1]
    %5377 = vrot.lane.b32.xlu0 %v5375, 48
    %v5378 = vpop.permute.xlu0 %5377
    %5380 = vst.msk [vmem:[#allocation3 + $0x7] sm:$0x1] %vm4759, %v5378
    %v5381 = vld [vmem:[%s3730 + $0x2] sm:$0x1]
    %5383 = vrot.lane.b32.xlu0 %v5381, 64
    %v5384 = vpop.permute.xlu0 %5383
    %5386 = vst.msk [vmem:[#allocation3 + $0x7] sm:$0x1] %vm4766, %v5384
    %v5387 = vld [vmem:[%s3730 + $0x3] sm:$0x1]
    %5389 = vrot.lane.b32.xlu0 %v5387, 80
    %v5390 = vpop.permute.xlu0 %5389
    %5392 = vst.msk [vmem:[#allocation3 + $0x7] sm:$0x1] %vm4773, %v5390
    %v5393 = vld [vmem:[%s3730 + $0x4] sm:$0x1]
    %5395 = vrot.lane.b32.xlu0 %v5393, 96
    %v5396 = vpop.permute.xlu0 %5395
    %5398 = vst.msk [vmem:[#allocation3 + $0x7] sm:$0x1] %vm4780, %v5396
    %v5399 = vld [vmem:[%s3730 + $0x5] sm:$0x1]
    %5401 = vrot.lane.b32.xlu0 %v5399, 112
    %v5402 = vpop.permute.xlu0 %5401
    %5404 = vst.msk [vmem:[#allocation3 + $0x7] sm:$0x1] %vm4787, %v5402
    %v5405 = vld [vmem:[%s4065 + $0x2] sm:$0x1]
    %5406 = vst.msk [vmem:[#allocation3 + $0xf] sm:$0x1] %vm4738, %v5405
    %v5407 = vld [vmem:[%s4065 + $0x3] sm:$0x1]
    %5409 = vrot.lane.b32.xlu0 %v5407, 16
    %v5410 = vpop.permute.xlu0 %5409
    %5412 = vst.msk [vmem:[#allocation3 + $0xf] sm:$0x1] %vm4745, %v5410
    %v5413 = vld [vmem:[%s4065 + $0x4] sm:$0x1]
    %5415 = vrot.lane.b32.xlu0 %v5413, 32
    %v5416 = vpop.permute.xlu0 %5415
    %5418 = vst.msk [vmem:[#allocation3 + $0xf] sm:$0x1] %vm4752, %v5416
    %v5419 = vld [vmem:[%s4065 + $0x5] sm:$0x1]
    %5421 = vrot.lane.b32.xlu0 %v5419, 48
    %v5422 = vpop.permute.xlu0 %5421
    %5424 = vst.msk [vmem:[#allocation3 + $0xf] sm:$0x1] %vm4759, %v5422
    %v5425 = vld [vmem:[%s4400 + $0x2] sm:$0x1]
    %5427 = vrot.lane.b32.xlu0 %v5425, 64
    %v5428 = vpop.permute.xlu0 %5427
    %5430 = vst.msk [vmem:[#allocation3 + $0xf] sm:$0x1] %vm4766, %v5428
    %v5431 = vld [vmem:[%s4400 + $0x3] sm:$0x1]
    %5433 = vrot.lane.b32.xlu0 %v5431, 80
    %v5434 = vpop.permute.xlu0 %5433
    %5436 = vst.msk [vmem:[#allocation3 + $0xf] sm:$0x1] %vm4773, %v5434
    %v5437 = vld [vmem:[%s4400 + $0x4] sm:$0x1]
    %5439 = vrot.lane.b32.xlu0 %v5437, 96
    %v5440 = vpop.permute.xlu0 %5439
    %5442 = vst.msk [vmem:[#allocation3 + $0xf] sm:$0x1] %vm4780, %v5440
    %v5443 = vld [vmem:[%s4400 + $0x5] sm:$0x1]
    %5445 = vrot.lane.b32.xlu0 %v5443, 112
    %v5446 = vpop.permute.xlu0 %5445
    %5448 = vst.msk [vmem:[#allocation3 + $0xf] sm:$0x1] %vm4787, %v5446
    %v5449 = vld [vmem:[#allocation3] sm:$0xff]
    %v5450 = vld [vmem:[#allocation3 + $0x8] sm:$0xff]
    %v5451 = vld [vmem:[%s3] sm:$0xff]
    %v5452 = vld [vmem:[%s3 + $0x8] sm:$0xff]
    %v5453 = vld [vmem:[%s3 + $0x10] sm:$0xff]
    %v5454 = vld [vmem:[%s3 + $0x18] sm:$0xff]
    %v5455 = vld [vmem:[%s3 + $0x20] sm:$0xff]
    %v5456 = vld [vmem:[%s3 + $0x28] sm:$0xff]
    %v5457 = vld [vmem:[%s3 + $0x30] sm:$0xff]
    %v5458 = vld [vmem:[%s3 + $0x38] sm:$0xff]
    %v5459 = vld [vmem:[%s3 + $0x40] sm:$0xff]
    %v5460 = vld [vmem:[%s3 + $0x48] sm:$0xff]
    %v5461 = vld [vmem:[%s3 + $0x50] sm:$0xff]
    %v5462 = vld [vmem:[%s3 + $0x58] sm:$0xff]
    %v5463 = vld [vmem:[%s3 + $0x60] sm:$0xff]
    %v5464 = vld [vmem:[%s3 + $0x68] sm:$0xff]
    %v5465 = vld [vmem:[%s3 + $0x70] sm:$0xff]
    %v5466 = vld [vmem:[%s3 + $0x78] sm:$0xff]
    %v5467 = vld [vmem:[%s3 + $0x80] sm:$0xff]
    %v5468 = vld [vmem:[%s3 + $0x88] sm:$0xff]
    %v5469 = vld [vmem:[%s3 + $0x90] sm:$0xff]
    %v5470 = vld [vmem:[%s3 + $0x98] sm:$0xff]
    %v5471 = vld [vmem:[%s3 + $0xa0] sm:$0xff]
    %v5472 = vld [vmem:[%s3 + $0xa8] sm:$0xff]
    %v5473 = vld [vmem:[%s3 + $0xb0] sm:$0xff]
    %v5474 = vld [vmem:[%s3 + $0xb8] sm:$0xff]
    %v5475 = vld [vmem:[%s3 + $0xc0] sm:$0xff]
    %v5476 = vld [vmem:[%s3 + $0xc8] sm:$0xff]
    %v5477 = vld [vmem:[%s3 + $0xd0] sm:$0xff]
    %v5478 = vld [vmem:[%s3 + $0xd8] sm:$0xff]
    %v5479 = vld [vmem:[%s3 + $0xe0] sm:$0xff]
    %v5480 = vld [vmem:[%s3 + $0xe8] sm:$0xff]
    %v5481 = vld [vmem:[%s3 + $0xf0] sm:$0xff]
    %v5482 = vld [vmem:[%s3 + $0xf8] sm:$0xff]
    %v5483 = vld [vmem:[%s4] sm:$0x1]
    %v5485 = vlaneseq
    %v5486 = vshrl.u32 %v5485, 7
    %v5487 = vsub.s32 0, %v5486
    %v5488 = vrot.slane %v5483, %v5487
    %5490 = vmatprep.subr.mxu0 0.0
    %5491 = vmatpush1.msra.mxu0 %v5451
    %5492 = vmatprep.subr.mxu0 0.0
    %5493 = vmatpush1.msra.mxu0 %v5452
    %5494 = vmatprep.subr.mxu0 0.0
    %5495 = vmatpush1.msra.mxu0 %v5453
    %5496 = vmatprep.subr.mxu0 0.0
    %5497 = vmatpush1.msra.mxu0 %v5454
    %5498 = vmatprep.subr.mxu0 0.0
    %5499 = vmatpush1.msra.mxu0 %v5455
    %5500 = vmatprep.subr.mxu0 0.0
    %5501 = vmatpush1.msra.mxu0 %v5456
    %5502 = vmatprep.subr.mxu0 0.0
    %5503 = vmatpush1.msra.mxu0 %v5457
    %5504 = vmatprep.subr.mxu0 0.0
    %5505 = vmatpush1.msra.mxu0 %v5458
    %5506 = vmatprep.subr.mxu0 0.0
    %5507 = vmatpush1.msra.mxu0 %v5459
    %5508 = vmatprep.subr.mxu0 0.0
    %5509 = vmatpush1.msra.mxu0 %v5460
    %5510 = vmatprep.subr.mxu0 0.0
    %5511 = vmatpush1.msra.mxu0 %v5461
    %5512 = vmatprep.subr.mxu0 0.0
    %5513 = vmatpush1.msra.mxu0 %v5462
    %5514 = vmatprep.subr.mxu0 0.0
    %5515 = vmatpush1.msra.mxu0 %v5463
    %5516 = vmatprep.subr.mxu0 0.0
    %5517 = vmatpush1.msra.mxu0 %v5464
    %5518 = vmatprep.subr.mxu0 0.0
    %5519 = vmatpush1.msra.mxu0 %v5465
    %5520 = vmatprep.subr.mxu0 0.0
    %5521 = vmatpush1.msra.mxu0 %v5466
    %5522 = vmatprep.subr.mxu0 0.0
    %5523 = vmatpush1.msra.mxu0 %v5467
    %5524 = vmatprep.subr.mxu0 0.0
    %5525 = vmatpush1.msra.mxu0 %v5468
    %5526 = vmatprep.subr.mxu0 0.0
    %5527 = vmatpush1.msra.mxu0 %v5469
    %5528 = vmatprep.subr.mxu0 0.0
    %5529 = vmatpush1.msra.mxu0 %v5470
    %5530 = vmatprep.subr.mxu0 0.0
    %5531 = vmatpush1.msra.mxu0 %v5471
    %5532 = vmatprep.subr.mxu0 0.0
    %5533 = vmatpush1.msra.mxu0 %v5472
    %5534 = vmatprep.subr.mxu0 0.0
    %5535 = vmatpush1.msra.mxu0 %v5473
    %5536 = vmatprep.subr.mxu0 0.0
    %5537 = vmatpush1.msra.mxu0 %v5474
    %5538 = vmatprep.subr.mxu0 0.0
    %5539 = vmatpush1.msra.mxu0 %v5475
    %5540 = vmatprep.subr.mxu0 0.0
    %5541 = vmatpush1.msra.mxu0 %v5476
    %5542 = vmatprep.subr.mxu0 0.0
    %5543 = vmatpush1.msra.mxu0 %v5477
    %5544 = vmatprep.subr.mxu0 0.0
    %5545 = vmatpush1.msra.mxu0 %v5478
    %5546 = vmatprep.subr.mxu0 0.0
    %5547 = vmatpush1.msra.mxu0 %v5479
    %5548 = vmatprep.subr.mxu0 0.0
    %5549 = vmatpush1.msra.mxu0 %v5480
    %5550 = vmatprep.subr.mxu0 0.0
    %5551 = vmatpush1.msra.mxu0 %v5481
    %5552 = vmatprep.subr.mxu0 0.0
    %5553 = vmatpush1.msra.mxu0 %v5482
    %5554 = vmatprep.mubr.f32.mxu0 %v5450
    %5555 = vmatmul.mubr.f32.gmra.mrb[0].mxu0 %v5449
    %v5556 = vpop.f32.mrb[0].mxu0
    %v5557 = vadd.f32 %v5488, %v5556
    %v5558 = vpop.f32.mrb[0].mxu0
    %5559 = vdwg.mxu0
    %v5560 = vmax.f32 %v5557, 0.0
    %v5561 = vld [vmem:[%s5] sm:$0xff]
    %v5562 = vld [vmem:[%s5 + $0x8] sm:$0xff]
    %v5563 = vld [vmem:[%s5 + $0x10] sm:$0xff]
    %v5564 = vld [vmem:[%s5 + $0x18] sm:$0xff]
    %v5565 = vld [vmem:[%s5 + $0x20] sm:$0xff]
    %v5566 = vld [vmem:[%s5 + $0x28] sm:$0xff]
    %v5567 = vld [vmem:[%s5 + $0x30] sm:$0xff]
    %v5568 = vld [vmem:[%s5 + $0x38] sm:$0xff]
    %v5569 = vld [vmem:[%s5 + $0x40] sm:$0xff]
    %v5570 = vld [vmem:[%s5 + $0x48] sm:$0xff]
    %v5571 = vld [vmem:[%s5 + $0x50] sm:$0xff]
    %v5572 = vld [vmem:[%s5 + $0x58] sm:$0xff]
    %v5573 = vld [vmem:[%s5 + $0x60] sm:$0xff]
    %v5574 = vld [vmem:[%s5 + $0x68] sm:$0xff]
    %v5575 = vld [vmem:[%s5 + $0x70] sm:$0xff]
    %v5576 = vld [vmem:[%s5 + $0x78] sm:$0xff]
    %v5577 = vld [vmem:[%s5 + $0x80] sm:$0xff]
    %v5578 = vld [vmem:[%s5 + $0x88] sm:$0xff]
    %v5579 = vld [vmem:[%s5 + $0x90] sm:$0xff]
    %v5580 = vld [vmem:[%s5 + $0x98] sm:$0xff]
    %v5581 = vld [vmem:[%s5 + $0xa0] sm:$0xff]
    %v5582 = vld [vmem:[%s5 + $0xa8] sm:$0xff]
    %v5583 = vld [vmem:[%s5 + $0xb0] sm:$0xff]
    %v5584 = vld [vmem:[%s5 + $0xb8] sm:$0xff]
    %v5585 = vld [vmem:[%s5 + $0xc0] sm:$0xff]
    %v5586 = vld [vmem:[%s5 + $0xc8] sm:$0xff]
    %v5587 = vld [vmem:[%s5 + $0xd0] sm:$0xff]
    %v5588 = vld [vmem:[%s5 + $0xd8] sm:$0xff]
    %v5589 = vld [vmem:[%s5 + $0xe0] sm:$0xff]
    %v5590 = vld [vmem:[%s5 + $0xe8] sm:$0xff]
    %v5591 = vld [vmem:[%s5 + $0xf0] sm:$0xff]
    %v5592 = vld [vmem:[%s5 + $0xf8] sm:$0xff]
    %v5594 = vrot.slane %v5560, 2
    %vm5595 = vcmask 261120
    %v5596 = vsel %vm5595, %v5594, 0
    %5598 = vmatprep.subr.mxu0 %v5578
    %5599 = vmatpush1.msra.mxu0 %v5577
    %5600 = vmatprep.subr.mxu0 %v5582
    %5601 = vmatpush1.msra.mxu0 %v5581
    %5602 = vmatprep.subr.mxu0 %v5586
    %5603 = vmatpush1.msra.mxu0 %v5585
    %5604 = vmatprep.subr.mxu0 %v5590
    %5605 = vmatpush1.msra.mxu0 %v5589
    %5606 = vmatprep.subr.mxu0 0.0
    %5607 = vmatpush1.msra.mxu0 0.0
    %5608 = vmatprep.subr.mxu0 0.0
    %5609 = vmatpush1.msra.mxu0 0.0
    %5610 = vmatprep.subr.mxu0 0.0
    %5611 = vmatpush1.msra.mxu0 0.0
    %5612 = vmatprep.subr.mxu0 0.0
    %5613 = vmatpush1.msra.mxu0 0.0
    %5614 = vmatprep.subr.mxu0 0.0
    %5615 = vmatpush1.msra.mxu0 0.0
    %5616 = vmatprep.subr.mxu0 0.0
    %5617 = vmatpush1.msra.mxu0 0.0
    %5618 = vmatprep.subr.mxu0 0.0
    %5619 = vmatpush1.msra.mxu0 0.0
    %5620 = vmatprep.subr.mxu0 0.0
    %5621 = vmatpush1.msra.mxu0 0.0
    %5622 = vmatprep.subr.mxu0 0.0
    %5623 = vmatpush1.msra.mxu0 0.0
    %5624 = vmatprep.subr.mxu0 0.0
    %5625 = vmatpush1.msra.mxu0 0.0
    %5626 = vmatprep.subr.mxu0 0.0
    %5627 = vmatpush1.msra.mxu0 0.0
    %5628 = vmatprep.subr.mxu0 0.0
    %5629 = vmatpush1.msra.mxu0 0.0
    %5630 = vmatprep.subr.mxu0 0.0
    %5631 = vmatpush1.msra.mxu0 0.0
    %5632 = vmatprep.subr.mxu0 0.0
    %5633 = vmatpush1.msra.mxu0 0.0
    %5634 = vmatprep.subr.mxu0 0.0
    %5635 = vmatpush1.msra.mxu0 0.0
    %5636 = vmatprep.subr.mxu0 0.0
    %5637 = vmatpush1.msra.mxu0 0.0
    %5638 = vmatprep.subr.mxu0 0.0
    %5639 = vmatpush1.msra.mxu0 0.0
    %5640 = vmatprep.subr.mxu0 0.0
    %5641 = vmatpush1.msra.mxu0 0.0
    %5642 = vmatprep.subr.mxu0 0.0
    %5643 = vmatpush1.msra.mxu0 0.0
    %5644 = vmatprep.subr.mxu0 0.0
    %5645 = vmatpush1.msra.mxu0 0.0
    %5646 = vmatprep.subr.mxu0 0.0
    %5647 = vmatpush1.msra.mxu0 0.0
    %5648 = vmatprep.subr.mxu0 0.0
    %5649 = vmatpush1.msra.mxu0 0.0
    %5650 = vmatprep.subr.mxu0 0.0
    %5651 = vmatpush1.msra.mxu0 0.0
    %5652 = vmatprep.subr.mxu0 0.0
    %5653 = vmatpush1.msra.mxu0 0.0
    %5654 = vmatprep.subr.mxu0 0.0
    %5655 = vmatpush1.msra.mxu0 0.0
    %5656 = vmatprep.subr.mxu0 0.0
    %5657 = vmatpush1.msra.mxu0 0.0
    %5658 = vmatprep.subr.mxu0 0.0
    %5659 = vmatpush1.msra.mxu0 0.0
    %5660 = vmatprep.subr.mxu0 0.0
    %5661 = vmatpush1.msra.mxu0 0.0
    %5662 = vmatprep.mubr.f32.mxu0 0.0
    %5663 = vmatmul.mubr.f32.gmra.mrb[0].mxu0 %v5596
    %v5664 = vpop.f32.mrb[0].mxu0
    %v5665 = vadd.f32 0.0, %v5664
    %v5666 = vpop.f32.mrb[0].mxu0
    %v5667 = vadd.f32 0.0, %v5666
    %5668 = vdwg.mxu0
    %5669 = vmatprep.subr.mxu0 %v5580
    %5670 = vmatpush1.msra.mxu0 %v5579
    %5671 = vmatprep.subr.mxu0 %v5584
    %5672 = vmatpush1.msra.mxu0 %v5583
    %5673 = vmatprep.subr.mxu0 %v5588
    %5674 = vmatpush1.msra.mxu0 %v5587
    %5675 = vmatprep.subr.mxu0 %v5592
    %5676 = vmatpush1.msra.mxu0 %v5591
    %5677 = vmatprep.subr.mxu0 0.0
    %5678 = vmatpush1.msra.mxu0 0.0
    %5679 = vmatprep.subr.mxu0 0.0
    %5680 = vmatpush1.msra.mxu0 0.0
    %5681 = vmatprep.subr.mxu0 0.0
    %5682 = vmatpush1.msra.mxu0 0.0
    %5683 = vmatprep.subr.mxu0 0.0
    %5684 = vmatpush1.msra.mxu0 0.0
    %5685 = vmatprep.subr.mxu0 0.0
    %5686 = vmatpush1.msra.mxu0 0.0
    %5687 = vmatprep.subr.mxu0 0.0
    %5688 = vmatpush1.msra.mxu0 0.0
    %5689 = vmatprep.subr.mxu0 0.0
    %5690 = vmatpush1.msra.mxu0 0.0
    %5691 = vmatprep.subr.mxu0 0.0
    %5692 = vmatpush1.msra.mxu0 0.0
    %5693 = vmatprep.subr.mxu0 0.0
    %5694 = vmatpush1.msra.mxu0 0.0
    %5695 = vmatprep.subr.mxu0 0.0
    %5696 = vmatpush1.msra.mxu0 0.0
    %5697 = vmatprep.subr.mxu0 0.0
    %5698 = vmatpush1.msra.mxu0 0.0
    %5699 = vmatprep.subr.mxu0 0.0
    %5700 = vmatpush1.msra.mxu0 0.0
    %5701 = vmatprep.subr.mxu0 0.0
    %5702 = vmatpush1.msra.mxu0 0.0
    %5703 = vmatprep.subr.mxu0 0.0
    %5704 = vmatpush1.msra.mxu0 0.0
    %5705 = vmatprep.subr.mxu0 0.0
    %5706 = vmatpush1.msra.mxu0 0.0
    %5707 = vmatprep.subr.mxu0 0.0
    %5708 = vmatpush1.msra.mxu0 0.0
    %5709 = vmatprep.subr.mxu0 0.0
    %5710 = vmatpush1.msra.mxu0 0.0
    %5711 = vmatprep.subr.mxu0 0.0
    %5712 = vmatpush1.msra.mxu0 0.0
    %5713 = vmatprep.subr.mxu0 0.0
    %5714 = vmatpush1.msra.mxu0 0.0
    %5715 = vmatprep.subr.mxu0 0.0
    %5716 = vmatpush1.msra.mxu0 0.0
    %5717 = vmatprep.subr.mxu0 0.0
    %5718 = vmatpush1.msra.mxu0 0.0
    %5719 = vmatprep.subr.mxu0 0.0
    %5720 = vmatpush1.msra.mxu0 0.0
    %5721 = vmatprep.subr.mxu0 0.0
    %5722 = vmatpush1.msra.mxu0 0.0
    %5723 = vmatprep.subr.mxu0 0.0
    %5724 = vmatpush1.msra.mxu0 0.0
    %5725 = vmatprep.subr.mxu0 0.0
    %5726 = vmatpush1.msra.mxu0 0.0
    %5727 = vmatprep.subr.mxu0 0.0
    %5728 = vmatpush1.msra.mxu0 0.0
    %5729 = vmatprep.subr.mxu0 0.0
    %5730 = vmatpush1.msra.mxu0 0.0
    %5731 = vmatprep.subr.mxu0 0.0
    %5732 = vmatpush1.msra.mxu0 0.0
    %5733 = vmatprep.mubr.f32.mxu0 0.0
    %5734 = vmatmul.mubr.f32.gmra.mrb[0].mxu0 %v5596
    %v5735 = vpop.f32.mrb[0].mxu0
    %v5736 = vadd.f32 0.0, %v5735
    %v5737 = vpop.f32.mrb[0].mxu0
    %v5738 = vadd.f32 0.0, %v5737
    %5739 = vdwg.mxu0
    %v5740 = vsel %vm5595, %v5560, 0
    %5742 = vmatprep.subr.mxu0 %v5562
    %5743 = vmatpush1.msra.mxu0 %v5561
    %5744 = vmatprep.subr.mxu0 %v5566
    %5745 = vmatpush1.msra.mxu0 %v5565
    %5746 = vmatprep.subr.mxu0 %v5570
    %5747 = vmatpush1.msra.mxu0 %v5569
    %5748 = vmatprep.subr.mxu0 %v5574
    %5749 = vmatpush1.msra.mxu0 %v5573
    %5750 = vmatprep.subr.mxu0 0.0
    %5751 = vmatpush1.msra.mxu0 0.0
    %5752 = vmatprep.subr.mxu0 0.0
    %5753 = vmatpush1.msra.mxu0 0.0
    %5754 = vmatprep.subr.mxu0 0.0
    %5755 = vmatpush1.msra.mxu0 0.0
    %5756 = vmatprep.subr.mxu0 0.0
    %5757 = vmatpush1.msra.mxu0 0.0
    %5758 = vmatprep.subr.mxu0 0.0
    %5759 = vmatpush1.msra.mxu0 0.0
    %5760 = vmatprep.subr.mxu0 0.0
    %5761 = vmatpush1.msra.mxu0 0.0
    %5762 = vmatprep.subr.mxu0 0.0
    %5763 = vmatpush1.msra.mxu0 0.0
    %5764 = vmatprep.subr.mxu0 0.0
    %5765 = vmatpush1.msra.mxu0 0.0
    %5766 = vmatprep.subr.mxu0 0.0
    %5767 = vmatpush1.msra.mxu0 0.0
    %5768 = vmatprep.subr.mxu0 0.0
    %5769 = vmatpush1.msra.mxu0 0.0
    %5770 = vmatprep.subr.mxu0 0.0
    %5771 = vmatpush1.msra.mxu0 0.0
    %5772 = vmatprep.subr.mxu0 0.0
    %5773 = vmatpush1.msra.mxu0 0.0
    %5774 = vmatprep.subr.mxu0 0.0
    %5775 = vmatpush1.msra.mxu0 0.0
    %5776 = vmatprep.subr.mxu0 0.0
    %5777 = vmatpush1.msra.mxu0 0.0
    %5778 = vmatprep.subr.mxu0 0.0
    %5779 = vmatpush1.msra.mxu0 0.0
    %5780 = vmatprep.subr.mxu0 0.0
    %5781 = vmatpush1.msra.mxu0 0.0
    %5782 = vmatprep.subr.mxu0 0.0
    %5783 = vmatpush1.msra.mxu0 0.0
    %5784 = vmatprep.subr.mxu0 0.0
    %5785 = vmatpush1.msra.mxu0 0.0
    %5786 = vmatprep.subr.mxu0 0.0
    %5787 = vmatpush1.msra.mxu0 0.0
    %5788 = vmatprep.subr.mxu0 0.0
    %5789 = vmatpush1.msra.mxu0 0.0
    %5790 = vmatprep.subr.mxu0 0.0
    %5791 = vmatpush1.msra.mxu0 0.0
    %5792 = vmatprep.subr.mxu0 0.0
    %5793 = vmatpush1.msra.mxu0 0.0
    %5794 = vmatprep.subr.mxu0 0.0
    %5795 = vmatpush1.msra.mxu0 0.0
    %5796 = vmatprep.subr.mxu0 0.0
    %5797 = vmatpush1.msra.mxu0 0.0
    %5798 = vmatprep.subr.mxu0 0.0
    %5799 = vmatpush1.msra.mxu0 0.0
    %5800 = vmatprep.subr.mxu0 0.0
    %5801 = vmatpush1.msra.mxu0 0.0
    %5802 = vmatprep.subr.mxu0 0.0
    %5803 = vmatpush1.msra.mxu0 0.0
    %5804 = vmatprep.subr.mxu0 0.0
    %5805 = vmatpush1.msra.mxu0 0.0
    %5806 = vmatprep.mubr.f32.mxu0 0.0
    %5807 = vmatmul.mubr.f32.gmra.mrb[0].mxu0 %v5740
    %v5808 = vpop.f32.mrb[0].mxu0
    %v5809 = vadd.f32 %v5665, %v5808
    %v5810 = vpop.f32.mrb[0].mxu0
    %v5811 = vadd.f32 %v5667, %v5810
    %5812 = vdwg.mxu0
    %5813 = vmatprep.subr.mxu0 %v5564
    %5814 = vmatpush1.msra.mxu0 %v5563
    %5815 = vmatprep.subr.mxu0 %v5568
    %5816 = vmatpush1.msra.mxu0 %v5567
    %5817 = vmatprep.subr.mxu0 %v5572
    %5818 = vmatpush1.msra.mxu0 %v5571
    %5819 = vmatprep.subr.mxu0 %v5576
    %5820 = vmatpush1.msra.mxu0 %v5575
    %5821 = vmatprep.subr.mxu0 0.0
    %5822 = vmatpush1.msra.mxu0 0.0
    %5823 = vmatprep.subr.mxu0 0.0
    %5824 = vmatpush1.msra.mxu0 0.0
    %5825 = vmatprep.subr.mxu0 0.0
    %5826 = vmatpush1.msra.mxu0 0.0
    %5827 = vmatprep.subr.mxu0 0.0
    %5828 = vmatpush1.msra.mxu0 0.0
    %5829 = vmatprep.subr.mxu0 0.0
    %5830 = vmatpush1.msra.mxu0 0.0
    %5831 = vmatprep.subr.mxu0 0.0
    %5832 = vmatpush1.msra.mxu0 0.0
    %5833 = vmatprep.subr.mxu0 0.0
    %5834 = vmatpush1.msra.mxu0 0.0
    %5835 = vmatprep.subr.mxu0 0.0
    %5836 = vmatpush1.msra.mxu0 0.0
    %5837 = vmatprep.subr.mxu0 0.0
    %5838 = vmatpush1.msra.mxu0 0.0
    %5839 = vmatprep.subr.mxu0 0.0
    %5840 = vmatpush1.msra.mxu0 0.0
    %5841 = vmatprep.subr.mxu0 0.0
    %5842 = vmatpush1.msra.mxu0 0.0
    %5843 = vmatprep.subr.mxu0 0.0
    %5844 = vmatpush1.msra.mxu0 0.0
    %5845 = vmatprep.subr.mxu0 0.0
    %5846 = vmatpush1.msra.mxu0 0.0
    %5847 = vmatprep.subr.mxu0 0.0
    %5848 = vmatpush1.msra.mxu0 0.0
    %5849 = vmatprep.subr.mxu0 0.0
    %5850 = vmatpush1.msra.mxu0 0.0
    %5851 = vmatprep.subr.mxu0 0.0
    %5852 = vmatpush1.msra.mxu0 0.0
    %5853 = vmatprep.subr.mxu0 0.0
    %5854 = vmatpush1.msra.mxu0 0.0
    %5855 = vmatprep.subr.mxu0 0.0
    %5856 = vmatpush1.msra.mxu0 0.0
    %5857 = vmatprep.subr.mxu0 0.0
    %5858 = vmatpush1.msra.mxu0 0.0
    %5859 = vmatprep.subr.mxu0 0.0
    %5860 = vmatpush1.msra.mxu0 0.0
    %5861 = vmatprep.subr.mxu0 0.0
    %5862 = vmatpush1.msra.mxu0 0.0
    %5863 = vmatprep.subr.mxu0 0.0
    %5864 = vmatpush1.msra.mxu0 0.0
    %5865 = vmatprep.subr.mxu0 0.0
    %5866 = vmatpush1.msra.mxu0 0.0
    %5867 = vmatprep.subr.mxu0 0.0
    %5868 = vmatpush1.msra.mxu0 0.0
    %5869 = vmatprep.subr.mxu0 0.0
    %5870 = vmatpush1.msra.mxu0 0.0
    %5871 = vmatprep.subr.mxu0 0.0
    %5872 = vmatpush1.msra.mxu0 0.0
    %5873 = vmatprep.subr.mxu0 0.0
    %5874 = vmatpush1.msra.mxu0 0.0
    %5875 = vmatprep.subr.mxu0 0.0
    %5876 = vmatpush1.msra.mxu0 0.0
    %5877 = vmatprep.mubr.f32.mxu0 0.0
    %5878 = vmatmul.mubr.f32.gmra.mrb[0].mxu0 %v5740
    %v5879 = vpop.f32.mrb[0].mxu0
    %v5880 = vadd.f32 %v5736, %v5879
    %v5881 = vpop.f32.mrb[0].mxu0
    %v5882 = vadd.f32 %v5738, %v5881
    %5883 = vdwg.mxu0
    %v5884 = vld [vmem:[%s5 + $0x100] sm:$0xff]
    %v5885 = vld [vmem:[%s5 + $0x108] sm:$0xff]
    %v5886 = vld [vmem:[%s5 + $0x110] sm:$0xff]
    %v5887 = vld [vmem:[%s5 + $0x118] sm:$0xff]
    %v5888 = vld [vmem:[%s5 + $0x120] sm:$0xff]
    %v5889 = vld [vmem:[%s5 + $0x128] sm:$0xff]
    %v5890 = vld [vmem:[%s5 + $0x130] sm:$0xff]
    %v5891 = vld [vmem:[%s5 + $0x138] sm:$0xff]
    %v5892 = vld [vmem:[%s5 + $0x140] sm:$0xff]
    %v5893 = vld [vmem:[%s5 + $0x148] sm:$0xff]
    %v5894 = vld [vmem:[%s5 + $0x150] sm:$0xff]
    %v5895 = vld [vmem:[%s5 + $0x158] sm:$0xff]
    %v5896 = vld [vmem:[%s5 + $0x160] sm:$0xff]
    %v5897 = vld [vmem:[%s5 + $0x168] sm:$0xff]
    %v5898 = vld [vmem:[%s5 + $0x170] sm:$0xff]
    %v5899 = vld [vmem:[%s5 + $0x178] sm:$0xff]
    %v5900 = vrot.slane %v5560, 4
    %v5901 = vsel %vm5595, %v5900, 0
    %5903 = vmatprep.subr.mxu0 %v5885
    %5904 = vmatpush1.msra.mxu0 %v5884
    %5905 = vmatprep.subr.mxu0 %v5889
    %5906 = vmatpush1.msra.mxu0 %v5888
    %5907 = vmatprep.subr.mxu0 %v5893
    %5908 = vmatpush1.msra.mxu0 %v5892
    %5909 = vmatprep.subr.mxu0 %v5897
    %5910 = vmatpush1.msra.mxu0 %v5896
    %5911 = vmatprep.subr.mxu0 0.0
    %5912 = vmatpush1.msra.mxu0 0.0
    %5913 = vmatprep.subr.mxu0 0.0
    %5914 = vmatpush1.msra.mxu0 0.0
    %5915 = vmatprep.subr.mxu0 0.0
    %5916 = vmatpush1.msra.mxu0 0.0
    %5917 = vmatprep.subr.mxu0 0.0
    %5918 = vmatpush1.msra.mxu0 0.0
    %5919 = vmatprep.subr.mxu0 0.0
    %5920 = vmatpush1.msra.mxu0 0.0
    %5921 = vmatprep.subr.mxu0 0.0
    %5922 = vmatpush1.msra.mxu0 0.0
    %5923 = vmatprep.subr.mxu0 0.0
    %5924 = vmatpush1.msra.mxu0 0.0
    %5925 = vmatprep.subr.mxu0 0.0
    %5926 = vmatpush1.msra.mxu0 0.0
    %5927 = vmatprep.subr.mxu0 0.0
    %5928 = vmatpush1.msra.mxu0 0.0
    %5929 = vmatprep.subr.mxu0 0.0
    %5930 = vmatpush1.msra.mxu0 0.0
    %5931 = vmatprep.subr.mxu0 0.0
    %5932 = vmatpush1.msra.mxu0 0.0
    %5933 = vmatprep.subr.mxu0 0.0
    %5934 = vmatpush1.msra.mxu0 0.0
    %5935 = vmatprep.subr.mxu0 0.0
    %5936 = vmatpush1.msra.mxu0 0.0
    %5937 = vmatprep.subr.mxu0 0.0
    %5938 = vmatpush1.msra.mxu0 0.0
    %5939 = vmatprep.subr.mxu0 0.0
    %5940 = vmatpush1.msra.mxu0 0.0
    %5941 = vmatprep.subr.mxu0 0.0
    %5942 = vmatpush1.msra.mxu0 0.0
    %5943 = vmatprep.subr.mxu0 0.0
    %5944 = vmatpush1.msra.mxu0 0.0
    %5945 = vmatprep.subr.mxu0 0.0
    %5946 = vmatpush1.msra.mxu0 0.0
    %5947 = vmatprep.subr.mxu0 0.0
    %5948 = vmatpush1.msra.mxu0 0.0
    %5949 = vmatprep.subr.mxu0 0.0
    %5950 = vmatpush1.msra.mxu0 0.0
    %5951 = vmatprep.subr.mxu0 0.0
    %5952 = vmatpush1.msra.mxu0 0.0
    %5953 = vmatprep.subr.mxu0 0.0
    %5954 = vmatpush1.msra.mxu0 0.0
    %5955 = vmatprep.subr.mxu0 0.0
    %5956 = vmatpush1.msra.mxu0 0.0
    %5957 = vmatprep.subr.mxu0 0.0
    %5958 = vmatpush1.msra.mxu0 0.0
    %5959 = vmatprep.subr.mxu0 0.0
    %5960 = vmatpush1.msra.mxu0 0.0
    %5961 = vmatprep.subr.mxu0 0.0
    %5962 = vmatpush1.msra.mxu0 0.0
    %5963 = vmatprep.subr.mxu0 0.0
    %5964 = vmatpush1.msra.mxu0 0.0
    %5965 = vmatprep.subr.mxu0 0.0
    %5966 = vmatpush1.msra.mxu0 0.0
    %5967 = vmatprep.mubr.f32.mxu0 0.0
    %5968 = vmatmul.mubr.f32.gmra.mrb[0].mxu0 %v5901
    %v5969 = vpop.f32.mrb[0].mxu0
    %v5970 = vadd.f32 0.0, %v5969
    %v5971 = vpop.f32.mrb[0].mxu0
    %v5972 = vadd.f32 0.0, %v5971
    %5973 = vdwg.mxu0
    %5974 = vmatprep.subr.mxu0 %v5887
    %5975 = vmatpush1.msra.mxu0 %v5886
    %5976 = vmatprep.subr.mxu0 %v5891
    %5977 = vmatpush1.msra.mxu0 %v5890
    %5978 = vmatprep.subr.mxu0 %v5895
    %5979 = vmatpush1.msra.mxu0 %v5894
    %5980 = vmatprep.subr.mxu0 %v5899
    %5981 = vmatpush1.msra.mxu0 %v5898
    %5982 = vmatprep.subr.mxu0 0.0
    %5983 = vmatpush1.msra.mxu0 0.0
    %5984 = vmatprep.subr.mxu0 0.0
    %5985 = vmatpush1.msra.mxu0 0.0
    %5986 = vmatprep.subr.mxu0 0.0
    %5987 = vmatpush1.msra.mxu0 0.0
    %5988 = vmatprep.subr.mxu0 0.0
    %5989 = vmatpush1.msra.mxu0 0.0
    %5990 = vmatprep.subr.mxu0 0.0
    %5991 = vmatpush1.msra.mxu0 0.0
    %5992 = vmatprep.subr.mxu0 0.0
    %5993 = vmatpush1.msra.mxu0 0.0
    %5994 = vmatprep.subr.mxu0 0.0
    %5995 = vmatpush1.msra.mxu0 0.0
    %5996 = vmatprep.subr.mxu0 0.0
    %5997 = vmatpush1.msra.mxu0 0.0
    %5998 = vmatprep.subr.mxu0 0.0
    %5999 = vmatpush1.msra.mxu0 0.0
    %6000 = vmatprep.subr.mxu0 0.0
    %6001 = vmatpush1.msra.mxu0 0.0
    %6002 = vmatprep.subr.mxu0 0.0
    %6003 = vmatpush1.msra.mxu0 0.0
    %6004 = vmatprep.subr.mxu0 0.0
    %6005 = vmatpush1.msra.mxu0 0.0
    %6006 = vmatprep.subr.mxu0 0.0
    %6007 = vmatpush1.msra.mxu0 0.0
    %6008 = vmatprep.subr.mxu0 0.0
    %6009 = vmatpush1.msra.mxu0 0.0
    %6010 = vmatprep.subr.mxu0 0.0
    %6011 = vmatpush1.msra.mxu0 0.0
    %6012 = vmatprep.subr.mxu0 0.0
    %6013 = vmatpush1.msra.mxu0 0.0
    %6014 = vmatprep.subr.mxu0 0.0
    %6015 = vmatpush1.msra.mxu0 0.0
    %6016 = vmatprep.subr.mxu0 0.0
    %6017 = vmatpush1.msra.mxu0 0.0
    %6018 = vmatprep.subr.mxu0 0.0
    %6019 = vmatpush1.msra.mxu0 0.0
    %6020 = vmatprep.subr.mxu0 0.0
    %6021 = vmatpush1.msra.mxu0 0.0
    %6022 = vmatprep.subr.mxu0 0.0
    %6023 = vmatpush1.msra.mxu0 0.0
    %6024 = vmatprep.subr.mxu0 0.0
    %6025 = vmatpush1.msra.mxu0 0.0
    %6026 = vmatprep.subr.mxu0 0.0
    %6027 = vmatpush1.msra.mxu0 0.0
    %6028 = vmatprep.subr.mxu0 0.0
    %6029 = vmatpush1.msra.mxu0 0.0
    %6030 = vmatprep.subr.mxu0 0.0
    %6031 = vmatpush1.msra.mxu0 0.0
    %6032 = vmatprep.subr.mxu0 0.0
    %6033 = vmatpush1.msra.mxu0 0.0
    %6034 = vmatprep.subr.mxu0 0.0
    %6035 = vmatpush1.msra.mxu0 0.0
    %6036 = vmatprep.subr.mxu0 0.0
    %6037 = vmatpush1.msra.mxu0 0.0
    %6038 = vmatprep.mubr.f32.mxu0 0.0
    %6039 = vmatmul.mubr.f32.gmra.mrb[0].mxu0 %v5901
    %v6040 = vpop.f32.mrb[0].mxu0
    %v6041 = vadd.f32 0.0, %v6040
    %v6042 = vpop.f32.mrb[0].mxu0
    %v6043 = vadd.f32 0.0, %v6042
    %6044 = vdwg.mxu0
    %v6045 = vadd.f32 %v5809, %v5970
    %v6046 = vadd.f32 %v5811, %v5972
    %v6047 = vadd.f32 %v5880, %v6041
    %v6048 = vadd.f32 %v5882, %v6043
    %v6049 = vld [vmem:[%s5 + $0x180] sm:$0xff]
    %v6050 = vld [vmem:[%s5 + $0x188] sm:$0xff]
    %v6051 = vld [vmem:[%s5 + $0x190] sm:$0xff]
    %v6052 = vld [vmem:[%s5 + $0x198] sm:$0xff]
    %v6053 = vld [vmem:[%s5 + $0x1a0] sm:$0xff]
    %v6054 = vld [vmem:[%s5 + $0x1a8] sm:$0xff]
    %v6055 = vld [vmem:[%s5 + $0x1b0] sm:$0xff]
    %v6056 = vld [vmem:[%s5 + $0x1b8] sm:$0xff]
    %v6057 = vld [vmem:[%s5 + $0x1c0] sm:$0xff]
    %v6058 = vld [vmem:[%s5 + $0x1c8] sm:$0xff]
    %v6059 = vld [vmem:[%s5 + $0x1d0] sm:$0xff]
    %v6060 = vld [vmem:[%s5 + $0x1d8] sm:$0xff]
    %v6061 = vld [vmem:[%s5 + $0x1e0] sm:$0xff]
    %v6062 = vld [vmem:[%s5 + $0x1e8] sm:$0xff]
    %v6063 = vld [vmem:[%s5 + $0x1f0] sm:$0xff]
    %v6064 = vld [vmem:[%s5 + $0x1f8] sm:$0xff]
    %v6065 = vrot.slane %v5560, 6
    %v6066 = vsel %vm5595, %v6065, 0
    %6068 = vmatprep.subr.mxu0 %v6050
    %6069 = vmatpush1.msra.mxu0 %v6049
    %6070 = vmatprep.subr.mxu0 %v6054
    %6071 = vmatpush1.msra.mxu0 %v6053
    %6072 = vmatprep.subr.mxu0 %v6058
    %6073 = vmatpush1.msra.mxu0 %v6057
    %6074 = vmatprep.subr.mxu0 %v6062
    %6075 = vmatpush1.msra.mxu0 %v6061
    %6076 = vmatprep.subr.mxu0 0.0
    %6077 = vmatpush1.msra.mxu0 0.0
    %6078 = vmatprep.subr.mxu0 0.0
    %6079 = vmatpush1.msra.mxu0 0.0
    %6080 = vmatprep.subr.mxu0 0.0
    %6081 = vmatpush1.msra.mxu0 0.0
    %6082 = vmatprep.subr.mxu0 0.0
    %6083 = vmatpush1.msra.mxu0 0.0
    %6084 = vmatprep.subr.mxu0 0.0
    %6085 = vmatpush1.msra.mxu0 0.0
    %6086 = vmatprep.subr.mxu0 0.0
    %6087 = vmatpush1.msra.mxu0 0.0
    %6088 = vmatprep.subr.mxu0 0.0
    %6089 = vmatpush1.msra.mxu0 0.0
    %6090 = vmatprep.subr.mxu0 0.0
    %6091 = vmatpush1.msra.mxu0 0.0
    %6092 = vmatprep.subr.mxu0 0.0
    %6093 = vmatpush1.msra.mxu0 0.0
    %6094 = vmatprep.subr.mxu0 0.0
    %6095 = vmatpush1.msra.mxu0 0.0
    %6096 = vmatprep.subr.mxu0 0.0
    %6097 = vmatpush1.msra.mxu0 0.0
    %6098 = vmatprep.subr.mxu0 0.0
    %6099 = vmatpush1.msra.mxu0 0.0
    %6100 = vmatprep.subr.mxu0 0.0
    %6101 = vmatpush1.msra.mxu0 0.0
    %6102 = vmatprep.subr.mxu0 0.0
    %6103 = vmatpush1.msra.mxu0 0.0
    %6104 = vmatprep.subr.mxu0 0.0
    %6105 = vmatpush1.msra.mxu0 0.0
    %6106 = vmatprep.subr.mxu0 0.0
    %6107 = vmatpush1.msra.mxu0 0.0
    %6108 = vmatprep.subr.mxu0 0.0
    %6109 = vmatpush1.msra.mxu0 0.0
    %6110 = vmatprep.subr.mxu0 0.0
    %6111 = vmatpush1.msra.mxu0 0.0
    %6112 = vmatprep.subr.mxu0 0.0
    %6113 = vmatpush1.msra.mxu0 0.0
    %6114 = vmatprep.subr.mxu0 0.0
    %6115 = vmatpush1.msra.mxu0 0.0
    %6116 = vmatprep.subr.mxu0 0.0
    %6117 = vmatpush1.msra.mxu0 0.0
    %6118 = vmatprep.subr.mxu0 0.0
    %6119 = vmatpush1.msra.mxu0 0.0
    %6120 = vmatprep.subr.mxu0 0.0
    %6121 = vmatpush1.msra.mxu0 0.0
    %6122 = vmatprep.subr.mxu0 0.0
    %6123 = vmatpush1.msra.mxu0 0.0
    %6124 = vmatprep.subr.mxu0 0.0
    %6125 = vmatpush1.msra.mxu0 0.0
    %6126 = vmatprep.subr.mxu0 0.0
    %6127 = vmatpush1.msra.mxu0 0.0
    %6128 = vmatprep.subr.mxu0 0.0
    %6129 = vmatpush1.msra.mxu0 0.0
    %6130 = vmatprep.subr.mxu0 0.0
    %6131 = vmatpush1.msra.mxu0 0.0
    %6132 = vmatprep.mubr.f32.mxu0 0.0
    %6133 = vmatmul.mubr.f32.gmra.mrb[0].mxu0 %v6066
    %v6134 = vpop.f32.mrb[0].mxu0
    %v6135 = vadd.f32 0.0, %v6134
    %v6136 = vpop.f32.mrb[0].mxu0
    %v6137 = vadd.f32 0.0, %v6136
    %6138 = vdwg.mxu0
    %6139 = vmatprep.subr.mxu0 %v6052
    %6140 = vmatpush1.msra.mxu0 %v6051
    %6141 = vmatprep.subr.mxu0 %v6056
    %6142 = vmatpush1.msra.mxu0 %v6055
    %6143 = vmatprep.subr.mxu0 %v6060
    %6144 = vmatpush1.msra.mxu0 %v6059
    %6145 = vmatprep.subr.mxu0 %v6064
    %6146 = vmatpush1.msra.mxu0 %v6063
    %6147 = vmatprep.subr.mxu0 0.0
    %6148 = vmatpush1.msra.mxu0 0.0
    %6149 = vmatprep.subr.mxu0 0.0
    %6150 = vmatpush1.msra.mxu0 0.0
    %6151 = vmatprep.subr.mxu0 0.0
    %6152 = vmatpush1.msra.mxu0 0.0
    %6153 = vmatprep.subr.mxu0 0.0
    %6154 = vmatpush1.msra.mxu0 0.0
    %6155 = vmatprep.subr.mxu0 0.0
    %6156 = vmatpush1.msra.mxu0 0.0
    %6157 = vmatprep.subr.mxu0 0.0
    %6158 = vmatpush1.msra.mxu0 0.0
    %6159 = vmatprep.subr.mxu0 0.0
    %6160 = vmatpush1.msra.mxu0 0.0
    %6161 = vmatprep.subr.mxu0 0.0
    %6162 = vmatpush1.msra.mxu0 0.0
    %6163 = vmatprep.subr.mxu0 0.0
    %6164 = vmatpush1.msra.mxu0 0.0
    %6165 = vmatprep.subr.mxu0 0.0
    %6166 = vmatpush1.msra.mxu0 0.0
    %6167 = vmatprep.subr.mxu0 0.0
    %6168 = vmatpush1.msra.mxu0 0.0
    %6169 = vmatprep.subr.mxu0 0.0
    %6170 = vmatpush1.msra.mxu0 0.0
    %6171 = vmatprep.subr.mxu0 0.0
    %6172 = vmatpush1.msra.mxu0 0.0
    %6173 = vmatprep.subr.mxu0 0.0
    %6174 = vmatpush1.msra.mxu0 0.0
    %6175 = vmatprep.subr.mxu0 0.0
    %6176 = vmatpush1.msra.mxu0 0.0
    %6177 = vmatprep.subr.mxu0 0.0
    %6178 = vmatpush1.msra.mxu0 0.0
    %6179 = vmatprep.subr.mxu0 0.0
    %6180 = vmatpush1.msra.mxu0 0.0
    %6181 = vmatprep.subr.mxu0 0.0
    %6182 = vmatpush1.msra.mxu0 0.0
    %6183 = vmatprep.subr.mxu0 0.0
    %6184 = vmatpush1.msra.mxu0 0.0
    %6185 = vmatprep.subr.mxu0 0.0
    %6186 = vmatpush1.msra.mxu0 0.0
    %6187 = vmatprep.subr.mxu0 0.0
    %6188 = vmatpush1.msra.mxu0 0.0
    %6189 = vmatprep.subr.mxu0 0.0
    %6190 = vmatpush1.msra.mxu0 0.0
    %6191 = vmatprep.subr.mxu0 0.0
    %6192 = vmatpush1.msra.mxu0 0.0
    %6193 = vmatprep.subr.mxu0 0.0
    %6194 = vmatpush1.msra.mxu0 0.0
    %6195 = vmatprep.subr.mxu0 0.0
    %6196 = vmatpush1.msra.mxu0 0.0
    %6197 = vmatprep.subr.mxu0 0.0
    %6198 = vmatpush1.msra.mxu0 0.0
    %6199 = vmatprep.subr.mxu0 0.0
    %6200 = vmatpush1.msra.mxu0 0.0
    %6201 = vmatprep.subr.mxu0 0.0
    %6202 = vmatpush1.msra.mxu0 0.0
    %6203 = vmatprep.mubr.f32.mxu0 0.0
    %6204 = vmatmul.mubr.f32.gmra.mrb[0].mxu0 %v6066
    %v6205 = vpop.f32.mrb[0].mxu0
    %v6206 = vadd.f32 0.0, %v6205
    %v6207 = vpop.f32.mrb[0].mxu0
    %v6208 = vadd.f32 0.0, %v6207
    %6209 = vdwg.mxu0
    %v6210 = vadd.f32 %v6045, %v6135
    %v6211 = vadd.f32 %v6046, %v6137
    %v6212 = vadd.f32 %v6047, %v6206
    %v6213 = vadd.f32 %v6048, %v6208
    %v6214 = vld [vmem:[%s6] sm:$0xf]
    %v6216 = vlaneseq
    %v6217 = vshrl.u32 %v6216, 7
    %v6218 = vsub.s32 0, %v6217
    %v6219 = vrot.slane %v6214, %v6218
    %v6220 = vlaneseq
    %v6221 = vshrl.u32 %v6220, 7
    %v6222 = vsub.s32 1, %v6221
    %v6223 = vrot.slane %v6214, %v6222
    %v6224 = vlaneseq
    %v6225 = vshrl.u32 %v6224, 7
    %v6226 = vsub.s32 2, %v6225
    %v6227 = vrot.slane %v6214, %v6226
    %v6228 = vlaneseq
    %v6229 = vshrl.u32 %v6228, 7
    %v6230 = vsub.s32 3, %v6229
    %v6231 = vrot.slane %v6214, %v6230
    %v6236 = vadd.f32 %v6210, %v6219
    %v6237 = vadd.f32 %v6211, %v6223
    %v6238 = vadd.f32 %v6212, %v6227
    %v6239 = vadd.f32 %v6213, %v6231
    %v6240 = vmax.f32 %v6236, 0.0
    %v6241 = vmax.f32 %v6237, 0.0
    %v6242 = vmax.f32 %v6238, 0.0
    %v6243 = vmax.f32 %v6239, 0.0
    %v6244 = vld [vmem:[%s7] sm:$0xff]
    %v6245 = vld [vmem:[%s7 + $0x8] sm:$0xff]
    %v6246 = vld [vmem:[%s7 + $0x10] sm:$0xff]
    %v6247 = vld [vmem:[%s7 + $0x18] sm:$0xff]
    %v6248 = vld [vmem:[%s7 + $0x20] sm:$0xff]
    %v6249 = vld [vmem:[%s7 + $0x28] sm:$0xff]
    %v6250 = vld [vmem:[%s7 + $0x30] sm:$0xff]
    %v6251 = vld [vmem:[%s7 + $0x38] sm:$0xff]
    %v6252 = vld [vmem:[%s7 + $0x40] sm:$0xff]
    %v6253 = vld [vmem:[%s7 + $0x48] sm:$0xff]
    %v6254 = vld [vmem:[%s7 + $0x50] sm:$0xff]
    %v6255 = vld [vmem:[%s7 + $0x58] sm:$0xff]
    %v6256 = vld [vmem:[%s7 + $0x60] sm:$0xff]
    %v6257 = vld [vmem:[%s7 + $0x68] sm:$0xff]
    %v6258 = vld [vmem:[%s7 + $0x70] sm:$0xff]
    %v6259 = vld [vmem:[%s7 + $0x78] sm:$0xff]
    %v6260 = vld [vmem:[%s7 + $0x80] sm:$0xff]
    %v6261 = vld [vmem:[%s7 + $0x88] sm:$0xff]
    %v6262 = vld [vmem:[%s7 + $0x90] sm:$0xff]
    %v6263 = vld [vmem:[%s7 + $0x98] sm:$0xff]
    %v6264 = vld [vmem:[%s7 + $0xa0] sm:$0xff]
    %v6265 = vld [vmem:[%s7 + $0xa8] sm:$0xff]
    %v6266 = vld [vmem:[%s7 + $0xb0] sm:$0xff]
    %v6267 = vld [vmem:[%s7 + $0xb8] sm:$0xff]
    %v6268 = vld [vmem:[%s7 + $0xc0] sm:$0xff]
    %v6269 = vld [vmem:[%s7 + $0xc8] sm:$0xff]
    %v6270 = vld [vmem:[%s7 + $0xd0] sm:$0xff]
    %v6271 = vld [vmem:[%s7 + $0xd8] sm:$0xff]
    %v6272 = vld [vmem:[%s7 + $0xe0] sm:$0xff]
    %v6273 = vld [vmem:[%s7 + $0xe8] sm:$0xff]
    %v6274 = vld [vmem:[%s7 + $0xf0] sm:$0xff]
    %v6275 = vld [vmem:[%s7 + $0xf8] sm:$0xff]
    %v6276 = vld [vmem:[%s7 + $0x100] sm:$0xff]
    %v6277 = vld [vmem:[%s7 + $0x108] sm:$0xff]
    %v6278 = vld [vmem:[%s7 + $0x110] sm:$0xff]
    %v6279 = vld [vmem:[%s7 + $0x118] sm:$0xff]
    %v6280 = vld [vmem:[%s7 + $0x120] sm:$0xff]
    %v6281 = vld [vmem:[%s7 + $0x128] sm:$0xff]
    %v6282 = vld [vmem:[%s7 + $0x130] sm:$0xff]
    %v6283 = vld [vmem:[%s7 + $0x138] sm:$0xff]
    %v6284 = vld [vmem:[%s7 + $0x140] sm:$0xff]
    %v6285 = vld [vmem:[%s7 + $0x148] sm:$0xff]
    %v6286 = vld [vmem:[%s7 + $0x150] sm:$0xff]
    %v6287 = vld [vmem:[%s7 + $0x158] sm:$0xff]
    %v6288 = vld [vmem:[%s7 + $0x160] sm:$0xff]
    %v6289 = vld [vmem:[%s7 + $0x168] sm:$0xff]
    %v6290 = vld [vmem:[%s7 + $0x170] sm:$0xff]
    %v6291 = vld [vmem:[%s7 + $0x178] sm:$0xff]
    %v6292 = vld [vmem:[%s7 + $0x180] sm:$0xff]
    %v6293 = vld [vmem:[%s7 + $0x188] sm:$0xff]
    %v6294 = vld [vmem:[%s7 + $0x190] sm:$0xff]
    %v6295 = vld [vmem:[%s7 + $0x198] sm:$0xff]
    %v6296 = vld [vmem:[%s7 + $0x1a0] sm:$0xff]
    %v6297 = vld [vmem:[%s7 + $0x1a8] sm:$0xff]
    %v6298 = vld [vmem:[%s7 + $0x1b0] sm:$0xff]
    %v6299 = vld [vmem:[%s7 + $0x1b8] sm:$0xff]
    %v6300 = vld [vmem:[%s7 + $0x1c0] sm:$0xff]
    %v6301 = vld [vmem:[%s7 + $0x1c8] sm:$0xff]
    %v6302 = vld [vmem:[%s7 + $0x1d0] sm:$0xff]
    %v6303 = vld [vmem:[%s7 + $0x1d8] sm:$0xff]
    %v6304 = vld [vmem:[%s7 + $0x1e0] sm:$0xff]
    %v6305 = vld [vmem:[%s7 + $0x1e8] sm:$0xff]
    %v6306 = vld [vmem:[%s7 + $0x1f0] sm:$0xff]
    %v6307 = vld [vmem:[%s7 + $0x1f8] sm:$0xff]
    %v6308 = vld [vmem:[%s8] sm:$0x1]
    %v6310 = vlaneseq
    %v6311 = vshrl.u32 %v6310, 7
    %v6312 = vsub.s32 0, %v6311
    %v6313 = vrot.slane %v6308, %v6312
    %6315 = vmatprep.subr.mxu0 0.0
    %6316 = vmatpush1.msra.mxu0 %v6244
    %6317 = vmatprep.subr.mxu0 0.0
    %6318 = vmatpush1.msra.mxu0 %v6245
    %6319 = vmatprep.subr.mxu0 0.0
    %6320 = vmatpush1.msra.mxu0 %v6246
    %6321 = vmatprep.subr.mxu0 0.0
    %6322 = vmatpush1.msra.mxu0 %v6247
    %6323 = vmatprep.subr.mxu0 0.0
    %6324 = vmatpush1.msra.mxu0 %v6248
    %6325 = vmatprep.subr.mxu0 0.0
    %6326 = vmatpush1.msra.mxu0 %v6249
    %6327 = vmatprep.subr.mxu0 0.0
    %6328 = vmatpush1.msra.mxu0 %v6250
    %6329 = vmatprep.subr.mxu0 0.0
    %6330 = vmatpush1.msra.mxu0 %v6251
    %6331 = vmatprep.subr.mxu0 0.0
    %6332 = vmatpush1.msra.mxu0 %v6252
    %6333 = vmatprep.subr.mxu0 0.0
    %6334 = vmatpush1.msra.mxu0 %v6253
    %6335 = vmatprep.subr.mxu0 0.0
    %6336 = vmatpush1.msra.mxu0 %v6254
    %6337 = vmatprep.subr.mxu0 0.0
    %6338 = vmatpush1.msra.mxu0 %v6255
    %6339 = vmatprep.subr.mxu0 0.0
    %6340 = vmatpush1.msra.mxu0 %v6256
    %6341 = vmatprep.subr.mxu0 0.0
    %6342 = vmatpush1.msra.mxu0 %v6257
    %6343 = vmatprep.subr.mxu0 0.0
    %6344 = vmatpush1.msra.mxu0 %v6258
    %6345 = vmatprep.subr.mxu0 0.0
    %6346 = vmatpush1.msra.mxu0 %v6259
    %6347 = vmatprep.subr.mxu0 0.0
    %6348 = vmatpush1.msra.mxu0 %v6260
    %6349 = vmatprep.subr.mxu0 0.0
    %6350 = vmatpush1.msra.mxu0 %v6261
    %6351 = vmatprep.subr.mxu0 0.0
    %6352 = vmatpush1.msra.mxu0 %v6262
    %6353 = vmatprep.subr.mxu0 0.0
    %6354 = vmatpush1.msra.mxu0 %v6263
    %6355 = vmatprep.subr.mxu0 0.0
    %6356 = vmatpush1.msra.mxu0 %v6264
    %6357 = vmatprep.subr.mxu0 0.0
    %6358 = vmatpush1.msra.mxu0 %v6265
    %6359 = vmatprep.subr.mxu0 0.0
    %6360 = vmatpush1.msra.mxu0 %v6266
    %6361 = vmatprep.subr.mxu0 0.0
    %6362 = vmatpush1.msra.mxu0 %v6267
    %6363 = vmatprep.subr.mxu0 0.0
    %6364 = vmatpush1.msra.mxu0 %v6268
    %6365 = vmatprep.subr.mxu0 0.0
    %6366 = vmatpush1.msra.mxu0 %v6269
    %6367 = vmatprep.subr.mxu0 0.0
    %6368 = vmatpush1.msra.mxu0 %v6270
    %6369 = vmatprep.subr.mxu0 0.0
    %6370 = vmatpush1.msra.mxu0 %v6271
    %6371 = vmatprep.subr.mxu0 0.0
    %6372 = vmatpush1.msra.mxu0 %v6272
    %6373 = vmatprep.subr.mxu0 0.0
    %6374 = vmatpush1.msra.mxu0 %v6273
    %6375 = vmatprep.subr.mxu0 0.0
    %6376 = vmatpush1.msra.mxu0 %v6274
    %6377 = vmatprep.subr.mxu0 0.0
    %6378 = vmatpush1.msra.mxu0 %v6275
    %6379 = vmatprep.mubr.f32.mxu0 %v6241
    %6380 = vmatmul.mubr.f32.gmra.mrb[0].mxu0 %v6240
    %v6381 = vpop.f32.mrb[0].mxu0
    %v6382 = vadd.f32 %v6313, %v6381
    %v6383 = vpop.f32.mrb[0].mxu0
    %6384 = vdwg.mxu0
    %6385 = vmatprep.subr.mxu0 0.0
    %6386 = vmatpush1.msra.mxu0 %v6276
    %6387 = vmatprep.subr.mxu0 0.0
    %6388 = vmatpush1.msra.mxu0 %v6277
    %6389 = vmatprep.subr.mxu0 0.0
    %6390 = vmatpush1.msra.mxu0 %v6278
    %6391 = vmatprep.subr.mxu0 0.0
    %6392 = vmatpush1.msra.mxu0 %v6279
    %6393 = vmatprep.subr.mxu0 0.0
    %6394 = vmatpush1.msra.mxu0 %v6280
    %6395 = vmatprep.subr.mxu0 0.0
    %6396 = vmatpush1.msra.mxu0 %v6281
    %6397 = vmatprep.subr.mxu0 0.0
    %6398 = vmatpush1.msra.mxu0 %v6282
    %6399 = vmatprep.subr.mxu0 0.0
    %6400 = vmatpush1.msra.mxu0 %v6283
    %6401 = vmatprep.subr.mxu0 0.0
    %6402 = vmatpush1.msra.mxu0 %v6284
    %6403 = vmatprep.subr.mxu0 0.0
    %6404 = vmatpush1.msra.mxu0 %v6285
    %6405 = vmatprep.subr.mxu0 0.0
    %6406 = vmatpush1.msra.mxu0 %v6286
    %6407 = vmatprep.subr.mxu0 0.0
    %6408 = vmatpush1.msra.mxu0 %v6287
    %6409 = vmatprep.subr.mxu0 0.0
    %6410 = vmatpush1.msra.mxu0 %v6288
    %6411 = vmatprep.subr.mxu0 0.0
    %6412 = vmatpush1.msra.mxu0 %v6289
    %6413 = vmatprep.subr.mxu0 0.0
    %6414 = vmatpush1.msra.mxu0 %v6290
    %6415 = vmatprep.subr.mxu0 0.0
    %6416 = vmatpush1.msra.mxu0 %v6291
    %6417 = vmatprep.subr.mxu0 0.0
    %6418 = vmatpush1.msra.mxu0 %v6292
    %6419 = vmatprep.subr.mxu0 0.0
    %6420 = vmatpush1.msra.mxu0 %v6293
    %6421 = vmatprep.subr.mxu0 0.0
    %6422 = vmatpush1.msra.mxu0 %v6294
    %6423 = vmatprep.subr.mxu0 0.0
    %6424 = vmatpush1.msra.mxu0 %v6295
    %6425 = vmatprep.subr.mxu0 0.0
    %6426 = vmatpush1.msra.mxu0 %v6296
    %6427 = vmatprep.subr.mxu0 0.0
    %6428 = vmatpush1.msra.mxu0 %v6297
    %6429 = vmatprep.subr.mxu0 0.0
    %6430 = vmatpush1.msra.mxu0 %v6298
    %6431 = vmatprep.subr.mxu0 0.0
    %6432 = vmatpush1.msra.mxu0 %v6299
    %6433 = vmatprep.subr.mxu0 0.0
    %6434 = vmatpush1.msra.mxu0 %v6300
    %6435 = vmatprep.subr.mxu0 0.0
    %6436 = vmatpush1.msra.mxu0 %v6301
    %6437 = vmatprep.subr.mxu0 0.0
    %6438 = vmatpush1.msra.mxu0 %v6302
    %6439 = vmatprep.subr.mxu0 0.0
    %6440 = vmatpush1.msra.mxu0 %v6303
    %6441 = vmatprep.subr.mxu0 0.0
    %6442 = vmatpush1.msra.mxu0 %v6304
    %6443 = vmatprep.subr.mxu0 0.0
    %6444 = vmatpush1.msra.mxu0 %v6305
    %6445 = vmatprep.subr.mxu0 0.0
    %6446 = vmatpush1.msra.mxu0 %v6306
    %6447 = vmatprep.subr.mxu0 0.0
    %6448 = vmatpush1.msra.mxu0 %v6307
    %6449 = vmatprep.mubr.f32.mxu0 %v6243
    %6450 = vmatmul.mubr.f32.gmra.mrb[0].mxu0 %v6242
    %v6451 = vpop.f32.mrb[0].mxu0
    %v6452 = vadd.f32 %v6382, %v6451
    %v6453 = vpop.f32.mrb[0].mxu0
    %6454 = vdwg.mxu0
    %vm6455 = vcmask 1024
    %6456 = vst.msk [vmem:[%s9] sm:$0x3] %vm6455, %v6452
    %vm6457 = vcmask 50184
    %v6458 = vsel %vm6457, %v6452, -inf
    %6459 = vmax.xlane.f32.xlu0 %v6458
    %v6460 = vpop.xlane.xlu0 %6459
    %v6461 = vsub.f32 %v6452, %v6460
    %v6462 = vmul.f32 %v6461, 1.442695
    %v6463 = vpow.pop %v6462
    %6465 = vrot.lane.b32.xlu0 %v6463, 127
    %v6466 = vpop.permute.xlu0 %6465
    %vm6468 = vcmask 41984
    %v6469 = vsel %vm6468, %v6466, 0.0
    %6470 = vadd.xlane.f32.xlu0 %v6469
    %v6471 = vpop.xlane.xlu0 %6470
    %v6472 = vrcp.pop %v6471
    %v6473 = vmul.f32 %v6463, %v6472
    %6475 = vrot.lane.b32.xlu0 %v6473, 127
    %v6476 = vpop.permute.xlu0 %6475
    %6478 = vst.msk [vmem:[#allocation4] sm:$0x3] %vm6468, %v6476
    // Predicated region
    $region38: #{forward.1} parent=1 // pred_check
      _
    $region39: #{forward.1} parent=1 // pred_check_branch
      %6480 = sbr.rel (0) target = $region41
    $region40: #{forward.1} parent=1 // pred_region
      _
    $region41: #{forward.1} parent=1 // pred_fallthru
      _
    // Predicated region
    $region42: #{forward.1} parent=1 // pred_check
      _
    $region43: #{forward.1} parent=1 // pred_check_branch
      %6482 = sbr.rel (0) target = $region45
    $region44: #{forward.1} parent=1 // pred_region
      %s6484 = ssub.s32 32, 32
      %6485 = vsyncadd [#allocation5], %s6484
      %s6487 = sshll.u32 [#allocation4], 4
      %s6488 = int_to_ptr.vmem [resolvable:$true] %s6487
      %6490 = dma.vmem_to_hbm [thread:$0]  %s6488, 32, %s10, [#allocation5]
    $region45: #{forward.1} parent=1 // pred_fallthru
      _
    // Predicated region
    $region46: #{forward.1} parent=1 // pred_check
      _
    $region47: #{forward.1} parent=1 // pred_check_branch
      %6492 = sbr.rel (0) target = $region49
    $region48: #{forward.1} parent=1 // pred_region
      _
    $region49: #{forward.1} parent=1 // pred_fallthru
      _
    // Predicated region
    $region50: #{forward.1} parent=1 // pred_check
      _
    $region51: #{forward.1} parent=1 // pred_check_branch
      %6494 = sbr.rel (0) target = $region53
    $region52: #{forward.1} parent=1 // pred_region
      %6495 = dma.done [#allocation5], 32
    $region53: #{forward.1} parent=1 // pred_fallthru
      _
    %6496 = vsyncpa [#allocation5], 1

</llo_original>
